<compile_context>
chip_gen: v6e
topology: v6e:2x2x1
jax: 0.10.0
libtpu: 0.0.40
codegen_flags: <defaults>
</compile_context>

<pallas_src>
import functools

import jax
import jax.numpy as jnp
from jax.experimental import pallas as pl
from jax.experimental.pallas import tpu as pltpu

F_CONV = 128           # Conv1d out channels (fixed by the module)
LANE = 128             # lane width
SUB = 16               # bf16 native sublane tile rows


def _round_up(x, m):
    return ((x + m - 1) // m) * m


def _vmem_limit():
    # v7x: 64 MiB VMEM/TC -> ~54 MiB budget; v5e/v6e: 128 MiB -> 100 MiB.
    try:
        cap = pltpu.get_tpu_info().vmem_capacity_bytes
    except Exception:                      # info query unavailable -> v7x-safe
        cap = 64 * 1024 * 1024
    return min(100 * 1024 * 1024, int(cap * 0.85))


# ============================================================================
# Single fused kernel: projections + interleaved BiGRU/BiLSTM + conv+pool+head
# ============================================================================
def lstm_gru_cnn_kernel(
        x_ref,                                            # (S*TB, E) bf16
        wih_gf_ref, bih_gf_ref, whh_gf_ref, bhn_gf_ref,   # GRU fwd
        wih_gb_ref, bih_gb_ref, whh_gb_ref, bhn_gb_ref,   # GRU bwd
        wih_lf_ref, bih_lf_ref, whh_lf_ref,               # LSTM fwd (bhh folded)
        wih_lb_ref, bih_lb_ref, whh_lb_ref,               # LSTM bwd
        wc1k0_ref, wc1k1_ref, bc1_ref,                    # conv1 taps / bias
        wc2k0_ref, wc2k1_ref, bc2_ref,                    # conv2
        wd1_ref, bd1_ref, wd2_ref, bd2_ref, wo_ref, bo_ref,
        out_ref,                                          # (TB, O) f32
        gi_gf, gi_gb, gi_lf, gi_lb,                       # bf16 scratch (S*TB, 3U/4U)
        hgf_sc, hgb_sc, hlf_sc, hlb_sc,                   # bf16 scratch (S*TB, U)
        *, seq_len, batch_tile):
    S, TB = seq_len, batch_tile
    U = whh_gf_ref.shape[0]          # padded hidden size (multiple of 128)
    F = bc1_ref.shape[1]
    bf16 = jnp.bfloat16

    # ---- 1. Hoisted input projections: one MXU matmul per direction, each
    #         written directly into its own bf16 scratch (biases pre-folded). ----
    x = x_ref[...]
    gi_gf[...] = (jnp.dot(x, wih_gf_ref[...], preferred_element_type=jnp.float32)
                  + bih_gf_ref[...]).astype(bf16)
    gi_gb[...] = (jnp.dot(x, wih_gb_ref[...], preferred_element_type=jnp.float32)
                  + bih_gb_ref[...]).astype(bf16)
    gi_lf[...] = (jnp.dot(x, wih_lf_ref[...], preferred_element_type=jnp.float32)
                  + bih_lf_ref[...]).astype(bf16)
    gi_lb[...] = (jnp.dot(x, wih_lb_ref[...], preferred_element_type=jnp.float32)
                  + bih_lb_ref[...]).astype(bf16)

    # ---- 2. Interleaved recurrence: 4 independent serial chains in ONE loop
    #         so MXU / EUP / VPU latencies overlap across directions. ----
    whh_gf = whh_gf_ref[...]
    whh_gb = whh_gb_ref[...]
    whh_lf = whh_lf_ref[...]
    whh_lb = whh_lb_ref[...]
    # b_hn broadcasts hoisted out of the loop (broadcasts are not CSE'd).
    bhn_gf = jnp.broadcast_to(bhn_gf_ref[...], (TB, U))
    bhn_gb = jnp.broadcast_to(bhn_gb_ref[...], (TB, U))

    def gru_update(gi, gh, bhn, h):
        # gi already contains b_i* plus folded b_hr / b_hz; b_hn stays inside r*(.)
        r = jax.nn.sigmoid(gi[:, 0 * U:1 * U] + gh[:, 0 * U:1 * U])
        z = jax.nn.sigmoid(gi[:, 1 * U:2 * U] + gh[:, 1 * U:2 * U])
        n = jnp.tanh(gi[:, 2 * U:3 * U] + r * (gh[:, 2 * U:3 * U] + bhn))
        return (1.0 - z) * n + z * h

    def lstm_update(g, c):
        ig = jax.nn.sigmoid(g[:, 0 * U:1 * U])
        fg = jax.nn.sigmoid(g[:, 1 * U:2 * U])
        gg = jnp.tanh(g[:, 2 * U:3 * U])
        og = jax.nn.sigmoid(g[:, 3 * U:4 * U])
        c_new = fg * c + ig * gg
        return og * jnp.tanh(c_new), c_new

    def step(t, carry):
        h_gf, h_gb, h_lf, c_lf, h_lb, c_lb = carry
        rf = pl.ds(pl.multiple_of(t * TB, TB), TB)                 # forward time
        rb = pl.ds(pl.multiple_of((S - 1 - t) * TB, TB), TB)       # reversed time

        # Four independent small recurrent matmuls -> scheduler overlaps them.
        gh_gf = jnp.dot(h_gf.astype(bf16), whh_gf, preferred_element_type=jnp.float32)
        gh_gb = jnp.dot(h_gb.astype(bf16), whh_gb, preferred_element_type=jnp.float32)
        gh_lf = jnp.dot(h_lf.astype(bf16), whh_lf, preferred_element_type=jnp.float32)
        gh_lb = jnp.dot(h_lb.astype(bf16), whh_lb, preferred_element_type=jnp.float32)

        h_gf = gru_update(gi_gf[rf, :], gh_gf, bhn_gf, h_gf)
        h_gb = gru_update(gi_gb[rb, :], gh_gb, bhn_gb, h_gb)
        h_lf, c_lf = lstm_update(gi_lf[rf, :] + gh_lf, c_lf)
        h_lb, c_lb = lstm_update(gi_lb[rb, :] + gh_lb, c_lb)

        hgf_sc[rf, :] = h_gf.astype(bf16)
        hgb_sc[rb, :] = h_gb.astype(bf16)
        hlf_sc[rf, :] = h_lf.astype(bf16)
        hlb_sc[rb, :] = h_lb.astype(bf16)
        return h_gf, h_gb, h_lf, c_lf, h_lb, c_lb

    z0 = jnp.zeros((TB, U), jnp.float32)
    jax.lax.fori_loop(0, S, step, (z0, z0, z0, z0, z0, z0))

    # ---- 3. Conv1d(k=2) as whole-sequence block matmuls + global pooling.
    #         Bidirectional concat never materialized (weights pre-split);
    #         bias added after pooling (per-channel constant commutes). ----
    L = S - 1
    LTB = L * TB

    def conv_pool(hf_sc, hb_sc, wk0_ref, wk1_ref, b_ref):
        w0f = wk0_ref[pl.ds(0, U), :]
        w0b = wk0_ref[pl.ds(U, U), :]
        w1f = wk1_ref[pl.ds(0, U), :]
        w1b = wk1_ref[pl.ds(U, U), :]
        y = (jnp.dot(hf_sc[pl.ds(0, LTB), :], w0f, preferred_element_type=jnp.float32)
             + jnp.dot(hb_sc[pl.ds(0, LTB), :], w0b, preferred_element_type=jnp.float32)
             + jnp.dot(hf_sc[pl.ds(TB, LTB), :], w1f, preferred_element_type=jnp.float32)
             + jnp.dot(hb_sc[pl.ds(TB, LTB), :], w1b, preferred_element_type=jnp.float32))
        y = y.reshape(L, TB, F)                    # leading-dim split only; tile-preserving
        bias = b_ref[...]
        mx = jnp.max(y, axis=0) + bias
        av = jnp.sum(y, axis=0) * (1.0 / L) + bias
        return mx, av

    max1, avg1 = conv_pool(hgf_sc, hgb_sc, wc1k0_ref, wc1k1_ref, bc1_ref)
    max2, avg2 = conv_pool(hlf_sc, hlb_sc, wc2k0_ref, wc2k1_ref, bc2_ref)

    # ---- 4. Dense head; the (B,512) concat is consumed as 4 row-blocks of wd1. ----
    h1 = (jnp.dot(max1.astype(bf16), wd1_ref[pl.ds(0 * F, F), :],
                  preferred_element_type=jnp.float32)
          + jnp.dot(avg1.astype(bf16), wd1_ref[pl.ds(1 * F, F), :],
                    preferred_element_type=jnp.float32)
          + jnp.dot(max2.astype(bf16), wd1_ref[pl.ds(2 * F, F), :],
                    preferred_element_type=jnp.float32)
          + jnp.dot(avg2.astype(bf16), wd1_ref[pl.ds(3 * F, F), :],
                    preferred_element_type=jnp.float32)
          + bd1_ref[...])
    h1 = jnp.maximum(h1, 0.0)
    h2 = jnp.maximum(
        jnp.dot(h1.astype(bf16), wd2_ref[...],
                preferred_element_type=jnp.float32) + bd2_ref[...], 0.0)
    out_ref[...] = (jnp.dot(h2.astype(bf16), wo_ref[...],
                            preferred_element_type=jnp.float32) + bo_ref[...])


# ----------------------------------------------------------------------------
# Wrapper
# ----------------------------------------------------------------------------
def _pinned(arr):
    nd = arr.ndim
    return pl.BlockSpec(tuple(arr.shape), lambda g, _n=nd: (0,) * _n)


def _batch_tiling(batch, seq_len, embed_size, u_pad, vmem_limit):
    """Pick the batch tile TB (rows per grid step).

    TB is the M dimension of every per-timestep recurrent matmul, so bigger is
    better for MXU fill, but the VMEM-resident bf16 scratch (gi + h), the
    double-buffered embedding tile and the f32 projection temporaries all
    scale with S*TB.  TB is a multiple of 16 so every per-timestep bf16 block
    starts on a native (16,128) tile.
    """
    resident = 18 * u_pad * 2                 # gi (14*U) + h (4*U), bf16
    xbuf = 2 * embed_size * 2                 # double-buffered bf16 emb tile
    transient = 16 * u_pad + 4 * F_CONV       # largest f32 proj temp + conv y
    per_row = resident + xbuf + transient
    budget = max(vmem_limit - (8 << 20), 8 << 20)   # headroom for weights etc.
    tb_cap = max(SUB, (budget // (seq_len * per_row)) // SUB * SUB)
    tb = max(SUB, min(64, tb_cap, _round_up(batch, SUB)))
    return tb, pl.cdiv(batch, tb)


def lstm_gru_cnn_forward(params, x_ids, features):
    """Packed-params forward. x_ids: (B, S) int32. Returns (B, 1 + num_aux)."""
    del features                       # unused by the reference forward()
    p = params
    B, S = x_ids.shape
    assert S >= 2, "Conv1d(kernel_size=2) needs sequence length >= 2"
    E = p["emb"].shape[1]
    U = p["whh_gf"].shape[0]           # padded hidden size
    F = p["bc1"].shape[1]
    O = p["bo"].shape[1]
    assert p["wd1"].shape[0] == 4 * F  # dense_units1 must be 4 * 128 = 512

    vmem_limit = _vmem_limit()
    TB, G = _batch_tiling(B, S, E, U, vmem_limit)
    B_pad = TB * G

    # Embedding gather straight into the kernel's tiled, time-major-flattened
    # layout: tile g, row t*TB + b_local  ==  token (g*TB + b_local, t).
    # SpatialDropout(Dropout2d) is the identity at inference.
    ids = x_ids if B_pad == B else jnp.pad(x_ids, ((0, B_pad - B), (0, 0)))
    idx = ids.reshape(G, TB, S).transpose(0, 2, 1).reshape(G, S * TB)
    x_tiles = jnp.take(p["emb"], idx, axis=0)          # (G, S*TB, E) bf16

    weights = (
        p["wih_gf"], p["bih_gf"], p["whh_gf"], p["bhn_gf"],
        p["wih_gb"], p["bih_gb"], p["whh_gb"], p["bhn_gb"],
        p["wih_lf"], p["bih_lf"], p["whh_lf"],
        p["wih_lb"], p["bih_lb"], p["whh_lb"],
        p["wc1k0"], p["wc1k1"], p["bc1"],
        p["wc2k0"], p["wc2k1"], p["bc2"],
        p["wd1"], p["bd1"], p["wd2"], p["bd2"], p["wo"], p["bo"])

    out_pad = pl.pallas_call(
        functools.partial(lstm_gru_cnn_kernel, seq_len=S, batch_tile=TB),
        out_shape=jax.ShapeDtypeStruct((B_pad, O), jnp.float32),
        grid_spec=pltpu.PrefetchScalarGridSpec(
            num_scalar_prefetch=0,
            grid=(G,),
            in_specs=[pl.BlockSpec((None, S * TB, E), lambda g: (g, 0, 0))]
                     + [_pinned(w) for w in weights],
            out_specs=pl.BlockSpec((TB, O), lambda g: (g, 0)),
            scratch_shapes=[
                pltpu.VMEM((S * TB, 3 * U), jnp.bfloat16),   # gi GRU fwd
                pltpu.VMEM((S * TB, 3 * U), jnp.bfloat16),   # gi GRU bwd
                pltpu.VMEM((S * TB, 4 * U), jnp.bfloat16),   # gi LSTM fwd
                pltpu.VMEM((S * TB, 4 * U), jnp.bfloat16),   # gi LSTM bwd
                pltpu.VMEM((S * TB, U), jnp.bfloat16),       # h GRU fwd
                pltpu.VMEM((S * TB, U), jnp.bfloat16),       # h GRU bwd
                pltpu.VMEM((S * TB, U), jnp.bfloat16),       # h LSTM fwd
                pltpu.VMEM((S * TB, U), jnp.bfloat16),       # h LSTM bwd
            ]),
        compiler_params=pltpu.CompilerParams(
            dimension_semantics=("parallel",),     # batch tiles -> both TCs on v7x
            vmem_limit_bytes=vmem_limit),
    )(x_tiles, *weights)

    return out_pad[:B]


# ----------------------------------------------------------------------------
# Parameter init (torch-shaped) and packing into the fused / padded layout.
# ----------------------------------------------------------------------------
def _rnn_raw(key, e, u, gates, scale=0.1):
    k = jax.random.split(key, 4)
    return dict(
        wih=jax.random.normal(k[0], (gates * u, e), jnp.float32) * scale,
        whh=jax.random.normal(k[1], (gates * u, u), jnp.float32) * scale,
        bih=jax.random.normal(k[2], (gates * u,), jnp.float32) * scale,
        bhh=jax.random.normal(k[3], (gates * u,), jnp.float32) * scale)


def _conv_raw(key, cin, cout, scale=0.1):
    k = jax.random.split(key, 2)
    return dict(w=jax.random.normal(k[0], (cout, cin, 2), jnp.float32) * scale,
                b=jax.random.normal(k[1], (cout,), jnp.float32) * scale)


def _linear_raw(key, fin, fout, scale=0.05):
    k = jax.random.split(key, 2)
    return dict(w=jax.random.normal(k[0], (fout, fin), jnp.float32) * scale,
                b=jax.random.normal(k[1], (fout,), jnp.float32) * scale)


def init_raw_params(key, max_features, embed_size, units,
                    dense1, dense2, dense3, num_aux):
    ks = jax.random.split(key, 11)
    return dict(
        embedding=jax.random.normal(ks[0], (max_features, embed_size),
                                    jnp.float32) * 0.1,
        gru_f=_rnn_raw(ks[1], embed_size, units, 3),
        gru_b=_rnn_raw(ks[2], embed_size, units, 3),
        lstm_f=_rnn_raw(ks[3], embed_size, units, 4),
        lstm_b=_rnn_raw(ks[4], embed_size, units, 4),
        conv1=_conv_raw(ks[5], 2 * units, F_CONV),
        conv2=_conv_raw(ks[6], 2 * units, F_CONV),
        linear1=_linear_raw(ks[7], dense1, dense2),
        linear2=_linear_raw(ks[8], dense2, dense3),
        lin_out=_linear_raw(ks[9], dense3, 1),
        lin_aux=_linear_raw(ks[10], dense3, num_aux))


def pack_params(raw):
    """Torch-layout params -> padded / transposed / bf16 kernel layout.

    Hidden size U is zero-padded (per gate) to a multiple of 128 lanes so all
    in-kernel gate slices and per-timestep stores are lane-aligned.  Padded
    hidden columns stay exactly zero through the GRU/LSTM recurrences and are
    multiplied by zero conv-weight rows, so results are unchanged.
    """
    bf16 = jnp.bfloat16
    gf, gb, lf, lb = raw["gru_f"], raw["gru_b"], raw["lstm_f"], raw["lstm_b"]
    U = gf["whh"].shape[1]
    Up = _round_up(U, LANE)

    def pad_gate_cols(w, gates):              # (rows, gates*U) -> (rows, gates*Up)
        if Up == U:
            return w
        return jnp.concatenate(
            [jnp.pad(w[:, g * U:(g + 1) * U], ((0, 0), (0, Up - U)))
             for g in range(gates)], axis=1)

    def pad_gate_vec(v, gates):               # (gates*U,) -> (1, gates*Up)
        if Up == U:
            return v[None, :]
        return jnp.concatenate(
            [jnp.pad(v[g * U:(g + 1) * U], (0, Up - U)) for g in range(gates)]
        )[None, :]

    def pad_rows(w):                          # (U, cols) -> (Up, cols)
        return w if Up == U else jnp.pad(w, ((0, Up - U), (0, 0)))

    def pack_gru(d):
        # Fold b_hr, b_hz into the hoisted projection bias; keep b_hn separate
        # (it must sit inside the r * (W_hn h + b_hn) term).
        bih = d["bih"] + jnp.concatenate(
            [d["bhh"][:2 * U], jnp.zeros((U,), jnp.float32)])
        return dict(
            wih=pad_gate_cols(d["wih"].T, 3).astype(bf16),
            bih=pad_gate_vec(bih, 3),
            whh=pad_rows(pad_gate_cols(d["whh"].T, 3)).astype(bf16),
            bhn=pad_gate_vec(d["bhh"][2 * U:], 1))

    def pack_lstm(d):
        return dict(
            wih=pad_gate_cols(d["wih"].T, 4).astype(bf16),
            bih=pad_gate_vec(d["bih"] + d["bhh"], 4),   # ih/hh biases always summed
            whh=pad_rows(pad_gate_cols(d["whh"].T, 4)).astype(bf16))

    def pack_conv(c):
        # Conv1d weight (F, 2U, 2) -> two taps, each split fwd/bwd and padded.
        def tap(k):
            w = c["w"][:, :, k].T                         # (2U, F)
            return jnp.concatenate(
                [pad_rows(w[:U, :]), pad_rows(w[U:, :])], axis=0).astype(bf16)
        return tap(0), tap(1), c["b"][None, :]

    ggf, ggb = pack_gru(gf), pack_gru(gb)
    llf, llb = pack_lstm(lf), pack_lstm(lb)
    wc1k0, wc1k1, bc1 = pack_conv(raw["conv1"])
    wc2k0, wc2k1, bc2 = pack_conv(raw["conv2"])
    # linear_out / linear_aux_out fused: out = x @ cat([w_out, w_aux])^T once.
    wo = jnp.concatenate([raw["lin_out"]["w"], raw["lin_aux"]["w"]], axis=0).T
    bo = jnp.concatenate([raw["lin_out"]["b"], raw["lin_aux"]["b"]])[None, :]
    return dict(
        emb=raw["embedding"].astype(bf16),
        wih_gf=ggf["wih"], bih_gf=ggf["bih"], whh_gf=ggf["whh"], bhn_gf=ggf["bhn"],
        wih_gb=ggb["wih"], bih_gb=ggb["bih"], whh_gb=ggb["whh"], bhn_gb=ggb["bhn"],
        wih_lf=llf["wih"], bih_lf=llf["bih"], whh_lf=llf["whh"],
        wih_lb=llb["wih"], bih_lb=llb["bih"], whh_lb=llb["whh"],
        wc1k0=wc1k0, wc1k1=wc1k1, bc1=bc1,
        wc2k0=wc2k0, wc2k1=wc2k1, bc2=bc2,
        wd1=raw["linear1"]["w"].T.astype(bf16), bd1=raw["linear1"]["b"][None, :],
        wd2=raw["linear2"]["w"].T.astype(bf16), bd2=raw["linear2"]["b"][None, :],
        wo=wo.astype(bf16), bo=bo)


# ----------------------------------------------------------------------------
if __name__ == "__main__":
    B, S = 2, 8
    max_features = 100
    embed_size = 32
    lstm_units = 32
    dense1, dense2, dense3 = 512, 64, 64    # dense1 must be 4 * 128
    num_aux = 6

    key = jax.random.PRNGKey(0)
    k_param, k_x, k_feat = jax.random.split(key, 3)

    raw = init_raw_params(k_param, max_features, embed_size, lstm_units,
                          dense1, dense2, dense3, num_aux)
    params = pack_params(raw)

    x_ids = jax.random.randint(k_x, (B, S), 0, max_features, dtype=jnp.int32)
    features = jax.random.normal(k_feat, (B, 4), jnp.float32)  # unused, mirrors torch API

    out = jax.jit(lstm_gru_cnn_forward)(params, x_ids, features)
    out = jax.block_until_ready(out)
    assert out.shape == (B, 1 + num_aux)
    assert bool(jnp.all(jnp.isfinite(out)))
    print("KERNEL_OK")
</pallas_src>

<mosaic_0001>
module attributes {stable_mosaic.version = 11 : i64} {
  func.func @lstm_gru_cnn_kernel(%arg0: i32, %arg1: memref<1x128x32xbf16, #tpu.memory_space<vmem>>, %arg2: memref<32x384xbf16, #tpu.memory_space<vmem>>, %arg3: memref<1x384xf32, #tpu.memory_space<vmem>>, %arg4: memref<128x384xbf16, #tpu.memory_space<vmem>>, %arg5: memref<1x128xf32, #tpu.memory_space<vmem>>, %arg6: memref<32x384xbf16, #tpu.memory_space<vmem>>, %arg7: memref<1x384xf32, #tpu.memory_space<vmem>>, %arg8: memref<128x384xbf16, #tpu.memory_space<vmem>>, %arg9: memref<1x128xf32, #tpu.memory_space<vmem>>, %arg10: memref<32x512xbf16, #tpu.memory_space<vmem>>, %arg11: memref<1x512xf32, #tpu.memory_space<vmem>>, %arg12: memref<128x512xbf16, #tpu.memory_space<vmem>>, %arg13: memref<32x512xbf16, #tpu.memory_space<vmem>>, %arg14: memref<1x512xf32, #tpu.memory_space<vmem>>, %arg15: memref<128x512xbf16, #tpu.memory_space<vmem>>, %arg16: memref<256x128xbf16, #tpu.memory_space<vmem>>, %arg17: memref<256x128xbf16, #tpu.memory_space<vmem>>, %arg18: memref<1x128xf32, #tpu.memory_space<vmem>>, %arg19: memref<256x128xbf16, #tpu.memory_space<vmem>>, %arg20: memref<256x128xbf16, #tpu.memory_space<vmem>>, %arg21: memref<1x128xf32, #tpu.memory_space<vmem>>, %arg22: memref<512x64xbf16, #tpu.memory_space<vmem>>, %arg23: memref<1x64xf32, #tpu.memory_space<vmem>>, %arg24: memref<64x64xbf16, #tpu.memory_space<vmem>>, %arg25: memref<1x64xf32, #tpu.memory_space<vmem>>, %arg26: memref<64x7xbf16, #tpu.memory_space<vmem>>, %arg27: memref<1x7xf32, #tpu.memory_space<vmem>>, %arg28: memref<16x7xf32, #tpu.memory_space<vmem>>, %arg29: memref<128x384xbf16, #tpu.memory_space<vmem>>, %arg30: memref<128x384xbf16, #tpu.memory_space<vmem>>, %arg31: memref<128x512xbf16, #tpu.memory_space<vmem>>, %arg32: memref<128x512xbf16, #tpu.memory_space<vmem>>, %arg33: memref<128x128xbf16, #tpu.memory_space<vmem>>, %arg34: memref<128x128xbf16, #tpu.memory_space<vmem>>, %arg35: memref<128x128xbf16, #tpu.memory_space<vmem>>, %arg36: memref<128x128xbf16, #tpu.memory_space<vmem>>) attributes {dimension_semantics = [#tpu.dimension_semantics<parallel>], iteration_bounds = array<i64: 1>, scalar_prefetch = 0 : i64, scratch_operands = 8 : i64, tpu.core_type = #tpu.core_type<tc>, window_params = [{transform_indices = @transform_0, window_bounds = array<i64: 1, 128, 32>}, {pipeline_mode = #tpu.pipeline_mode<synchronous>, transform_indices = @transform_1, window_bounds = array<i64: 32, 384>}, {pipeline_mode = #tpu.pipeline_mode<synchronous>, transform_indices = @transform_2, window_bounds = array<i64: 1, 384>}, {pipeline_mode = #tpu.pipeline_mode<synchronous>, transform_indices = @transform_3, window_bounds = array<i64: 128, 384>}, {pipeline_mode = #tpu.pipeline_mode<synchronous>, transform_indices = @transform_4, window_bounds = array<i64: 1, 128>}, {pipeline_mode = #tpu.pipeline_mode<synchronous>, transform_indices = @transform_5, window_bounds = array<i64: 32, 384>}, {pipeline_mode = #tpu.pipeline_mode<synchronous>, transform_indices = @transform_6, window_bounds = array<i64: 1, 384>}, {pipeline_mode = #tpu.pipeline_mode<synchronous>, transform_indices = @transform_7, window_bounds = array<i64: 128, 384>}, {pipeline_mode = #tpu.pipeline_mode<synchronous>, transform_indices = @transform_8, window_bounds = array<i64: 1, 128>}, {pipeline_mode = #tpu.pipeline_mode<synchronous>, transform_indices = @transform_9, window_bounds = array<i64: 32, 512>}, {pipeline_mode = #tpu.pipeline_mode<synchronous>, transform_indices = @transform_10, window_bounds = array<i64: 1, 512>}, {pipeline_mode = #tpu.pipeline_mode<synchronous>, transform_indices = @transform_11, window_bounds = array<i64: 128, 512>}, {pipeline_mode = #tpu.pipeline_mode<synchronous>, transform_indices = @transform_12, window_bounds = array<i64: 32, 512>}, {pipeline_mode = #tpu.pipeline_mode<synchronous>, transform_indices = @transform_13, window_bounds = array<i64: 1, 512>}, {pipeline_mode = #tpu.pipeline_mode<synchronous>, transform_indices = @transform_14, window_bounds = array<i64: 128, 512>}, {pipeline_mode = #tpu.pipeline_mode<synchronous>, transform_indices = @transform_15, window_bounds = array<i64: 256, 128>}, {pipeline_mode = #tpu.pipeline_mode<synchronous>, transform_indices = @transform_16, window_bounds = array<i64: 256, 128>}, {pipeline_mode = #tpu.pipeline_mode<synchronous>, transform_indices = @transform_17, window_bounds = array<i64: 1, 128>}, {pipeline_mode = #tpu.pipeline_mode<synchronous>, transform_indices = @transform_18, window_bounds = array<i64: 256, 128>}, {pipeline_mode = #tpu.pipeline_mode<synchronous>, transform_indices = @transform_19, window_bounds = array<i64: 256, 128>}, {pipeline_mode = #tpu.pipeline_mode<synchronous>, transform_indices = @transform_20, window_bounds = array<i64: 1, 128>}, {pipeline_mode = #tpu.pipeline_mode<synchronous>, transform_indices = @transform_21, window_bounds = array<i64: 512, 64>}, {pipeline_mode = #tpu.pipeline_mode<synchronous>, transform_indices = @transform_22, window_bounds = array<i64: 1, 64>}, {pipeline_mode = #tpu.pipeline_mode<synchronous>, transform_indices = @transform_23, window_bounds = array<i64: 64, 64>}, {pipeline_mode = #tpu.pipeline_mode<synchronous>, transform_indices = @transform_24, window_bounds = array<i64: 1, 64>}, {pipeline_mode = #tpu.pipeline_mode<synchronous>, transform_indices = @transform_25, window_bounds = array<i64: 64, 7>}, {pipeline_mode = #tpu.pipeline_mode<synchronous>, transform_indices = @transform_26, window_bounds = array<i64: 1, 7>}, {transform_indices = @transform_27, window_bounds = array<i64: 16, 7>}]} {
    %c0 = arith.constant 0 : index
    %c0_0 = arith.constant 0 : index
    %c0_1 = arith.constant 0 : index
    %0 = vector.load %arg1[%c0, %c0_0, %c0_1] : memref<1x128x32xbf16, #tpu.memory_space<vmem>>, vector<1x128x32xbf16>
    %1 = vector.shape_cast %0 : vector<1x128x32xbf16> to vector<128x32xbf16>
    %c0_2 = arith.constant 0 : index
    %c0_3 = arith.constant 0 : index
    %2 = vector.load %arg2[%c0_2, %c0_3] : memref<32x384xbf16, #tpu.memory_space<vmem>>, vector<32x384xbf16>
    %cst = arith.constant dense<0.000000e+00> : vector<128x384xf32>
    %3 = tpu.matmul %1, %2, %cst {dimension_numbers = #tpu.dot_dimension_numbers<[1], [0], [0], [1], [0, 0, 1, 1], [], []>} : vector<128x32xbf16>, vector<32x384xbf16>, vector<128x384xf32> -> vector<128x384xf32>
    %c0_4 = arith.constant 0 : index
    %c0_5 = arith.constant 0 : index
    %4 = vector.load %arg3[%c0_4, %c0_5] : memref<1x384xf32, #tpu.memory_space<vmem>>, vector<1x384xf32>
    %5 = vector.broadcast %4 : vector<1x384xf32> to vector<128x384xf32>
    %6 = arith.addf %3, %5 : vector<128x384xf32>
    %7 = arith.truncf %6 : vector<128x384xf32> to vector<128x384xbf16>
    %c0_6 = arith.constant 0 : index
    %c0_7 = arith.constant 0 : index
    %8 = vector.load %arg29[%c0_6, %c0_7] : memref<128x384xbf16, #tpu.memory_space<vmem>>, vector<128x384xbf16>
    tpu.vector_store %arg29[%c0_6, %c0_7], %7 {strides = array<i32>} : memref<128x384xbf16, #tpu.memory_space<vmem>>, vector<128x384xbf16>,
    %c0_8 = arith.constant 0 : index
    %c0_9 = arith.constant 0 : index
    %9 = vector.load %arg6[%c0_8, %c0_9] : memref<32x384xbf16, #tpu.memory_space<vmem>>, vector<32x384xbf16>
    %cst_10 = arith.constant dense<0.000000e+00> : vector<128x384xf32>
    %10 = tpu.matmul %1, %9, %cst_10 {dimension_numbers = #tpu.dot_dimension_numbers<[1], [0], [0], [1], [0, 0, 1, 1], [], []>} : vector<128x32xbf16>, vector<32x384xbf16>, vector<128x384xf32> -> vector<128x384xf32>
    %c0_11 = arith.constant 0 : index
    %c0_12 = arith.constant 0 : index
    %11 = vector.load %arg7[%c0_11, %c0_12] : memref<1x384xf32, #tpu.memory_space<vmem>>, vector<1x384xf32>
    %12 = vector.broadcast %11 : vector<1x384xf32> to vector<128x384xf32>
    %13 = arith.addf %10, %12 : vector<128x384xf32>
    %14 = arith.truncf %13 : vector<128x384xf32> to vector<128x384xbf16>
    %c0_13 = arith.constant 0 : index
    %c0_14 = arith.constant 0 : index
    %15 = vector.load %arg30[%c0_13, %c0_14] : memref<128x384xbf16, #tpu.memory_space<vmem>>, vector<128x384xbf16>
    tpu.vector_store %arg30[%c0_13, %c0_14], %14 {strides = array<i32>} : memref<128x384xbf16, #tpu.memory_space<vmem>>, vector<128x384xbf16>,
    %c0_15 = arith.constant 0 : index
    %c0_16 = arith.constant 0 : index
    %16 = vector.load %arg10[%c0_15, %c0_16] : memref<32x512xbf16, #tpu.memory_space<vmem>>, vector<32x512xbf16>
    %cst_17 = arith.constant dense<0.000000e+00> : vector<128x512xf32>
    %17 = tpu.matmul %1, %16, %cst_17 {dimension_numbers = #tpu.dot_dimension_numbers<[1], [0], [0], [1], [0, 0, 1, 1], [], []>} : vector<128x32xbf16>, vector<32x512xbf16>, vector<128x512xf32> -> vector<128x512xf32>
    %c0_18 = arith.constant 0 : index
    %c0_19 = arith.constant 0 : index
    %18 = vector.load %arg11[%c0_18, %c0_19] : memref<1x512xf32, #tpu.memory_space<vmem>>, vector<1x512xf32>
    %19 = vector.broadcast %18 : vector<1x512xf32> to vector<128x512xf32>
    %20 = arith.addf %17, %19 : vector<128x512xf32>
    %21 = arith.truncf %20 : vector<128x512xf32> to vector<128x512xbf16>
    %c0_20 = arith.constant 0 : index
    %c0_21 = arith.constant 0 : index
    %22 = vector.load %arg31[%c0_20, %c0_21] : memref<128x512xbf16, #tpu.memory_space<vmem>>, vector<128x512xbf16>
    tpu.vector_store %arg31[%c0_20, %c0_21], %21 {strides = array<i32>} : memref<128x512xbf16, #tpu.memory_space<vmem>>, vector<128x512xbf16>,
    %c0_22 = arith.constant 0 : index
    %c0_23 = arith.constant 0 : index
    %23 = vector.load %arg13[%c0_22, %c0_23] : memref<32x512xbf16, #tpu.memory_space<vmem>>, vector<32x512xbf16>
    %cst_24 = arith.constant dense<0.000000e+00> : vector<128x512xf32>
    %24 = tpu.matmul %1, %23, %cst_24 {dimension_numbers = #tpu.dot_dimension_numbers<[1], [0], [0], [1], [0, 0, 1, 1], [], []>} : vector<128x32xbf16>, vector<32x512xbf16>, vector<128x512xf32> -> vector<128x512xf32>
    %c0_25 = arith.constant 0 : index
    %c0_26 = arith.constant 0 : index
    %25 = vector.load %arg14[%c0_25, %c0_26] : memref<1x512xf32, #tpu.memory_space<vmem>>, vector<1x512xf32>
    %26 = vector.broadcast %25 : vector<1x512xf32> to vector<128x512xf32>
    %27 = arith.addf %24, %26 : vector<128x512xf32>
    %28 = arith.truncf %27 : vector<128x512xf32> to vector<128x512xbf16>
    %c0_27 = arith.constant 0 : index
    %c0_28 = arith.constant 0 : index
    %29 = vector.load %arg32[%c0_27, %c0_28] : memref<128x512xbf16, #tpu.memory_space<vmem>>, vector<128x512xbf16>
    tpu.vector_store %arg32[%c0_27, %c0_28], %28 {strides = array<i32>} : memref<128x512xbf16, #tpu.memory_space<vmem>>, vector<128x512xbf16>,
    %c0_29 = arith.constant 0 : index
    %c0_30 = arith.constant 0 : index
    %30 = vector.load %arg4[%c0_29, %c0_30] : memref<128x384xbf16, #tpu.memory_space<vmem>>, vector<128x384xbf16>
    %c0_31 = arith.constant 0 : index
    %c0_32 = arith.constant 0 : index
    %31 = vector.load %arg8[%c0_31, %c0_32] : memref<128x384xbf16, #tpu.memory_space<vmem>>, vector<128x384xbf16>
    %c0_33 = arith.constant 0 : index
    %c0_34 = arith.constant 0 : index
    %32 = vector.load %arg12[%c0_33, %c0_34] : memref<128x512xbf16, #tpu.memory_space<vmem>>, vector<128x512xbf16>
    %c0_35 = arith.constant 0 : index
    %c0_36 = arith.constant 0 : index
    %33 = vector.load %arg15[%c0_35, %c0_36] : memref<128x512xbf16, #tpu.memory_space<vmem>>, vector<128x512xbf16>
    %c0_37 = arith.constant 0 : index
    %c0_38 = arith.constant 0 : index
    %34 = vector.load %arg5[%c0_37, %c0_38] : memref<1x128xf32, #tpu.memory_space<vmem>>, vector<1x128xf32>
    %35 = vector.shape_cast %34 : vector<1x128xf32> to vector<1x128xf32>
    %36 = vector.broadcast %35 : vector<1x128xf32> to vector<16x128xf32>
    %c0_39 = arith.constant 0 : index
    %c0_40 = arith.constant 0 : index
    %37 = vector.load %arg9[%c0_39, %c0_40] : memref<1x128xf32, #tpu.memory_space<vmem>>, vector<1x128xf32>
    %38 = vector.shape_cast %37 : vector<1x128xf32> to vector<1x128xf32>
    %39 = vector.broadcast %38 : vector<1x128xf32> to vector<16x128xf32>
    %cst_41 = arith.constant 0.000000e+00 : f32
    %40 = vector.broadcast %cst_41 : f32 to vector<16x128xf32>
    %c0_i32 = arith.constant 0 : i32
    %c8_i32 = arith.constant 8 : i32
    %41 = arith.addi %c0_i32, %c8_i32 : i32
    %c1_i32 = arith.constant 1 : i32
    %42:6 = scf.for %arg37 = %c0_i32 to %41 step %c1_i32 iter_args(%arg38 = %40, %arg39 = %40, %arg40 = %40, %arg41 = %40, %arg42 = %40, %arg43 = %40) -> (vector<16x128xf32>, vector<16x128xf32>, vector<16x128xf32>, vector<16x128xf32>, vector<16x128xf32>, vector<16x128xf32>)  : i32 {
      %c16_i32 = arith.constant 16 : i32
      %128 = arith.muli %arg37, %c16_i32 : i32
      %129 = tpu.assume_multiple %128, 16 : i32
      %c7_i32 = arith.constant 7 : i32
      %130 = arith.subi %c7_i32, %arg37 : i32
      %c16_i32_117 = arith.constant 16 : i32
      %131 = arith.muli %130, %c16_i32_117 : i32
      %132 = tpu.assume_multiple %131, 16 : i32
      %133 = arith.truncf %arg38 : vector<16x128xf32> to vector<16x128xbf16>
      %cst_118 = arith.constant dense<0.000000e+00> : vector<16x384xf32>
      %134 = tpu.matmul %133, %30, %cst_118 {dimension_numbers = #tpu.dot_dimension_numbers<[1], [0], [0], [1], [0, 0, 1, 1], [], []>} : vector<16x128xbf16>, vector<128x384xbf16>, vector<16x384xf32> -> vector<16x384xf32>
      %135 = arith.truncf %arg39 : vector<16x128xf32> to vector<16x128xbf16>
      %cst_119 = arith.constant dense<0.000000e+00> : vector<16x384xf32>
      %136 = tpu.matmul %135, %31, %cst_119 {dimension_numbers = #tpu.dot_dimension_numbers<[1], [0], [0], [1], [0, 0, 1, 1], [], []>} : vector<16x128xbf16>, vector<128x384xbf16>, vector<16x384xf32> -> vector<16x384xf32>
      %137 = arith.truncf %arg40 : vector<16x128xf32> to vector<16x128xbf16>
      %cst_120 = arith.constant dense<0.000000e+00> : vector<16x512xf32>
      %138 = tpu.matmul %137, %32, %cst_120 {dimension_numbers = #tpu.dot_dimension_numbers<[1], [0], [0], [1], [0, 0, 1, 1], [], []>} : vector<16x128xbf16>, vector<128x512xbf16>, vector<16x512xf32> -> vector<16x512xf32>
      %139 = arith.truncf %arg42 : vector<16x128xf32> to vector<16x128xbf16>
      %cst_121 = arith.constant dense<0.000000e+00> : vector<16x512xf32>
      %140 = tpu.matmul %139, %33, %cst_121 {dimension_numbers = #tpu.dot_dimension_numbers<[1], [0], [0], [1], [0, 0, 1, 1], [], []>} : vector<16x128xbf16>, vector<128x512xbf16>, vector<16x512xf32> -> vector<16x512xf32>
      %141 = arith.index_cast %129 : i32 to index
      %c0_122 = arith.constant 0 : index
      %142 = vector.load %arg29[%141, %c0_122] : memref<128x384xbf16, #tpu.memory_space<vmem>>, vector<16x384xbf16>
      %143 = vector.extract_strided_slice %142 {offsets = [0, 0], sizes = [16, 128], strides = [1, 1]} : vector<16x384xbf16> to vector<16x128xbf16>
      %144 = vector.extract_strided_slice %134 {offsets = [0, 0], sizes = [16, 128], strides = [1, 1]} : vector<16x384xf32> to vector<16x128xf32>
      %145 = arith.extf %143 : vector<16x128xbf16> to vector<16x128xf32>
      %146 = arith.addf %145, %144 : vector<16x128xf32>
      %147 = arith.negf %146 : vector<16x128xf32>
      %148 = math.exp %147 : vector<16x128xf32>
      %cst_123 = arith.constant 1.000000e+00 : f32
      %149 = vector.broadcast %cst_123 : f32 to vector<16x128xf32>
      %150 = arith.addf %149, %148 : vector<16x128xf32>
      %151 = arith.divf %149, %150 : vector<16x128xf32>
      %152 = vector.extract_strided_slice %142 {offsets = [0, 128], sizes = [16, 128], strides = [1, 1]} : vector<16x384xbf16> to vector<16x128xbf16>
      %153 = vector.extract_strided_slice %134 {offsets = [0, 128], sizes = [16, 128], strides = [1, 1]} : vector<16x384xf32> to vector<16x128xf32>
      %154 = arith.extf %152 : vector<16x128xbf16> to vector<16x128xf32>
      %155 = arith.addf %154, %153 : vector<16x128xf32>
      %156 = arith.negf %155 : vector<16x128xf32>
      %157 = math.exp %156 : vector<16x128xf32>
      %cst_124 = arith.constant 1.000000e+00 : f32
      %158 = vector.broadcast %cst_124 : f32 to vector<16x128xf32>
      %159 = arith.addf %158, %157 : vector<16x128xf32>
      %160 = arith.divf %158, %159 : vector<16x128xf32>
      %161 = vector.extract_strided_slice %142 {offsets = [0, 256], sizes = [16, 128], strides = [1, 1]} : vector<16x384xbf16> to vector<16x128xbf16>
      %162 = vector.extract_strided_slice %134 {offsets = [0, 256], sizes = [16, 128], strides = [1, 1]} : vector<16x384xf32> to vector<16x128xf32>
      %163 = arith.addf %162, %36 : vector<16x128xf32>
      %164 = arith.mulf %151, %163 : vector<16x128xf32>
      %165 = arith.extf %161 : vector<16x128xbf16> to vector<16x128xf32>
      %166 = arith.addf %165, %164 : vector<16x128xf32>
      %167 = math.tanh %166 : vector<16x128xf32>
      %cst_125 = arith.constant 1.000000e+00 : f32
      %168 = vector.broadcast %cst_125 : f32 to vector<16x128xf32>
      %169 = arith.subf %168, %160 : vector<16x128xf32>
      %170 = arith.mulf %169, %167 : vector<16x128xf32>
      %171 = arith.mulf %160, %arg38 : vector<16x128xf32>
      %172 = arith.addf %170, %171 : vector<16x128xf32>
      %173 = arith.index_cast %132 : i32 to index
      %c0_126 = arith.constant 0 : index
      %174 = vector.load %arg30[%173, %c0_126] : memref<128x384xbf16, #tpu.memory_space<vmem>>, vector<16x384xbf16>
      %175 = vector.extract_strided_slice %174 {offsets = [0, 0], sizes = [16, 128], strides = [1, 1]} : vector<16x384xbf16> to vector<16x128xbf16>
      %176 = vector.extract_strided_slice %136 {offsets = [0, 0], sizes = [16, 128], strides = [1, 1]} : vector<16x384xf32> to vector<16x128xf32>
      %177 = arith.extf %175 : vector<16x128xbf16> to vector<16x128xf32>
      %178 = arith.addf %177, %176 : vector<16x128xf32>
      %179 = arith.negf %178 : vector<16x128xf32>
      %180 = math.exp %179 : vector<16x128xf32>
      %cst_127 = arith.constant 1.000000e+00 : f32
      %181 = vector.broadcast %cst_127 : f32 to vector<16x128xf32>
      %182 = arith.addf %181, %180 : vector<16x128xf32>
      %183 = arith.divf %181, %182 : vector<16x128xf32>
      %184 = vector.extract_strided_slice %174 {offsets = [0, 128], sizes = [16, 128], strides = [1, 1]} : vector<16x384xbf16> to vector<16x128xbf16>
      %185 = vector.extract_strided_slice %136 {offsets = [0, 128], sizes = [16, 128], strides = [1, 1]} : vector<16x384xf32> to vector<16x128xf32>
      %186 = arith.extf %184 : vector<16x128xbf16> to vector<16x128xf32>
      %187 = arith.addf %186, %185 : vector<16x128xf32>
      %188 = arith.negf %187 : vector<16x128xf32>
      %189 = math.exp %188 : vector<16x128xf32>
      %cst_128 = arith.constant 1.000000e+00 : f32
      %190 = vector.broadcast %cst_128 : f32 to vector<16x128xf32>
      %191 = arith.addf %190, %189 : vector<16x128xf32>
      %192 = arith.divf %190, %191 : vector<16x128xf32>
      %193 = vector.extract_strided_slice %174 {offsets = [0, 256], sizes = [16, 128], strides = [1, 1]} : vector<16x384xbf16> to vector<16x128xbf16>
      %194 = vector.extract_strided_slice %136 {offsets = [0, 256], sizes = [16, 128], strides = [1, 1]} : vector<16x384xf32> to vector<16x128xf32>
      %195 = arith.addf %194, %39 : vector<16x128xf32>
      %196 = arith.mulf %183, %195 : vector<16x128xf32>
      %197 = arith.extf %193 : vector<16x128xbf16> to vector<16x128xf32>
      %198 = arith.addf %197, %196 : vector<16x128xf32>
      %199 = math.tanh %198 : vector<16x128xf32>
      %cst_129 = arith.constant 1.000000e+00 : f32
      %200 = vector.broadcast %cst_129 : f32 to vector<16x128xf32>
      %201 = arith.subf %200, %192 : vector<16x128xf32>
      %202 = arith.mulf %201, %199 : vector<16x128xf32>
      %203 = arith.mulf %192, %arg39 : vector<16x128xf32>
      %204 = arith.addf %202, %203 : vector<16x128xf32>
      %205 = arith.index_cast %129 : i32 to index
      %c0_130 = arith.constant 0 : index
      %206 = vector.load %arg31[%205, %c0_130] : memref<128x512xbf16, #tpu.memory_space<vmem>>, vector<16x512xbf16>
      %207 = arith.extf %206 : vector<16x512xbf16> to vector<16x512xf32>
      %208 = arith.addf %207, %138 : vector<16x512xf32>
      %209 = vector.extract_strided_slice %208 {offsets = [0, 0], sizes = [16, 128], strides = [1, 1]} : vector<16x512xf32> to vector<16x128xf32>
      %210 = arith.negf %209 : vector<16x128xf32>
      %211 = math.exp %210 : vector<16x128xf32>
      %cst_131 = arith.constant 1.000000e+00 : f32
      %212 = vector.broadcast %cst_131 : f32 to vector<16x128xf32>
      %213 = arith.addf %212, %211 : vector<16x128xf32>
      %214 = arith.divf %212, %213 : vector<16x128xf32>
      %215 = vector.extract_strided_slice %208 {offsets = [0, 128], sizes = [16, 128], strides = [1, 1]} : vector<16x512xf32> to vector<16x128xf32>
      %216 = arith.negf %215 : vector<16x128xf32>
      %217 = math.exp %216 : vector<16x128xf32>
      %cst_132 = arith.constant 1.000000e+00 : f32
      %218 = vector.broadcast %cst_132 : f32 to vector<16x128xf32>
      %219 = arith.addf %218, %217 : vector<16x128xf32>
      %220 = arith.divf %218, %219 : vector<16x128xf32>
      %221 = vector.extract_strided_slice %208 {offsets = [0, 256], sizes = [16, 128], strides = [1, 1]} : vector<16x512xf32> to vector<16x128xf32>
      %222 = math.tanh %221 : vector<16x128xf32>
      %223 = vector.extract_strided_slice %208 {offsets = [0, 384], sizes = [16, 128], strides = [1, 1]} : vector<16x512xf32> to vector<16x128xf32>
      %224 = arith.negf %223 : vector<16x128xf32>
      %225 = math.exp %224 : vector<16x128xf32>
      %cst_133 = arith.constant 1.000000e+00 : f32
      %226 = vector.broadcast %cst_133 : f32 to vector<16x128xf32>
      %227 = arith.addf %226, %225 : vector<16x128xf32>
      %228 = arith.divf %226, %227 : vector<16x128xf32>
      %229 = arith.mulf %220, %arg41 : vector<16x128xf32>
      %230 = arith.mulf %214, %222 : vector<16x128xf32>
      %231 = arith.addf %229, %230 : vector<16x128xf32>
      %232 = math.tanh %231 : vector<16x128xf32>
      %233 = arith.mulf %228, %232 : vector<16x128xf32>
      %234 = arith.index_cast %132 : i32 to index
      %c0_134 = arith.constant 0 : index
      %235 = vector.load %arg32[%234, %c0_134] : memref<128x512xbf16, #tpu.memory_space<vmem>>, vector<16x512xbf16>
      %236 = arith.extf %235 : vector<16x512xbf16> to vector<16x512xf32>
      %237 = arith.addf %236, %140 : vector<16x512xf32>
      %238 = vector.extract_strided_slice %237 {offsets = [0, 0], sizes = [16, 128], strides = [1, 1]} : vector<16x512xf32> to vector<16x128xf32>
      %239 = arith.negf %238 : vector<16x128xf32>
      %240 = math.exp %239 : vector<16x128xf32>
      %cst_135 = arith.constant 1.000000e+00 : f32
      %241 = vector.broadcast %cst_135 : f32 to vector<16x128xf32>
      %242 = arith.addf %241, %240 : vector<16x128xf32>
      %243 = arith.divf %241, %242 : vector<16x128xf32>
      %244 = vector.extract_strided_slice %237 {offsets = [0, 128], sizes = [16, 128], strides = [1, 1]} : vector<16x512xf32> to vector<16x128xf32>
      %245 = arith.negf %244 : vector<16x128xf32>
      %246 = math.exp %245 : vector<16x128xf32>
      %cst_136 = arith.constant 1.000000e+00 : f32
      %247 = vector.broadcast %cst_136 : f32 to vector<16x128xf32>
      %248 = arith.addf %247, %246 : vector<16x128xf32>
      %249 = arith.divf %247, %248 : vector<16x128xf32>
      %250 = vector.extract_strided_slice %237 {offsets = [0, 256], sizes = [16, 128], strides = [1, 1]} : vector<16x512xf32> to vector<16x128xf32>
      %251 = math.tanh %250 : vector<16x128xf32>
      %252 = vector.extract_strided_slice %237 {offsets = [0, 384], sizes = [16, 128], strides = [1, 1]} : vector<16x512xf32> to vector<16x128xf32>
      %253 = arith.negf %252 : vector<16x128xf32>
      %254 = math.exp %253 : vector<16x128xf32>
      %cst_137 = arith.constant 1.000000e+00 : f32
      %255 = vector.broadcast %cst_137 : f32 to vector<16x128xf32>
      %256 = arith.addf %255, %254 : vector<16x128xf32>
      %257 = arith.divf %255, %256 : vector<16x128xf32>
      %258 = arith.mulf %249, %arg43 : vector<16x128xf32>
      %259 = arith.mulf %243, %251 : vector<16x128xf32>
      %260 = arith.addf %258, %259 : vector<16x128xf32>
      %261 = math.tanh %260 : vector<16x128xf32>
      %262 = arith.mulf %257, %261 : vector<16x128xf32>
      %263 = arith.truncf %172 : vector<16x128xf32> to vector<16x128xbf16>
      %264 = arith.index_cast %129 : i32 to index
      %c0_138 = arith.constant 0 : index
      %265 = vector.load %arg33[%264, %c0_138] : memref<128x128xbf16, #tpu.memory_space<vmem>>, vector<16x128xbf16>
      tpu.vector_store %arg33[%264, %c0_138], %263 {strides = array<i32>} : memref<128x128xbf16, #tpu.memory_space<vmem>>, vector<16x128xbf16>,
      %266 = arith.truncf %204 : vector<16x128xf32> to vector<16x128xbf16>
      %267 = arith.index_cast %132 : i32 to index
      %c0_139 = arith.constant 0 : index
      %268 = vector.load %arg34[%267, %c0_139] : memref<128x128xbf16, #tpu.memory_space<vmem>>, vector<16x128xbf16>
      tpu.vector_store %arg34[%267, %c0_139], %266 {strides = array<i32>} : memref<128x128xbf16, #tpu.memory_space<vmem>>, vector<16x128xbf16>,
      %269 = arith.truncf %233 : vector<16x128xf32> to vector<16x128xbf16>
      %270 = arith.index_cast %129 : i32 to index
      %c0_140 = arith.constant 0 : index
      %271 = vector.load %arg35[%270, %c0_140] : memref<128x128xbf16, #tpu.memory_space<vmem>>, vector<16x128xbf16>
      tpu.vector_store %arg35[%270, %c0_140], %269 {strides = array<i32>} : memref<128x128xbf16, #tpu.memory_space<vmem>>, vector<16x128xbf16>,
      %272 = arith.truncf %262 : vector<16x128xf32> to vector<16x128xbf16>
      %273 = arith.index_cast %132 : i32 to index
      %c0_141 = arith.constant 0 : index
      %274 = vector.load %arg36[%273, %c0_141] : memref<128x128xbf16, #tpu.memory_space<vmem>>, vector<16x128xbf16>
      tpu.vector_store %arg36[%273, %c0_141], %272 {strides = array<i32>} : memref<128x128xbf16, #tpu.memory_space<vmem>>, vector<16x128xbf16>,
      scf.yield %172, %204, %233, %231, %262, %260 : vector<16x128xf32>, vector<16x128xf32>, vector<16x128xf32>, vector<16x128xf32>, vector<16x128xf32>, vector<16x128xf32>
    }
    %c8_i32_42 = arith.constant 8 : i32
    %c0_43 = arith.constant 0 : index
    %c0_44 = arith.constant 0 : index
    %43 = vector.load %arg16[%c0_43, %c0_44] : memref<256x128xbf16, #tpu.memory_space<vmem>>, vector<128x128xbf16>
    %c128 = arith.constant 128 : index
    %c0_45 = arith.constant 0 : index
    %44 = vector.load %arg16[%c128, %c0_45] : memref<256x128xbf16, #tpu.memory_space<vmem>>, vector<128x128xbf16>
    %c0_46 = arith.constant 0 : index
    %c0_47 = arith.constant 0 : index
    %45 = vector.load %arg17[%c0_46, %c0_47] : memref<256x128xbf16, #tpu.memory_space<vmem>>, vector<128x128xbf16>
    %c128_48 = arith.constant 128 : index
    %c0_49 = arith.constant 0 : index
    %46 = vector.load %arg17[%c128_48, %c0_49] : memref<256x128xbf16, #tpu.memory_space<vmem>>, vector<128x128xbf16>
    %c0_50 = arith.constant 0 : index
    %c0_51 = arith.constant 0 : index
    %47 = vector.load %arg33[%c0_50, %c0_51] : memref<128x128xbf16, #tpu.memory_space<vmem>>, vector<112x128xbf16>
    %cst_52 = arith.constant dense<0.000000e+00> : vector<112x128xf32>
    %48 = tpu.matmul %47, %43, %cst_52 {dimension_numbers = #tpu.dot_dimension_numbers<[1], [0], [0], [1], [0, 0, 1, 1], [], []>} : vector<112x128xbf16>, vector<128x128xbf16>, vector<112x128xf32> -> vector<112x128xf32>
    %c0_53 = arith.constant 0 : index
    %c0_54 = arith.constant 0 : index
    %49 = vector.load %arg34[%c0_53, %c0_54] : memref<128x128xbf16, #tpu.memory_space<vmem>>, vector<112x128xbf16>
    %cst_55 = arith.constant dense<0.000000e+00> : vector<112x128xf32>
    %50 = tpu.matmul %49, %44, %cst_55 {dimension_numbers = #tpu.dot_dimension_numbers<[1], [0], [0], [1], [0, 0, 1, 1], [], []>} : vector<112x128xbf16>, vector<128x128xbf16>, vector<112x128xf32> -> vector<112x128xf32>
    %51 = arith.addf %48, %50 : vector<112x128xf32>
    %c16 = arith.constant 16 : index
    %c0_56 = arith.constant 0 : index
    %52 = vector.load %arg33[%c16, %c0_56] : memref<128x128xbf16, #tpu.memory_space<vmem>>, vector<112x128xbf16>
    %cst_57 = arith.constant dense<0.000000e+00> : vector<112x128xf32>
    %53 = tpu.matmul %52, %45, %cst_57 {dimension_numbers = #tpu.dot_dimension_numbers<[1], [0], [0], [1], [0, 0, 1, 1], [], []>} : vector<112x128xbf16>, vector<128x128xbf16>, vector<112x128xf32> -> vector<112x128xf32>
    %54 = arith.addf %51, %53 : vector<112x128xf32>
    %c16_58 = arith.constant 16 : index
    %c0_59 = arith.constant 0 : index
    %55 = vector.load %arg34[%c16_58, %c0_59] : memref<128x128xbf16, #tpu.memory_space<vmem>>, vector<112x128xbf16>
    %cst_60 = arith.constant dense<0.000000e+00> : vector<112x128xf32>
    %56 = tpu.matmul %55, %46, %cst_60 {dimension_numbers = #tpu.dot_dimension_numbers<[1], [0], [0], [1], [0, 0, 1, 1], [], []>} : vector<112x128xbf16>, vector<128x128xbf16>, vector<112x128xf32> -> vector<112x128xf32>
    %57 = arith.addf %54, %56 : vector<112x128xf32>
    %58 = vector.shape_cast %57 : vector<112x128xf32> to vector<7x16x128xf32>
    %c0_61 = arith.constant 0 : index
    %c0_62 = arith.constant 0 : index
    %59 = vector.load %arg18[%c0_61, %c0_62] : memref<1x128xf32, #tpu.memory_space<vmem>>, vector<1x128xf32>
    %cst_63 = arith.constant dense<0xFF800000> : vector<16x128xf32>
    %60 = vector.multi_reduction <maximumf>, %58, %cst_63 [0] : vector<7x16x128xf32> to vector<16x128xf32>
    %61 = vector.broadcast %59 : vector<1x128xf32> to vector<16x128xf32>
    %62 = arith.addf %60, %61 : vector<16x128xf32>
    %cst_64 = arith.constant dense<0.000000e+00> : vector<16x128xf32>
    %63 = vector.multi_reduction <add>, %58, %cst_64 [0] : vector<7x16x128xf32> to vector<16x128xf32>
    %cst_65 = arith.constant 0.142857149 : f32
    %64 = vector.broadcast %cst_65 : f32 to vector<16x128xf32>
    %65 = arith.mulf %63, %64 : vector<16x128xf32>
    %66 = vector.broadcast %59 : vector<1x128xf32> to vector<16x128xf32>
    %67 = arith.addf %65, %66 : vector<16x128xf32>
    %c0_66 = arith.constant 0 : index
    %c0_67 = arith.constant 0 : index
    %68 = vector.load %arg19[%c0_66, %c0_67] : memref<256x128xbf16, #tpu.memory_space<vmem>>, vector<128x128xbf16>
    %c128_68 = arith.constant 128 : index
    %c0_69 = arith.constant 0 : index
    %69 = vector.load %arg19[%c128_68, %c0_69] : memref<256x128xbf16, #tpu.memory_space<vmem>>, vector<128x128xbf16>
    %c0_70 = arith.constant 0 : index
    %c0_71 = arith.constant 0 : index
    %70 = vector.load %arg20[%c0_70, %c0_71] : memref<256x128xbf16, #tpu.memory_space<vmem>>, vector<128x128xbf16>
    %c128_72 = arith.constant 128 : index
    %c0_73 = arith.constant 0 : index
    %71 = vector.load %arg20[%c128_72, %c0_73] : memref<256x128xbf16, #tpu.memory_space<vmem>>, vector<128x128xbf16>
    %c0_74 = arith.constant 0 : index
    %c0_75 = arith.constant 0 : index
    %72 = vector.load %arg35[%c0_74, %c0_75] : memref<128x128xbf16, #tpu.memory_space<vmem>>, vector<112x128xbf16>
    %cst_76 = arith.constant dense<0.000000e+00> : vector<112x128xf32>
    %73 = tpu.matmul %72, %68, %cst_76 {dimension_numbers = #tpu.dot_dimension_numbers<[1], [0], [0], [1], [0, 0, 1, 1], [], []>} : vector<112x128xbf16>, vector<128x128xbf16>, vector<112x128xf32> -> vector<112x128xf32>
    %c0_77 = arith.constant 0 : index
    %c0_78 = arith.constant 0 : index
    %74 = vector.load %arg36[%c0_77, %c0_78] : memref<128x128xbf16, #tpu.memory_space<vmem>>, vector<112x128xbf16>
    %cst_79 = arith.constant dense<0.000000e+00> : vector<112x128xf32>
    %75 = tpu.matmul %74, %69, %cst_79 {dimension_numbers = #tpu.dot_dimension_numbers<[1], [0], [0], [1], [0, 0, 1, 1], [], []>} : vector<112x128xbf16>, vector<128x128xbf16>, vector<112x128xf32> -> vector<112x128xf32>
    %76 = arith.addf %73, %75 : vector<112x128xf32>
    %c16_80 = arith.constant 16 : index
    %c0_81 = arith.constant 0 : index
    %77 = vector.load %arg35[%c16_80, %c0_81] : memref<128x128xbf16, #tpu.memory_space<vmem>>, vector<112x128xbf16>
    %cst_82 = arith.constant dense<0.000000e+00> : vector<112x128xf32>
    %78 = tpu.matmul %77, %70, %cst_82 {dimension_numbers = #tpu.dot_dimension_numbers<[1], [0], [0], [1], [0, 0, 1, 1], [], []>} : vector<112x128xbf16>, vector<128x128xbf16>, vector<112x128xf32> -> vector<112x128xf32>
    %79 = arith.addf %76, %78 : vector<112x128xf32>
    %c16_83 = arith.constant 16 : index
    %c0_84 = arith.constant 0 : index
    %80 = vector.load %arg36[%c16_83, %c0_84] : memref<128x128xbf16, #tpu.memory_space<vmem>>, vector<112x128xbf16>
    %cst_85 = arith.constant dense<0.000000e+00> : vector<112x128xf32>
    %81 = tpu.matmul %80, %71, %cst_85 {dimension_numbers = #tpu.dot_dimension_numbers<[1], [0], [0], [1], [0, 0, 1, 1], [], []>} : vector<112x128xbf16>, vector<128x128xbf16>, vector<112x128xf32> -> vector<112x128xf32>
    %82 = arith.addf %79, %81 : vector<112x128xf32>
    %83 = vector.shape_cast %82 : vector<112x128xf32> to vector<7x16x128xf32>
    %c0_86 = arith.constant 0 : index
    %c0_87 = arith.constant 0 : index
    %84 = vector.load %arg21[%c0_86, %c0_87] : memref<1x128xf32, #tpu.memory_space<vmem>>, vector<1x128xf32>
    %cst_88 = arith.constant dense<0xFF800000> : vector<16x128xf32>
    %85 = vector.multi_reduction <maximumf>, %83, %cst_88 [0] : vector<7x16x128xf32> to vector<16x128xf32>
    %86 = vector.broadcast %84 : vector<1x128xf32> to vector<16x128xf32>
    %87 = arith.addf %85, %86 : vector<16x128xf32>
    %cst_89 = arith.constant dense<0.000000e+00> : vector<16x128xf32>
    %88 = vector.multi_reduction <add>, %83, %cst_89 [0] : vector<7x16x128xf32> to vector<16x128xf32>
    %cst_90 = arith.constant 0.142857149 : f32
    %89 = vector.broadcast %cst_90 : f32 to vector<16x128xf32>
    %90 = arith.mulf %88, %89 : vector<16x128xf32>
    %91 = vector.broadcast %84 : vector<1x128xf32> to vector<16x128xf32>
    %92 = arith.addf %90, %91 : vector<16x128xf32>
    %93 = arith.truncf %62 : vector<16x128xf32> to vector<16x128xbf16>
    %c0_91 = arith.constant 0 : index
    %c0_92 = arith.constant 0 : index
    %94 = vector.load %arg22[%c0_91, %c0_92] : memref<512x64xbf16, #tpu.memory_space<vmem>>, vector<128x64xbf16>
    %cst_93 = arith.constant dense<0.000000e+00> : vector<16x64xf32>
    %95 = tpu.matmul %93, %94, %cst_93 {dimension_numbers = #tpu.dot_dimension_numbers<[1], [0], [0], [1], [0, 0, 1, 1], [], []>} : vector<16x128xbf16>, vector<128x64xbf16>, vector<16x64xf32> -> vector<16x64xf32>
    %96 = arith.truncf %67 : vector<16x128xf32> to vector<16x128xbf16>
    %c128_94 = arith.constant 128 : index
    %c0_95 = arith.constant 0 : index
    %97 = vector.load %arg22[%c128_94, %c0_95] : memref<512x64xbf16, #tpu.memory_space<vmem>>, vector<128x64xbf16>
    %cst_96 = arith.constant dense<0.000000e+00> : vector<16x64xf32>
    %98 = tpu.matmul %96, %97, %cst_96 {dimension_numbers = #tpu.dot_dimension_numbers<[1], [0], [0], [1], [0, 0, 1, 1], [], []>} : vector<16x128xbf16>, vector<128x64xbf16>, vector<16x64xf32> -> vector<16x64xf32>
    %99 = arith.addf %95, %98 : vector<16x64xf32>
    %100 = arith.truncf %87 : vector<16x128xf32> to vector<16x128xbf16>
    %c256 = arith.constant 256 : index
    %c0_97 = arith.constant 0 : index
    %101 = vector.load %arg22[%c256, %c0_97] : memref<512x64xbf16, #tpu.memory_space<vmem>>, vector<128x64xbf16>
    %cst_98 = arith.constant dense<0.000000e+00> : vector<16x64xf32>
    %102 = tpu.matmul %100, %101, %cst_98 {dimension_numbers = #tpu.dot_dimension_numbers<[1], [0], [0], [1], [0, 0, 1, 1], [], []>} : vector<16x128xbf16>, vector<128x64xbf16>, vector<16x64xf32> -> vector<16x64xf32>
    %103 = arith.addf %99, %102 : vector<16x64xf32>
    %104 = arith.truncf %92 : vector<16x128xf32> to vector<16x128xbf16>
    %c384 = arith.constant 384 : index
    %c0_99 = arith.constant 0 : index
    %105 = vector.load %arg22[%c384, %c0_99] : memref<512x64xbf16, #tpu.memory_space<vmem>>, vector<128x64xbf16>
    %cst_100 = arith.constant dense<0.000000e+00> : vector<16x64xf32>
    %106 = tpu.matmul %104, %105, %cst_100 {dimension_numbers = #tpu.dot_dimension_numbers<[1], [0], [0], [1], [0, 0, 1, 1], [], []>} : vector<16x128xbf16>, vector<128x64xbf16>, vector<16x64xf32> -> vector<16x64xf32>
    %107 = arith.addf %103, %106 : vector<16x64xf32>
    %c0_101 = arith.constant 0 : index
    %c0_102 = arith.constant 0 : index
    %108 = vector.load %arg23[%c0_101, %c0_102] : memref<1x64xf32, #tpu.memory_space<vmem>>, vector<1x64xf32>
    %109 = vector.broadcast %108 : vector<1x64xf32> to vector<16x64xf32>
    %110 = arith.addf %107, %109 : vector<16x64xf32>
    %cst_103 = arith.constant 0.000000e+00 : f32
    %111 = vector.broadcast %cst_103 : f32 to vector<16x64xf32>
    %112 = arith.maximumf %110, %111 : vector<16x64xf32>
    %113 = arith.truncf %112 : vector<16x64xf32> to vector<16x64xbf16>
    %c0_104 = arith.constant 0 : index
    %c0_105 = arith.constant 0 : index
    %114 = vector.load %arg24[%c0_104, %c0_105] : memref<64x64xbf16, #tpu.memory_space<vmem>>, vector<64x64xbf16>
    %cst_106 = arith.constant dense<0.000000e+00> : vector<16x64xf32>
    %115 = tpu.matmul %113, %114, %cst_106 {dimension_numbers = #tpu.dot_dimension_numbers<[1], [0], [0], [1], [0, 0, 1, 1], [], []>} : vector<16x64xbf16>, vector<64x64xbf16>, vector<16x64xf32> -> vector<16x64xf32>
    %c0_107 = arith.constant 0 : index
    %c0_108 = arith.constant 0 : index
    %116 = vector.load %arg25[%c0_107, %c0_108] : memref<1x64xf32, #tpu.memory_space<vmem>>, vector<1x64xf32>
    %117 = vector.broadcast %116 : vector<1x64xf32> to vector<16x64xf32>
    %118 = arith.addf %115, %117 : vector<16x64xf32>
    %cst_109 = arith.constant 0.000000e+00 : f32
    %119 = vector.broadcast %cst_109 : f32 to vector<16x64xf32>
    %120 = arith.maximumf %118, %119 : vector<16x64xf32>
    %121 = arith.truncf %120 : vector<16x64xf32> to vector<16x64xbf16>
    %c0_110 = arith.constant 0 : index
    %c0_111 = arith.constant 0 : index
    %122 = vector.load %arg26[%c0_110, %c0_111] : memref<64x7xbf16, #tpu.memory_space<vmem>>, vector<64x7xbf16>
    %cst_112 = arith.constant dense<0.000000e+00> : vector<16x7xf32>
    %123 = tpu.matmul %121, %122, %cst_112 {dimension_numbers = #tpu.dot_dimension_numbers<[1], [0], [0], [1], [0, 0, 1, 1], [], []>} : vector<16x64xbf16>, vector<64x7xbf16>, vector<16x7xf32> -> vector<16x7xf32>
    %c0_113 = arith.constant 0 : index
    %c0_114 = arith.constant 0 : index
    %124 = vector.load %arg27[%c0_113, %c0_114] : memref<1x7xf32, #tpu.memory_space<vmem>>, vector<1x7xf32>
    %125 = vector.broadcast %124 : vector<1x7xf32> to vector<16x7xf32>
    %126 = arith.addf %123, %125 : vector<16x7xf32>
    %c0_115 = arith.constant 0 : index
    %c0_116 = arith.constant 0 : index
    %127 = vector.load %arg28[%c0_115, %c0_116] : memref<16x7xf32, #tpu.memory_space<vmem>>, vector<16x7xf32>
    tpu.vector_store %arg28[%c0_115, %c0_116], %126 {strides = array<i32>} : memref<16x7xf32, #tpu.memory_space<vmem>>, vector<16x7xf32>,
    return
  }
  func.func @transform_0(%arg0: i32) -> (i32, i32, i32) {
    %c0_i32 = arith.constant 0 : i32
    %c0_i32_0 = arith.constant 0 : i32
    %c0_i32_1 = arith.constant 0 : i32
    return %arg0, %c0_i32, %c0_i32_0 : i32, i32, i32
  }
  func.func @transform_1(%arg0: i32) -> (i32, i32) {
    %c0_i32 = arith.constant 0 : i32
    %c0_i32_0 = arith.constant 0 : i32
    %c0_i32_1 = arith.constant 0 : i32
    return %c0_i32, %c0_i32_0 : i32, i32
  }
  func.func @transform_2(%arg0: i32) -> (i32, i32) {
    %c0_i32 = arith.constant 0 : i32
    %c0_i32_0 = arith.constant 0 : i32
    %c0_i32_1 = arith.constant 0 : i32
    return %c0_i32, %c0_i32_0 : i32, i32
  }
  func.func @transform_3(%arg0: i32) -> (i32, i32) {
    %c0_i32 = arith.constant 0 : i32
    %c0_i32_0 = arith.constant 0 : i32
    %c0_i32_1 = arith.constant 0 : i32
    return %c0_i32, %c0_i32_0 : i32, i32
  }
  func.func @transform_4(%arg0: i32) -> (i32, i32) {
    %c0_i32 = arith.constant 0 : i32
    %c0_i32_0 = arith.constant 0 : i32
    %c0_i32_1 = arith.constant 0 : i32
    return %c0_i32, %c0_i32_0 : i32, i32
  }
  func.func @transform_5(%arg0: i32) -> (i32, i32) {
    %c0_i32 = arith.constant 0 : i32
    %c0_i32_0 = arith.constant 0 : i32
    %c0_i32_1 = arith.constant 0 : i32
    return %c0_i32, %c0_i32_0 : i32, i32
  }
  func.func @transform_6(%arg0: i32) -> (i32, i32) {
    %c0_i32 = arith.constant 0 : i32
    %c0_i32_0 = arith.constant 0 : i32
    %c0_i32_1 = arith.constant 0 : i32
    return %c0_i32, %c0_i32_0 : i32, i32
  }
  func.func @transform_7(%arg0: i32) -> (i32, i32) {
    %c0_i32 = arith.constant 0 : i32
    %c0_i32_0 = arith.constant 0 : i32
    %c0_i32_1 = arith.constant 0 : i32
    return %c0_i32, %c0_i32_0 : i32, i32
  }
  func.func @transform_8(%arg0: i32) -> (i32, i32) {
    %c0_i32 = arith.constant 0 : i32
    %c0_i32_0 = arith.constant 0 : i32
    %c0_i32_1 = arith.constant 0 : i32
    return %c0_i32, %c0_i32_0 : i32, i32
  }
  func.func @transform_9(%arg0: i32) -> (i32, i32) {
    %c0_i32 = arith.constant 0 : i32
    %c0_i32_0 = arith.constant 0 : i32
    %c0_i32_1 = arith.constant 0 : i32
    return %c0_i32, %c0_i32_0 : i32, i32
  }
  func.func @transform_10(%arg0: i32) -> (i32, i32) {
    %c0_i32 = arith.constant 0 : i32
    %c0_i32_0 = arith.constant 0 : i32
    %c0_i32_1 = arith.constant 0 : i32
    return %c0_i32, %c0_i32_0 : i32, i32
  }
  func.func @transform_11(%arg0: i32) -> (i32, i32) {
    %c0_i32 = arith.constant 0 : i32
    %c0_i32_0 = arith.constant 0 : i32
    %c0_i32_1 = arith.constant 0 : i32
    return %c0_i32, %c0_i32_0 : i32, i32
  }
  func.func @transform_12(%arg0: i32) -> (i32, i32) {
    %c0_i32 = arith.constant 0 : i32
    %c0_i32_0 = arith.constant 0 : i32
    %c0_i32_1 = arith.constant 0 : i32
    return %c0_i32, %c0_i32_0 : i32, i32
  }
  func.func @transform_13(%arg0: i32) -> (i32, i32) {
    %c0_i32 = arith.constant 0 : i32
    %c0_i32_0 = arith.constant 0 : i32
    %c0_i32_1 = arith.constant 0 : i32
    return %c0_i32, %c0_i32_0 : i32, i32
  }
  func.func @transform_14(%arg0: i32) -> (i32, i32) {
    %c0_i32 = arith.constant 0 : i32
    %c0_i32_0 = arith.constant 0 : i32
    %c0_i32_1 = arith.constant 0 : i32
    return %c0_i32, %c0_i32_0 : i32, i32
  }
  func.func @transform_15(%arg0: i32) -> (i32, i32) {
    %c0_i32 = arith.constant 0 : i32
    %c0_i32_0 = arith.constant 0 : i32
    %c0_i32_1 = arith.constant 0 : i32
    return %c0_i32, %c0_i32_0 : i32, i32
  }
  func.func @transform_16(%arg0: i32) -> (i32, i32) {
    %c0_i32 = arith.constant 0 : i32
    %c0_i32_0 = arith.constant 0 : i32
    %c0_i32_1 = arith.constant 0 : i32
    return %c0_i32, %c0_i32_0 : i32, i32
  }
  func.func @transform_17(%arg0: i32) -> (i32, i32) {
    %c0_i32 = arith.constant 0 : i32
    %c0_i32_0 = arith.constant 0 : i32
    %c0_i32_1 = arith.constant 0 : i32
    return %c0_i32, %c0_i32_0 : i32, i32
  }
  func.func @transform_18(%arg0: i32) -> (i32, i32) {
    %c0_i32 = arith.constant 0 : i32
    %c0_i32_0 = arith.constant 0 : i32
    %c0_i32_1 = arith.constant 0 : i32
    return %c0_i32, %c0_i32_0 : i32, i32
  }
  func.func @transform_19(%arg0: i32) -> (i32, i32) {
    %c0_i32 = arith.constant 0 : i32
    %c0_i32_0 = arith.constant 0 : i32
    %c0_i32_1 = arith.constant 0 : i32
    return %c0_i32, %c0_i32_0 : i32, i32
  }
  func.func @transform_20(%arg0: i32) -> (i32, i32) {
    %c0_i32 = arith.constant 0 : i32
    %c0_i32_0 = arith.constant 0 : i32
    %c0_i32_1 = arith.constant 0 : i32
    return %c0_i32, %c0_i32_0 : i32, i32
  }
  func.func @transform_21(%arg0: i32) -> (i32, i32) {
    %c0_i32 = arith.constant 0 : i32
    %c0_i32_0 = arith.constant 0 : i32
    %c0_i32_1 = arith.constant 0 : i32
    return %c0_i32, %c0_i32_0 : i32, i32
  }
  func.func @transform_22(%arg0: i32) -> (i32, i32) {
    %c0_i32 = arith.constant 0 : i32
    %c0_i32_0 = arith.constant 0 : i32
    %c0_i32_1 = arith.constant 0 : i32
    return %c0_i32, %c0_i32_0 : i32, i32
  }
  func.func @transform_23(%arg0: i32) -> (i32, i32) {
    %c0_i32 = arith.constant 0 : i32
    %c0_i32_0 = arith.constant 0 : i32
    %c0_i32_1 = arith.constant 0 : i32
    return %c0_i32, %c0_i32_0 : i32, i32
  }
  func.func @transform_24(%arg0: i32) -> (i32, i32) {
    %c0_i32 = arith.constant 0 : i32
    %c0_i32_0 = arith.constant 0 : i32
    %c0_i32_1 = arith.constant 0 : i32
    return %c0_i32, %c0_i32_0 : i32, i32
  }
  func.func @transform_25(%arg0: i32) -> (i32, i32) {
    %c0_i32 = arith.constant 0 : i32
    %c0_i32_0 = arith.constant 0 : i32
    %c0_i32_1 = arith.constant 0 : i32
    return %c0_i32, %c0_i32_0 : i32, i32
  }
  func.func @transform_26(%arg0: i32) -> (i32, i32) {
    %c0_i32 = arith.constant 0 : i32
    %c0_i32_0 = arith.constant 0 : i32
    %c0_i32_1 = arith.constant 0 : i32
    return %c0_i32, %c0_i32_0 : i32, i32
  }
  func.func @transform_27(%arg0: i32) -> (i32, i32) {
    %c0_i32 = arith.constant 0 : i32
    %c0_i32_0 = arith.constant 0 : i32
    return %arg0, %c0_i32 : i32, i32
  }
}

</mosaic_0001>

<llo_original>
// kernel: lstm_gru_cnn_forward.1
$region0: #{lstm_gru_cnn_forward.1}
  #allocation0 [shape = 'u32[]', space=smem, size = 0x4, offset = 0x4, fixed_abs, tag = 'smem constant byte address 0x4 - core index']
  #allocation1 [shape = 'u32[144,128]{1,0:T(1,128)}', space=vmem, size = 0x12000, scoped, tag = 'internal scratch']
  #allocation2 [shape = 'bf16[128,384]{1,0:T(8,128)(2,1)}', space=vmem, size = 0x18000, scoped, tag = 'scratch operand']
  #allocation3 [shape = 'bf16[128,384]{1,0:T(8,128)(2,1)}', space=vmem, size = 0x18000, scoped, tag = 'scratch operand']
  #allocation4 [shape = 'bf16[128,512]{1,0:T(8,128)(2,1)}', space=vmem, size = 0x20000, scoped, tag = 'scratch operand']
  #allocation5 [shape = 'bf16[128,512]{1,0:T(8,128)(2,1)}', space=vmem, size = 0x20000, scoped, tag = 'scratch operand']
  #allocation6 [shape = 'bf16[128,128]{1,0:T(8,128)(2,1)}', space=vmem, size = 0x8000, scoped, tag = 'scratch operand']
  #allocation7 [shape = 'bf16[128,128]{1,0:T(8,128)(2,1)}', space=vmem, size = 0x8000, scoped, tag = 'scratch operand']
  #allocation8 [shape = 'bf16[128,128]{1,0:T(8,128)(2,1)}', space=vmem, size = 0x8000, scoped, tag = 'scratch operand']
  #allocation9 [shape = 'bf16[128,128]{1,0:T(8,128)(2,1)}', space=vmem, size = 0x8000, scoped, tag = 'scratch operand']
  %s0 = inlined_call_operand.vmem [shape: bf16[1,128,32], index: 0, kind: input, shape index: {}]
  %s1 = inlined_call_operand.hbm [shape: bf16[32,384], index: 1, kind: input, shape index: {}]
  %s2 = inlined_call_operand.hbm [shape: f32[1,384], index: 2, kind: input, shape index: {}]
  %s3 = inlined_call_operand.vmem [shape: bf16[128,384], index: 3, kind: input, shape index: {}]
  %s4 = inlined_call_operand.vmem [shape: f32[1,128], index: 4, kind: input, shape index: {}]
  %s5 = inlined_call_operand.hbm [shape: bf16[32,384], index: 5, kind: input, shape index: {}]
  %s6 = inlined_call_operand.hbm [shape: f32[1,384], index: 6, kind: input, shape index: {}]
  %s7 = inlined_call_operand.vmem [shape: bf16[128,384], index: 7, kind: input, shape index: {}]
  %s8 = inlined_call_operand.hbm [shape: f32[1,128], index: 8, kind: input, shape index: {}]
  %s9 = inlined_call_operand.vmem [shape: bf16[32,512], index: 9, kind: input, shape index: {}]
  %s10 = inlined_call_operand.hbm [shape: f32[1,512], index: 10, kind: input, shape index: {}]
  %s11 = inlined_call_operand.vmem [shape: bf16[128,512], index: 11, kind: input, shape index: {}]
  %s12 = inlined_call_operand.vmem [shape: bf16[32,512], index: 12, kind: input, shape index: {}]
  %s13 = inlined_call_operand.hbm [shape: f32[1,512], index: 13, kind: input, shape index: {}]
  %s14 = inlined_call_operand.vmem [shape: bf16[128,512], index: 14, kind: input, shape index: {}]
  %s15 = inlined_call_operand.vmem [shape: bf16[256,128], index: 15, kind: input, shape index: {}]
  %s16 = inlined_call_operand.hbm [shape: bf16[256,128], index: 16, kind: input, shape index: {}]
  %s17 = inlined_call_operand.hbm [shape: f32[1,128], index: 17, kind: input, shape index: {}]
  %s18 = inlined_call_operand.hbm [shape: bf16[256,128], index: 18, kind: input, shape index: {}]
  %s19 = inlined_call_operand.hbm [shape: bf16[256,128], index: 19, kind: input, shape index: {}]
  %s20 = inlined_call_operand.hbm [shape: f32[1,128], index: 20, kind: input, shape index: {}]
  %s21 = inlined_call_operand.vmem [shape: bf16[512,64], index: 21, kind: input, shape index: {}]
  %s22 = inlined_call_operand.hbm [shape: f32[1,64], index: 22, kind: input, shape index: {}]
  %s23 = inlined_call_operand.hbm [shape: bf16[64,64], index: 23, kind: input, shape index: {}]
  %s24 = inlined_call_operand.hbm [shape: f32[1,64], index: 24, kind: input, shape index: {}]
  %s25 = inlined_call_operand.vmem [shape: bf16[64,7], index: 25, kind: input, shape index: {}]
  %s26 = inlined_call_operand.hbm [shape: f32[1,7], index: 26, kind: input, shape index: {}]
  %s27 = inlined_call_operand.vmem [shape: f32[16,7], index: 27, kind: output, shape index: {}]
  %s28 = sld [smem:[#allocation0]]
  $region189: #{lstm_gru_cnn_forward.1} parent=0
    _
  %s30 = ssub.s32 1, %s28
  %s31 = scalar_select 0, %s30, %s28
  $region1: #{lstm_gru_cnn_forward.1} parent=0
    #allocation10 [shape = 'u8[24576]{0}', space=vmem, size = 0x6000, scoped, tag = 'input window, operand 1, single buffered']
    #allocation11 [shape = 's32[1]{0}', space=sflag, size = 0x4, scoped, tag = 'scoped memory for lstm_gru_cnn_forward.1']
    #allocation12 [shape = 'u8[1536]{0}', space=vmem, size = 0x800, scoped, tag = 'input window, operand 2, single buffered']
    #allocation13 [shape = 's32[1]{0}', space=sflag, size = 0x4, scoped, tag = 'scoped memory for lstm_gru_cnn_forward.1']
    #allocation14 [shape = 'u8[24576]{0}', space=vmem, size = 0x6000, scoped, tag = 'input window, operand 5, single buffered']
    #allocation15 [shape = 'u8[1536]{0}', space=vmem, size = 0x800, scoped, tag = 'input window, operand 6, single buffered']
    #allocation16 [shape = 's32[1]{0}', space=sflag, size = 0x4, scoped, tag = 'scoped memory for lstm_gru_cnn_forward.1']
    #allocation17 [shape = 'u8[512]{0}', space=vmem, size = 0x400, scoped, tag = 'input window, operand 8, single buffered']
    #allocation18 [shape = 'u8[2048]{0}', space=vmem, size = 0x800, scoped, tag = 'input window, operand 10, single buffered']
    #allocation19 [shape = 's32[1]{0}', space=sflag, size = 0x4, scoped, tag = 'scoped memory for lstm_gru_cnn_forward.1']
    #allocation20 [shape = 'u8[2048]{0}', space=vmem, size = 0x800, scoped, tag = 'input window, operand 13, single buffered']
    #allocation21 [shape = 'u8[65536]{0}', space=vmem, size = 0x10000, scoped, tag = 'input window, operand 16, single buffered']
    #allocation22 [shape = 's32[1]{0}', space=sflag, size = 0x4, scoped, tag = 'scoped memory for lstm_gru_cnn_forward.1']
    #allocation23 [shape = 'u8[512]{0}', space=vmem, size = 0x400, scoped, tag = 'input window, operand 17, single buffered']
    #allocation24 [shape = 'u8[65536]{0}', space=vmem, size = 0x10000, scoped, tag = 'input window, operand 18, single buffered']
    #allocation25 [shape = 's32[1]{0}', space=sflag, size = 0x4, scoped, tag = 'scoped memory for lstm_gru_cnn_forward.1']
    #allocation26 [shape = 'u8[65536]{0}', space=vmem, size = 0x10000, scoped, tag = 'input window, operand 19, single buffered']
    #allocation27 [shape = 'u8[512]{0}', space=vmem, size = 0x400, scoped, tag = 'input window, operand 20, single buffered']
    #allocation28 [shape = 's32[1]{0}', space=sflag, size = 0x4, scoped, tag = 'scoped memory for lstm_gru_cnn_forward.1']
    #allocation29 [shape = 'u8[512]{0}', space=vmem, size = 0x400, scoped, tag = 'input window, operand 22, single buffered']
    #allocation30 [shape = 'u8[16384]{0}', space=vmem, size = 0x4000, scoped, tag = 'input window, operand 23, single buffered']
    #allocation31 [shape = 's32[1]{0}', space=sflag, size = 0x4, scoped, tag = 'scoped memory for lstm_gru_cnn_forward.1']
    #allocation32 [shape = 'u8[512]{0}', space=vmem, size = 0x400, scoped, tag = 'input window, operand 24, single buffered']
    #allocation33 [shape = 'u8[512]{0}', space=vmem, size = 0x400, scoped, tag = 'input window, operand 26, single buffered']
    #allocation34 [shape = 's32[1]{0}', space=sflag, size = 0x4, scoped, tag = 'scoped memory for lstm_gru_cnn_forward.1']
    %32 = vsyncpa [#allocation11], 0
    %33 = vsyncpa [#allocation13], 0
    %34 = vsyncpa [#allocation16], 0
    %35 = vsyncpa [#allocation19], 0
    %36 = vsyncpa [#allocation22], 0
    %37 = vsyncpa [#allocation25], 0
    %38 = vsyncpa [#allocation28], 0
    %39 = vsyncpa [#allocation31], 0
    %40 = vsyncpa [#allocation34], 0
    // Predicated region
    $region2: #{lstm_gru_cnn_forward.1} parent=1 // pred_check
      _
    $region3: #{lstm_gru_cnn_forward.1} parent=1 // pred_check_branch
      %42 = sbr.rel (0) target = $region5
    $region4: #{lstm_gru_cnn_forward.1} parent=1 // pred_region
      _
    $region5: #{lstm_gru_cnn_forward.1} parent=1 // pred_fallthru
      _
    // Predicated region
    $region6: #{lstm_gru_cnn_forward.1} parent=1 // pred_check
      _
    $region7: #{lstm_gru_cnn_forward.1} parent=1 // pred_check_branch
      %44 = sbr.rel (0) target = $region9
    $region8: #{lstm_gru_cnn_forward.1} parent=1 // pred_region
      %s46 = ssub.s32 768, 768
      %47 = vsyncadd [#allocation11], %s46
      %s48 = sshll.u32 [#allocation10], 4
      %s49 = int_to_ptr.vmem [resolvable:$true] %s48
      %54 = dma.hbm_to_vmem [thread:$0]  %s1, 768, %s49, [#allocation11], 192, 192, 12
    $region9: #{lstm_gru_cnn_forward.1} parent=1 // pred_fallthru
      _
    // Predicated region
    $region10: #{lstm_gru_cnn_forward.1} parent=1 // pred_check
      _
    $region11: #{lstm_gru_cnn_forward.1} parent=1 // pred_check_branch
      %56 = sbr.rel (0) target = $region13
    $region12: #{lstm_gru_cnn_forward.1} parent=1 // pred_region
      %s58 = ssub.s32 48, 48
      %59 = vsyncadd [#allocation13], %s58
      %s61 = sshll.u32 [#allocation12], 4
      %s62 = int_to_ptr.vmem [resolvable:$true] %s61
      %64 = dma.hbm_to_vmem [thread:$0]  %s2, 48, %s62, [#allocation13]
    $region13: #{lstm_gru_cnn_forward.1} parent=1 // pred_fallthru
      _
    // Predicated region
    $region14: #{lstm_gru_cnn_forward.1} parent=1 // pred_check
      _
    $region15: #{lstm_gru_cnn_forward.1} parent=1 // pred_check_branch
      %66 = sbr.rel (0) target = $region17
    $region16: #{lstm_gru_cnn_forward.1} parent=1 // pred_region
      _
    $region17: #{lstm_gru_cnn_forward.1} parent=1 // pred_fallthru
      _
    // Predicated region
    $region18: #{lstm_gru_cnn_forward.1} parent=1 // pred_check
      _
    $region19: #{lstm_gru_cnn_forward.1} parent=1 // pred_check_branch
      %68 = sbr.rel (0) target = $region21
    $region20: #{lstm_gru_cnn_forward.1} parent=1 // pred_region
      _
    $region21: #{lstm_gru_cnn_forward.1} parent=1 // pred_fallthru
      _
    // Predicated region
    $region22: #{lstm_gru_cnn_forward.1} parent=1 // pred_check
      _
    $region23: #{lstm_gru_cnn_forward.1} parent=1 // pred_check_branch
      %70 = sbr.rel (0) target = $region25
    $region24: #{lstm_gru_cnn_forward.1} parent=1 // pred_region
      %s72 = ssub.s32 768, 768
      %73 = vsyncadd [#allocation13], %s72
      %s74 = sshll.u32 [#allocation14], 4
      %s75 = int_to_ptr.vmem [resolvable:$true] %s74
      %80 = dma.hbm_to_vmem [thread:$0]  %s5, 768, %s75, [#allocation13], 192, 192, 12
    $region25: #{lstm_gru_cnn_forward.1} parent=1 // pred_fallthru
      _
    // Predicated region
    $region26: #{lstm_gru_cnn_forward.1} parent=1 // pred_check
      _
    $region27: #{lstm_gru_cnn_forward.1} parent=1 // pred_check_branch
      %82 = sbr.rel (0) target = $region29
    $region28: #{lstm_gru_cnn_forward.1} parent=1 // pred_region
      %s84 = ssub.s32 48, 48
      %85 = vsyncadd [#allocation16], %s84
      %s87 = sshll.u32 [#allocation15], 4
      %s88 = int_to_ptr.vmem [resolvable:$true] %s87
      %90 = dma.hbm_to_vmem [thread:$0]  %s6, 48, %s88, [#allocation16]
    $region29: #{lstm_gru_cnn_forward.1} parent=1 // pred_fallthru
      _
    // Predicated region
    $region30: #{lstm_gru_cnn_forward.1} parent=1 // pred_check
      _
    $region31: #{lstm_gru_cnn_forward.1} parent=1 // pred_check_branch
      %92 = sbr.rel (0) target = $region33
    $region32: #{lstm_gru_cnn_forward.1} parent=1 // pred_region
      _
    $region33: #{lstm_gru_cnn_forward.1} parent=1 // pred_fallthru
      _
    // Predicated region
    $region34: #{lstm_gru_cnn_forward.1} parent=1 // pred_check
      _
    $region35: #{lstm_gru_cnn_forward.1} parent=1 // pred_check_branch
      %94 = sbr.rel (0) target = $region37
    $region36: #{lstm_gru_cnn_forward.1} parent=1 // pred_region
      %s96 = ssub.s32 16, 16
      %97 = vsyncadd [#allocation16], %s96
      %s99 = sshll.u32 [#allocation17], 4
      %s100 = int_to_ptr.vmem [resolvable:$true] %s99
      %102 = dma.hbm_to_vmem [thread:$0]  %s8, 16, %s100, [#allocation16]
    $region37: #{lstm_gru_cnn_forward.1} parent=1 // pred_fallthru
      _
    // Predicated region
    $region38: #{lstm_gru_cnn_forward.1} parent=1 // pred_check
      _
    $region39: #{lstm_gru_cnn_forward.1} parent=1 // pred_check_branch
      %104 = sbr.rel (0) target = $region41
    $region40: #{lstm_gru_cnn_forward.1} parent=1 // pred_region
      _
    $region41: #{lstm_gru_cnn_forward.1} parent=1 // pred_fallthru
      _
    // Predicated region
    $region42: #{lstm_gru_cnn_forward.1} parent=1 // pred_check
      _
    $region43: #{lstm_gru_cnn_forward.1} parent=1 // pred_check_branch
      %106 = sbr.rel (0) target = $region45
    $region44: #{lstm_gru_cnn_forward.1} parent=1 // pred_region
      %s108 = ssub.s32 64, 64
      %109 = vsyncadd [#allocation19], %s108
      %s111 = sshll.u32 [#allocation18], 4
      %s112 = int_to_ptr.vmem [resolvable:$true] %s111
      %114 = dma.hbm_to_vmem [thread:$0]  %s10, 64, %s112, [#allocation19]
    $region45: #{lstm_gru_cnn_forward.1} parent=1 // pred_fallthru
      _
    // Predicated region
    $region46: #{lstm_gru_cnn_forward.1} parent=1 // pred_check
      _
    $region47: #{lstm_gru_cnn_forward.1} parent=1 // pred_check_branch
      %116 = sbr.rel (0) target = $region49
    $region48: #{lstm_gru_cnn_forward.1} parent=1 // pred_region
      _
    $region49: #{lstm_gru_cnn_forward.1} parent=1 // pred_fallthru
      _
    // Predicated region
    $region50: #{lstm_gru_cnn_forward.1} parent=1 // pred_check
      _
    $region51: #{lstm_gru_cnn_forward.1} parent=1 // pred_check_branch
      %118 = sbr.rel (0) target = $region53
    $region52: #{lstm_gru_cnn_forward.1} parent=1 // pred_region
      _
    $region53: #{lstm_gru_cnn_forward.1} parent=1 // pred_fallthru
      _
    // Predicated region
    $region54: #{lstm_gru_cnn_forward.1} parent=1 // pred_check
      _
    $region55: #{lstm_gru_cnn_forward.1} parent=1 // pred_check_branch
      %120 = sbr.rel (0) target = $region57
    $region56: #{lstm_gru_cnn_forward.1} parent=1 // pred_region
      %s122 = ssub.s32 64, 64
      %123 = vsyncadd [#allocation19], %s122
      %s125 = sshll.u32 [#allocation20], 4
      %s126 = int_to_ptr.vmem [resolvable:$true] %s125
      %128 = dma.hbm_to_vmem [thread:$0]  %s13, 64, %s126, [#allocation19]
    $region57: #{lstm_gru_cnn_forward.1} parent=1 // pred_fallthru
      _
    // Predicated region
    $region58: #{lstm_gru_cnn_forward.1} parent=1 // pred_check
      _
    $region59: #{lstm_gru_cnn_forward.1} parent=1 // pred_check_branch
      %130 = sbr.rel (0) target = $region61
    $region60: #{lstm_gru_cnn_forward.1} parent=1 // pred_region
      _
    $region61: #{lstm_gru_cnn_forward.1} parent=1 // pred_fallthru
      _
    // Predicated region
    $region62: #{lstm_gru_cnn_forward.1} parent=1 // pred_check
      _
    $region63: #{lstm_gru_cnn_forward.1} parent=1 // pred_check_branch
      %132 = sbr.rel (0) target = $region65
    $region64: #{lstm_gru_cnn_forward.1} parent=1 // pred_region
      _
    $region65: #{lstm_gru_cnn_forward.1} parent=1 // pred_fallthru
      _
    // Predicated region
    $region66: #{lstm_gru_cnn_forward.1} parent=1 // pred_check
      _
    $region67: #{lstm_gru_cnn_forward.1} parent=1 // pred_check_branch
      %134 = sbr.rel (0) target = $region69
    $region68: #{lstm_gru_cnn_forward.1} parent=1 // pred_region
      %s136 = ssub.s32 2048, 2048
      %137 = vsyncadd [#allocation22], %s136
      %s138 = sshll.u32 [#allocation21], 4
      %s139 = int_to_ptr.vmem [resolvable:$true] %s138
      %144 = dma.hbm_to_vmem [thread:$0]  %s16, 2048, %s139, [#allocation22], 64, 64, 4
    $region69: #{lstm_gru_cnn_forward.1} parent=1 // pred_fallthru
      _
    // Predicated region
    $region70: #{lstm_gru_cnn_forward.1} parent=1 // pred_check
      _
    $region71: #{lstm_gru_cnn_forward.1} parent=1 // pred_check_branch
      %146 = sbr.rel (0) target = $region73
    $region72: #{lstm_gru_cnn_forward.1} parent=1 // pred_region
      %s148 = ssub.s32 16, 16
      %149 = vsyncadd [#allocation22], %s148
      %s151 = sshll.u32 [#allocation23], 4
      %s152 = int_to_ptr.vmem [resolvable:$true] %s151
      %154 = dma.hbm_to_vmem [thread:$0]  %s17, 16, %s152, [#allocation22]
    $region73: #{lstm_gru_cnn_forward.1} parent=1 // pred_fallthru
      _
    // Predicated region
    $region74: #{lstm_gru_cnn_forward.1} parent=1 // pred_check
      _
    $region75: #{lstm_gru_cnn_forward.1} parent=1 // pred_check_branch
      %156 = sbr.rel (0) target = $region77
    $region76: #{lstm_gru_cnn_forward.1} parent=1 // pred_region
      %s158 = ssub.s32 2048, 2048
      %159 = vsyncadd [#allocation25], %s158
      %s160 = sshll.u32 [#allocation24], 4
      %s161 = int_to_ptr.vmem [resolvable:$true] %s160
      %166 = dma.hbm_to_vmem [thread:$0]  %s18, 2048, %s161, [#allocation25], 64, 64, 4
    $region77: #{lstm_gru_cnn_forward.1} parent=1 // pred_fallthru
      _
    // Predicated region
    $region78: #{lstm_gru_cnn_forward.1} parent=1 // pred_check
      _
    $region79: #{lstm_gru_cnn_forward.1} parent=1 // pred_check_branch
      %168 = sbr.rel (0) target = $region81
    $region80: #{lstm_gru_cnn_forward.1} parent=1 // pred_region
      %s170 = ssub.s32 2048, 2048
      %171 = vsyncadd [#allocation25], %s170
      %s172 = sshll.u32 [#allocation26], 4
      %s173 = int_to_ptr.vmem [resolvable:$true] %s172
      %178 = dma.hbm_to_vmem [thread:$0]  %s19, 2048, %s173, [#allocation25], 64, 64, 4
    $region81: #{lstm_gru_cnn_forward.1} parent=1 // pred_fallthru
      _
    // Predicated region
    $region82: #{lstm_gru_cnn_forward.1} parent=1 // pred_check
      _
    $region83: #{lstm_gru_cnn_forward.1} parent=1 // pred_check_branch
      %180 = sbr.rel (0) target = $region85
    $region84: #{lstm_gru_cnn_forward.1} parent=1 // pred_region
      %s182 = ssub.s32 16, 16
      %183 = vsyncadd [#allocation28], %s182
      %s185 = sshll.u32 [#allocation27], 4
      %s186 = int_to_ptr.vmem [resolvable:$true] %s185
      %188 = dma.hbm_to_vmem [thread:$0]  %s20, 16, %s186, [#allocation28]
    $region85: #{lstm_gru_cnn_forward.1} parent=1 // pred_fallthru
      _
    // Predicated region
    $region86: #{lstm_gru_cnn_forward.1} parent=1 // pred_check
      _
    $region87: #{lstm_gru_cnn_forward.1} parent=1 // pred_check_branch
      %190 = sbr.rel (0) target = $region89
    $region88: #{lstm_gru_cnn_forward.1} parent=1 // pred_region
      _
    $region89: #{lstm_gru_cnn_forward.1} parent=1 // pred_fallthru
      _
    // Predicated region
    $region90: #{lstm_gru_cnn_forward.1} parent=1 // pred_check
      _
    $region91: #{lstm_gru_cnn_forward.1} parent=1 // pred_check_branch
      %192 = sbr.rel (0) target = $region93
    $region92: #{lstm_gru_cnn_forward.1} parent=1 // pred_region
      %s194 = ssub.s32 16, 16
      %195 = vsyncadd [#allocation28], %s194
      %s197 = sshll.u32 [#allocation29], 4
      %s198 = int_to_ptr.vmem [resolvable:$true] %s197
      %200 = dma.hbm_to_vmem [thread:$0]  %s22, 16, %s198, [#allocation28]
    $region93: #{lstm_gru_cnn_forward.1} parent=1 // pred_fallthru
      _
    // Predicated region
    $region94: #{lstm_gru_cnn_forward.1} parent=1 // pred_check
      _
    $region95: #{lstm_gru_cnn_forward.1} parent=1 // pred_check_branch
      %202 = sbr.rel (0) target = $region97
    $region96: #{lstm_gru_cnn_forward.1} parent=1 // pred_region
      %s204 = ssub.s32 512, 512
      %205 = vsyncadd [#allocation31], %s204
      %s206 = sshll.u32 [#allocation30], 4
      %s207 = int_to_ptr.vmem [resolvable:$true] %s206
      %212 = dma.hbm_to_vmem [thread:$0]  %s23, 512, %s207, [#allocation31], 64, 64, 4
    $region97: #{lstm_gru_cnn_forward.1} parent=1 // pred_fallthru
      _
    // Predicated region
    $region98: #{lstm_gru_cnn_forward.1} parent=1 // pred_check
      _
    $region99: #{lstm_gru_cnn_forward.1} parent=1 // pred_check_branch
      %214 = sbr.rel (0) target = $region101
    $region100: #{lstm_gru_cnn_forward.1} parent=1 // pred_region
      %s216 = ssub.s32 16, 16
      %217 = vsyncadd [#allocation31], %s216
      %s219 = sshll.u32 [#allocation32], 4
      %s220 = int_to_ptr.vmem [resolvable:$true] %s219
      %222 = dma.hbm_to_vmem [thread:$0]  %s24, 16, %s220, [#allocation31]
    $region101: #{lstm_gru_cnn_forward.1} parent=1 // pred_fallthru
      _
    // Predicated region
    $region102: #{lstm_gru_cnn_forward.1} parent=1 // pred_check
      _
    $region103: #{lstm_gru_cnn_forward.1} parent=1 // pred_check_branch
      %224 = sbr.rel (0) target = $region105
    $region104: #{lstm_gru_cnn_forward.1} parent=1 // pred_region
      _
    $region105: #{lstm_gru_cnn_forward.1} parent=1 // pred_fallthru
      _
    // Predicated region
    $region106: #{lstm_gru_cnn_forward.1} parent=1 // pred_check
      _
    $region107: #{lstm_gru_cnn_forward.1} parent=1 // pred_check_branch
      %226 = sbr.rel (0) target = $region109
    $region108: #{lstm_gru_cnn_forward.1} parent=1 // pred_region
      %s228 = ssub.s32 16, 16
      %229 = vsyncadd [#allocation34], %s228
      %s231 = sshll.u32 [#allocation33], 4
      %s232 = int_to_ptr.vmem [resolvable:$true] %s231
      %234 = dma.hbm_to_vmem [thread:$0]  %s26, 16, %s232, [#allocation34]
    $region109: #{lstm_gru_cnn_forward.1} parent=1 // pred_fallthru
      _
    // Predicated region
    $region110: #{lstm_gru_cnn_forward.1} parent=1 // pred_check
      _
    $region111: #{lstm_gru_cnn_forward.1} parent=1 // pred_check_branch
      %236 = sbr.rel (0) target = $region113
    $region112: #{lstm_gru_cnn_forward.1} parent=1 // pred_region
      %237 = dma.done [#allocation11], 768
    $region113: #{lstm_gru_cnn_forward.1} parent=1 // pred_fallthru
      _
    // Predicated region
    $region114: #{lstm_gru_cnn_forward.1} parent=1 // pred_check
      _
    $region115: #{lstm_gru_cnn_forward.1} parent=1 // pred_check_branch
      %239 = sbr.rel (0) target = $region117
    $region116: #{lstm_gru_cnn_forward.1} parent=1 // pred_region
      %240 = dma.done [#allocation13], 48
    $region117: #{lstm_gru_cnn_forward.1} parent=1 // pred_fallthru
      _
    // Predicated region
    $region118: #{lstm_gru_cnn_forward.1} parent=1 // pred_check
      _
    $region119: #{lstm_gru_cnn_forward.1} parent=1 // pred_check_branch
      %242 = sbr.rel (0) target = $region121
    $region120: #{lstm_gru_cnn_forward.1} parent=1 // pred_region
      %243 = dma.done [#allocation13], 768
    $region121: #{lstm_gru_cnn_forward.1} parent=1 // pred_fallthru
      _
    // Predicated region
    $region122: #{lstm_gru_cnn_forward.1} parent=1 // pred_check
      _
    $region123: #{lstm_gru_cnn_forward.1} parent=1 // pred_check_branch
      %245 = sbr.rel (0) target = $region125
    $region124: #{lstm_gru_cnn_forward.1} parent=1 // pred_region
      %246 = dma.done [#allocation16], 48
    $region125: #{lstm_gru_cnn_forward.1} parent=1 // pred_fallthru
      _
    // Predicated region
    $region126: #{lstm_gru_cnn_forward.1} parent=1 // pred_check
      _
    $region127: #{lstm_gru_cnn_forward.1} parent=1 // pred_check_branch
      %248 = sbr.rel (0) target = $region129
    $region128: #{lstm_gru_cnn_forward.1} parent=1 // pred_region
      %249 = dma.done [#allocation16], 16
    $region129: #{lstm_gru_cnn_forward.1} parent=1 // pred_fallthru
      _
    // Predicated region
    $region130: #{lstm_gru_cnn_forward.1} parent=1 // pred_check
      _
    $region131: #{lstm_gru_cnn_forward.1} parent=1 // pred_check_branch
      %251 = sbr.rel (0) target = $region133
    $region132: #{lstm_gru_cnn_forward.1} parent=1 // pred_region
      %252 = dma.done [#allocation19], 64
    $region133: #{lstm_gru_cnn_forward.1} parent=1 // pred_fallthru
      _
    // Predicated region
    $region134: #{lstm_gru_cnn_forward.1} parent=1 // pred_check
      _
    $region135: #{lstm_gru_cnn_forward.1} parent=1 // pred_check_branch
      %254 = sbr.rel (0) target = $region137
    $region136: #{lstm_gru_cnn_forward.1} parent=1 // pred_region
      %255 = dma.done [#allocation19], 64
    $region137: #{lstm_gru_cnn_forward.1} parent=1 // pred_fallthru
      _
    // Predicated region
    $region138: #{lstm_gru_cnn_forward.1} parent=1 // pred_check
      _
    $region139: #{lstm_gru_cnn_forward.1} parent=1 // pred_check_branch
      %257 = sbr.rel (0) target = $region141
    $region140: #{lstm_gru_cnn_forward.1} parent=1 // pred_region
      %258 = dma.done [#allocation22], 2048
    $region141: #{lstm_gru_cnn_forward.1} parent=1 // pred_fallthru
      _
    // Predicated region
    $region142: #{lstm_gru_cnn_forward.1} parent=1 // pred_check
      _
    $region143: #{lstm_gru_cnn_forward.1} parent=1 // pred_check_branch
      %260 = sbr.rel (0) target = $region145
    $region144: #{lstm_gru_cnn_forward.1} parent=1 // pred_region
      %261 = dma.done [#allocation22], 16
    $region145: #{lstm_gru_cnn_forward.1} parent=1 // pred_fallthru
      _
    // Predicated region
    $region146: #{lstm_gru_cnn_forward.1} parent=1 // pred_check
      _
    $region147: #{lstm_gru_cnn_forward.1} parent=1 // pred_check_branch
      %263 = sbr.rel (0) target = $region149
    $region148: #{lstm_gru_cnn_forward.1} parent=1 // pred_region
      %264 = dma.done [#allocation25], 2048
    $region149: #{lstm_gru_cnn_forward.1} parent=1 // pred_fallthru
      _
    // Predicated region
    $region150: #{lstm_gru_cnn_forward.1} parent=1 // pred_check
      _
    $region151: #{lstm_gru_cnn_forward.1} parent=1 // pred_check_branch
      %266 = sbr.rel (0) target = $region153
    $region152: #{lstm_gru_cnn_forward.1} parent=1 // pred_region
      %267 = dma.done [#allocation25], 2048
    $region153: #{lstm_gru_cnn_forward.1} parent=1 // pred_fallthru
      _
    // Predicated region
    $region154: #{lstm_gru_cnn_forward.1} parent=1 // pred_check
      _
    $region155: #{lstm_gru_cnn_forward.1} parent=1 // pred_check_branch
      %269 = sbr.rel (0) target = $region157
    $region156: #{lstm_gru_cnn_forward.1} parent=1 // pred_region
      %270 = dma.done [#allocation28], 16
    $region157: #{lstm_gru_cnn_forward.1} parent=1 // pred_fallthru
      _
    // Predicated region
    $region158: #{lstm_gru_cnn_forward.1} parent=1 // pred_check
      _
    $region159: #{lstm_gru_cnn_forward.1} parent=1 // pred_check_branch
      %272 = sbr.rel (0) target = $region161
    $region160: #{lstm_gru_cnn_forward.1} parent=1 // pred_region
      %273 = dma.done [#allocation28], 16
    $region161: #{lstm_gru_cnn_forward.1} parent=1 // pred_fallthru
      _
    // Predicated region
    $region162: #{lstm_gru_cnn_forward.1} parent=1 // pred_check
      _
    $region163: #{lstm_gru_cnn_forward.1} parent=1 // pred_check_branch
      %275 = sbr.rel (0) target = $region165
    $region164: #{lstm_gru_cnn_forward.1} parent=1 // pred_region
      %276 = dma.done [#allocation31], 512
    $region165: #{lstm_gru_cnn_forward.1} parent=1 // pred_fallthru
      _
    // Predicated region
    $region166: #{lstm_gru_cnn_forward.1} parent=1 // pred_check
      _
    $region167: #{lstm_gru_cnn_forward.1} parent=1 // pred_check_branch
      %278 = sbr.rel (0) target = $region169
    $region168: #{lstm_gru_cnn_forward.1} parent=1 // pred_region
      %279 = dma.done [#allocation31], 16
    $region169: #{lstm_gru_cnn_forward.1} parent=1 // pred_fallthru
      _
    // Predicated region
    $region170: #{lstm_gru_cnn_forward.1} parent=1 // pred_check
      _
    $region171: #{lstm_gru_cnn_forward.1} parent=1 // pred_check_branch
      %281 = sbr.rel (0) target = $region173
    $region172: #{lstm_gru_cnn_forward.1} parent=1 // pred_region
      %282 = dma.done [#allocation34], 16
    $region173: #{lstm_gru_cnn_forward.1} parent=1 // pred_fallthru
      _
    %v284 = vld [vmem:[%s0] sm:$0xf]
    %v285 = vld [vmem:[%s0 + $0x4] sm:$0xf]
    %v286 = vld [vmem:[%s0 + $0x8] sm:$0xf]
    %v287 = vld [vmem:[%s0 + $0xc] sm:$0xf]
    %v288 = vld [vmem:[%s0 + $0x10] sm:$0xf]
    %v289 = vld [vmem:[%s0 + $0x14] sm:$0xf]
    %v290 = vld [vmem:[%s0 + $0x18] sm:$0xf]
    %v291 = vld [vmem:[%s0 + $0x1c] sm:$0xf]
    %v292 = vld [vmem:[%s0 + $0x20] sm:$0xf]
    %v293 = vld [vmem:[%s0 + $0x24] sm:$0xf]
    %v294 = vld [vmem:[%s0 + $0x28] sm:$0xf]
    %v295 = vld [vmem:[%s0 + $0x2c] sm:$0xf]
    %v296 = vld [vmem:[%s0 + $0x30] sm:$0xf]
    %v297 = vld [vmem:[%s0 + $0x34] sm:$0xf]
    %v298 = vld [vmem:[%s0 + $0x38] sm:$0xf]
    %v299 = vld [vmem:[%s0 + $0x3c] sm:$0xf]
    %v300 = vld [vmem:[#allocation10] sm:$0xff]
    %v301 = vld [vmem:[#allocation10 + $0x8] sm:$0xf]
    %v302 = vld [vmem:[#allocation10 + $0xc] sm:$0xff]
    %v303 = vld [vmem:[#allocation10 + $0x14] sm:$0xf]
    %v304 = vld [vmem:[#allocation10 + $0x18] sm:$0xff]
    %v305 = vld [vmem:[#allocation10 + $0x20] sm:$0xf]
    %v306 = vld [vmem:[#allocation10 + $0x24] sm:$0xff]
    %v307 = vld [vmem:[#allocation10 + $0x2c] sm:$0xf]
    %v308 = vld [vmem:[#allocation12] sm:$0x7]
    %v310 = vlaneseq
    %v311 = vshrl.u32 %v310, 7
    %v312 = vsub.s32 0, %v311
    %v313 = vrot.slane %v308, %v312
    %v314 = vlaneseq
    %v315 = vshrl.u32 %v314, 7
    %v316 = vsub.s32 1, %v315
    %v317 = vrot.slane %v308, %v316
    %v318 = vlaneseq
    %v319 = vshrl.u32 %v318, 7
    %v320 = vsub.s32 2, %v319
    %v321 = vrot.slane %v308, %v320
    %v341 = vunpack.c.l.b16 %v284
    %v342 = vunpack.c.l.b16 %v285
    %v343 = vunpack.c.l.b16 %v286
    %v344 = vunpack.c.l.b16 %v287
    %v345 = vunpack.c.l.b16 %v288
    %v346 = vunpack.c.l.b16 %v289
    %v347 = vunpack.c.l.b16 %v290
    %v348 = vunpack.c.l.b16 %v291
    %v349 = vunpack.c.l.b16 %v292
    %v350 = vunpack.c.l.b16 %v293
    %v351 = vunpack.c.l.b16 %v294
    %v352 = vunpack.c.l.b16 %v295
    %v353 = vunpack.c.l.b16 %v296
    %v354 = vunpack.c.l.b16 %v297
    %v355 = vunpack.c.l.b16 %v298
    %v356 = vunpack.c.l.b16 %v299
    %v357 = vpack.c.b16 %v342, %v341
    %v358 = vpack.c.b16 %v344, %v343
    %v359 = vpack.c.b16 %v346, %v345
    %v360 = vpack.c.b16 %v348, %v347
    %v361 = vpack.c.b16 %v350, %v349
    %v362 = vpack.c.b16 %v352, %v351
    %v363 = vpack.c.b16 %v354, %v353
    %v364 = vpack.c.b16 %v356, %v355
    %v373 = vunpack.c.l.b16 %v300
    %v374 = vunpack.c.h.b16 %v300
    %v375 = vunpack.c.l.b16 %v301
    %v376 = vunpack.c.l.b16 %v302
    %v377 = vunpack.c.h.b16 %v302
    %v378 = vunpack.c.l.b16 %v303
    %v379 = vunpack.c.l.b16 %v304
    %v380 = vunpack.c.h.b16 %v304
    %v381 = vunpack.c.l.b16 %v305
    %v382 = vunpack.c.l.b16 %v306
    %v383 = vunpack.c.h.b16 %v306
    %v384 = vunpack.c.l.b16 %v307
    %v385 = vpack.c.b16 %v376, %v373
    %v386 = vpack.c.b16 %v377, %v374
    %v387 = vpack.c.b16 %v378, %v375
    %v388 = vpack.c.b16 %v382, %v379
    %v389 = vpack.c.b16 %v383, %v380
    %v390 = vpack.c.b16 %v384, %v381
    %vm397 = vcmask 261120
    %v399 = vsel %vm397, %v357, 0
    %v402 = vsel %vm397, %v358, 0
    %v405 = vsel %vm397, %v359, 0
    %v408 = vsel %vm397, %v360, 0
    %v411 = vsel %vm397, %v361, 0
    %v414 = vsel %vm397, %v362, 0
    %v417 = vsel %vm397, %v363, 0
    %v420 = vsel %vm397, %v364, 0
    %422 = vmatprep.subr.bf16.mxu0 0
    %423 = vmatpush1.bf16.msra.mxu0 0
    %424 = vmatprep.subr.bf16.mxu0 0
    %425 = vmatpush1.bf16.msra.mxu0 0
    %426 = vmatprep.subr.bf16.mxu0 0
    %427 = vmatpush1.bf16.msra.mxu0 0
    %428 = vmatprep.subr.bf16.mxu0 0
    %429 = vmatpush1.bf16.msra.mxu0 0
    %430 = vmatprep.subr.bf16.mxu0 0
    %431 = vmatpush1.bf16.msra.mxu0 0
    %432 = vmatprep.subr.bf16.mxu0 0
    %433 = vmatpush1.bf16.msra.mxu0 0
    %434 = vmatprep.subr.bf16.mxu0 %v389
    %435 = vmatpush1.bf16.msra.mxu0 %v388
    %436 = vmatprep.subr.bf16.mxu0 %v386
    %437 = vmatpush1.bf16.msra.mxu0 %v385
    %438 = vmatprep.subr.bf16.mxu0 0
    %439 = vmatpush2.bf16.msra.mxu0 0
    %440 = vmatprep.subr.bf16.mxu0 0
    %441 = vmatpush2.bf16.msra.mxu0 0
    %442 = vmatprep.subr.bf16.mxu0 0
    %443 = vmatpush2.bf16.msra.mxu0 0
    %444 = vmatprep.subr.bf16.mxu0 0
    %445 = vmatpush2.bf16.msra.mxu0 0
    %446 = vmatprep.subr.bf16.mxu0 0
    %447 = vmatpush2.bf16.msra.mxu0 0
    %448 = vmatprep.subr.bf16.mxu0 0
    %449 = vmatpush2.bf16.msra.mxu0 0
    %450 = vmatprep.subr.bf16.mxu0 0
    %451 = vmatpush2.bf16.msra.mxu0 0
    %452 = vmatprep.subr.bf16.mxu0 0
    %453 = vmatpush2.bf16.msra.mxu0 0
    %454 = vmatprep.mubr.bf16.mxu0 0
    %455 = vmatmul.mubr.bf16.gmra.mxu0 %v399
    %v456 = vpop.f32.mrf.mxu0
    %v457 = vadd.f32 %v313, %v456
    %v458 = vpop.f32.mrf.mxu0
    %v459 = vadd.f32 %v317, %v458
    %v460 = vpop.f32.mrf.mxu0
    %v461 = vadd.f32 %v313, %v460
    %v462 = vpop.f32.mrf.mxu0
    %v463 = vadd.f32 %v317, %v462
    %464 = vmatprep.mubr.bf16.mxu0 0
    %465 = vmatmul.mubr.bf16.gmra.mxu0 %v402
    %v466 = vpop.f32.mrf.mxu0
    %v467 = vadd.f32 %v313, %v466
    %v468 = vpop.f32.mrf.mxu0
    %v469 = vadd.f32 %v317, %v468
    %v470 = vpop.f32.mrf.mxu0
    %v471 = vadd.f32 %v313, %v470
    %v472 = vpop.f32.mrf.mxu0
    %v473 = vadd.f32 %v317, %v472
    %474 = vmatprep.mubr.bf16.mxu0 0
    %475 = vmatmul.mubr.bf16.gmra.mxu0 %v405
    %v476 = vpop.f32.mrf.mxu0
    %v477 = vadd.f32 %v313, %v476
    %v478 = vpop.f32.mrf.mxu0
    %v479 = vadd.f32 %v317, %v478
    %v480 = vpop.f32.mrf.mxu0
    %v481 = vadd.f32 %v313, %v480
    %v482 = vpop.f32.mrf.mxu0
    %v483 = vadd.f32 %v317, %v482
    %484 = vmatprep.mubr.bf16.mxu0 0
    %485 = vmatmul.mubr.bf16.gmra.mxu0 %v408
    %v486 = vpop.f32.mrf.mxu0
    %v487 = vadd.f32 %v313, %v486
    %v488 = vpop.f32.mrf.mxu0
    %v489 = vadd.f32 %v317, %v488
    %v490 = vpop.f32.mrf.mxu0
    %v491 = vadd.f32 %v313, %v490
    %v492 = vpop.f32.mrf.mxu0
    %v493 = vadd.f32 %v317, %v492
    %494 = vmatprep.mubr.bf16.mxu0 0
    %495 = vmatmul.mubr.bf16.gmra.mxu0 %v411
    %v496 = vpop.f32.mrf.mxu0
    %v497 = vadd.f32 %v313, %v496
    %v498 = vpop.f32.mrf.mxu0
    %v499 = vadd.f32 %v317, %v498
    %v500 = vpop.f32.mrf.mxu0
    %v501 = vadd.f32 %v313, %v500
    %v502 = vpop.f32.mrf.mxu0
    %v503 = vadd.f32 %v317, %v502
    %504 = vmatprep.mubr.bf16.mxu0 0
    %505 = vmatmul.mubr.bf16.gmra.mxu0 %v414
    %v506 = vpop.f32.mrf.mxu0
    %v507 = vadd.f32 %v313, %v506
    %v508 = vpop.f32.mrf.mxu0
    %v509 = vadd.f32 %v317, %v508
    %v510 = vpop.f32.mrf.mxu0
    %v511 = vadd.f32 %v313, %v510
    %v512 = vpop.f32.mrf.mxu0
    %v513 = vadd.f32 %v317, %v512
    %514 = vmatprep.mubr.bf16.mxu0 0
    %515 = vmatmul.mubr.bf16.gmra.mxu0 %v417
    %v516 = vpop.f32.mrf.mxu0
    %v517 = vadd.f32 %v313, %v516
    %v518 = vpop.f32.mrf.mxu0
    %v519 = vadd.f32 %v317, %v518
    %v520 = vpop.f32.mrf.mxu0
    %v521 = vadd.f32 %v313, %v520
    %v522 = vpop.f32.mrf.mxu0
    %v523 = vadd.f32 %v317, %v522
    %524 = vmatprep.mubr.bf16.mxu0 0
    %525 = vmatmul.mubr.bf16.gmra.mxu0 %v420
    %v526 = vpop.f32.mrf.mxu0
    %v527 = vadd.f32 %v313, %v526
    %v528 = vpop.f32.mrf.mxu0
    %v529 = vadd.f32 %v317, %v528
    %v530 = vpop.f32.mrf.mxu0
    %v531 = vadd.f32 %v313, %v530
    %v532 = vpop.f32.mrf.mxu0
    %v533 = vadd.f32 %v317, %v532
    %534 = vdwg.mxu0
    %535 = vmatprep.subr.bf16.mxu0 0
    %536 = vmatpush1.bf16.msra.mxu0 0
    %537 = vmatprep.subr.bf16.mxu0 0
    %538 = vmatpush1.bf16.msra.mxu0 0
    %539 = vmatprep.subr.bf16.mxu0 0
    %540 = vmatpush1.bf16.msra.mxu0 0
    %541 = vmatprep.subr.bf16.mxu0 0
    %542 = vmatpush1.bf16.msra.mxu0 0
    %543 = vmatprep.subr.bf16.mxu0 0
    %544 = vmatpush1.bf16.msra.mxu0 0
    %545 = vmatprep.subr.bf16.mxu0 0
    %546 = vmatpush1.bf16.msra.mxu0 0
    %547 = vmatprep.subr.bf16.mxu0 0
    %548 = vmatpush1.bf16.msra.mxu0 %v390
    %549 = vmatprep.subr.bf16.mxu0 0
    %550 = vmatpush1.bf16.msra.mxu0 %v387
    %551 = vmatprep.subr.bf16.mxu0 0
    %552 = vmatpush2.bf16.msra.mxu0 0
    %553 = vmatprep.subr.bf16.mxu0 0
    %554 = vmatpush2.bf16.msra.mxu0 0
    %555 = vmatprep.subr.bf16.mxu0 0
    %556 = vmatpush2.bf16.msra.mxu0 0
    %557 = vmatprep.subr.bf16.mxu0 0
    %558 = vmatpush2.bf16.msra.mxu0 0
    %559 = vmatprep.subr.bf16.mxu0 0
    %560 = vmatpush2.bf16.msra.mxu0 0
    %561 = vmatprep.subr.bf16.mxu0 0
    %562 = vmatpush2.bf16.msra.mxu0 0
    %563 = vmatprep.subr.bf16.mxu0 0
    %564 = vmatpush2.bf16.msra.mxu0 0
    %565 = vmatprep.subr.bf16.mxu0 0
    %566 = vmatpush2.bf16.msra.mxu0 0
    %567 = vmatprep.mubr.bf16.mxu0 0
    %568 = vmatmul.mubr.bf16.gmra.mxu0 %v399
    %v569 = vpop.f32.mrf.mxu0
    %v570 = vadd.f32 %v321, %v569
    %v571 = vpop.f32.mrf.mxu0
    %v572 = vpop.f32.mrf.mxu0
    %v573 = vadd.f32 %v321, %v572
    %v574 = vpop.f32.mrf.mxu0
    %575 = vmatprep.mubr.bf16.mxu0 0
    %576 = vmatmul.mubr.bf16.gmra.mxu0 %v402
    %v577 = vpop.f32.mrf.mxu0
    %v578 = vadd.f32 %v321, %v577
    %v579 = vpop.f32.mrf.mxu0
    %v580 = vpop.f32.mrf.mxu0
    %v581 = vadd.f32 %v321, %v580
    %v582 = vpop.f32.mrf.mxu0
    %583 = vmatprep.mubr.bf16.mxu0 0
    %584 = vmatmul.mubr.bf16.gmra.mxu0 %v405
    %v585 = vpop.f32.mrf.mxu0
    %v586 = vadd.f32 %v321, %v585
    %v587 = vpop.f32.mrf.mxu0
    %v588 = vpop.f32.mrf.mxu0
    %v589 = vadd.f32 %v321, %v588
    %v590 = vpop.f32.mrf.mxu0
    %591 = vmatprep.mubr.bf16.mxu0 0
    %592 = vmatmul.mubr.bf16.gmra.mxu0 %v408
    %v593 = vpop.f32.mrf.mxu0
    %v594 = vadd.f32 %v321, %v593
    %v595 = vpop.f32.mrf.mxu0
    %v596 = vpop.f32.mrf.mxu0
    %v597 = vadd.f32 %v321, %v596
    %v598 = vpop.f32.mrf.mxu0
    %599 = vmatprep.mubr.bf16.mxu0 0
    %600 = vmatmul.mubr.bf16.gmra.mxu0 %v411
    %v601 = vpop.f32.mrf.mxu0
    %v602 = vadd.f32 %v321, %v601
    %v603 = vpop.f32.mrf.mxu0
    %v604 = vpop.f32.mrf.mxu0
    %v605 = vadd.f32 %v321, %v604
    %v606 = vpop.f32.mrf.mxu0
    %607 = vmatprep.mubr.bf16.mxu0 0
    %608 = vmatmul.mubr.bf16.gmra.mxu0 %v414
    %v609 = vpop.f32.mrf.mxu0
    %v610 = vadd.f32 %v321, %v609
    %v611 = vpop.f32.mrf.mxu0
    %v612 = vpop.f32.mrf.mxu0
    %v613 = vadd.f32 %v321, %v612
    %v614 = vpop.f32.mrf.mxu0
    %615 = vmatprep.mubr.bf16.mxu0 0
    %616 = vmatmul.mubr.bf16.gmra.mxu0 %v417
    %v617 = vpop.f32.mrf.mxu0
    %v618 = vadd.f32 %v321, %v617
    %v619 = vpop.f32.mrf.mxu0
    %v620 = vpop.f32.mrf.mxu0
    %v621 = vadd.f32 %v321, %v620
    %v622 = vpop.f32.mrf.mxu0
    %623 = vmatprep.mubr.bf16.mxu0 0
    %624 = vmatmul.mubr.bf16.gmra.mxu0 %v420
    %v625 = vpop.f32.mrf.mxu0
    %v626 = vadd.f32 %v321, %v625
    %v627 = vpop.f32.mrf.mxu0
    %v628 = vpop.f32.mrf.mxu0
    %v629 = vadd.f32 %v321, %v628
    %v630 = vpop.f32.mrf.mxu0
    %631 = vdwg.mxu0
    %v632 = vpack.c.bf16 %v461, %v457
    %v633 = vpack.c.bf16 %v463, %v459
    %v634 = vpack.c.bf16 %v573, %v570
    %v635 = vpack.c.bf16 %v471, %v467
    %v636 = vpack.c.bf16 %v473, %v469
    %v637 = vpack.c.bf16 %v581, %v578
    %v638 = vpack.c.bf16 %v481, %v477
    %v639 = vpack.c.bf16 %v483, %v479
    %v640 = vpack.c.bf16 %v589, %v586
    %v641 = vpack.c.bf16 %v491, %v487
    %v642 = vpack.c.bf16 %v493, %v489
    %v643 = vpack.c.bf16 %v597, %v594
    %v644 = vpack.c.bf16 %v501, %v497
    %v645 = vpack.c.bf16 %v503, %v499
    %v646 = vpack.c.bf16 %v605, %v602
    %v647 = vpack.c.bf16 %v511, %v507
    %v648 = vpack.c.bf16 %v513, %v509
    %v649 = vpack.c.bf16 %v613, %v610
    %v650 = vpack.c.bf16 %v521, %v517
    %v651 = vpack.c.bf16 %v523, %v519
    %v652 = vpack.c.bf16 %v621, %v618
    %v653 = vpack.c.bf16 %v531, %v527
    %v654 = vpack.c.bf16 %v533, %v529
    %v655 = vpack.c.bf16 %v629, %v626
    %v680 = vunpack.c.l.b16 %v632
    %v681 = vunpack.c.l.b16 %v633
    %v682 = vunpack.c.l.b16 %v634
    %v683 = vunpack.c.h.b16 %v632
    %v684 = vunpack.c.h.b16 %v633
    %v685 = vunpack.c.h.b16 %v634
    %v686 = vunpack.c.l.b16 %v635
    %v687 = vunpack.c.l.b16 %v636
    %v688 = vunpack.c.l.b16 %v637
    %v689 = vunpack.c.h.b16 %v635
    %v690 = vunpack.c.h.b16 %v636
    %v691 = vunpack.c.h.b16 %v637
    %v692 = vunpack.c.l.b16 %v638
    %v693 = vunpack.c.l.b16 %v639
    %v694 = vunpack.c.l.b16 %v640
    %v695 = vunpack.c.h.b16 %v638
    %v696 = vunpack.c.h.b16 %v639
    %v697 = vunpack.c.h.b16 %v640
    %v698 = vunpack.c.l.b16 %v641
    %v699 = vunpack.c.l.b16 %v642
    %v700 = vunpack.c.l.b16 %v643
    %v701 = vunpack.c.h.b16 %v641
    %v702 = vunpack.c.h.b16 %v642
    %v703 = vunpack.c.h.b16 %v643
    %v704 = vunpack.c.l.b16 %v644
    %v705 = vunpack.c.l.b16 %v645
    %v706 = vunpack.c.l.b16 %v646
    %v707 = vunpack.c.h.b16 %v644
    %v708 = vunpack.c.h.b16 %v645
    %v709 = vunpack.c.h.b16 %v646
    %v710 = vunpack.c.l.b16 %v647
    %v711 = vunpack.c.l.b16 %v648
    %v712 = vunpack.c.l.b16 %v649
    %v713 = vunpack.c.h.b16 %v647
    %v714 = vunpack.c.h.b16 %v648
    %v715 = vunpack.c.h.b16 %v649
    %v716 = vunpack.c.l.b16 %v650
    %v717 = vunpack.c.l.b16 %v651
    %v718 = vunpack.c.l.b16 %v652
    %v719 = vunpack.c.h.b16 %v650
    %v720 = vunpack.c.h.b16 %v651
    %v721 = vunpack.c.h.b16 %v652
    %v722 = vunpack.c.l.b16 %v653
    %v723 = vunpack.c.l.b16 %v654
    %v724 = vunpack.c.l.b16 %v655
    %v725 = vunpack.c.h.b16 %v653
    %v726 = vunpack.c.h.b16 %v654
    %v727 = vunpack.c.h.b16 %v655
    %v728 = vpack.c.b16 %v681, %v680
    %v729 = vpack.c.b16 %v682, %v682
    %v730 = vpack.c.b16 %v684, %v683
    %v731 = vpack.c.b16 %v685, %v685
    %v732 = vpack.c.b16 %v687, %v686
    %v733 = vpack.c.b16 %v688, %v688
    %v734 = vpack.c.b16 %v690, %v689
    %v735 = vpack.c.b16 %v691, %v691
    %v736 = vpack.c.b16 %v693, %v692
    %v737 = vpack.c.b16 %v694, %v694
    %v738 = vpack.c.b16 %v696, %v695
    %v739 = vpack.c.b16 %v697, %v697
    %v740 = vpack.c.b16 %v699, %v698
    %v741 = vpack.c.b16 %v700, %v700
    %v742 = vpack.c.b16 %v702, %v701
    %v743 = vpack.c.b16 %v703, %v703
    %v744 = vpack.c.b16 %v705, %v704
    %v745 = vpack.c.b16 %v706, %v706
    %v746 = vpack.c.b16 %v708, %v707
    %v747 = vpack.c.b16 %v709, %v709
    %v748 = vpack.c.b16 %v711, %v710
    %v749 = vpack.c.b16 %v712, %v712
    %v750 = vpack.c.b16 %v714, %v713
    %v751 = vpack.c.b16 %v715, %v715
    %v752 = vpack.c.b16 %v717, %v716
    %v753 = vpack.c.b16 %v718, %v718
    %v754 = vpack.c.b16 %v720, %v719
    %v755 = vpack.c.b16 %v721, %v721
    %v756 = vpack.c.b16 %v723, %v722
    %v757 = vpack.c.b16 %v724, %v724
    %v758 = vpack.c.b16 %v726, %v725
    %v759 = vpack.c.b16 %v727, %v727
    %792 = vst [vmem:[#allocation2] sm:$0xff] %v728
    %793 = vst [vmem:[#allocation2 + $0x8] sm:$0xf] %v729
    %794 = vst [vmem:[#allocation2 + $0xc] sm:$0xff] %v730
    %795 = vst [vmem:[#allocation2 + $0x14] sm:$0xf] %v731
    %796 = vst [vmem:[#allocation2 + $0x18] sm:$0xff] %v732
    %797 = vst [vmem:[#allocation2 + $0x20] sm:$0xf] %v733
    %798 = vst [vmem:[#allocation2 + $0x24] sm:$0xff] %v734
    %799 = vst [vmem:[#allocation2 + $0x2c] sm:$0xf] %v735
    %800 = vst [vmem:[#allocation2 + $0x30] sm:$0xff] %v736
    %801 = vst [vmem:[#allocation2 + $0x38] sm:$0xf] %v737
    %802 = vst [vmem:[#allocation2 + $0x3c] sm:$0xff] %v738
    %803 = vst [vmem:[#allocation2 + $0x44] sm:$0xf] %v739
    %804 = vst [vmem:[#allocation2 + $0x48] sm:$0xff] %v740
    %805 = vst [vmem:[#allocation2 + $0x50] sm:$0xf] %v741
    %806 = vst [vmem:[#allocation2 + $0x54] sm:$0xff] %v742
    %807 = vst [vmem:[#allocation2 + $0x5c] sm:$0xf] %v743
    %808 = vst [vmem:[#allocation2 + $0x60] sm:$0xff] %v744
    %809 = vst [vmem:[#allocation2 + $0x68] sm:$0xf] %v745
    %810 = vst [vmem:[#allocation2 + $0x6c] sm:$0xff] %v746
    %811 = vst [vmem:[#allocation2 + $0x74] sm:$0xf] %v747
    %812 = vst [vmem:[#allocation2 + $0x78] sm:$0xff] %v748
    %813 = vst [vmem:[#allocation2 + $0x80] sm:$0xf] %v749
    %814 = vst [vmem:[#allocation2 + $0x84] sm:$0xff] %v750
    %815 = vst [vmem:[#allocation2 + $0x8c] sm:$0xf] %v751
    %816 = vst [vmem:[#allocation2 + $0x90] sm:$0xff] %v752
    %817 = vst [vmem:[#allocation2 + $0x98] sm:$0xf] %v753
    %818 = vst [vmem:[#allocation2 + $0x9c] sm:$0xff] %v754
    %819 = vst [vmem:[#allocation2 + $0xa4] sm:$0xf] %v755
    %820 = vst [vmem:[#allocation2 + $0xa8] sm:$0xff] %v756
    %821 = vst [vmem:[#allocation2 + $0xb0] sm:$0xf] %v757
    %822 = vst [vmem:[#allocation2 + $0xb4] sm:$0xff] %v758
    %823 = vst [vmem:[#allocation2 + $0xbc] sm:$0xf] %v759
    %v824 = vld [vmem:[#allocation14] sm:$0xff]
    %v825 = vld [vmem:[#allocation14 + $0x8] sm:$0xf]
    %v826 = vld [vmem:[#allocation14 + $0xc] sm:$0xff]
    %v827 = vld [vmem:[#allocation14 + $0x14] sm:$0xf]
    %v828 = vld [vmem:[#allocation14 + $0x18] sm:$0xff]
    %v829 = vld [vmem:[#allocation14 + $0x20] sm:$0xf]
    %v830 = vld [vmem:[#allocation14 + $0x24] sm:$0xff]
    %v831 = vld [vmem:[#allocation14 + $0x2c] sm:$0xf]
    %v832 = vld [vmem:[#allocation15] sm:$0x7]
    %v834 = vlaneseq
    %v835 = vshrl.u32 %v834, 7
    %v836 = vsub.s32 0, %v835
    %v837 = vrot.slane %v832, %v836
    %v838 = vlaneseq
    %v839 = vshrl.u32 %v838, 7
    %v840 = vsub.s32 1, %v839
    %v841 = vrot.slane %v832, %v840
    %v842 = vlaneseq
    %v843 = vshrl.u32 %v842, 7
    %v844 = vsub.s32 2, %v843
    %v845 = vrot.slane %v832, %v844
    %v857 = vunpack.c.l.b16 %v824
    %v858 = vunpack.c.h.b16 %v824
    %v859 = vunpack.c.l.b16 %v825
    %v860 = vunpack.c.l.b16 %v826
    %v861 = vunpack.c.h.b16 %v826
    %v862 = vunpack.c.l.b16 %v827
    %v863 = vunpack.c.l.b16 %v828
    %v864 = vunpack.c.h.b16 %v828
    %v865 = vunpack.c.l.b16 %v829
    %v866 = vunpack.c.l.b16 %v830
    %v867 = vunpack.c.h.b16 %v830
    %v868 = vunpack.c.l.b16 %v831
    %v869 = vpack.c.b16 %v860, %v857
    %v870 = vpack.c.b16 %v861, %v858
    %v871 = vpack.c.b16 %v862, %v859
    %v872 = vpack.c.b16 %v866, %v863
    %v873 = vpack.c.b16 %v867, %v864
    %v874 = vpack.c.b16 %v868, %v865
    %881 = vmatprep.subr.bf16.mxu0 0
    %882 = vmatpush1.bf16.msra.mxu0 0
    %883 = vmatprep.subr.bf16.mxu0 0
    %884 = vmatpush1.bf16.msra.mxu0 0
    %885 = vmatprep.subr.bf16.mxu0 0
    %886 = vmatpush1.bf16.msra.mxu0 0
    %887 = vmatprep.subr.bf16.mxu0 0
    %888 = vmatpush1.bf16.msra.mxu0 0
    %889 = vmatprep.subr.bf16.mxu0 0
    %890 = vmatpush1.bf16.msra.mxu0 0
    %891 = vmatprep.subr.bf16.mxu0 0
    %892 = vmatpush1.bf16.msra.mxu0 0
    %893 = vmatprep.subr.bf16.mxu0 %v873
    %894 = vmatpush1.bf16.msra.mxu0 %v872
    %895 = vmatprep.subr.bf16.mxu0 %v870
    %896 = vmatpush1.bf16.msra.mxu0 %v869
    %897 = vmatprep.subr.bf16.mxu0 0
    %898 = vmatpush2.bf16.msra.mxu0 0
    %899 = vmatprep.subr.bf16.mxu0 0
    %900 = vmatpush2.bf16.msra.mxu0 0
    %901 = vmatprep.subr.bf16.mxu0 0
    %902 = vmatpush2.bf16.msra.mxu0 0
    %903 = vmatprep.subr.bf16.mxu0 0
    %904 = vmatpush2.bf16.msra.mxu0 0
    %905 = vmatprep.subr.bf16.mxu0 0
    %906 = vmatpush2.bf16.msra.mxu0 0
    %907 = vmatprep.subr.bf16.mxu0 0
    %908 = vmatpush2.bf16.msra.mxu0 0
    %909 = vmatprep.subr.bf16.mxu0 0
    %910 = vmatpush2.bf16.msra.mxu0 0
    %911 = vmatprep.subr.bf16.mxu0 0
    %912 = vmatpush2.bf16.msra.mxu0 0
    %913 = vmatprep.mubr.bf16.mxu0 0
    %914 = vmatmul.mubr.bf16.gmra.mxu0 %v399
    %v915 = vpop.f32.mrf.mxu0
    %v916 = vadd.f32 %v837, %v915
    %v917 = vpop.f32.mrf.mxu0
    %v918 = vadd.f32 %v841, %v917
    %v919 = vpop.f32.mrf.mxu0
    %v920 = vadd.f32 %v837, %v919
    %v921 = vpop.f32.mrf.mxu0
    %v922 = vadd.f32 %v841, %v921
    %923 = vmatprep.mubr.bf16.mxu0 0
    %924 = vmatmul.mubr.bf16.gmra.mxu0 %v402
    %v925 = vpop.f32.mrf.mxu0
    %v926 = vadd.f32 %v837, %v925
    %v927 = vpop.f32.mrf.mxu0
    %v928 = vadd.f32 %v841, %v927
    %v929 = vpop.f32.mrf.mxu0
    %v930 = vadd.f32 %v837, %v929
    %v931 = vpop.f32.mrf.mxu0
    %v932 = vadd.f32 %v841, %v931
    %933 = vmatprep.mubr.bf16.mxu0 0
    %934 = vmatmul.mubr.bf16.gmra.mxu0 %v405
    %v935 = vpop.f32.mrf.mxu0
    %v936 = vadd.f32 %v837, %v935
    %v937 = vpop.f32.mrf.mxu0
    %v938 = vadd.f32 %v841, %v937
    %v939 = vpop.f32.mrf.mxu0
    %v940 = vadd.f32 %v837, %v939
    %v941 = vpop.f32.mrf.mxu0
    %v942 = vadd.f32 %v841, %v941
    %943 = vmatprep.mubr.bf16.mxu0 0
    %944 = vmatmul.mubr.bf16.gmra.mxu0 %v408
    %v945 = vpop.f32.mrf.mxu0
    %v946 = vadd.f32 %v837, %v945
    %v947 = vpop.f32.mrf.mxu0
    %v948 = vadd.f32 %v841, %v947
    %v949 = vpop.f32.mrf.mxu0
    %v950 = vadd.f32 %v837, %v949
    %v951 = vpop.f32.mrf.mxu0
    %v952 = vadd.f32 %v841, %v951
    %953 = vmatprep.mubr.bf16.mxu0 0
    %954 = vmatmul.mubr.bf16.gmra.mxu0 %v411
    %v955 = vpop.f32.mrf.mxu0
    %v956 = vadd.f32 %v837, %v955
    %v957 = vpop.f32.mrf.mxu0
    %v958 = vadd.f32 %v841, %v957
    %v959 = vpop.f32.mrf.mxu0
    %v960 = vadd.f32 %v837, %v959
    %v961 = vpop.f32.mrf.mxu0
    %v962 = vadd.f32 %v841, %v961
    %963 = vmatprep.mubr.bf16.mxu0 0
    %964 = vmatmul.mubr.bf16.gmra.mxu0 %v414
    %v965 = vpop.f32.mrf.mxu0
    %v966 = vadd.f32 %v837, %v965
    %v967 = vpop.f32.mrf.mxu0
    %v968 = vadd.f32 %v841, %v967
    %v969 = vpop.f32.mrf.mxu0
    %v970 = vadd.f32 %v837, %v969
    %v971 = vpop.f32.mrf.mxu0
    %v972 = vadd.f32 %v841, %v971
    %973 = vmatprep.mubr.bf16.mxu0 0
    %974 = vmatmul.mubr.bf16.gmra.mxu0 %v417
    %v975 = vpop.f32.mrf.mxu0
    %v976 = vadd.f32 %v837, %v975
    %v977 = vpop.f32.mrf.mxu0
    %v978 = vadd.f32 %v841, %v977
    %v979 = vpop.f32.mrf.mxu0
    %v980 = vadd.f32 %v837, %v979
    %v981 = vpop.f32.mrf.mxu0
    %v982 = vadd.f32 %v841, %v981
    %983 = vmatprep.mubr.bf16.mxu0 0
    %984 = vmatmul.mubr.bf16.gmra.mxu0 %v420
    %v985 = vpop.f32.mrf.mxu0
    %v986 = vadd.f32 %v837, %v985
    %v987 = vpop.f32.mrf.mxu0
    %v988 = vadd.f32 %v841, %v987
    %v989 = vpop.f32.mrf.mxu0
    %v990 = vadd.f32 %v837, %v989
    %v991 = vpop.f32.mrf.mxu0
    %v992 = vadd.f32 %v841, %v991
    %993 = vdwg.mxu0
    %994 = vmatprep.subr.bf16.mxu0 0
    %995 = vmatpush1.bf16.msra.mxu0 0
    %996 = vmatprep.subr.bf16.mxu0 0
    %997 = vmatpush1.bf16.msra.mxu0 0
    %998 = vmatprep.subr.bf16.mxu0 0
    %999 = vmatpush1.bf16.msra.mxu0 0
    %1000 = vmatprep.subr.bf16.mxu0 0
    %1001 = vmatpush1.bf16.msra.mxu0 0
    %1002 = vmatprep.subr.bf16.mxu0 0
    %1003 = vmatpush1.bf16.msra.mxu0 0
    %1004 = vmatprep.subr.bf16.mxu0 0
    %1005 = vmatpush1.bf16.msra.mxu0 0
    %1006 = vmatprep.subr.bf16.mxu0 0
    %1007 = vmatpush1.bf16.msra.mxu0 %v874
    %1008 = vmatprep.subr.bf16.mxu0 0
    %1009 = vmatpush1.bf16.msra.mxu0 %v871
    %1010 = vmatprep.subr.bf16.mxu0 0
    %1011 = vmatpush2.bf16.msra.mxu0 0
    %1012 = vmatprep.subr.bf16.mxu0 0
    %1013 = vmatpush2.bf16.msra.mxu0 0
    %1014 = vmatprep.subr.bf16.mxu0 0
    %1015 = vmatpush2.bf16.msra.mxu0 0
    %1016 = vmatprep.subr.bf16.mxu0 0
    %1017 = vmatpush2.bf16.msra.mxu0 0
    %1018 = vmatprep.subr.bf16.mxu0 0
    %1019 = vmatpush2.bf16.msra.mxu0 0
    %1020 = vmatprep.subr.bf16.mxu0 0
    %1021 = vmatpush2.bf16.msra.mxu0 0
    %1022 = vmatprep.subr.bf16.mxu0 0
    %1023 = vmatpush2.bf16.msra.mxu0 0
    %1024 = vmatprep.subr.bf16.mxu0 0
    %1025 = vmatpush2.bf16.msra.mxu0 0
    %1026 = vmatprep.mubr.bf16.mxu0 0
    %1027 = vmatmul.mubr.bf16.gmra.mxu0 %v399
    %v1028 = vpop.f32.mrf.mxu0
    %v1029 = vadd.f32 %v845, %v1028
    %v1030 = vpop.f32.mrf.mxu0
    %v1031 = vpop.f32.mrf.mxu0
    %v1032 = vadd.f32 %v845, %v1031
    %v1033 = vpop.f32.mrf.mxu0
    %1034 = vmatprep.mubr.bf16.mxu0 0
    %1035 = vmatmul.mubr.bf16.gmra.mxu0 %v402
    %v1036 = vpop.f32.mrf.mxu0
    %v1037 = vadd.f32 %v845, %v1036
    %v1038 = vpop.f32.mrf.mxu0
    %v1039 = vpop.f32.mrf.mxu0
    %v1040 = vadd.f32 %v845, %v1039
    %v1041 = vpop.f32.mrf.mxu0
    %1042 = vmatprep.mubr.bf16.mxu0 0
    %1043 = vmatmul.mubr.bf16.gmra.mxu0 %v405
    %v1044 = vpop.f32.mrf.mxu0
    %v1045 = vadd.f32 %v845, %v1044
    %v1046 = vpop.f32.mrf.mxu0
    %v1047 = vpop.f32.mrf.mxu0
    %v1048 = vadd.f32 %v845, %v1047
    %v1049 = vpop.f32.mrf.mxu0
    %1050 = vmatprep.mubr.bf16.mxu0 0
    %1051 = vmatmul.mubr.bf16.gmra.mxu0 %v408
    %v1052 = vpop.f32.mrf.mxu0
    %v1053 = vadd.f32 %v845, %v1052
    %v1054 = vpop.f32.mrf.mxu0
    %v1055 = vpop.f32.mrf.mxu0
    %v1056 = vadd.f32 %v845, %v1055
    %v1057 = vpop.f32.mrf.mxu0
    %1058 = vmatprep.mubr.bf16.mxu0 0
    %1059 = vmatmul.mubr.bf16.gmra.mxu0 %v411
    %v1060 = vpop.f32.mrf.mxu0
    %v1061 = vadd.f32 %v845, %v1060
    %v1062 = vpop.f32.mrf.mxu0
    %v1063 = vpop.f32.mrf.mxu0
    %v1064 = vadd.f32 %v845, %v1063
    %v1065 = vpop.f32.mrf.mxu0
    %1066 = vmatprep.mubr.bf16.mxu0 0
    %1067 = vmatmul.mubr.bf16.gmra.mxu0 %v414
    %v1068 = vpop.f32.mrf.mxu0
    %v1069 = vadd.f32 %v845, %v1068
    %v1070 = vpop.f32.mrf.mxu0
    %v1071 = vpop.f32.mrf.mxu0
    %v1072 = vadd.f32 %v845, %v1071
    %v1073 = vpop.f32.mrf.mxu0
    %1074 = vmatprep.mubr.bf16.mxu0 0
    %1075 = vmatmul.mubr.bf16.gmra.mxu0 %v417
    %v1076 = vpop.f32.mrf.mxu0
    %v1077 = vadd.f32 %v845, %v1076
    %v1078 = vpop.f32.mrf.mxu0
    %v1079 = vpop.f32.mrf.mxu0
    %v1080 = vadd.f32 %v845, %v1079
    %v1081 = vpop.f32.mrf.mxu0
    %1082 = vmatprep.mubr.bf16.mxu0 0
    %1083 = vmatmul.mubr.bf16.gmra.mxu0 %v420
    %v1084 = vpop.f32.mrf.mxu0
    %v1085 = vadd.f32 %v845, %v1084
    %v1086 = vpop.f32.mrf.mxu0
    %v1087 = vpop.f32.mrf.mxu0
    %v1088 = vadd.f32 %v845, %v1087
    %v1089 = vpop.f32.mrf.mxu0
    %1090 = vdwg.mxu0
    %v1091 = vpack.c.bf16 %v920, %v916
    %v1092 = vpack.c.bf16 %v922, %v918
    %v1093 = vpack.c.bf16 %v1032, %v1029
    %v1094 = vpack.c.bf16 %v930, %v926
    %v1095 = vpack.c.bf16 %v932, %v928
    %v1096 = vpack.c.bf16 %v1040, %v1037
    %v1097 = vpack.c.bf16 %v940, %v936
    %v1098 = vpack.c.bf16 %v942, %v938
    %v1099 = vpack.c.bf16 %v1048, %v1045
    %v1100 = vpack.c.bf16 %v950, %v946
    %v1101 = vpack.c.bf16 %v952, %v948
    %v1102 = vpack.c.bf16 %v1056, %v1053
    %v1103 = vpack.c.bf16 %v960, %v956
    %v1104 = vpack.c.bf16 %v962, %v958
    %v1105 = vpack.c.bf16 %v1064, %v1061
    %v1106 = vpack.c.bf16 %v970, %v966
    %v1107 = vpack.c.bf16 %v972, %v968
    %v1108 = vpack.c.bf16 %v1072, %v1069
    %v1109 = vpack.c.bf16 %v980, %v976
    %v1110 = vpack.c.bf16 %v982, %v978
    %v1111 = vpack.c.bf16 %v1080, %v1077
    %v1112 = vpack.c.bf16 %v990, %v986
    %v1113 = vpack.c.bf16 %v992, %v988
    %v1114 = vpack.c.bf16 %v1088, %v1085
    %v1139 = vunpack.c.l.b16 %v1091
    %v1140 = vunpack.c.l.b16 %v1092
    %v1141 = vunpack.c.l.b16 %v1093
    %v1142 = vunpack.c.h.b16 %v1091
    %v1143 = vunpack.c.h.b16 %v1092
    %v1144 = vunpack.c.h.b16 %v1093
    %v1145 = vunpack.c.l.b16 %v1094
    %v1146 = vunpack.c.l.b16 %v1095
    %v1147 = vunpack.c.l.b16 %v1096
    %v1148 = vunpack.c.h.b16 %v1094
    %v1149 = vunpack.c.h.b16 %v1095
    %v1150 = vunpack.c.h.b16 %v1096
    %v1151 = vunpack.c.l.b16 %v1097
    %v1152 = vunpack.c.l.b16 %v1098
    %v1153 = vunpack.c.l.b16 %v1099
    %v1154 = vunpack.c.h.b16 %v1097
    %v1155 = vunpack.c.h.b16 %v1098
    %v1156 = vunpack.c.h.b16 %v1099
    %v1157 = vunpack.c.l.b16 %v1100
    %v1158 = vunpack.c.l.b16 %v1101
    %v1159 = vunpack.c.l.b16 %v1102
    %v1160 = vunpack.c.h.b16 %v1100
    %v1161 = vunpack.c.h.b16 %v1101
    %v1162 = vunpack.c.h.b16 %v1102
    %v1163 = vunpack.c.l.b16 %v1103
    %v1164 = vunpack.c.l.b16 %v1104
    %v1165 = vunpack.c.l.b16 %v1105
    %v1166 = vunpack.c.h.b16 %v1103
    %v1167 = vunpack.c.h.b16 %v1104
    %v1168 = vunpack.c.h.b16 %v1105
    %v1169 = vunpack.c.l.b16 %v1106
    %v1170 = vunpack.c.l.b16 %v1107
    %v1171 = vunpack.c.l.b16 %v1108
    %v1172 = vunpack.c.h.b16 %v1106
    %v1173 = vunpack.c.h.b16 %v1107
    %v1174 = vunpack.c.h.b16 %v1108
    %v1175 = vunpack.c.l.b16 %v1109
    %v1176 = vunpack.c.l.b16 %v1110
    %v1177 = vunpack.c.l.b16 %v1111
    %v1178 = vunpack.c.h.b16 %v1109
    %v1179 = vunpack.c.h.b16 %v1110
    %v1180 = vunpack.c.h.b16 %v1111
    %v1181 = vunpack.c.l.b16 %v1112
    %v1182 = vunpack.c.l.b16 %v1113
    %v1183 = vunpack.c.l.b16 %v1114
    %v1184 = vunpack.c.h.b16 %v1112
    %v1185 = vunpack.c.h.b16 %v1113
    %v1186 = vunpack.c.h.b16 %v1114
    %v1187 = vpack.c.b16 %v1140, %v1139
    %v1188 = vpack.c.b16 %v1141, %v1141
    %v1189 = vpack.c.b16 %v1143, %v1142
    %v1190 = vpack.c.b16 %v1144, %v1144
    %v1191 = vpack.c.b16 %v1146, %v1145
    %v1192 = vpack.c.b16 %v1147, %v1147
    %v1193 = vpack.c.b16 %v1149, %v1148
    %v1194 = vpack.c.b16 %v1150, %v1150
    %v1195 = vpack.c.b16 %v1152, %v1151
    %v1196 = vpack.c.b16 %v1153, %v1153
    %v1197 = vpack.c.b16 %v1155, %v1154
    %v1198 = vpack.c.b16 %v1156, %v1156
    %v1199 = vpack.c.b16 %v1158, %v1157
    %v1200 = vpack.c.b16 %v1159, %v1159
    %v1201 = vpack.c.b16 %v1161, %v1160
    %v1202 = vpack.c.b16 %v1162, %v1162
    %v1203 = vpack.c.b16 %v1164, %v1163
    %v1204 = vpack.c.b16 %v1165, %v1165
    %v1205 = vpack.c.b16 %v1167, %v1166
    %v1206 = vpack.c.b16 %v1168, %v1168
    %v1207 = vpack.c.b16 %v1170, %v1169
    %v1208 = vpack.c.b16 %v1171, %v1171
    %v1209 = vpack.c.b16 %v1173, %v1172
    %v1210 = vpack.c.b16 %v1174, %v1174
    %v1211 = vpack.c.b16 %v1176, %v1175
    %v1212 = vpack.c.b16 %v1177, %v1177
    %v1213 = vpack.c.b16 %v1179, %v1178
    %v1214 = vpack.c.b16 %v1180, %v1180
    %v1215 = vpack.c.b16 %v1182, %v1181
    %v1216 = vpack.c.b16 %v1183, %v1183
    %v1217 = vpack.c.b16 %v1185, %v1184
    %v1218 = vpack.c.b16 %v1186, %v1186
    %1251 = vst [vmem:[#allocation3] sm:$0xff] %v1187
    %1252 = vst [vmem:[#allocation3 + $0x8] sm:$0xf] %v1188
    %1253 = vst [vmem:[#allocation3 + $0xc] sm:$0xff] %v1189
    %1254 = vst [vmem:[#allocation3 + $0x14] sm:$0xf] %v1190
    %1255 = vst [vmem:[#allocation3 + $0x18] sm:$0xff] %v1191
    %1256 = vst [vmem:[#allocation3 + $0x20] sm:$0xf] %v1192
    %1257 = vst [vmem:[#allocation3 + $0x24] sm:$0xff] %v1193
    %1258 = vst [vmem:[#allocation3 + $0x2c] sm:$0xf] %v1194
    %1259 = vst [vmem:[#allocation3 + $0x30] sm:$0xff] %v1195
    %1260 = vst [vmem:[#allocation3 + $0x38] sm:$0xf] %v1196
    %1261 = vst [vmem:[#allocation3 + $0x3c] sm:$0xff] %v1197
    %1262 = vst [vmem:[#allocation3 + $0x44] sm:$0xf] %v1198
    %1263 = vst [vmem:[#allocation3 + $0x48] sm:$0xff] %v1199
    %1264 = vst [vmem:[#allocation3 + $0x50] sm:$0xf] %v1200
    %1265 = vst [vmem:[#allocation3 + $0x54] sm:$0xff] %v1201
    %1266 = vst [vmem:[#allocation3 + $0x5c] sm:$0xf] %v1202
    %1267 = vst [vmem:[#allocation3 + $0x60] sm:$0xff] %v1203
    %1268 = vst [vmem:[#allocation3 + $0x68] sm:$0xf] %v1204
    %1269 = vst [vmem:[#allocation3 + $0x6c] sm:$0xff] %v1205
    %1270 = vst [vmem:[#allocation3 + $0x74] sm:$0xf] %v1206
    %1271 = vst [vmem:[#allocation3 + $0x78] sm:$0xff] %v1207
    %1272 = vst [vmem:[#allocation3 + $0x80] sm:$0xf] %v1208
    %1273 = vst [vmem:[#allocation3 + $0x84] sm:$0xff] %v1209
    %1274 = vst [vmem:[#allocation3 + $0x8c] sm:$0xf] %v1210
    %1275 = vst [vmem:[#allocation3 + $0x90] sm:$0xff] %v1211
    %1276 = vst [vmem:[#allocation3 + $0x98] sm:$0xf] %v1212
    %1277 = vst [vmem:[#allocation3 + $0x9c] sm:$0xff] %v1213
    %1278 = vst [vmem:[#allocation3 + $0xa4] sm:$0xf] %v1214
    %1279 = vst [vmem:[#allocation3 + $0xa8] sm:$0xff] %v1215
    %1280 = vst [vmem:[#allocation3 + $0xb0] sm:$0xf] %v1216
    %1281 = vst [vmem:[#allocation3 + $0xb4] sm:$0xff] %v1217
    %1282 = vst [vmem:[#allocation3 + $0xbc] sm:$0xf] %v1218
    %v1283 = vld [vmem:[%s9] sm:$0xff]
    %v1284 = vld [vmem:[%s9 + $0x8] sm:$0xff]
    %v1285 = vld [vmem:[%s9 + $0x10] sm:$0xff]
    %v1286 = vld [vmem:[%s9 + $0x18] sm:$0xff]
    %v1287 = vld [vmem:[%s9 + $0x20] sm:$0xff]
    %v1288 = vld [vmem:[%s9 + $0x28] sm:$0xff]
    %v1289 = vld [vmem:[%s9 + $0x30] sm:$0xff]
    %v1290 = vld [vmem:[%s9 + $0x38] sm:$0xff]
    %v1291 = vld [vmem:[#allocation18] sm:$0xf]
    %v1293 = vlaneseq
    %v1294 = vshrl.u32 %v1293, 7
    %v1295 = vsub.s32 0, %v1294
    %v1296 = vrot.slane %v1291, %v1295
    %v1297 = vlaneseq
    %v1298 = vshrl.u32 %v1297, 7
    %v1299 = vsub.s32 1, %v1298
    %v1300 = vrot.slane %v1291, %v1299
    %v1301 = vlaneseq
    %v1302 = vshrl.u32 %v1301, 7
    %v1303 = vsub.s32 2, %v1302
    %v1304 = vrot.slane %v1291, %v1303
    %v1305 = vlaneseq
    %v1306 = vshrl.u32 %v1305, 7
    %v1307 = vsub.s32 3, %v1306
    %v1308 = vrot.slane %v1291, %v1307
    %v1321 = vunpack.c.l.b16 %v1283
    %v1322 = vunpack.c.h.b16 %v1283
    %v1323 = vunpack.c.l.b16 %v1284
    %v1324 = vunpack.c.h.b16 %v1284
    %v1325 = vunpack.c.l.b16 %v1285
    %v1326 = vunpack.c.h.b16 %v1285
    %v1327 = vunpack.c.l.b16 %v1286
    %v1328 = vunpack.c.h.b16 %v1286
    %v1329 = vunpack.c.l.b16 %v1287
    %v1330 = vunpack.c.h.b16 %v1287
    %v1331 = vunpack.c.l.b16 %v1288
    %v1332 = vunpack.c.h.b16 %v1288
    %v1333 = vunpack.c.l.b16 %v1289
    %v1334 = vunpack.c.h.b16 %v1289
    %v1335 = vunpack.c.l.b16 %v1290
    %v1336 = vunpack.c.h.b16 %v1290
    %v1337 = vpack.c.b16 %v1325, %v1321
    %v1338 = vpack.c.b16 %v1326, %v1322
    %v1339 = vpack.c.b16 %v1327, %v1323
    %v1340 = vpack.c.b16 %v1328, %v1324
    %v1341 = vpack.c.b16 %v1333, %v1329
    %v1342 = vpack.c.b16 %v1334, %v1330
    %v1343 = vpack.c.b16 %v1335, %v1331
    %v1344 = vpack.c.b16 %v1336, %v1332
    %1353 = vmatprep.subr.bf16.mxu0 0
    %1354 = vmatpush1.bf16.msra.mxu0 0
    %1355 = vmatprep.subr.bf16.mxu0 0
    %1356 = vmatpush1.bf16.msra.mxu0 0
    %1357 = vmatprep.subr.bf16.mxu0 0
    %1358 = vmatpush1.bf16.msra.mxu0 0
    %1359 = vmatprep.subr.bf16.mxu0 0
    %1360 = vmatpush1.bf16.msra.mxu0 0
    %1361 = vmatprep.subr.bf16.mxu0 0
    %1362 = vmatpush1.bf16.msra.mxu0 0
    %1363 = vmatprep.subr.bf16.mxu0 0
    %1364 = vmatpush1.bf16.msra.mxu0 0
    %1365 = vmatprep.subr.bf16.mxu0 %v1342
    %1366 = vmatpush1.bf16.msra.mxu0 %v1341
    %1367 = vmatprep.subr.bf16.mxu0 %v1338
    %1368 = vmatpush1.bf16.msra.mxu0 %v1337
    %1369 = vmatprep.subr.bf16.mxu0 0
    %1370 = vmatpush2.bf16.msra.mxu0 0
    %1371 = vmatprep.subr.bf16.mxu0 0
    %1372 = vmatpush2.bf16.msra.mxu0 0
    %1373 = vmatprep.subr.bf16.mxu0 0
    %1374 = vmatpush2.bf16.msra.mxu0 0
    %1375 = vmatprep.subr.bf16.mxu0 0
    %1376 = vmatpush2.bf16.msra.mxu0 0
    %1377 = vmatprep.subr.bf16.mxu0 0
    %1378 = vmatpush2.bf16.msra.mxu0 0
    %1379 = vmatprep.subr.bf16.mxu0 0
    %1380 = vmatpush2.bf16.msra.mxu0 0
    %1381 = vmatprep.subr.bf16.mxu0 0
    %1382 = vmatpush2.bf16.msra.mxu0 0
    %1383 = vmatprep.subr.bf16.mxu0 0
    %1384 = vmatpush2.bf16.msra.mxu0 0
    %1385 = vmatprep.mubr.bf16.mxu0 0
    %1386 = vmatmul.mubr.bf16.gmra.mxu0 %v399
    %v1387 = vpop.f32.mrf.mxu0
    %v1388 = vadd.f32 %v1296, %v1387
    %v1389 = vpop.f32.mrf.mxu0
    %v1390 = vadd.f32 %v1300, %v1389
    %v1391 = vpop.f32.mrf.mxu0
    %v1392 = vadd.f32 %v1296, %v1391
    %v1393 = vpop.f32.mrf.mxu0
    %v1394 = vadd.f32 %v1300, %v1393
    %1395 = vmatprep.mubr.bf16.mxu0 0
    %1396 = vmatmul.mubr.bf16.gmra.mxu0 %v402
    %v1397 = vpop.f32.mrf.mxu0
    %v1398 = vadd.f32 %v1296, %v1397
    %v1399 = vpop.f32.mrf.mxu0
    %v1400 = vadd.f32 %v1300, %v1399
    %v1401 = vpop.f32.mrf.mxu0
    %v1402 = vadd.f32 %v1296, %v1401
    %v1403 = vpop.f32.mrf.mxu0
    %v1404 = vadd.f32 %v1300, %v1403
    %1405 = vmatprep.mubr.bf16.mxu0 0
    %1406 = vmatmul.mubr.bf16.gmra.mxu0 %v405
    %v1407 = vpop.f32.mrf.mxu0
    %v1408 = vadd.f32 %v1296, %v1407
    %v1409 = vpop.f32.mrf.mxu0
    %v1410 = vadd.f32 %v1300, %v1409
    %v1411 = vpop.f32.mrf.mxu0
    %v1412 = vadd.f32 %v1296, %v1411
    %v1413 = vpop.f32.mrf.mxu0
    %v1414 = vadd.f32 %v1300, %v1413
    %1415 = vmatprep.mubr.bf16.mxu0 0
    %1416 = vmatmul.mubr.bf16.gmra.mxu0 %v408
    %v1417 = vpop.f32.mrf.mxu0
    %v1418 = vadd.f32 %v1296, %v1417
    %v1419 = vpop.f32.mrf.mxu0
    %v1420 = vadd.f32 %v1300, %v1419
    %v1421 = vpop.f32.mrf.mxu0
    %v1422 = vadd.f32 %v1296, %v1421
    %v1423 = vpop.f32.mrf.mxu0
    %v1424 = vadd.f32 %v1300, %v1423
    %1425 = vmatprep.mubr.bf16.mxu0 0
    %1426 = vmatmul.mubr.bf16.gmra.mxu0 %v411
    %v1427 = vpop.f32.mrf.mxu0
    %v1428 = vadd.f32 %v1296, %v1427
    %v1429 = vpop.f32.mrf.mxu0
    %v1430 = vadd.f32 %v1300, %v1429
    %v1431 = vpop.f32.mrf.mxu0
    %v1432 = vadd.f32 %v1296, %v1431
    %v1433 = vpop.f32.mrf.mxu0
    %v1434 = vadd.f32 %v1300, %v1433
    %1435 = vmatprep.mubr.bf16.mxu0 0
    %1436 = vmatmul.mubr.bf16.gmra.mxu0 %v414
    %v1437 = vpop.f32.mrf.mxu0
    %v1438 = vadd.f32 %v1296, %v1437
    %v1439 = vpop.f32.mrf.mxu0
    %v1440 = vadd.f32 %v1300, %v1439
    %v1441 = vpop.f32.mrf.mxu0
    %v1442 = vadd.f32 %v1296, %v1441
    %v1443 = vpop.f32.mrf.mxu0
    %v1444 = vadd.f32 %v1300, %v1443
    %1445 = vmatprep.mubr.bf16.mxu0 0
    %1446 = vmatmul.mubr.bf16.gmra.mxu0 %v417
    %v1447 = vpop.f32.mrf.mxu0
    %v1448 = vadd.f32 %v1296, %v1447
    %v1449 = vpop.f32.mrf.mxu0
    %v1450 = vadd.f32 %v1300, %v1449
    %v1451 = vpop.f32.mrf.mxu0
    %v1452 = vadd.f32 %v1296, %v1451
    %v1453 = vpop.f32.mrf.mxu0
    %v1454 = vadd.f32 %v1300, %v1453
    %1455 = vmatprep.mubr.bf16.mxu0 0
    %1456 = vmatmul.mubr.bf16.gmra.mxu0 %v420
    %v1457 = vpop.f32.mrf.mxu0
    %v1458 = vadd.f32 %v1296, %v1457
    %v1459 = vpop.f32.mrf.mxu0
    %v1460 = vadd.f32 %v1300, %v1459
    %v1461 = vpop.f32.mrf.mxu0
    %v1462 = vadd.f32 %v1296, %v1461
    %v1463 = vpop.f32.mrf.mxu0
    %v1464 = vadd.f32 %v1300, %v1463
    %1465 = vdwg.mxu0
    %1466 = vmatprep.subr.bf16.mxu0 0
    %1467 = vmatpush1.bf16.msra.mxu0 0
    %1468 = vmatprep.subr.bf16.mxu0 0
    %1469 = vmatpush1.bf16.msra.mxu0 0
    %1470 = vmatprep.subr.bf16.mxu0 0
    %1471 = vmatpush1.bf16.msra.mxu0 0
    %1472 = vmatprep.subr.bf16.mxu0 0
    %1473 = vmatpush1.bf16.msra.mxu0 0
    %1474 = vmatprep.subr.bf16.mxu0 0
    %1475 = vmatpush1.bf16.msra.mxu0 0
    %1476 = vmatprep.subr.bf16.mxu0 0
    %1477 = vmatpush1.bf16.msra.mxu0 0
    %1478 = vmatprep.subr.bf16.mxu0 %v1344
    %1479 = vmatpush1.bf16.msra.mxu0 %v1343
    %1480 = vmatprep.subr.bf16.mxu0 %v1340
    %1481 = vmatpush1.bf16.msra.mxu0 %v1339
    %1482 = vmatprep.subr.bf16.mxu0 0
    %1483 = vmatpush2.bf16.msra.mxu0 0
    %1484 = vmatprep.subr.bf16.mxu0 0
    %1485 = vmatpush2.bf16.msra.mxu0 0
    %1486 = vmatprep.subr.bf16.mxu0 0
    %1487 = vmatpush2.bf16.msra.mxu0 0
    %1488 = vmatprep.subr.bf16.mxu0 0
    %1489 = vmatpush2.bf16.msra.mxu0 0
    %1490 = vmatprep.subr.bf16.mxu0 0
    %1491 = vmatpush2.bf16.msra.mxu0 0
    %1492 = vmatprep.subr.bf16.mxu0 0
    %1493 = vmatpush2.bf16.msra.mxu0 0
    %1494 = vmatprep.subr.bf16.mxu0 0
    %1495 = vmatpush2.bf16.msra.mxu0 0
    %1496 = vmatprep.subr.bf16.mxu0 0
    %1497 = vmatpush2.bf16.msra.mxu0 0
    %1498 = vmatprep.mubr.bf16.mxu0 0
    %1499 = vmatmul.mubr.bf16.gmra.mxu0 %v399
    %v1500 = vpop.f32.mrf.mxu0
    %v1501 = vadd.f32 %v1304, %v1500
    %v1502 = vpop.f32.mrf.mxu0
    %v1503 = vadd.f32 %v1308, %v1502
    %v1504 = vpop.f32.mrf.mxu0
    %v1505 = vadd.f32 %v1304, %v1504
    %v1506 = vpop.f32.mrf.mxu0
    %v1507 = vadd.f32 %v1308, %v1506
    %1508 = vmatprep.mubr.bf16.mxu0 0
    %1509 = vmatmul.mubr.bf16.gmra.mxu0 %v402
    %v1510 = vpop.f32.mrf.mxu0
    %v1511 = vadd.f32 %v1304, %v1510
    %v1512 = vpop.f32.mrf.mxu0
    %v1513 = vadd.f32 %v1308, %v1512
    %v1514 = vpop.f32.mrf.mxu0
    %v1515 = vadd.f32 %v1304, %v1514
    %v1516 = vpop.f32.mrf.mxu0
    %v1517 = vadd.f32 %v1308, %v1516
    %1518 = vmatprep.mubr.bf16.mxu0 0
    %1519 = vmatmul.mubr.bf16.gmra.mxu0 %v405
    %v1520 = vpop.f32.mrf.mxu0
    %v1521 = vadd.f32 %v1304, %v1520
    %v1522 = vpop.f32.mrf.mxu0
    %v1523 = vadd.f32 %v1308, %v1522
    %v1524 = vpop.f32.mrf.mxu0
    %v1525 = vadd.f32 %v1304, %v1524
    %v1526 = vpop.f32.mrf.mxu0
    %v1527 = vadd.f32 %v1308, %v1526
    %1528 = vmatprep.mubr.bf16.mxu0 0
    %1529 = vmatmul.mubr.bf16.gmra.mxu0 %v408
    %v1530 = vpop.f32.mrf.mxu0
    %v1531 = vadd.f32 %v1304, %v1530
    %v1532 = vpop.f32.mrf.mxu0
    %v1533 = vadd.f32 %v1308, %v1532
    %v1534 = vpop.f32.mrf.mxu0
    %v1535 = vadd.f32 %v1304, %v1534
    %v1536 = vpop.f32.mrf.mxu0
    %v1537 = vadd.f32 %v1308, %v1536
    %1538 = vmatprep.mubr.bf16.mxu0 0
    %1539 = vmatmul.mubr.bf16.gmra.mxu0 %v411
    %v1540 = vpop.f32.mrf.mxu0
    %v1541 = vadd.f32 %v1304, %v1540
    %v1542 = vpop.f32.mrf.mxu0
    %v1543 = vadd.f32 %v1308, %v1542
    %v1544 = vpop.f32.mrf.mxu0
    %v1545 = vadd.f32 %v1304, %v1544
    %v1546 = vpop.f32.mrf.mxu0
    %v1547 = vadd.f32 %v1308, %v1546
    %1548 = vmatprep.mubr.bf16.mxu0 0
    %1549 = vmatmul.mubr.bf16.gmra.mxu0 %v414
    %v1550 = vpop.f32.mrf.mxu0
    %v1551 = vadd.f32 %v1304, %v1550
    %v1552 = vpop.f32.mrf.mxu0
    %v1553 = vadd.f32 %v1308, %v1552
    %v1554 = vpop.f32.mrf.mxu0
    %v1555 = vadd.f32 %v1304, %v1554
    %v1556 = vpop.f32.mrf.mxu0
    %v1557 = vadd.f32 %v1308, %v1556
    %1558 = vmatprep.mubr.bf16.mxu0 0
    %1559 = vmatmul.mubr.bf16.gmra.mxu0 %v417
    %v1560 = vpop.f32.mrf.mxu0
    %v1561 = vadd.f32 %v1304, %v1560
    %v1562 = vpop.f32.mrf.mxu0
    %v1563 = vadd.f32 %v1308, %v1562
    %v1564 = vpop.f32.mrf.mxu0
    %v1565 = vadd.f32 %v1304, %v1564
    %v1566 = vpop.f32.mrf.mxu0
    %v1567 = vadd.f32 %v1308, %v1566
    %1568 = vmatprep.mubr.bf16.mxu0 0
    %1569 = vmatmul.mubr.bf16.gmra.mxu0 %v420
    %v1570 = vpop.f32.mrf.mxu0
    %v1571 = vadd.f32 %v1304, %v1570
    %v1572 = vpop.f32.mrf.mxu0
    %v1573 = vadd.f32 %v1308, %v1572
    %v1574 = vpop.f32.mrf.mxu0
    %v1575 = vadd.f32 %v1304, %v1574
    %v1576 = vpop.f32.mrf.mxu0
    %v1577 = vadd.f32 %v1308, %v1576
    %1578 = vdwg.mxu0
    %v1579 = vpack.c.bf16 %v1392, %v1388
    %v1580 = vpack.c.bf16 %v1394, %v1390
    %v1581 = vpack.c.bf16 %v1505, %v1501
    %v1582 = vpack.c.bf16 %v1507, %v1503
    %v1583 = vpack.c.bf16 %v1402, %v1398
    %v1584 = vpack.c.bf16 %v1404, %v1400
    %v1585 = vpack.c.bf16 %v1515, %v1511
    %v1586 = vpack.c.bf16 %v1517, %v1513
    %v1587 = vpack.c.bf16 %v1412, %v1408
    %v1588 = vpack.c.bf16 %v1414, %v1410
    %v1589 = vpack.c.bf16 %v1525, %v1521
    %v1590 = vpack.c.bf16 %v1527, %v1523
    %v1591 = vpack.c.bf16 %v1422, %v1418
    %v1592 = vpack.c.bf16 %v1424, %v1420
    %v1593 = vpack.c.bf16 %v1535, %v1531
    %v1594 = vpack.c.bf16 %v1537, %v1533
    %v1595 = vpack.c.bf16 %v1432, %v1428
    %v1596 = vpack.c.bf16 %v1434, %v1430
    %v1597 = vpack.c.bf16 %v1545, %v1541
    %v1598 = vpack.c.bf16 %v1547, %v1543
    %v1599 = vpack.c.bf16 %v1442, %v1438
    %v1600 = vpack.c.bf16 %v1444, %v1440
    %v1601 = vpack.c.bf16 %v1555, %v1551
    %v1602 = vpack.c.bf16 %v1557, %v1553
    %v1603 = vpack.c.bf16 %v1452, %v1448
    %v1604 = vpack.c.bf16 %v1454, %v1450
    %v1605 = vpack.c.bf16 %v1565, %v1561
    %v1606 = vpack.c.bf16 %v1567, %v1563
    %v1607 = vpack.c.bf16 %v1462, %v1458
    %v1608 = vpack.c.bf16 %v1464, %v1460
    %v1609 = vpack.c.bf16 %v1575, %v1571
    %v1610 = vpack.c.bf16 %v1577, %v1573
    %v1643 = vunpack.c.l.b16 %v1579
    %v1644 = vunpack.c.l.b16 %v1580
    %v1645 = vunpack.c.l.b16 %v1581
    %v1646 = vunpack.c.l.b16 %v1582
    %v1647 = vunpack.c.h.b16 %v1579
    %v1648 = vunpack.c.h.b16 %v1580
    %v1649 = vunpack.c.h.b16 %v1581
    %v1650 = vunpack.c.h.b16 %v1582
    %v1651 = vunpack.c.l.b16 %v1583
    %v1652 = vunpack.c.l.b16 %v1584
    %v1653 = vunpack.c.l.b16 %v1585
    %v1654 = vunpack.c.l.b16 %v1586
    %v1655 = vunpack.c.h.b16 %v1583
    %v1656 = vunpack.c.h.b16 %v1584
    %v1657 = vunpack.c.h.b16 %v1585
    %v1658 = vunpack.c.h.b16 %v1586
    %v1659 = vunpack.c.l.b16 %v1587
    %v1660 = vunpack.c.l.b16 %v1588
    %v1661 = vunpack.c.l.b16 %v1589
    %v1662 = vunpack.c.l.b16 %v1590
    %v1663 = vunpack.c.h.b16 %v1587
    %v1664 = vunpack.c.h.b16 %v1588
    %v1665 = vunpack.c.h.b16 %v1589
    %v1666 = vunpack.c.h.b16 %v1590
    %v1667 = vunpack.c.l.b16 %v1591
    %v1668 = vunpack.c.l.b16 %v1592
    %v1669 = vunpack.c.l.b16 %v1593
    %v1670 = vunpack.c.l.b16 %v1594
    %v1671 = vunpack.c.h.b16 %v1591
    %v1672 = vunpack.c.h.b16 %v1592
    %v1673 = vunpack.c.h.b16 %v1593
    %v1674 = vunpack.c.h.b16 %v1594
    %v1675 = vunpack.c.l.b16 %v1595
    %v1676 = vunpack.c.l.b16 %v1596
    %v1677 = vunpack.c.l.b16 %v1597
    %v1678 = vunpack.c.l.b16 %v1598
    %v1679 = vunpack.c.h.b16 %v1595
    %v1680 = vunpack.c.h.b16 %v1596
    %v1681 = vunpack.c.h.b16 %v1597
    %v1682 = vunpack.c.h.b16 %v1598
    %v1683 = vunpack.c.l.b16 %v1599
    %v1684 = vunpack.c.l.b16 %v1600
    %v1685 = vunpack.c.l.b16 %v1601
    %v1686 = vunpack.c.l.b16 %v1602
    %v1687 = vunpack.c.h.b16 %v1599
    %v1688 = vunpack.c.h.b16 %v1600
    %v1689 = vunpack.c.h.b16 %v1601
    %v1690 = vunpack.c.h.b16 %v1602
    %v1691 = vunpack.c.l.b16 %v1603
    %v1692 = vunpack.c.l.b16 %v1604
    %v1693 = vunpack.c.l.b16 %v1605
    %v1694 = vunpack.c.l.b16 %v1606
    %v1695 = vunpack.c.h.b16 %v1603
    %v1696 = vunpack.c.h.b16 %v1604
    %v1697 = vunpack.c.h.b16 %v1605
    %v1698 = vunpack.c.h.b16 %v1606
    %v1699 = vunpack.c.l.b16 %v1607
    %v1700 = vunpack.c.l.b16 %v1608
    %v1701 = vunpack.c.l.b16 %v1609
    %v1702 = vunpack.c.l.b16 %v1610
    %v1703 = vunpack.c.h.b16 %v1607
    %v1704 = vunpack.c.h.b16 %v1608
    %v1705 = vunpack.c.h.b16 %v1609
    %v1706 = vunpack.c.h.b16 %v1610
    %v1707 = vpack.c.b16 %v1644, %v1643
    %v1708 = vpack.c.b16 %v1646, %v1645
    %v1709 = vpack.c.b16 %v1648, %v1647
    %v1710 = vpack.c.b16 %v1650, %v1649
    %v1711 = vpack.c.b16 %v1652, %v1651
    %v1712 = vpack.c.b16 %v1654, %v1653
    %v1713 = vpack.c.b16 %v1656, %v1655
    %v1714 = vpack.c.b16 %v1658, %v1657
    %v1715 = vpack.c.b16 %v1660, %v1659
    %v1716 = vpack.c.b16 %v1662, %v1661
    %v1717 = vpack.c.b16 %v1664, %v1663
    %v1718 = vpack.c.b16 %v1666, %v1665
    %v1719 = vpack.c.b16 %v1668, %v1667
    %v1720 = vpack.c.b16 %v1670, %v1669
    %v1721 = vpack.c.b16 %v1672, %v1671
    %v1722 = vpack.c.b16 %v1674, %v1673
    %v1723 = vpack.c.b16 %v1676, %v1675
    %v1724 = vpack.c.b16 %v1678, %v1677
    %v1725 = vpack.c.b16 %v1680, %v1679
    %v1726 = vpack.c.b16 %v1682, %v1681
    %v1727 = vpack.c.b16 %v1684, %v1683
    %v1728 = vpack.c.b16 %v1686, %v1685
    %v1729 = vpack.c.b16 %v1688, %v1687
    %v1730 = vpack.c.b16 %v1690, %v1689
    %v1731 = vpack.c.b16 %v1692, %v1691
    %v1732 = vpack.c.b16 %v1694, %v1693
    %v1733 = vpack.c.b16 %v1696, %v1695
    %v1734 = vpack.c.b16 %v1698, %v1697
    %v1735 = vpack.c.b16 %v1700, %v1699
    %v1736 = vpack.c.b16 %v1702, %v1701
    %v1737 = vpack.c.b16 %v1704, %v1703
    %v1738 = vpack.c.b16 %v1706, %v1705
    %1771 = vst [vmem:[#allocation4] sm:$0xff] %v1707
    %1772 = vst [vmem:[#allocation4 + $0x8] sm:$0xff] %v1708
    %1773 = vst [vmem:[#allocation4 + $0x10] sm:$0xff] %v1709
    %1774 = vst [vmem:[#allocation4 + $0x18] sm:$0xff] %v1710
    %1775 = vst [vmem:[#allocation4 + $0x20] sm:$0xff] %v1711
    %1776 = vst [vmem:[#allocation4 + $0x28] sm:$0xff] %v1712
    %1777 = vst [vmem:[#allocation4 + $0x30] sm:$0xff] %v1713
    %1778 = vst [vmem:[#allocation4 + $0x38] sm:$0xff] %v1714
    %1779 = vst [vmem:[#allocation4 + $0x40] sm:$0xff] %v1715
    %1780 = vst [vmem:[#allocation4 + $0x48] sm:$0xff] %v1716
    %1781 = vst [vmem:[#allocation4 + $0x50] sm:$0xff] %v1717
    %1782 = vst [vmem:[#allocation4 + $0x58] sm:$0xff] %v1718
    %1783 = vst [vmem:[#allocation4 + $0x60] sm:$0xff] %v1719
    %1784 = vst [vmem:[#allocation4 + $0x68] sm:$0xff] %v1720
    %1785 = vst [vmem:[#allocation4 + $0x70] sm:$0xff] %v1721
    %1786 = vst [vmem:[#allocation4 + $0x78] sm:$0xff] %v1722
    %1787 = vst [vmem:[#allocation4 + $0x80] sm:$0xff] %v1723
    %1788 = vst [vmem:[#allocation4 + $0x88] sm:$0xff] %v1724
    %1789 = vst [vmem:[#allocation4 + $0x90] sm:$0xff] %v1725
    %1790 = vst [vmem:[#allocation4 + $0x98] sm:$0xff] %v1726
    %1791 = vst [vmem:[#allocation4 + $0xa0] sm:$0xff] %v1727
    %1792 = vst [vmem:[#allocation4 + $0xa8] sm:$0xff] %v1728
    %1793 = vst [vmem:[#allocation4 + $0xb0] sm:$0xff] %v1729
    %1794 = vst [vmem:[#allocation4 + $0xb8] sm:$0xff] %v1730
    %1795 = vst [vmem:[#allocation4 + $0xc0] sm:$0xff] %v1731
    %1796 = vst [vmem:[#allocation4 + $0xc8] sm:$0xff] %v1732
    %1797 = vst [vmem:[#allocation4 + $0xd0] sm:$0xff] %v1733
    %1798 = vst [vmem:[#allocation4 + $0xd8] sm:$0xff] %v1734
    %1799 = vst [vmem:[#allocation4 + $0xe0] sm:$0xff] %v1735
    %1800 = vst [vmem:[#allocation4 + $0xe8] sm:$0xff] %v1736
    %1801 = vst [vmem:[#allocation4 + $0xf0] sm:$0xff] %v1737
    %1802 = vst [vmem:[#allocation4 + $0xf8] sm:$0xff] %v1738
    %v1803 = vld [vmem:[%s12] sm:$0xff]
    %v1804 = vld [vmem:[%s12 + $0x8] sm:$0xff]
    %v1805 = vld [vmem:[%s12 + $0x10] sm:$0xff]
    %v1806 = vld [vmem:[%s12 + $0x18] sm:$0xff]
    %v1807 = vld [vmem:[%s12 + $0x20] sm:$0xff]
    %v1808 = vld [vmem:[%s12 + $0x28] sm:$0xff]
    %v1809 = vld [vmem:[%s12 + $0x30] sm:$0xff]
    %v1810 = vld [vmem:[%s12 + $0x38] sm:$0xff]
    %v1811 = vld [vmem:[#allocation20] sm:$0xf]
    %v1813 = vlaneseq
    %v1814 = vshrl.u32 %v1813, 7
    %v1815 = vsub.s32 0, %v1814
    %v1816 = vrot.slane %v1811, %v1815
    %v1817 = vlaneseq
    %v1818 = vshrl.u32 %v1817, 7
    %v1819 = vsub.s32 1, %v1818
    %v1820 = vrot.slane %v1811, %v1819
    %v1821 = vlaneseq
    %v1822 = vshrl.u32 %v1821, 7
    %v1823 = vsub.s32 2, %v1822
    %v1824 = vrot.slane %v1811, %v1823
    %v1825 = vlaneseq
    %v1826 = vshrl.u32 %v1825, 7
    %v1827 = vsub.s32 3, %v1826
    %v1828 = vrot.slane %v1811, %v1827
    %v1841 = vunpack.c.l.b16 %v1803
    %v1842 = vunpack.c.h.b16 %v1803
    %v1843 = vunpack.c.l.b16 %v1804
    %v1844 = vunpack.c.h.b16 %v1804
    %v1845 = vunpack.c.l.b16 %v1805
    %v1846 = vunpack.c.h.b16 %v1805
    %v1847 = vunpack.c.l.b16 %v1806
    %v1848 = vunpack.c.h.b16 %v1806
    %v1849 = vunpack.c.l.b16 %v1807
    %v1850 = vunpack.c.h.b16 %v1807
    %v1851 = vunpack.c.l.b16 %v1808
    %v1852 = vunpack.c.h.b16 %v1808
    %v1853 = vunpack.c.l.b16 %v1809
    %v1854 = vunpack.c.h.b16 %v1809
    %v1855 = vunpack.c.l.b16 %v1810
    %v1856 = vunpack.c.h.b16 %v1810
    %v1857 = vpack.c.b16 %v1845, %v1841
    %v1858 = vpack.c.b16 %v1846, %v1842
    %v1859 = vpack.c.b16 %v1847, %v1843
    %v1860 = vpack.c.b16 %v1848, %v1844
    %v1861 = vpack.c.b16 %v1853, %v1849
    %v1862 = vpack.c.b16 %v1854, %v1850
    %v1863 = vpack.c.b16 %v1855, %v1851
    %v1864 = vpack.c.b16 %v1856, %v1852
    %1873 = vmatprep.subr.bf16.mxu0 0
    %1874 = vmatpush1.bf16.msra.mxu0 0
    %1875 = vmatprep.subr.bf16.mxu0 0
    %1876 = vmatpush1.bf16.msra.mxu0 0
    %1877 = vmatprep.subr.bf16.mxu0 0
    %1878 = vmatpush1.bf16.msra.mxu0 0
    %1879 = vmatprep.subr.bf16.mxu0 0
    %1880 = vmatpush1.bf16.msra.mxu0 0
    %1881 = vmatprep.subr.bf16.mxu0 0
    %1882 = vmatpush1.bf16.msra.mxu0 0
    %1883 = vmatprep.subr.bf16.mxu0 0
    %1884 = vmatpush1.bf16.msra.mxu0 0
    %1885 = vmatprep.subr.bf16.mxu0 %v1862
    %1886 = vmatpush1.bf16.msra.mxu0 %v1861
    %1887 = vmatprep.subr.bf16.mxu0 %v1858
    %1888 = vmatpush1.bf16.msra.mxu0 %v1857
    %1889 = vmatprep.subr.bf16.mxu0 0
    %1890 = vmatpush2.bf16.msra.mxu0 0
    %1891 = vmatprep.subr.bf16.mxu0 0
    %1892 = vmatpush2.bf16.msra.mxu0 0
    %1893 = vmatprep.subr.bf16.mxu0 0
    %1894 = vmatpush2.bf16.msra.mxu0 0
    %1895 = vmatprep.subr.bf16.mxu0 0
    %1896 = vmatpush2.bf16.msra.mxu0 0
    %1897 = vmatprep.subr.bf16.mxu0 0
    %1898 = vmatpush2.bf16.msra.mxu0 0
    %1899 = vmatprep.subr.bf16.mxu0 0
    %1900 = vmatpush2.bf16.msra.mxu0 0
    %1901 = vmatprep.subr.bf16.mxu0 0
    %1902 = vmatpush2.bf16.msra.mxu0 0
    %1903 = vmatprep.subr.bf16.mxu0 0
    %1904 = vmatpush2.bf16.msra.mxu0 0
    %1905 = vmatprep.mubr.bf16.mxu0 0
    %1906 = vmatmul.mubr.bf16.gmra.mxu0 %v399
    %v1907 = vpop.f32.mrf.mxu0
    %v1908 = vadd.f32 %v1816, %v1907
    %v1909 = vpop.f32.mrf.mxu0
    %v1910 = vadd.f32 %v1820, %v1909
    %v1911 = vpop.f32.mrf.mxu0
    %v1912 = vadd.f32 %v1816, %v1911
    %v1913 = vpop.f32.mrf.mxu0
    %v1914 = vadd.f32 %v1820, %v1913
    %1915 = vmatprep.mubr.bf16.mxu0 0
    %1916 = vmatmul.mubr.bf16.gmra.mxu0 %v402
    %v1917 = vpop.f32.mrf.mxu0
    %v1918 = vadd.f32 %v1816, %v1917
    %v1919 = vpop.f32.mrf.mxu0
    %v1920 = vadd.f32 %v1820, %v1919
    %v1921 = vpop.f32.mrf.mxu0
    %v1922 = vadd.f32 %v1816, %v1921
    %v1923 = vpop.f32.mrf.mxu0
    %v1924 = vadd.f32 %v1820, %v1923
    %1925 = vmatprep.mubr.bf16.mxu0 0
    %1926 = vmatmul.mubr.bf16.gmra.mxu0 %v405
    %v1927 = vpop.f32.mrf.mxu0
    %v1928 = vadd.f32 %v1816, %v1927
    %v1929 = vpop.f32.mrf.mxu0
    %v1930 = vadd.f32 %v1820, %v1929
    %v1931 = vpop.f32.mrf.mxu0
    %v1932 = vadd.f32 %v1816, %v1931
    %v1933 = vpop.f32.mrf.mxu0
    %v1934 = vadd.f32 %v1820, %v1933
    %1935 = vmatprep.mubr.bf16.mxu0 0
    %1936 = vmatmul.mubr.bf16.gmra.mxu0 %v408
    %v1937 = vpop.f32.mrf.mxu0
    %v1938 = vadd.f32 %v1816, %v1937
    %v1939 = vpop.f32.mrf.mxu0
    %v1940 = vadd.f32 %v1820, %v1939
    %v1941 = vpop.f32.mrf.mxu0
    %v1942 = vadd.f32 %v1816, %v1941
    %v1943 = vpop.f32.mrf.mxu0
    %v1944 = vadd.f32 %v1820, %v1943
    %1945 = vmatprep.mubr.bf16.mxu0 0
    %1946 = vmatmul.mubr.bf16.gmra.mxu0 %v411
    %v1947 = vpop.f32.mrf.mxu0
    %v1948 = vadd.f32 %v1816, %v1947
    %v1949 = vpop.f32.mrf.mxu0
    %v1950 = vadd.f32 %v1820, %v1949
    %v1951 = vpop.f32.mrf.mxu0
    %v1952 = vadd.f32 %v1816, %v1951
    %v1953 = vpop.f32.mrf.mxu0
    %v1954 = vadd.f32 %v1820, %v1953
    %1955 = vmatprep.mubr.bf16.mxu0 0
    %1956 = vmatmul.mubr.bf16.gmra.mxu0 %v414
    %v1957 = vpop.f32.mrf.mxu0
    %v1958 = vadd.f32 %v1816, %v1957
    %v1959 = vpop.f32.mrf.mxu0
    %v1960 = vadd.f32 %v1820, %v1959
    %v1961 = vpop.f32.mrf.mxu0
    %v1962 = vadd.f32 %v1816, %v1961
    %v1963 = vpop.f32.mrf.mxu0
    %v1964 = vadd.f32 %v1820, %v1963
    %1965 = vmatprep.mubr.bf16.mxu0 0
    %1966 = vmatmul.mubr.bf16.gmra.mxu0 %v417
    %v1967 = vpop.f32.mrf.mxu0
    %v1968 = vadd.f32 %v1816, %v1967
    %v1969 = vpop.f32.mrf.mxu0
    %v1970 = vadd.f32 %v1820, %v1969
    %v1971 = vpop.f32.mrf.mxu0
    %v1972 = vadd.f32 %v1816, %v1971
    %v1973 = vpop.f32.mrf.mxu0
    %v1974 = vadd.f32 %v1820, %v1973
    %1975 = vmatprep.mubr.bf16.mxu0 0
    %1976 = vmatmul.mubr.bf16.gmra.mxu0 %v420
    %v1977 = vpop.f32.mrf.mxu0
    %v1978 = vadd.f32 %v1816, %v1977
    %v1979 = vpop.f32.mrf.mxu0
    %v1980 = vadd.f32 %v1820, %v1979
    %v1981 = vpop.f32.mrf.mxu0
    %v1982 = vadd.f32 %v1816, %v1981
    %v1983 = vpop.f32.mrf.mxu0
    %v1984 = vadd.f32 %v1820, %v1983
    %1985 = vdwg.mxu0
    %1986 = vmatprep.subr.bf16.mxu0 0
    %1987 = vmatpush1.bf16.msra.mxu0 0
    %1988 = vmatprep.subr.bf16.mxu0 0
    %1989 = vmatpush1.bf16.msra.mxu0 0
    %1990 = vmatprep.subr.bf16.mxu0 0
    %1991 = vmatpush1.bf16.msra.mxu0 0
    %1992 = vmatprep.subr.bf16.mxu0 0
    %1993 = vmatpush1.bf16.msra.mxu0 0
    %1994 = vmatprep.subr.bf16.mxu0 0
    %1995 = vmatpush1.bf16.msra.mxu0 0
    %1996 = vmatprep.subr.bf16.mxu0 0
    %1997 = vmatpush1.bf16.msra.mxu0 0
    %1998 = vmatprep.subr.bf16.mxu0 %v1864
    %1999 = vmatpush1.bf16.msra.mxu0 %v1863
    %2000 = vmatprep.subr.bf16.mxu0 %v1860
    %2001 = vmatpush1.bf16.msra.mxu0 %v1859
    %2002 = vmatprep.subr.bf16.mxu0 0
    %2003 = vmatpush2.bf16.msra.mxu0 0
    %2004 = vmatprep.subr.bf16.mxu0 0
    %2005 = vmatpush2.bf16.msra.mxu0 0
    %2006 = vmatprep.subr.bf16.mxu0 0
    %2007 = vmatpush2.bf16.msra.mxu0 0
    %2008 = vmatprep.subr.bf16.mxu0 0
    %2009 = vmatpush2.bf16.msra.mxu0 0
    %2010 = vmatprep.subr.bf16.mxu0 0
    %2011 = vmatpush2.bf16.msra.mxu0 0
    %2012 = vmatprep.subr.bf16.mxu0 0
    %2013 = vmatpush2.bf16.msra.mxu0 0
    %2014 = vmatprep.subr.bf16.mxu0 0
    %2015 = vmatpush2.bf16.msra.mxu0 0
    %2016 = vmatprep.subr.bf16.mxu0 0
    %2017 = vmatpush2.bf16.msra.mxu0 0
    %2018 = vmatprep.mubr.bf16.mxu0 0
    %2019 = vmatmul.mubr.bf16.gmra.mxu0 %v399
    %v2020 = vpop.f32.mrf.mxu0
    %v2021 = vadd.f32 %v1824, %v2020
    %v2022 = vpop.f32.mrf.mxu0
    %v2023 = vadd.f32 %v1828, %v2022
    %v2024 = vpop.f32.mrf.mxu0
    %v2025 = vadd.f32 %v1824, %v2024
    %v2026 = vpop.f32.mrf.mxu0
    %v2027 = vadd.f32 %v1828, %v2026
    %2028 = vmatprep.mubr.bf16.mxu0 0
    %2029 = vmatmul.mubr.bf16.gmra.mxu0 %v402
    %v2030 = vpop.f32.mrf.mxu0
    %v2031 = vadd.f32 %v1824, %v2030
    %v2032 = vpop.f32.mrf.mxu0
    %v2033 = vadd.f32 %v1828, %v2032
    %v2034 = vpop.f32.mrf.mxu0
    %v2035 = vadd.f32 %v1824, %v2034
    %v2036 = vpop.f32.mrf.mxu0
    %v2037 = vadd.f32 %v1828, %v2036
    %2038 = vmatprep.mubr.bf16.mxu0 0
    %2039 = vmatmul.mubr.bf16.gmra.mxu0 %v405
    %v2040 = vpop.f32.mrf.mxu0
    %v2041 = vadd.f32 %v1824, %v2040
    %v2042 = vpop.f32.mrf.mxu0
    %v2043 = vadd.f32 %v1828, %v2042
    %v2044 = vpop.f32.mrf.mxu0
    %v2045 = vadd.f32 %v1824, %v2044
    %v2046 = vpop.f32.mrf.mxu0
    %v2047 = vadd.f32 %v1828, %v2046
    %2048 = vmatprep.mubr.bf16.mxu0 0
    %2049 = vmatmul.mubr.bf16.gmra.mxu0 %v408
    %v2050 = vpop.f32.mrf.mxu0
    %v2051 = vadd.f32 %v1824, %v2050
    %v2052 = vpop.f32.mrf.mxu0
    %v2053 = vadd.f32 %v1828, %v2052
    %v2054 = vpop.f32.mrf.mxu0
    %v2055 = vadd.f32 %v1824, %v2054
    %v2056 = vpop.f32.mrf.mxu0
    %v2057 = vadd.f32 %v1828, %v2056
    %2058 = vmatprep.mubr.bf16.mxu0 0
    %2059 = vmatmul.mubr.bf16.gmra.mxu0 %v411
    %v2060 = vpop.f32.mrf.mxu0
    %v2061 = vadd.f32 %v1824, %v2060
    %v2062 = vpop.f32.mrf.mxu0
    %v2063 = vadd.f32 %v1828, %v2062
    %v2064 = vpop.f32.mrf.mxu0
    %v2065 = vadd.f32 %v1824, %v2064
    %v2066 = vpop.f32.mrf.mxu0
    %v2067 = vadd.f32 %v1828, %v2066
    %2068 = vmatprep.mubr.bf16.mxu0 0
    %2069 = vmatmul.mubr.bf16.gmra.mxu0 %v414
    %v2070 = vpop.f32.mrf.mxu0
    %v2071 = vadd.f32 %v1824, %v2070
    %v2072 = vpop.f32.mrf.mxu0
    %v2073 = vadd.f32 %v1828, %v2072
    %v2074 = vpop.f32.mrf.mxu0
    %v2075 = vadd.f32 %v1824, %v2074
    %v2076 = vpop.f32.mrf.mxu0
    %v2077 = vadd.f32 %v1828, %v2076
    %2078 = vmatprep.mubr.bf16.mxu0 0
    %2079 = vmatmul.mubr.bf16.gmra.mxu0 %v417
    %v2080 = vpop.f32.mrf.mxu0
    %v2081 = vadd.f32 %v1824, %v2080
    %v2082 = vpop.f32.mrf.mxu0
    %v2083 = vadd.f32 %v1828, %v2082
    %v2084 = vpop.f32.mrf.mxu0
    %v2085 = vadd.f32 %v1824, %v2084
    %v2086 = vpop.f32.mrf.mxu0
    %v2087 = vadd.f32 %v1828, %v2086
    %2088 = vmatprep.mubr.bf16.mxu0 0
    %2089 = vmatmul.mubr.bf16.gmra.mxu0 %v420
    %v2090 = vpop.f32.mrf.mxu0
    %v2091 = vadd.f32 %v1824, %v2090
    %v2092 = vpop.f32.mrf.mxu0
    %v2093 = vadd.f32 %v1828, %v2092
    %v2094 = vpop.f32.mrf.mxu0
    %v2095 = vadd.f32 %v1824, %v2094
    %v2096 = vpop.f32.mrf.mxu0
    %v2097 = vadd.f32 %v1828, %v2096
    %2098 = vdwg.mxu0
    %v2099 = vpack.c.bf16 %v1912, %v1908
    %v2100 = vpack.c.bf16 %v1914, %v1910
    %v2101 = vpack.c.bf16 %v2025, %v2021
    %v2102 = vpack.c.bf16 %v2027, %v2023
    %v2103 = vpack.c.bf16 %v1922, %v1918
    %v2104 = vpack.c.bf16 %v1924, %v1920
    %v2105 = vpack.c.bf16 %v2035, %v2031
    %v2106 = vpack.c.bf16 %v2037, %v2033
    %v2107 = vpack.c.bf16 %v1932, %v1928
    %v2108 = vpack.c.bf16 %v1934, %v1930
    %v2109 = vpack.c.bf16 %v2045, %v2041
    %v2110 = vpack.c.bf16 %v2047, %v2043
    %v2111 = vpack.c.bf16 %v1942, %v1938
    %v2112 = vpack.c.bf16 %v1944, %v1940
    %v2113 = vpack.c.bf16 %v2055, %v2051
    %v2114 = vpack.c.bf16 %v2057, %v2053
    %v2115 = vpack.c.bf16 %v1952, %v1948
    %v2116 = vpack.c.bf16 %v1954, %v1950
    %v2117 = vpack.c.bf16 %v2065, %v2061
    %v2118 = vpack.c.bf16 %v2067, %v2063
    %v2119 = vpack.c.bf16 %v1962, %v1958
    %v2120 = vpack.c.bf16 %v1964, %v1960
    %v2121 = vpack.c.bf16 %v2075, %v2071
    %v2122 = vpack.c.bf16 %v2077, %v2073
    %v2123 = vpack.c.bf16 %v1972, %v1968
    %v2124 = vpack.c.bf16 %v1974, %v1970
    %v2125 = vpack.c.bf16 %v2085, %v2081
    %v2126 = vpack.c.bf16 %v2087, %v2083
    %v2127 = vpack.c.bf16 %v1982, %v1978
    %v2128 = vpack.c.bf16 %v1984, %v1980
    %v2129 = vpack.c.bf16 %v2095, %v2091
    %v2130 = vpack.c.bf16 %v2097, %v2093
    %v2163 = vunpack.c.l.b16 %v2099
    %v2164 = vunpack.c.l.b16 %v2100
    %v2165 = vunpack.c.l.b16 %v2101
    %v2166 = vunpack.c.l.b16 %v2102
    %v2167 = vunpack.c.h.b16 %v2099
    %v2168 = vunpack.c.h.b16 %v2100
    %v2169 = vunpack.c.h.b16 %v2101
    %v2170 = vunpack.c.h.b16 %v2102
    %v2171 = vunpack.c.l.b16 %v2103
    %v2172 = vunpack.c.l.b16 %v2104
    %v2173 = vunpack.c.l.b16 %v2105
    %v2174 = vunpack.c.l.b16 %v2106
    %v2175 = vunpack.c.h.b16 %v2103
    %v2176 = vunpack.c.h.b16 %v2104
    %v2177 = vunpack.c.h.b16 %v2105
    %v2178 = vunpack.c.h.b16 %v2106
    %v2179 = vunpack.c.l.b16 %v2107
    %v2180 = vunpack.c.l.b16 %v2108
    %v2181 = vunpack.c.l.b16 %v2109
    %v2182 = vunpack.c.l.b16 %v2110
    %v2183 = vunpack.c.h.b16 %v2107
    %v2184 = vunpack.c.h.b16 %v2108
    %v2185 = vunpack.c.h.b16 %v2109
    %v2186 = vunpack.c.h.b16 %v2110
    %v2187 = vunpack.c.l.b16 %v2111
    %v2188 = vunpack.c.l.b16 %v2112
    %v2189 = vunpack.c.l.b16 %v2113
    %v2190 = vunpack.c.l.b16 %v2114
    %v2191 = vunpack.c.h.b16 %v2111
    %v2192 = vunpack.c.h.b16 %v2112
    %v2193 = vunpack.c.h.b16 %v2113
    %v2194 = vunpack.c.h.b16 %v2114
    %v2195 = vunpack.c.l.b16 %v2115
    %v2196 = vunpack.c.l.b16 %v2116
    %v2197 = vunpack.c.l.b16 %v2117
    %v2198 = vunpack.c.l.b16 %v2118
    %v2199 = vunpack.c.h.b16 %v2115
    %v2200 = vunpack.c.h.b16 %v2116
    %v2201 = vunpack.c.h.b16 %v2117
    %v2202 = vunpack.c.h.b16 %v2118
    %v2203 = vunpack.c.l.b16 %v2119
    %v2204 = vunpack.c.l.b16 %v2120
    %v2205 = vunpack.c.l.b16 %v2121
    %v2206 = vunpack.c.l.b16 %v2122
    %v2207 = vunpack.c.h.b16 %v2119
    %v2208 = vunpack.c.h.b16 %v2120
    %v2209 = vunpack.c.h.b16 %v2121
    %v2210 = vunpack.c.h.b16 %v2122
    %v2211 = vunpack.c.l.b16 %v2123
    %v2212 = vunpack.c.l.b16 %v2124
    %v2213 = vunpack.c.l.b16 %v2125
    %v2214 = vunpack.c.l.b16 %v2126
    %v2215 = vunpack.c.h.b16 %v2123
    %v2216 = vunpack.c.h.b16 %v2124
    %v2217 = vunpack.c.h.b16 %v2125
    %v2218 = vunpack.c.h.b16 %v2126
    %v2219 = vunpack.c.l.b16 %v2127
    %v2220 = vunpack.c.l.b16 %v2128
    %v2221 = vunpack.c.l.b16 %v2129
    %v2222 = vunpack.c.l.b16 %v2130
    %v2223 = vunpack.c.h.b16 %v2127
    %v2224 = vunpack.c.h.b16 %v2128
    %v2225 = vunpack.c.h.b16 %v2129
    %v2226 = vunpack.c.h.b16 %v2130
    %v2227 = vpack.c.b16 %v2164, %v2163
    %v2228 = vpack.c.b16 %v2166, %v2165
    %v2229 = vpack.c.b16 %v2168, %v2167
    %v2230 = vpack.c.b16 %v2170, %v2169
    %v2231 = vpack.c.b16 %v2172, %v2171
    %v2232 = vpack.c.b16 %v2174, %v2173
    %v2233 = vpack.c.b16 %v2176, %v2175
    %v2234 = vpack.c.b16 %v2178, %v2177
    %v2235 = vpack.c.b16 %v2180, %v2179
    %v2236 = vpack.c.b16 %v2182, %v2181
    %v2237 = vpack.c.b16 %v2184, %v2183
    %v2238 = vpack.c.b16 %v2186, %v2185
    %v2239 = vpack.c.b16 %v2188, %v2187
    %v2240 = vpack.c.b16 %v2190, %v2189
    %v2241 = vpack.c.b16 %v2192, %v2191
    %v2242 = vpack.c.b16 %v2194, %v2193
    %v2243 = vpack.c.b16 %v2196, %v2195
    %v2244 = vpack.c.b16 %v2198, %v2197
    %v2245 = vpack.c.b16 %v2200, %v2199
    %v2246 = vpack.c.b16 %v2202, %v2201
    %v2247 = vpack.c.b16 %v2204, %v2203
    %v2248 = vpack.c.b16 %v2206, %v2205
    %v2249 = vpack.c.b16 %v2208, %v2207
    %v2250 = vpack.c.b16 %v2210, %v2209
    %v2251 = vpack.c.b16 %v2212, %v2211
    %v2252 = vpack.c.b16 %v2214, %v2213
    %v2253 = vpack.c.b16 %v2216, %v2215
    %v2254 = vpack.c.b16 %v2218, %v2217
    %v2255 = vpack.c.b16 %v2220, %v2219
    %v2256 = vpack.c.b16 %v2222, %v2221
    %v2257 = vpack.c.b16 %v2224, %v2223
    %v2258 = vpack.c.b16 %v2226, %v2225
    %2291 = vst [vmem:[#allocation5] sm:$0xff] %v2227
    %2292 = vst [vmem:[#allocation5 + $0x8] sm:$0xff] %v2228
    %2293 = vst [vmem:[#allocation5 + $0x10] sm:$0xff] %v2229
    %2294 = vst [vmem:[#allocation5 + $0x18] sm:$0xff] %v2230
    %2295 = vst [vmem:[#allocation5 + $0x20] sm:$0xff] %v2231
    %2296 = vst [vmem:[#allocation5 + $0x28] sm:$0xff] %v2232
    %2297 = vst [vmem:[#allocation5 + $0x30] sm:$0xff] %v2233
    %2298 = vst [vmem:[#allocation5 + $0x38] sm:$0xff] %v2234
    %2299 = vst [vmem:[#allocation5 + $0x40] sm:$0xff] %v2235
    %2300 = vst [vmem:[#allocation5 + $0x48] sm:$0xff] %v2236
    %2301 = vst [vmem:[#allocation5 + $0x50] sm:$0xff] %v2237
    %2302 = vst [vmem:[#allocation5 + $0x58] sm:$0xff] %v2238
    %2303 = vst [vmem:[#allocation5 + $0x60] sm:$0xff] %v2239
    %2304 = vst [vmem:[#allocation5 + $0x68] sm:$0xff] %v2240
    %2305 = vst [vmem:[#allocation5 + $0x70] sm:$0xff] %v2241
    %2306 = vst [vmem:[#allocation5 + $0x78] sm:$0xff] %v2242
    %2307 = vst [vmem:[#allocation5 + $0x80] sm:$0xff] %v2243
    %2308 = vst [vmem:[#allocation5 + $0x88] sm:$0xff] %v2244
    %2309 = vst [vmem:[#allocation5 + $0x90] sm:$0xff] %v2245
    %2310 = vst [vmem:[#allocation5 + $0x98] sm:$0xff] %v2246
    %2311 = vst [vmem:[#allocation5 + $0xa0] sm:$0xff] %v2247
    %2312 = vst [vmem:[#allocation5 + $0xa8] sm:$0xff] %v2248
    %2313 = vst [vmem:[#allocation5 + $0xb0] sm:$0xff] %v2249
    %2314 = vst [vmem:[#allocation5 + $0xb8] sm:$0xff] %v2250
    %2315 = vst [vmem:[#allocation5 + $0xc0] sm:$0xff] %v2251
    %2316 = vst [vmem:[#allocation5 + $0xc8] sm:$0xff] %v2252
    %2317 = vst [vmem:[#allocation5 + $0xd0] sm:$0xff] %v2253
    %2318 = vst [vmem:[#allocation5 + $0xd8] sm:$0xff] %v2254
    %2319 = vst [vmem:[#allocation5 + $0xe0] sm:$0xff] %v2255
    %2320 = vst [vmem:[#allocation5 + $0xe8] sm:$0xff] %v2256
    %2321 = vst [vmem:[#allocation5 + $0xf0] sm:$0xff] %v2257
    %2322 = vst [vmem:[#allocation5 + $0xf8] sm:$0xff] %v2258
    %v2323 = vld [vmem:[%s3] sm:$0xff]
    %v2324 = vld [vmem:[%s3 + $0x8] sm:$0xf]
    %v2325 = vld [vmem:[%s3 + $0xc] sm:$0xff]
    %v2326 = vld [vmem:[%s3 + $0x14] sm:$0xf]
    %v2327 = vld [vmem:[%s3 + $0x18] sm:$0xff]
    %v2328 = vld [vmem:[%s3 + $0x20] sm:$0xf]
    %v2329 = vld [vmem:[%s3 + $0x24] sm:$0xff]
    %v2330 = vld [vmem:[%s3 + $0x2c] sm:$0xf]
    %v2331 = vld [vmem:[%s3 + $0x30] sm:$0xff]
    %v2332 = vld [vmem:[%s3 + $0x38] sm:$0xf]
    %v2333 = vld [vmem:[%s3 + $0x3c] sm:$0xff]
    %v2334 = vld [vmem:[%s3 + $0x44] sm:$0xf]
    %v2335 = vld [vmem:[%s3 + $0x48] sm:$0xff]
    %v2336 = vld [vmem:[%s3 + $0x50] sm:$0xf]
    %v2337 = vld [vmem:[%s3 + $0x54] sm:$0xff]
    %v2338 = vld [vmem:[%s3 + $0x5c] sm:$0xf]
    %v2339 = vld [vmem:[%s3 + $0x60] sm:$0xff]
    %v2340 = vld [vmem:[%s3 + $0x68] sm:$0xf]
    %v2341 = vld [vmem:[%s3 + $0x6c] sm:$0xff]
    %v2342 = vld [vmem:[%s3 + $0x74] sm:$0xf]
    %v2343 = vld [vmem:[%s3 + $0x78] sm:$0xff]
    %v2344 = vld [vmem:[%s3 + $0x80] sm:$0xf]
    %v2345 = vld [vmem:[%s3 + $0x84] sm:$0xff]
    %v2346 = vld [vmem:[%s3 + $0x8c] sm:$0xf]
    %v2347 = vld [vmem:[%s3 + $0x90] sm:$0xff]
    %v2348 = vld [vmem:[%s3 + $0x98] sm:$0xf]
    %v2349 = vld [vmem:[%s3 + $0x9c] sm:$0xff]
    %v2350 = vld [vmem:[%s3 + $0xa4] sm:$0xf]
    %v2351 = vld [vmem:[%s3 + $0xa8] sm:$0xff]
    %v2352 = vld [vmem:[%s3 + $0xb0] sm:$0xf]
    %v2353 = vld [vmem:[%s3 + $0xb4] sm:$0xff]
    %v2354 = vld [vmem:[%s3 + $0xbc] sm:$0xf]
    %v2355 = vld [vmem:[%s7] sm:$0xff]
    %v2356 = vld [vmem:[%s7 + $0x8] sm:$0xf]
    %v2357 = vld [vmem:[%s7 + $0xc] sm:$0xff]
    %v2358 = vld [vmem:[%s7 + $0x14] sm:$0xf]
    %v2359 = vld [vmem:[%s7 + $0x18] sm:$0xff]
    %v2360 = vld [vmem:[%s7 + $0x20] sm:$0xf]
    %v2361 = vld [vmem:[%s7 + $0x24] sm:$0xff]
    %v2362 = vld [vmem:[%s7 + $0x2c] sm:$0xf]
    %v2363 = vld [vmem:[%s7 + $0x30] sm:$0xff]
    %v2364 = vld [vmem:[%s7 + $0x38] sm:$0xf]
    %v2365 = vld [vmem:[%s7 + $0x3c] sm:$0xff]
    %v2366 = vld [vmem:[%s7 + $0x44] sm:$0xf]
    %v2367 = vld [vmem:[%s7 + $0x48] sm:$0xff]
    %v2368 = vld [vmem:[%s7 + $0x50] sm:$0xf]
    %v2369 = vld [vmem:[%s7 + $0x54] sm:$0xff]
    %v2370 = vld [vmem:[%s7 + $0x5c] sm:$0xf]
    %v2371 = vld [vmem:[%s7 + $0x60] sm:$0xff]
    %v2372 = vld [vmem:[%s7 + $0x68] sm:$0xf]
    %v2373 = vld [vmem:[%s7 + $0x6c] sm:$0xff]
    %v2374 = vld [vmem:[%s7 + $0x74] sm:$0xf]
    %v2375 = vld [vmem:[%s7 + $0x78] sm:$0xff]
    %v2376 = vld [vmem:[%s7 + $0x80] sm:$0xf]
    %v2377 = vld [vmem:[%s7 + $0x84] sm:$0xff]
    %v2378 = vld [vmem:[%s7 + $0x8c] sm:$0xf]
    %v2379 = vld [vmem:[%s7 + $0x90] sm:$0xff]
    %v2380 = vld [vmem:[%s7 + $0x98] sm:$0xf]
    %v2381 = vld [vmem:[%s7 + $0x9c] sm:$0xff]
    %v2382 = vld [vmem:[%s7 + $0xa4] sm:$0xf]
    %v2383 = vld [vmem:[%s7 + $0xa8] sm:$0xff]
    %v2384 = vld [vmem:[%s7 + $0xb0] sm:$0xf]
    %v2385 = vld [vmem:[%s7 + $0xb4] sm:$0xff]
    %v2386 = vld [vmem:[%s7 + $0xbc] sm:$0xf]
    %v2387 = vld [vmem:[%s11] sm:$0xff]
    %v2388 = vld [vmem:[%s11 + $0x8] sm:$0xff]
    %v2389 = vld [vmem:[%s11 + $0x10] sm:$0xff]
    %v2390 = vld [vmem:[%s11 + $0x18] sm:$0xff]
    %v2391 = vld [vmem:[%s11 + $0x20] sm:$0xff]
    %v2392 = vld [vmem:[%s11 + $0x28] sm:$0xff]
    %v2393 = vld [vmem:[%s11 + $0x30] sm:$0xff]
    %v2394 = vld [vmem:[%s11 + $0x38] sm:$0xff]
    %v2395 = vld [vmem:[%s11 + $0x40] sm:$0xff]
    %v2396 = vld [vmem:[%s11 + $0x48] sm:$0xff]
    %v2397 = vld [vmem:[%s11 + $0x50] sm:$0xff]
    %v2398 = vld [vmem:[%s11 + $0x58] sm:$0xff]
    %v2399 = vld [vmem:[%s11 + $0x60] sm:$0xff]
    %v2400 = vld [vmem:[%s11 + $0x68] sm:$0xff]
    %v2401 = vld [vmem:[%s11 + $0x70] sm:$0xff]
    %v2402 = vld [vmem:[%s11 + $0x78] sm:$0xff]
    %v2403 = vld [vmem:[%s11 + $0x80] sm:$0xff]
    %v2404 = vld [vmem:[%s11 + $0x88] sm:$0xff]
    %v2405 = vld [vmem:[%s11 + $0x90] sm:$0xff]
    %v2406 = vld [vmem:[%s11 + $0x98] sm:$0xff]
    %v2407 = vld [vmem:[%s11 + $0xa0] sm:$0xff]
    %v2408 = vld [vmem:[%s11 + $0xa8] sm:$0xff]
    %v2409 = vld [vmem:[%s11 + $0xb0] sm:$0xff]
    %v2410 = vld [vmem:[%s11 + $0xb8] sm:$0xff]
    %v2411 = vld [vmem:[%s11 + $0xc0] sm:$0xff]
    %v2412 = vld [vmem:[%s11 + $0xc8] sm:$0xff]
    %v2413 = vld [vmem:[%s11 + $0xd0] sm:$0xff]
    %v2414 = vld [vmem:[%s11 + $0xd8] sm:$0xff]
    %v2415 = vld [vmem:[%s11 + $0xe0] sm:$0xff]
    %v2416 = vld [vmem:[%s11 + $0xe8] sm:$0xff]
    %v2417 = vld [vmem:[%s11 + $0xf0] sm:$0xff]
    %v2418 = vld [vmem:[%s11 + $0xf8] sm:$0xff]
    %v2419 = vld [vmem:[%s14] sm:$0xff]
    %v2420 = vld [vmem:[%s14 + $0x8] sm:$0xff]
    %v2421 = vld [vmem:[%s14 + $0x10] sm:$0xff]
    %v2422 = vld [vmem:[%s14 + $0x18] sm:$0xff]
    %v2423 = vld [vmem:[%s14 + $0x20] sm:$0xff]
    %v2424 = vld [vmem:[%s14 + $0x28] sm:$0xff]
    %v2425 = vld [vmem:[%s14 + $0x30] sm:$0xff]
    %v2426 = vld [vmem:[%s14 + $0x38] sm:$0xff]
    %v2427 = vld [vmem:[%s14 + $0x40] sm:$0xff]
    %v2428 = vld [vmem:[%s14 + $0x48] sm:$0xff]
    %v2429 = vld [vmem:[%s14 + $0x50] sm:$0xff]
    %v2430 = vld [vmem:[%s14 + $0x58] sm:$0xff]
    %v2431 = vld [vmem:[%s14 + $0x60] sm:$0xff]
    %v2432 = vld [vmem:[%s14 + $0x68] sm:$0xff]
    %v2433 = vld [vmem:[%s14 + $0x70] sm:$0xff]
    %v2434 = vld [vmem:[%s14 + $0x78] sm:$0xff]
    %v2435 = vld [vmem:[%s14 + $0x80] sm:$0xff]
    %v2436 = vld [vmem:[%s14 + $0x88] sm:$0xff]
    %v2437 = vld [vmem:[%s14 + $0x90] sm:$0xff]
    %v2438 = vld [vmem:[%s14 + $0x98] sm:$0xff]
    %v2439 = vld [vmem:[%s14 + $0xa0] sm:$0xff]
    %v2440 = vld [vmem:[%s14 + $0xa8] sm:$0xff]
    %v2441 = vld [vmem:[%s14 + $0xb0] sm:$0xff]
    %v2442 = vld [vmem:[%s14 + $0xb8] sm:$0xff]
    %v2443 = vld [vmem:[%s14 + $0xc0] sm:$0xff]
    %v2444 = vld [vmem:[%s14 + $0xc8] sm:$0xff]
    %v2445 = vld [vmem:[%s14 + $0xd0] sm:$0xff]
    %v2446 = vld [vmem:[%s14 + $0xd8] sm:$0xff]
    %v2447 = vld [vmem:[%s14 + $0xe0] sm:$0xff]
    %v2448 = vld [vmem:[%s14 + $0xe8] sm:$0xff]
    %v2449 = vld [vmem:[%s14 + $0xf0] sm:$0xff]
    %v2450 = vld [vmem:[%s14 + $0xf8] sm:$0xff]
    %v2451 = vld [vmem:[%s4] sm:$0x1]
    %v2453 = vlaneseq
    %v2454 = vshrl.u32 %v2453, 7
    %v2455 = vsub.s32 0, %v2454
    %v2456 = vrot.slane %v2451, %v2455
    %v2458 = vld [vmem:[#allocation17] sm:$0x1]
    %v2460 = vlaneseq
    %v2461 = vshrl.u32 %v2460, 7
    %v2462 = vsub.s32 0, %v2461
    %v2463 = vrot.slane %v2458, %v2462
    loop: start=0, step=1, limit=8
    $region174: #{lstm_gru_cnn_forward.1} parent=1 // loop_pre_header
      _
    $region175: #{lstm_gru_cnn_forward.1} parent=1 // loop_header
      %s2466 = sphi 0, %s2470
      %p2467 = scmp.ge.s32.totalorder %s2466, 8
      %v2471 = vphi 0.0, %v3469
      %v2472 = vphi 0.0, %v3470
      %v2473 = vphi 0.0, %v3534
      %v2474 = vphi 0.0, %v3535
      %v2475 = vphi 0.0, %v3605
      %v2476 = vphi 0.0, %v3606
      %v2477 = vphi 0.0, %v3601
      %v2478 = vphi 0.0, %v3602
      %v2479 = vphi 0.0, %v3676
      %v2480 = vphi 0.0, %v3677
      %v2481 = vphi 0.0, %v3672
      %v2482 = vphi 0.0, %v3673
    $region176: #{lstm_gru_cnn_forward.1} parent=1 // loop_header_branch
      %2469 = sbr.rel (%p2467) target = $region180
    $region177: #{lstm_gru_cnn_forward.1} parent=1 // loop_body
      %s2483 = smul.u32 %s2466, 16
      %s2484 = ssub.s32 7, %s2466
      %s2485 = smul.u32 %s2484, 16
      %v2486 = vpack.c.bf16 %v2472, %v2471
      %v2519 = vunpack.c.l.b16 %v2323
      %v2520 = vunpack.c.h.b16 %v2323
      %v2521 = vunpack.c.l.b16 %v2324
      %v2522 = vunpack.c.l.b16 %v2325
      %v2523 = vunpack.c.h.b16 %v2325
      %v2524 = vunpack.c.l.b16 %v2326
      %v2525 = vunpack.c.l.b16 %v2327
      %v2526 = vunpack.c.h.b16 %v2327
      %v2527 = vunpack.c.l.b16 %v2328
      %v2528 = vunpack.c.l.b16 %v2329
      %v2529 = vunpack.c.h.b16 %v2329
      %v2530 = vunpack.c.l.b16 %v2330
      %v2531 = vunpack.c.l.b16 %v2331
      %v2532 = vunpack.c.h.b16 %v2331
      %v2533 = vunpack.c.l.b16 %v2332
      %v2534 = vunpack.c.l.b16 %v2333
      %v2535 = vunpack.c.h.b16 %v2333
      %v2536 = vunpack.c.l.b16 %v2334
      %v2537 = vunpack.c.l.b16 %v2335
      %v2538 = vunpack.c.h.b16 %v2335
      %v2539 = vunpack.c.l.b16 %v2336
      %v2540 = vunpack.c.l.b16 %v2337
      %v2541 = vunpack.c.h.b16 %v2337
      %v2542 = vunpack.c.l.b16 %v2338
      %v2543 = vunpack.c.l.b16 %v2339
      %v2544 = vunpack.c.h.b16 %v2339
      %v2545 = vunpack.c.l.b16 %v2340
      %v2546 = vunpack.c.l.b16 %v2341
      %v2547 = vunpack.c.h.b16 %v2341
      %v2548 = vunpack.c.l.b16 %v2342
      %v2549 = vunpack.c.l.b16 %v2343
      %v2550 = vunpack.c.h.b16 %v2343
      %v2551 = vunpack.c.l.b16 %v2344
      %v2552 = vunpack.c.l.b16 %v2345
      %v2553 = vunpack.c.h.b16 %v2345
      %v2554 = vunpack.c.l.b16 %v2346
      %v2555 = vunpack.c.l.b16 %v2347
      %v2556 = vunpack.c.h.b16 %v2347
      %v2557 = vunpack.c.l.b16 %v2348
      %v2558 = vunpack.c.l.b16 %v2349
      %v2559 = vunpack.c.h.b16 %v2349
      %v2560 = vunpack.c.l.b16 %v2350
      %v2561 = vunpack.c.l.b16 %v2351
      %v2562 = vunpack.c.h.b16 %v2351
      %v2563 = vunpack.c.l.b16 %v2352
      %v2564 = vunpack.c.l.b16 %v2353
      %v2565 = vunpack.c.h.b16 %v2353
      %v2566 = vunpack.c.l.b16 %v2354
      %v2567 = vpack.c.b16 %v2522, %v2519
      %v2568 = vpack.c.b16 %v2523, %v2520
      %v2569 = vpack.c.b16 %v2524, %v2521
      %v2570 = vpack.c.b16 %v2528, %v2525
      %v2571 = vpack.c.b16 %v2529, %v2526
      %v2572 = vpack.c.b16 %v2530, %v2527
      %v2573 = vpack.c.b16 %v2534, %v2531
      %v2574 = vpack.c.b16 %v2535, %v2532
      %v2575 = vpack.c.b16 %v2536, %v2533
      %v2576 = vpack.c.b16 %v2540, %v2537
      %v2577 = vpack.c.b16 %v2541, %v2538
      %v2578 = vpack.c.b16 %v2542, %v2539
      %v2579 = vpack.c.b16 %v2546, %v2543
      %v2580 = vpack.c.b16 %v2547, %v2544
      %v2581 = vpack.c.b16 %v2548, %v2545
      %v2582 = vpack.c.b16 %v2552, %v2549
      %v2583 = vpack.c.b16 %v2553, %v2550
      %v2584 = vpack.c.b16 %v2554, %v2551
      %v2585 = vpack.c.b16 %v2558, %v2555
      %v2586 = vpack.c.b16 %v2559, %v2556
      %v2587 = vpack.c.b16 %v2560, %v2557
      %v2588 = vpack.c.b16 %v2564, %v2561
      %v2589 = vpack.c.b16 %v2565, %v2562
      %v2590 = vpack.c.b16 %v2566, %v2563
      %2615 = vmatprep.subr.bf16.mxu0 %v2589
      %2616 = vmatpush1.bf16.msra.mxu0 %v2588
      %2617 = vmatprep.subr.bf16.mxu0 %v2586
      %2618 = vmatpush1.bf16.msra.mxu0 %v2585
      %2619 = vmatprep.subr.bf16.mxu0 %v2583
      %2620 = vmatpush1.bf16.msra.mxu0 %v2582
      %2621 = vmatprep.subr.bf16.mxu0 %v2580
      %2622 = vmatpush1.bf16.msra.mxu0 %v2579
      %2623 = vmatprep.subr.bf16.mxu0 %v2577
      %2624 = vmatpush1.bf16.msra.mxu0 %v2576
      %2625 = vmatprep.subr.bf16.mxu0 %v2574
      %2626 = vmatpush1.bf16.msra.mxu0 %v2573
      %2627 = vmatprep.subr.bf16.mxu0 %v2571
      %2628 = vmatpush1.bf16.msra.mxu0 %v2570
      %2629 = vmatprep.subr.bf16.mxu0 %v2568
      %2630 = vmatpush1.bf16.msra.mxu0 %v2567
      %2631 = vmatprep.subr.bf16.mxu0 0
      %2632 = vmatpush2.bf16.msra.mxu0 0
      %2633 = vmatprep.subr.bf16.mxu0 0
      %2634 = vmatpush2.bf16.msra.mxu0 0
      %2635 = vmatprep.subr.bf16.mxu0 0
      %2636 = vmatpush2.bf16.msra.mxu0 0
      %2637 = vmatprep.subr.bf16.mxu0 0
      %2638 = vmatpush2.bf16.msra.mxu0 0
      %2639 = vmatprep.subr.bf16.mxu0 0
      %2640 = vmatpush2.bf16.msra.mxu0 0
      %2641 = vmatprep.subr.bf16.mxu0 0
      %2642 = vmatpush2.bf16.msra.mxu0 0
      %2643 = vmatprep.subr.bf16.mxu0 0
      %2644 = vmatpush2.bf16.msra.mxu0 0
      %2645 = vmatprep.subr.bf16.mxu0 0
      %2646 = vmatpush2.bf16.msra.mxu0 0
      %2647 = vmatprep.mubr.bf16.mxu0 0
      %2648 = vmatmul.mubr.bf16.gmra.mxu0 %v2486
      %v2649 = vpop.f32.mrf.mxu0
      %v2650 = vadd.f32 0.0, %v2649
      %v2651 = vpop.f32.mrf.mxu0
      %v2652 = vadd.f32 0.0, %v2651
      %v2653 = vpop.f32.mrf.mxu0
      %v2654 = vadd.f32 0.0, %v2653
      %v2655 = vpop.f32.mrf.mxu0
      %v2656 = vadd.f32 0.0, %v2655
      %2657 = vdwg.mxu0
      %2658 = vmatprep.subr.bf16.mxu0 0
      %2659 = vmatpush1.bf16.msra.mxu0 %v2590
      %2660 = vmatprep.subr.bf16.mxu0 0
      %2661 = vmatpush1.bf16.msra.mxu0 %v2587
      %2662 = vmatprep.subr.bf16.mxu0 0
      %2663 = vmatpush1.bf16.msra.mxu0 %v2584
      %2664 = vmatprep.subr.bf16.mxu0 0
      %2665 = vmatpush1.bf16.msra.mxu0 %v2581
      %2666 = vmatprep.subr.bf16.mxu0 0
      %2667 = vmatpush1.bf16.msra.mxu0 %v2578
      %2668 = vmatprep.subr.bf16.mxu0 0
      %2669 = vmatpush1.bf16.msra.mxu0 %v2575
      %2670 = vmatprep.subr.bf16.mxu0 0
      %2671 = vmatpush1.bf16.msra.mxu0 %v2572
      %2672 = vmatprep.subr.bf16.mxu0 0
      %2673 = vmatpush1.bf16.msra.mxu0 %v2569
      %2674 = vmatprep.subr.bf16.mxu0 0
      %2675 = vmatpush2.bf16.msra.mxu0 0
      %2676 = vmatprep.subr.bf16.mxu0 0
      %2677 = vmatpush2.bf16.msra.mxu0 0
      %2678 = vmatprep.subr.bf16.mxu0 0
      %2679 = vmatpush2.bf16.msra.mxu0 0
      %2680 = vmatprep.subr.bf16.mxu0 0
      %2681 = vmatpush2.bf16.msra.mxu0 0
      %2682 = vmatprep.subr.bf16.mxu0 0
      %2683 = vmatpush2.bf16.msra.mxu0 0
      %2684 = vmatprep.subr.bf16.mxu0 0
      %2685 = vmatpush2.bf16.msra.mxu0 0
      %2686 = vmatprep.subr.bf16.mxu0 0
      %2687 = vmatpush2.bf16.msra.mxu0 0
      %2688 = vmatprep.subr.bf16.mxu0 0
      %2689 = vmatpush2.bf16.msra.mxu0 0
      %2690 = vmatprep.mubr.bf16.mxu0 0
      %2691 = vmatmul.mubr.bf16.gmra.mxu0 %v2486
      %v2692 = vpop.f32.mrf.mxu0
      %v2693 = vadd.f32 0.0, %v2692
      %v2694 = vpop.f32.mrf.mxu0
      %v2695 = vpop.f32.mrf.mxu0
      %v2696 = vadd.f32 0.0, %v2695
      %v2697 = vpop.f32.mrf.mxu0
      %2698 = vdwg.mxu0
      %v2699 = vpack.c.bf16 %v2474, %v2473
      %v2732 = vunpack.c.l.b16 %v2355
      %v2733 = vunpack.c.h.b16 %v2355
      %v2734 = vunpack.c.l.b16 %v2356
      %v2735 = vunpack.c.l.b16 %v2357
      %v2736 = vunpack.c.h.b16 %v2357
      %v2737 = vunpack.c.l.b16 %v2358
      %v2738 = vunpack.c.l.b16 %v2359
      %v2739 = vunpack.c.h.b16 %v2359
      %v2740 = vunpack.c.l.b16 %v2360
      %v2741 = vunpack.c.l.b16 %v2361
      %v2742 = vunpack.c.h.b16 %v2361
      %v2743 = vunpack.c.l.b16 %v2362
      %v2744 = vunpack.c.l.b16 %v2363
      %v2745 = vunpack.c.h.b16 %v2363
      %v2746 = vunpack.c.l.b16 %v2364
      %v2747 = vunpack.c.l.b16 %v2365
      %v2748 = vunpack.c.h.b16 %v2365
      %v2749 = vunpack.c.l.b16 %v2366
      %v2750 = vunpack.c.l.b16 %v2367
      %v2751 = vunpack.c.h.b16 %v2367
      %v2752 = vunpack.c.l.b16 %v2368
      %v2753 = vunpack.c.l.b16 %v2369
      %v2754 = vunpack.c.h.b16 %v2369
      %v2755 = vunpack.c.l.b16 %v2370
      %v2756 = vunpack.c.l.b16 %v2371
      %v2757 = vunpack.c.h.b16 %v2371
      %v2758 = vunpack.c.l.b16 %v2372
      %v2759 = vunpack.c.l.b16 %v2373
      %v2760 = vunpack.c.h.b16 %v2373
      %v2761 = vunpack.c.l.b16 %v2374
      %v2762 = vunpack.c.l.b16 %v2375
      %v2763 = vunpack.c.h.b16 %v2375
      %v2764 = vunpack.c.l.b16 %v2376
      %v2765 = vunpack.c.l.b16 %v2377
      %v2766 = vunpack.c.h.b16 %v2377
      %v2767 = vunpack.c.l.b16 %v2378
      %v2768 = vunpack.c.l.b16 %v2379
      %v2769 = vunpack.c.h.b16 %v2379
      %v2770 = vunpack.c.l.b16 %v2380
      %v2771 = vunpack.c.l.b16 %v2381
      %v2772 = vunpack.c.h.b16 %v2381
      %v2773 = vunpack.c.l.b16 %v2382
      %v2774 = vunpack.c.l.b16 %v2383
      %v2775 = vunpack.c.h.b16 %v2383
      %v2776 = vunpack.c.l.b16 %v2384
      %v2777 = vunpack.c.l.b16 %v2385
      %v2778 = vunpack.c.h.b16 %v2385
      %v2779 = vunpack.c.l.b16 %v2386
      %v2780 = vpack.c.b16 %v2735, %v2732
      %v2781 = vpack.c.b16 %v2736, %v2733
      %v2782 = vpack.c.b16 %v2737, %v2734
      %v2783 = vpack.c.b16 %v2741, %v2738
      %v2784 = vpack.c.b16 %v2742, %v2739
      %v2785 = vpack.c.b16 %v2743, %v2740
      %v2786 = vpack.c.b16 %v2747, %v2744
      %v2787 = vpack.c.b16 %v2748, %v2745
      %v2788 = vpack.c.b16 %v2749, %v2746
      %v2789 = vpack.c.b16 %v2753, %v2750
      %v2790 = vpack.c.b16 %v2754, %v2751
      %v2791 = vpack.c.b16 %v2755, %v2752
      %v2792 = vpack.c.b16 %v2759, %v2756
      %v2793 = vpack.c.b16 %v2760, %v2757
      %v2794 = vpack.c.b16 %v2761, %v2758
      %v2795 = vpack.c.b16 %v2765, %v2762
      %v2796 = vpack.c.b16 %v2766, %v2763
      %v2797 = vpack.c.b16 %v2767, %v2764
      %v2798 = vpack.c.b16 %v2771, %v2768
      %v2799 = vpack.c.b16 %v2772, %v2769
      %v2800 = vpack.c.b16 %v2773, %v2770
      %v2801 = vpack.c.b16 %v2777, %v2774
      %v2802 = vpack.c.b16 %v2778, %v2775
      %v2803 = vpack.c.b16 %v2779, %v2776
      %2828 = vmatprep.subr.bf16.mxu0 %v2802
      %2829 = vmatpush1.bf16.msra.mxu0 %v2801
      %2830 = vmatprep.subr.bf16.mxu0 %v2799
      %2831 = vmatpush1.bf16.msra.mxu0 %v2798
      %2832 = vmatprep.subr.bf16.mxu0 %v2796
      %2833 = vmatpush1.bf16.msra.mxu0 %v2795
      %2834 = vmatprep.subr.bf16.mxu0 %v2793
      %2835 = vmatpush1.bf16.msra.mxu0 %v2792
      %2836 = vmatprep.subr.bf16.mxu0 %v2790
      %2837 = vmatpush1.bf16.msra.mxu0 %v2789
      %2838 = vmatprep.subr.bf16.mxu0 %v2787
      %2839 = vmatpush1.bf16.msra.mxu0 %v2786
      %2840 = vmatprep.subr.bf16.mxu0 %v2784
      %2841 = vmatpush1.bf16.msra.mxu0 %v2783
      %2842 = vmatprep.subr.bf16.mxu0 %v2781
      %2843 = vmatpush1.bf16.msra.mxu0 %v2780
      %2844 = vmatprep.subr.bf16.mxu0 0
      %2845 = vmatpush2.bf16.msra.mxu0 0
      %2846 = vmatprep.subr.bf16.mxu0 0
      %2847 = vmatpush2.bf16.msra.mxu0 0
      %2848 = vmatprep.subr.bf16.mxu0 0
      %2849 = vmatpush2.bf16.msra.mxu0 0
      %2850 = vmatprep.subr.bf16.mxu0 0
      %2851 = vmatpush2.bf16.msra.mxu0 0
      %2852 = vmatprep.subr.bf16.mxu0 0
      %2853 = vmatpush2.bf16.msra.mxu0 0
      %2854 = vmatprep.subr.bf16.mxu0 0
      %2855 = vmatpush2.bf16.msra.mxu0 0
      %2856 = vmatprep.subr.bf16.mxu0 0
      %2857 = vmatpush2.bf16.msra.mxu0 0
      %2858 = vmatprep.subr.bf16.mxu0 0
      %2859 = vmatpush2.bf16.msra.mxu0 0
      %2860 = vmatprep.mubr.bf16.mxu0 0
      %2861 = vmatmul.mubr.bf16.gmra.mxu0 %v2699
      %v2862 = vpop.f32.mrf.mxu0
      %v2863 = vadd.f32 0.0, %v2862
      %v2864 = vpop.f32.mrf.mxu0
      %v2865 = vadd.f32 0.0, %v2864
      %v2866 = vpop.f32.mrf.mxu0
      %v2867 = vadd.f32 0.0, %v2866
      %v2868 = vpop.f32.mrf.mxu0
      %v2869 = vadd.f32 0.0, %v2868
      %2870 = vdwg.mxu0
      %2871 = vmatprep.subr.bf16.mxu0 0
      %2872 = vmatpush1.bf16.msra.mxu0 %v2803
      %2873 = vmatprep.subr.bf16.mxu0 0
      %2874 = vmatpush1.bf16.msra.mxu0 %v2800
      %2875 = vmatprep.subr.bf16.mxu0 0
      %2876 = vmatpush1.bf16.msra.mxu0 %v2797
      %2877 = vmatprep.subr.bf16.mxu0 0
      %2878 = vmatpush1.bf16.msra.mxu0 %v2794
      %2879 = vmatprep.subr.bf16.mxu0 0
      %2880 = vmatpush1.bf16.msra.mxu0 %v2791
      %2881 = vmatprep.subr.bf16.mxu0 0
      %2882 = vmatpush1.bf16.msra.mxu0 %v2788
      %2883 = vmatprep.subr.bf16.mxu0 0
      %2884 = vmatpush1.bf16.msra.mxu0 %v2785
      %2885 = vmatprep.subr.bf16.mxu0 0
      %2886 = vmatpush1.bf16.msra.mxu0 %v2782
      %2887 = vmatprep.subr.bf16.mxu0 0
      %2888 = vmatpush2.bf16.msra.mxu0 0
      %2889 = vmatprep.subr.bf16.mxu0 0
      %2890 = vmatpush2.bf16.msra.mxu0 0
      %2891 = vmatprep.subr.bf16.mxu0 0
      %2892 = vmatpush2.bf16.msra.mxu0 0
      %2893 = vmatprep.subr.bf16.mxu0 0
      %2894 = vmatpush2.bf16.msra.mxu0 0
      %2895 = vmatprep.subr.bf16.mxu0 0
      %2896 = vmatpush2.bf16.msra.mxu0 0
      %2897 = vmatprep.subr.bf16.mxu0 0
      %2898 = vmatpush2.bf16.msra.mxu0 0
      %2899 = vmatprep.subr.bf16.mxu0 0
      %2900 = vmatpush2.bf16.msra.mxu0 0
      %2901 = vmatprep.subr.bf16.mxu0 0
      %2902 = vmatpush2.bf16.msra.mxu0 0
      %2903 = vmatprep.mubr.bf16.mxu0 0
      %2904 = vmatmul.mubr.bf16.gmra.mxu0 %v2699
      %v2905 = vpop.f32.mrf.mxu0
      %v2906 = vadd.f32 0.0, %v2905
      %v2907 = vpop.f32.mrf.mxu0
      %v2908 = vpop.f32.mrf.mxu0
      %v2909 = vadd.f32 0.0, %v2908
      %v2910 = vpop.f32.mrf.mxu0
      %2911 = vdwg.mxu0
      %v2912 = vpack.c.bf16 %v2476, %v2475
      %v2945 = vunpack.c.l.b16 %v2387
      %v2946 = vunpack.c.h.b16 %v2387
      %v2947 = vunpack.c.l.b16 %v2388
      %v2948 = vunpack.c.h.b16 %v2388
      %v2949 = vunpack.c.l.b16 %v2389
      %v2950 = vunpack.c.h.b16 %v2389
      %v2951 = vunpack.c.l.b16 %v2390
      %v2952 = vunpack.c.h.b16 %v2390
      %v2953 = vunpack.c.l.b16 %v2391
      %v2954 = vunpack.c.h.b16 %v2391
      %v2955 = vunpack.c.l.b16 %v2392
      %v2956 = vunpack.c.h.b16 %v2392
      %v2957 = vunpack.c.l.b16 %v2393
      %v2958 = vunpack.c.h.b16 %v2393
      %v2959 = vunpack.c.l.b16 %v2394
      %v2960 = vunpack.c.h.b16 %v2394
      %v2961 = vunpack.c.l.b16 %v2395
      %v2962 = vunpack.c.h.b16 %v2395
      %v2963 = vunpack.c.l.b16 %v2396
      %v2964 = vunpack.c.h.b16 %v2396
      %v2965 = vunpack.c.l.b16 %v2397
      %v2966 = vunpack.c.h.b16 %v2397
      %v2967 = vunpack.c.l.b16 %v2398
      %v2968 = vunpack.c.h.b16 %v2398
      %v2969 = vunpack.c.l.b16 %v2399
      %v2970 = vunpack.c.h.b16 %v2399
      %v2971 = vunpack.c.l.b16 %v2400
      %v2972 = vunpack.c.h.b16 %v2400
      %v2973 = vunpack.c.l.b16 %v2401
      %v2974 = vunpack.c.h.b16 %v2401
      %v2975 = vunpack.c.l.b16 %v2402
      %v2976 = vunpack.c.h.b16 %v2402
      %v2977 = vunpack.c.l.b16 %v2403
      %v2978 = vunpack.c.h.b16 %v2403
      %v2979 = vunpack.c.l.b16 %v2404
      %v2980 = vunpack.c.h.b16 %v2404
      %v2981 = vunpack.c.l.b16 %v2405
      %v2982 = vunpack.c.h.b16 %v2405
      %v2983 = vunpack.c.l.b16 %v2406
      %v2984 = vunpack.c.h.b16 %v2406
      %v2985 = vunpack.c.l.b16 %v2407
      %v2986 = vunpack.c.h.b16 %v2407
      %v2987 = vunpack.c.l.b16 %v2408
      %v2988 = vunpack.c.h.b16 %v2408
      %v2989 = vunpack.c.l.b16 %v2409
      %v2990 = vunpack.c.h.b16 %v2409
      %v2991 = vunpack.c.l.b16 %v2410
      %v2992 = vunpack.c.h.b16 %v2410
      %v2993 = vunpack.c.l.b16 %v2411
      %v2994 = vunpack.c.h.b16 %v2411
      %v2995 = vunpack.c.l.b16 %v2412
      %v2996 = vunpack.c.h.b16 %v2412
      %v2997 = vunpack.c.l.b16 %v2413
      %v2998 = vunpack.c.h.b16 %v2413
      %v2999 = vunpack.c.l.b16 %v2414
      %v3000 = vunpack.c.h.b16 %v2414
      %v3001 = vunpack.c.l.b16 %v2415
      %v3002 = vunpack.c.h.b16 %v2415
      %v3003 = vunpack.c.l.b16 %v2416
      %v3004 = vunpack.c.h.b16 %v2416
      %v3005 = vunpack.c.l.b16 %v2417
      %v3006 = vunpack.c.h.b16 %v2417
      %v3007 = vunpack.c.l.b16 %v2418
      %v3008 = vunpack.c.h.b16 %v2418
      %v3009 = vpack.c.b16 %v2949, %v2945
      %v3010 = vpack.c.b16 %v2950, %v2946
      %v3011 = vpack.c.b16 %v2951, %v2947
      %v3012 = vpack.c.b16 %v2952, %v2948
      %v3013 = vpack.c.b16 %v2957, %v2953
      %v3014 = vpack.c.b16 %v2958, %v2954
      %v3015 = vpack.c.b16 %v2959, %v2955
      %v3016 = vpack.c.b16 %v2960, %v2956
      %v3017 = vpack.c.b16 %v2965, %v2961
      %v3018 = vpack.c.b16 %v2966, %v2962
      %v3019 = vpack.c.b16 %v2967, %v2963
      %v3020 = vpack.c.b16 %v2968, %v2964
      %v3021 = vpack.c.b16 %v2973, %v2969
      %v3022 = vpack.c.b16 %v2974, %v2970
      %v3023 = vpack.c.b16 %v2975, %v2971
      %v3024 = vpack.c.b16 %v2976, %v2972
      %v3025 = vpack.c.b16 %v2981, %v2977
      %v3026 = vpack.c.b16 %v2982, %v2978
      %v3027 = vpack.c.b16 %v2983, %v2979
      %v3028 = vpack.c.b16 %v2984, %v2980
      %v3029 = vpack.c.b16 %v2989, %v2985
      %v3030 = vpack.c.b16 %v2990, %v2986
      %v3031 = vpack.c.b16 %v2991, %v2987
      %v3032 = vpack.c.b16 %v2992, %v2988
      %v3033 = vpack.c.b16 %v2997, %v2993
      %v3034 = vpack.c.b16 %v2998, %v2994
      %v3035 = vpack.c.b16 %v2999, %v2995
      %v3036 = vpack.c.b16 %v3000, %v2996
      %v3037 = vpack.c.b16 %v3005, %v3001
      %v3038 = vpack.c.b16 %v3006, %v3002
      %v3039 = vpack.c.b16 %v3007, %v3003
      %v3040 = vpack.c.b16 %v3008, %v3004
      %3073 = vmatprep.subr.bf16.mxu0 %v3038
      %3074 = vmatpush1.bf16.msra.mxu0 %v3037
      %3075 = vmatprep.subr.bf16.mxu0 %v3034
      %3076 = vmatpush1.bf16.msra.mxu0 %v3033
      %3077 = vmatprep.subr.bf16.mxu0 %v3030
      %3078 = vmatpush1.bf16.msra.mxu0 %v3029
      %3079 = vmatprep.subr.bf16.mxu0 %v3026
      %3080 = vmatpush1.bf16.msra.mxu0 %v3025
      %3081 = vmatprep.subr.bf16.mxu0 %v3022
      %3082 = vmatpush1.bf16.msra.mxu0 %v3021
      %3083 = vmatprep.subr.bf16.mxu0 %v3018
      %3084 = vmatpush1.bf16.msra.mxu0 %v3017
      %3085 = vmatprep.subr.bf16.mxu0 %v3014
      %3086 = vmatpush1.bf16.msra.mxu0 %v3013
      %3087 = vmatprep.subr.bf16.mxu0 %v3010
      %3088 = vmatpush1.bf16.msra.mxu0 %v3009
      %3089 = vmatprep.subr.bf16.mxu0 0
      %3090 = vmatpush2.bf16.msra.mxu0 0
      %3091 = vmatprep.subr.bf16.mxu0 0
      %3092 = vmatpush2.bf16.msra.mxu0 0
      %3093 = vmatprep.subr.bf16.mxu0 0
      %3094 = vmatpush2.bf16.msra.mxu0 0
      %3095 = vmatprep.subr.bf16.mxu0 0
      %3096 = vmatpush2.bf16.msra.mxu0 0
      %3097 = vmatprep.subr.bf16.mxu0 0
      %3098 = vmatpush2.bf16.msra.mxu0 0
      %3099 = vmatprep.subr.bf16.mxu0 0
      %3100 = vmatpush2.bf16.msra.mxu0 0
      %3101 = vmatprep.subr.bf16.mxu0 0
      %3102 = vmatpush2.bf16.msra.mxu0 0
      %3103 = vmatprep.subr.bf16.mxu0 0
      %3104 = vmatpush2.bf16.msra.mxu0 0
      %3105 = vmatprep.mubr.bf16.mxu0 0
      %3106 = vmatmul.mubr.bf16.gmra.mxu0 %v2912
      %v3107 = vpop.f32.mrf.mxu0
      %v3108 = vadd.f32 0.0, %v3107
      %v3109 = vpop.f32.mrf.mxu0
      %v3110 = vadd.f32 0.0, %v3109
      %v3111 = vpop.f32.mrf.mxu0
      %v3112 = vadd.f32 0.0, %v3111
      %v3113 = vpop.f32.mrf.mxu0
      %v3114 = vadd.f32 0.0, %v3113
      %3115 = vdwg.mxu0
      %3116 = vmatprep.subr.bf16.mxu0 %v3040
      %3117 = vmatpush1.bf16.msra.mxu0 %v3039
      %3118 = vmatprep.subr.bf16.mxu0 %v3036
      %3119 = vmatpush1.bf16.msra.mxu0 %v3035
      %3120 = vmatprep.subr.bf16.mxu0 %v3032
      %3121 = vmatpush1.bf16.msra.mxu0 %v3031
      %3122 = vmatprep.subr.bf16.mxu0 %v3028
      %3123 = vmatpush1.bf16.msra.mxu0 %v3027
      %3124 = vmatprep.subr.bf16.mxu0 %v3024
      %3125 = vmatpush1.bf16.msra.mxu0 %v3023
      %3126 = vmatprep.subr.bf16.mxu0 %v3020
      %3127 = vmatpush1.bf16.msra.mxu0 %v3019
      %3128 = vmatprep.subr.bf16.mxu0 %v3016
      %3129 = vmatpush1.bf16.msra.mxu0 %v3015
      %3130 = vmatprep.subr.bf16.mxu0 %v3012
      %3131 = vmatpush1.bf16.msra.mxu0 %v3011
      %3132 = vmatprep.subr.bf16.mxu0 0
      %3133 = vmatpush2.bf16.msra.mxu0 0
      %3134 = vmatprep.subr.bf16.mxu0 0
      %3135 = vmatpush2.bf16.msra.mxu0 0
      %3136 = vmatprep.subr.bf16.mxu0 0
      %3137 = vmatpush2.bf16.msra.mxu0 0
      %3138 = vmatprep.subr.bf16.mxu0 0
      %3139 = vmatpush2.bf16.msra.mxu0 0
      %3140 = vmatprep.subr.bf16.mxu0 0
      %3141 = vmatpush2.bf16.msra.mxu0 0
      %3142 = vmatprep.subr.bf16.mxu0 0
      %3143 = vmatpush2.bf16.msra.mxu0 0
      %3144 = vmatprep.subr.bf16.mxu0 0
      %3145 = vmatpush2.bf16.msra.mxu0 0
      %3146 = vmatprep.subr.bf16.mxu0 0
      %3147 = vmatpush2.bf16.msra.mxu0 0
      %3148 = vmatprep.mubr.bf16.mxu0 0
      %3149 = vmatmul.mubr.bf16.gmra.mxu0 %v2912
      %v3150 = vpop.f32.mrf.mxu0
      %v3151 = vadd.f32 0.0, %v3150
      %v3152 = vpop.f32.mrf.mxu0
      %v3153 = vadd.f32 0.0, %v3152
      %v3154 = vpop.f32.mrf.mxu0
      %v3155 = vadd.f32 0.0, %v3154
      %v3156 = vpop.f32.mrf.mxu0
      %v3157 = vadd.f32 0.0, %v3156
      %3158 = vdwg.mxu0
      %v3159 = vpack.c.bf16 %v2480, %v2479
      %v3192 = vunpack.c.l.b16 %v2419
      %v3193 = vunpack.c.h.b16 %v2419
      %v3194 = vunpack.c.l.b16 %v2420
      %v3195 = vunpack.c.h.b16 %v2420
      %v3196 = vunpack.c.l.b16 %v2421
      %v3197 = vunpack.c.h.b16 %v2421
      %v3198 = vunpack.c.l.b16 %v2422
      %v3199 = vunpack.c.h.b16 %v2422
      %v3200 = vunpack.c.l.b16 %v2423
      %v3201 = vunpack.c.h.b16 %v2423
      %v3202 = vunpack.c.l.b16 %v2424
      %v3203 = vunpack.c.h.b16 %v2424
      %v3204 = vunpack.c.l.b16 %v2425
      %v3205 = vunpack.c.h.b16 %v2425
      %v3206 = vunpack.c.l.b16 %v2426
      %v3207 = vunpack.c.h.b16 %v2426
      %v3208 = vunpack.c.l.b16 %v2427
      %v3209 = vunpack.c.h.b16 %v2427
      %v3210 = vunpack.c.l.b16 %v2428
      %v3211 = vunpack.c.h.b16 %v2428
      %v3212 = vunpack.c.l.b16 %v2429
      %v3213 = vunpack.c.h.b16 %v2429
      %v3214 = vunpack.c.l.b16 %v2430
      %v3215 = vunpack.c.h.b16 %v2430
      %v3216 = vunpack.c.l.b16 %v2431
      %v3217 = vunpack.c.h.b16 %v2431
      %v3218 = vunpack.c.l.b16 %v2432
      %v3219 = vunpack.c.h.b16 %v2432
      %v3220 = vunpack.c.l.b16 %v2433
      %v3221 = vunpack.c.h.b16 %v2433
      %v3222 = vunpack.c.l.b16 %v2434
      %v3223 = vunpack.c.h.b16 %v2434
      %v3224 = vunpack.c.l.b16 %v2435
      %v3225 = vunpack.c.h.b16 %v2435
      %v3226 = vunpack.c.l.b16 %v2436
      %v3227 = vunpack.c.h.b16 %v2436
      %v3228 = vunpack.c.l.b16 %v2437
      %v3229 = vunpack.c.h.b16 %v2437
      %v3230 = vunpack.c.l.b16 %v2438
      %v3231 = vunpack.c.h.b16 %v2438
      %v3232 = vunpack.c.l.b16 %v2439
      %v3233 = vunpack.c.h.b16 %v2439
      %v3234 = vunpack.c.l.b16 %v2440
      %v3235 = vunpack.c.h.b16 %v2440
      %v3236 = vunpack.c.l.b16 %v2441
      %v3237 = vunpack.c.h.b16 %v2441
      %v3238 = vunpack.c.l.b16 %v2442
      %v3239 = vunpack.c.h.b16 %v2442
      %v3240 = vunpack.c.l.b16 %v2443
      %v3241 = vunpack.c.h.b16 %v2443
      %v3242 = vunpack.c.l.b16 %v2444
      %v3243 = vunpack.c.h.b16 %v2444
      %v3244 = vunpack.c.l.b16 %v2445
      %v3245 = vunpack.c.h.b16 %v2445
      %v3246 = vunpack.c.l.b16 %v2446
      %v3247 = vunpack.c.h.b16 %v2446
      %v3248 = vunpack.c.l.b16 %v2447
      %v3249 = vunpack.c.h.b16 %v2447
      %v3250 = vunpack.c.l.b16 %v2448
      %v3251 = vunpack.c.h.b16 %v2448
      %v3252 = vunpack.c.l.b16 %v2449
      %v3253 = vunpack.c.h.b16 %v2449
      %v3254 = vunpack.c.l.b16 %v2450
      %v3255 = vunpack.c.h.b16 %v2450
      %v3256 = vpack.c.b16 %v3196, %v3192
      %v3257 = vpack.c.b16 %v3197, %v3193
      %v3258 = vpack.c.b16 %v3198, %v3194
      %v3259 = vpack.c.b16 %v3199, %v3195
      %v3260 = vpack.c.b16 %v3204, %v3200
      %v3261 = vpack.c.b16 %v3205, %v3201
      %v3262 = vpack.c.b16 %v3206, %v3202
      %v3263 = vpack.c.b16 %v3207, %v3203
      %v3264 = vpack.c.b16 %v3212, %v3208
      %v3265 = vpack.c.b16 %v3213, %v3209
      %v3266 = vpack.c.b16 %v3214, %v3210
      %v3267 = vpack.c.b16 %v3215, %v3211
      %v3268 = vpack.c.b16 %v3220, %v3216
      %v3269 = vpack.c.b16 %v3221, %v3217
      %v3270 = vpack.c.b16 %v3222, %v3218
      %v3271 = vpack.c.b16 %v3223, %v3219
      %v3272 = vpack.c.b16 %v3228, %v3224
      %v3273 = vpack.c.b16 %v3229, %v3225
      %v3274 = vpack.c.b16 %v3230, %v3226
      %v3275 = vpack.c.b16 %v3231, %v3227
      %v3276 = vpack.c.b16 %v3236, %v3232
      %v3277 = vpack.c.b16 %v3237, %v3233
      %v3278 = vpack.c.b16 %v3238, %v3234
      %v3279 = vpack.c.b16 %v3239, %v3235
      %v3280 = vpack.c.b16 %v3244, %v3240
      %v3281 = vpack.c.b16 %v3245, %v3241
      %v3282 = vpack.c.b16 %v3246, %v3242
      %v3283 = vpack.c.b16 %v3247, %v3243
      %v3284 = vpack.c.b16 %v3252, %v3248
      %v3285 = vpack.c.b16 %v3253, %v3249
      %v3286 = vpack.c.b16 %v3254, %v3250
      %v3287 = vpack.c.b16 %v3255, %v3251
      %3320 = vmatprep.subr.bf16.mxu0 %v3285
      %3321 = vmatpush1.bf16.msra.mxu0 %v3284
      %3322 = vmatprep.subr.bf16.mxu0 %v3281
      %3323 = vmatpush1.bf16.msra.mxu0 %v3280
      %3324 = vmatprep.subr.bf16.mxu0 %v3277
      %3325 = vmatpush1.bf16.msra.mxu0 %v3276
      %3326 = vmatprep.subr.bf16.mxu0 %v3273
      %3327 = vmatpush1.bf16.msra.mxu0 %v3272
      %3328 = vmatprep.subr.bf16.mxu0 %v3269
      %3329 = vmatpush1.bf16.msra.mxu0 %v3268
      %3330 = vmatprep.subr.bf16.mxu0 %v3265
      %3331 = vmatpush1.bf16.msra.mxu0 %v3264
      %3332 = vmatprep.subr.bf16.mxu0 %v3261
      %3333 = vmatpush1.bf16.msra.mxu0 %v3260
      %3334 = vmatprep.subr.bf16.mxu0 %v3257
      %3335 = vmatpush1.bf16.msra.mxu0 %v3256
      %3336 = vmatprep.subr.bf16.mxu0 0
      %3337 = vmatpush2.bf16.msra.mxu0 0
      %3338 = vmatprep.subr.bf16.mxu0 0
      %3339 = vmatpush2.bf16.msra.mxu0 0
      %3340 = vmatprep.subr.bf16.mxu0 0
      %3341 = vmatpush2.bf16.msra.mxu0 0
      %3342 = vmatprep.subr.bf16.mxu0 0
      %3343 = vmatpush2.bf16.msra.mxu0 0
      %3344 = vmatprep.subr.bf16.mxu0 0
      %3345 = vmatpush2.bf16.msra.mxu0 0
      %3346 = vmatprep.subr.bf16.mxu0 0
      %3347 = vmatpush2.bf16.msra.mxu0 0
      %3348 = vmatprep.subr.bf16.mxu0 0
      %3349 = vmatpush2.bf16.msra.mxu0 0
      %3350 = vmatprep.subr.bf16.mxu0 0
      %3351 = vmatpush2.bf16.msra.mxu0 0
      %3352 = vmatprep.mubr.bf16.mxu0 0
      %3353 = vmatmul.mubr.bf16.gmra.mxu0 %v3159
      %v3354 = vpop.f32.mrf.mxu0
      %v3355 = vadd.f32 0.0, %v3354
      %v3356 = vpop.f32.mrf.mxu0
      %v3357 = vadd.f32 0.0, %v3356
      %v3358 = vpop.f32.mrf.mxu0
      %v3359 = vadd.f32 0.0, %v3358
      %v3360 = vpop.f32.mrf.mxu0
      %v3361 = vadd.f32 0.0, %v3360
      %3362 = vdwg.mxu0
      %3363 = vmatprep.subr.bf16.mxu0 %v3287
      %3364 = vmatpush1.bf16.msra.mxu0 %v3286
      %3365 = vmatprep.subr.bf16.mxu0 %v3283
      %3366 = vmatpush1.bf16.msra.mxu0 %v3282
      %3367 = vmatprep.subr.bf16.mxu0 %v3279
      %3368 = vmatpush1.bf16.msra.mxu0 %v3278
      %3369 = vmatprep.subr.bf16.mxu0 %v3275
      %3370 = vmatpush1.bf16.msra.mxu0 %v3274
      %3371 = vmatprep.subr.bf16.mxu0 %v3271
      %3372 = vmatpush1.bf16.msra.mxu0 %v3270
      %3373 = vmatprep.subr.bf16.mxu0 %v3267
      %3374 = vmatpush1.bf16.msra.mxu0 %v3266
      %3375 = vmatprep.subr.bf16.mxu0 %v3263
      %3376 = vmatpush1.bf16.msra.mxu0 %v3262
      %3377 = vmatprep.subr.bf16.mxu0 %v3259
      %3378 = vmatpush1.bf16.msra.mxu0 %v3258
      %3379 = vmatprep.subr.bf16.mxu0 0
      %3380 = vmatpush2.bf16.msra.mxu0 0
      %3381 = vmatprep.subr.bf16.mxu0 0
      %3382 = vmatpush2.bf16.msra.mxu0 0
      %3383 = vmatprep.subr.bf16.mxu0 0
      %3384 = vmatpush2.bf16.msra.mxu0 0
      %3385 = vmatprep.subr.bf16.mxu0 0
      %3386 = vmatpush2.bf16.msra.mxu0 0
      %3387 = vmatprep.subr.bf16.mxu0 0
      %3388 = vmatpush2.bf16.msra.mxu0 0
      %3389 = vmatprep.subr.bf16.mxu0 0
      %3390 = vmatpush2.bf16.msra.mxu0 0
      %3391 = vmatprep.subr.bf16.mxu0 0
      %3392 = vmatpush2.bf16.msra.mxu0 0
      %3393 = vmatprep.subr.bf16.mxu0 0
      %3394 = vmatpush2.bf16.msra.mxu0 0
      %3395 = vmatprep.mubr.bf16.mxu0 0
      %3396 = vmatmul.mubr.bf16.gmra.mxu0 %v3159
      %v3397 = vpop.f32.mrf.mxu0
      %v3398 = vadd.f32 0.0, %v3397
      %v3399 = vpop.f32.mrf.mxu0
      %v3400 = vadd.f32 0.0, %v3399
      %v3401 = vpop.f32.mrf.mxu0
      %v3402 = vadd.f32 0.0, %v3401
      %v3403 = vpop.f32.mrf.mxu0
      %v3404 = vadd.f32 0.0, %v3403
      %3405 = vdwg.mxu0
      %s3406 = sshra.s32 %s2483, 3
      %s3407 = sand.u32 %s2483, 7
      %s3408 = smul.u32 %s3406, 3
      %s3409 = smul.addr %s3408, 4
      %s3410 = scalar_lea.vmem [#allocation2], %s3409
      %v3411 = vld [vmem:[%s3410] sm:$0xff]
      %v3412 = vld [vmem:[%s3410 + $0x8] sm:$0xf]
      %v3413 = vld [vmem:[%s3410 + $0xc] sm:$0xff]
      %v3414 = vld [vmem:[%s3410 + $0x14] sm:$0xf]
      %v3415 = vunpack.c.l.bf16 %v3411
      %v3416 = vunpack.c.l.bf16 %v3413
      %v3417 = vadd.f32 %v3415, %v2650
      %v3418 = vadd.f32 %v3416, %v2654
      %v3419 = vxor.u32 %v3417, 2147483648
      %v3420 = vxor.u32 %v3418, 2147483648
      %v3421 = vmul.f32 %v3419, 1.442695
      %v3422 = vpow.pop %v3421
      %v3423 = vmul.f32 %v3420, 1.442695
      %v3424 = vpow.pop %v3423
      %v3425 = vadd.f32 %v3422, 1.0
      %v3426 = vadd.f32 %v3424, 1.0
      %v3427 = vrcp.pop %v3425
      %v3428 = vmul.f32 1.0, %v3427
      %v3429 = vrcp.pop %v3426
      %v3430 = vmul.f32 1.0, %v3429
      %v3433 = vrot.slane %v3411, 4
      %v3434 = vrot.slane %v3413, 4
      %v3437 = vunpack.c.l.bf16 %v3433
      %v3438 = vunpack.c.l.bf16 %v3434
      %v3439 = vadd.f32 %v3437, %v2652
      %v3440 = vadd.f32 %v3438, %v2656
      %v3441 = vxor.u32 %v3439, 2147483648
      %v3442 = vxor.u32 %v3440, 2147483648
      %v3443 = vmul.f32 %v3441, 1.442695
      %v3444 = vpow.pop %v3443
      %v3445 = vmul.f32 %v3442, 1.442695
      %v3446 = vpow.pop %v3445
      %v3447 = vadd.f32 %v3444, 1.0
      %v3448 = vadd.f32 %v3446, 1.0
      %v3449 = vrcp.pop %v3447
      %v3450 = vmul.f32 1.0, %v3449
      %v3451 = vrcp.pop %v3448
      %v3452 = vmul.f32 1.0, %v3451
      %v3453 = vadd.f32 %v2693, %v2456
      %v3454 = vadd.f32 %v2696, %v2456
      %v3455 = vmul.f32 %v3428, %v3453
      %v3456 = vmul.f32 %v3430, %v3454
      %v3457 = vunpack.c.l.bf16 %v3412
      %v3458 = vunpack.c.l.bf16 %v3414
      %v3459 = vadd.f32 %v3457, %v3455
      %v3460 = vadd.f32 %v3458, %v3456
      %v3461 = vtanh.pop %v3459
      %v3462 = vtanh.pop %v3460
      %v3463 = vsub.f32 1.0, %v3450
      %v3464 = vsub.f32 1.0, %v3452
      %v3465 = vmul.f32 %v3463, %v3461
      %v3466 = vmul.f32 %v3464, %v3462
      %v3467 = vmul.f32 %v3450, %v2471
      %v3468 = vmul.f32 %v3452, %v2472
      %v3469 = vadd.f32 %v3465, %v3467
      %v3470 = vadd.f32 %v3466, %v3468
      %s3471 = sshra.s32 %s2485, 3
      %s3472 = sand.u32 %s2485, 7
      %s3473 = smul.u32 %s3471, 3
      %s3474 = smul.addr %s3473, 4
      %s3475 = scalar_lea.vmem [#allocation3], %s3474
      %v3476 = vld [vmem:[%s3475] sm:$0xff]
      %v3477 = vld [vmem:[%s3475 + $0x8] sm:$0xf]
      %v3478 = vld [vmem:[%s3475 + $0xc] sm:$0xff]
      %v3479 = vld [vmem:[%s3475 + $0x14] sm:$0xf]
      %v3480 = vunpack.c.l.bf16 %v3476
      %v3481 = vunpack.c.l.bf16 %v3478
      %v3482 = vadd.f32 %v3480, %v2863
      %v3483 = vadd.f32 %v3481, %v2867
      %v3484 = vxor.u32 %v3482, 2147483648
      %v3485 = vxor.u32 %v3483, 2147483648
      %v3486 = vmul.f32 %v3484, 1.442695
      %v3487 = vpow.pop %v3486
      %v3488 = vmul.f32 %v3485, 1.442695
      %v3489 = vpow.pop %v3488
      %v3490 = vadd.f32 %v3487, 1.0
      %v3491 = vadd.f32 %v3489, 1.0
      %v3492 = vrcp.pop %v3490
      %v3493 = vmul.f32 1.0, %v3492
      %v3494 = vrcp.pop %v3491
      %v3495 = vmul.f32 1.0, %v3494
      %v3498 = vrot.slane %v3476, 4
      %v3499 = vrot.slane %v3478, 4
      %v3502 = vunpack.c.l.bf16 %v3498
      %v3503 = vunpack.c.l.bf16 %v3499
      %v3504 = vadd.f32 %v3502, %v2865
      %v3505 = vadd.f32 %v3503, %v2869
      %v3506 = vxor.u32 %v3504, 2147483648
      %v3507 = vxor.u32 %v3505, 2147483648
      %v3508 = vmul.f32 %v3506, 1.442695
      %v3509 = vpow.pop %v3508
      %v3510 = vmul.f32 %v3507, 1.442695
      %v3511 = vpow.pop %v3510
      %v3512 = vadd.f32 %v3509, 1.0
      %v3513 = vadd.f32 %v3511, 1.0
      %v3514 = vrcp.pop %v3512
      %v3515 = vmul.f32 1.0, %v3514
      %v3516 = vrcp.pop %v3513
      %v3517 = vmul.f32 1.0, %v3516
      %v3518 = vadd.f32 %v2906, %v2463
      %v3519 = vadd.f32 %v2909, %v2463
      %v3520 = vmul.f32 %v3493, %v3518
      %v3521 = vmul.f32 %v3495, %v3519
      %v3522 = vunpack.c.l.bf16 %v3477
      %v3523 = vunpack.c.l.bf16 %v3479
      %v3524 = vadd.f32 %v3522, %v3520
      %v3525 = vadd.f32 %v3523, %v3521
      %v3526 = vtanh.pop %v3524
      %v3527 = vtanh.pop %v3525
      %v3528 = vsub.f32 1.0, %v3515
      %v3529 = vsub.f32 1.0, %v3517
      %v3530 = vmul.f32 %v3528, %v3526
      %v3531 = vmul.f32 %v3529, %v3527
      %v3532 = vmul.f32 %v3515, %v2473
      %v3533 = vmul.f32 %v3517, %v2474
      %v3534 = vadd.f32 %v3530, %v3532
      %v3535 = vadd.f32 %v3531, %v3533
      %s3536 = smul.u32 %s3406, 4
      %s3537 = smul.addr %s3536, 4
      %s3538 = scalar_lea.vmem [#allocation4], %s3537
      %v3539 = vld [vmem:[%s3538] sm:$0xff]
      %v3540 = vld [vmem:[%s3538 + $0x8] sm:$0xff]
      %v3541 = vld [vmem:[%s3538 + $0x10] sm:$0xff]
      %v3542 = vld [vmem:[%s3538 + $0x18] sm:$0xff]
      %v3543 = vunpack.c.l.bf16 %v3539
      %v3544 = vunpack.c.h.bf16 %v3539
      %v3545 = vunpack.c.l.bf16 %v3540
      %v3546 = vunpack.c.h.bf16 %v3540
      %v3547 = vunpack.c.l.bf16 %v3541
      %v3548 = vunpack.c.h.bf16 %v3541
      %v3549 = vunpack.c.l.bf16 %v3542
      %v3550 = vunpack.c.h.bf16 %v3542
      %v3551 = vadd.f32 %v3543, %v3108
      %v3552 = vadd.f32 %v3544, %v3110
      %v3553 = vadd.f32 %v3545, %v3151
      %v3554 = vadd.f32 %v3546, %v3153
      %v3555 = vadd.f32 %v3547, %v3112
      %v3556 = vadd.f32 %v3548, %v3114
      %v3557 = vadd.f32 %v3549, %v3155
      %v3558 = vadd.f32 %v3550, %v3157
      %v3559 = vxor.u32 %v3551, 2147483648
      %v3560 = vxor.u32 %v3555, 2147483648
      %v3561 = vmul.f32 %v3559, 1.442695
      %v3562 = vpow.pop %v3561
      %v3563 = vmul.f32 %v3560, 1.442695
      %v3564 = vpow.pop %v3563
      %v3565 = vadd.f32 %v3562, 1.0
      %v3566 = vadd.f32 %v3564, 1.0
      %v3567 = vrcp.pop %v3565
      %v3568 = vmul.f32 1.0, %v3567
      %v3569 = vrcp.pop %v3566
      %v3570 = vmul.f32 1.0, %v3569
      %v3571 = vxor.u32 %v3552, 2147483648
      %v3572 = vxor.u32 %v3556, 2147483648
      %v3573 = vmul.f32 %v3571, 1.442695
      %v3574 = vpow.pop %v3573
      %v3575 = vmul.f32 %v3572, 1.442695
      %v3576 = vpow.pop %v3575
      %v3577 = vadd.f32 %v3574, 1.0
      %v3578 = vadd.f32 %v3576, 1.0
      %v3579 = vrcp.pop %v3577
      %v3580 = vmul.f32 1.0, %v3579
      %v3581 = vrcp.pop %v3578
      %v3582 = vmul.f32 1.0, %v3581
      %v3583 = vtanh.pop %v3553
      %v3584 = vtanh.pop %v3557
      %v3585 = vxor.u32 %v3554, 2147483648
      %v3586 = vxor.u32 %v3558, 2147483648
      %v3587 = vmul.f32 %v3585, 1.442695
      %v3588 = vpow.pop %v3587
      %v3589 = vmul.f32 %v3586, 1.442695
      %v3590 = vpow.pop %v3589
      %v3591 = vadd.f32 %v3588, 1.0
      %v3592 = vadd.f32 %v3590, 1.0
      %v3593 = vrcp.pop %v3591
      %v3594 = vmul.f32 1.0, %v3593
      %v3595 = vrcp.pop %v3592
      %v3596 = vmul.f32 1.0, %v3595
      %v3597 = vmul.f32 %v3580, %v2477
      %v3598 = vmul.f32 %v3582, %v2478
      %v3599 = vmul.f32 %v3568, %v3583
      %v3600 = vmul.f32 %v3570, %v3584
      %v3601 = vadd.f32 %v3597, %v3599
      %v3602 = vadd.f32 %v3598, %v3600
      %v3603 = vtanh.pop %v3601
      %v3604 = vtanh.pop %v3602
      %v3605 = vmul.f32 %v3594, %v3603
      %v3606 = vmul.f32 %v3596, %v3604
      %s3607 = smul.u32 %s3471, 4
      %s3608 = smul.addr %s3607, 4
      %s3609 = scalar_lea.vmem [#allocation5], %s3608
      %v3610 = vld [vmem:[%s3609] sm:$0xff]
      %v3611 = vld [vmem:[%s3609 + $0x8] sm:$0xff]
      %v3612 = vld [vmem:[%s3609 + $0x10] sm:$0xff]
      %v3613 = vld [vmem:[%s3609 + $0x18] sm:$0xff]
      %v3614 = vunpack.c.l.bf16 %v3610
      %v3615 = vunpack.c.h.bf16 %v3610
      %v3616 = vunpack.c.l.bf16 %v3611
      %v3617 = vunpack.c.h.bf16 %v3611
      %v3618 = vunpack.c.l.bf16 %v3612
      %v3619 = vunpack.c.h.bf16 %v3612
      %v3620 = vunpack.c.l.bf16 %v3613
      %v3621 = vunpack.c.h.bf16 %v3613
      %v3622 = vadd.f32 %v3614, %v3355
      %v3623 = vadd.f32 %v3615, %v3357
      %v3624 = vadd.f32 %v3616, %v3398
      %v3625 = vadd.f32 %v3617, %v3400
      %v3626 = vadd.f32 %v3618, %v3359
      %v3627 = vadd.f32 %v3619, %v3361
      %v3628 = vadd.f32 %v3620, %v3402
      %v3629 = vadd.f32 %v3621, %v3404
      %v3630 = vxor.u32 %v3622, 2147483648
      %v3631 = vxor.u32 %v3626, 2147483648
      %v3632 = vmul.f32 %v3630, 1.442695
      %v3633 = vpow.pop %v3632
      %v3634 = vmul.f32 %v3631, 1.442695
      %v3635 = vpow.pop %v3634
      %v3636 = vadd.f32 %v3633, 1.0
      %v3637 = vadd.f32 %v3635, 1.0
      %v3638 = vrcp.pop %v3636
      %v3639 = vmul.f32 1.0, %v3638
      %v3640 = vrcp.pop %v3637
      %v3641 = vmul.f32 1.0, %v3640
      %v3642 = vxor.u32 %v3623, 2147483648
      %v3643 = vxor.u32 %v3627, 2147483648
      %v3644 = vmul.f32 %v3642, 1.442695
      %v3645 = vpow.pop %v3644
      %v3646 = vmul.f32 %v3643, 1.442695
      %v3647 = vpow.pop %v3646
      %v3648 = vadd.f32 %v3645, 1.0
      %v3649 = vadd.f32 %v3647, 1.0
      %v3650 = vrcp.pop %v3648
      %v3651 = vmul.f32 1.0, %v3650
      %v3652 = vrcp.pop %v3649
      %v3653 = vmul.f32 1.0, %v3652
      %v3654 = vtanh.pop %v3624
      %v3655 = vtanh.pop %v3628
      %v3656 = vxor.u32 %v3625, 2147483648
      %v3657 = vxor.u32 %v3629, 2147483648
      %v3658 = vmul.f32 %v3656, 1.442695
      %v3659 = vpow.pop %v3658
      %v3660 = vmul.f32 %v3657, 1.442695
      %v3661 = vpow.pop %v3660
      %v3662 = vadd.f32 %v3659, 1.0
      %v3663 = vadd.f32 %v3661, 1.0
      %v3664 = vrcp.pop %v3662
      %v3665 = vmul.f32 1.0, %v3664
      %v3666 = vrcp.pop %v3663
      %v3667 = vmul.f32 1.0, %v3666
      %v3668 = vmul.f32 %v3651, %v2481
      %v3669 = vmul.f32 %v3653, %v2482
      %v3670 = vmul.f32 %v3639, %v3654
      %v3671 = vmul.f32 %v3641, %v3655
      %v3672 = vadd.f32 %v3668, %v3670
      %v3673 = vadd.f32 %v3669, %v3671
      %v3674 = vtanh.pop %v3672
      %v3675 = vtanh.pop %v3673
      %v3676 = vmul.f32 %v3665, %v3674
      %v3677 = vmul.f32 %v3667, %v3675
      %v3678 = vpack.c.bf16 %v3470, %v3469
      %v3680 = vunpack.c.l.b16 %v3678
      %v3681 = vunpack.c.h.b16 %v3678
      %v3682 = vpack.c.b16 %v3680, %v3680
      %v3683 = vpack.c.b16 %v3681, %v3681
      %s3686 = smul.addr %s3406, 4
      %s3687 = scalar_lea.vmem [#allocation6], %s3686
      %3688 = vst [vmem:[%s3687] sm:$0xf] %v3682
      %3689 = vst [vmem:[%s3687 + $0x4] sm:$0xf] %v3683
      %v3690 = vpack.c.bf16 %v3535, %v3534
      %v3692 = vunpack.c.l.b16 %v3690
      %v3693 = vunpack.c.h.b16 %v3690
      %v3694 = vpack.c.b16 %v3692, %v3692
      %v3695 = vpack.c.b16 %v3693, %v3693
      %s3698 = smul.addr %s3471, 4
      %s3699 = scalar_lea.vmem [#allocation7], %s3698
      %3700 = vst [vmem:[%s3699] sm:$0xf] %v3694
      %3701 = vst [vmem:[%s3699 + $0x4] sm:$0xf] %v3695
      %v3702 = vpack.c.bf16 %v3606, %v3605
      %v3704 = vunpack.c.l.b16 %v3702
      %v3705 = vunpack.c.h.b16 %v3702
      %v3706 = vpack.c.b16 %v3704, %v3704
      %v3707 = vpack.c.b16 %v3705, %v3705
      %s3710 = smul.addr %s3406, 4
      %s3711 = scalar_lea.vmem [#allocation8], %s3710
      %3712 = vst [vmem:[%s3711] sm:$0xf] %v3706
      %3713 = vst [vmem:[%s3711 + $0x4] sm:$0xf] %v3707
      %v3714 = vpack.c.bf16 %v3677, %v3676
      %v3716 = vunpack.c.l.b16 %v3714
      %v3717 = vunpack.c.h.b16 %v3714
      %v3718 = vpack.c.b16 %v3716, %v3716
      %v3719 = vpack.c.b16 %v3717, %v3717
      %s3722 = smul.addr %s3471, 4
      %s3723 = scalar_lea.vmem [#allocation9], %s3722
      %3724 = vst [vmem:[%s3723] sm:$0xf] %v3718
      %3725 = vst [vmem:[%s3723 + $0x4] sm:$0xf] %v3719
    $region178: #{lstm_gru_cnn_forward.1} parent=1 // loop_footer
      %s2470 = sadd.s32 1, %s2466
    $region179: #{lstm_gru_cnn_forward.1} parent=1 // loop_footer_branch
      %2465 = sbr.rel target = $region175
    $region180: #{lstm_gru_cnn_forward.1} parent=1 // loop_exit
      _
    %v3726 = vld [vmem:[%s15] sm:$0xf]
    %v3727 = vld [vmem:[%s15 + $0x4] sm:$0xf]
    %v3728 = vld [vmem:[%s15 + $0x8] sm:$0xf]
    %v3729 = vld [vmem:[%s15 + $0xc] sm:$0xf]
    %v3730 = vld [vmem:[%s15 + $0x10] sm:$0xf]
    %v3731 = vld [vmem:[%s15 + $0x14] sm:$0xf]
    %v3732 = vld [vmem:[%s15 + $0x18] sm:$0xf]
    %v3733 = vld [vmem:[%s15 + $0x1c] sm:$0xf]
    %v3734 = vld [vmem:[%s15 + $0x20] sm:$0xf]
    %v3735 = vld [vmem:[%s15 + $0x24] sm:$0xf]
    %v3736 = vld [vmem:[%s15 + $0x28] sm:$0xf]
    %v3737 = vld [vmem:[%s15 + $0x2c] sm:$0xf]
    %v3738 = vld [vmem:[%s15 + $0x30] sm:$0xf]
    %v3739 = vld [vmem:[%s15 + $0x34] sm:$0xf]
    %v3740 = vld [vmem:[%s15 + $0x38] sm:$0xf]
    %v3741 = vld [vmem:[%s15 + $0x3c] sm:$0xf]
    %v3742 = vld [vmem:[%s15 + $0x40] sm:$0xf]
    %v3743 = vld [vmem:[%s15 + $0x44] sm:$0xf]
    %v3744 = vld [vmem:[%s15 + $0x48] sm:$0xf]
    %v3745 = vld [vmem:[%s15 + $0x4c] sm:$0xf]
    %v3746 = vld [vmem:[%s15 + $0x50] sm:$0xf]
    %v3747 = vld [vmem:[%s15 + $0x54] sm:$0xf]
    %v3748 = vld [vmem:[%s15 + $0x58] sm:$0xf]
    %v3749 = vld [vmem:[%s15 + $0x5c] sm:$0xf]
    %v3750 = vld [vmem:[%s15 + $0x60] sm:$0xf]
    %v3751 = vld [vmem:[%s15 + $0x64] sm:$0xf]
    %v3752 = vld [vmem:[%s15 + $0x68] sm:$0xf]
    %v3753 = vld [vmem:[%s15 + $0x6c] sm:$0xf]
    %v3754 = vld [vmem:[%s15 + $0x70] sm:$0xf]
    %v3755 = vld [vmem:[%s15 + $0x74] sm:$0xf]
    %v3756 = vld [vmem:[%s15 + $0x78] sm:$0xf]
    %v3757 = vld [vmem:[%s15 + $0x7c] sm:$0xf]
    %v3758 = vld [vmem:[#allocation21] sm:$0xf]
    %v3759 = vld [vmem:[#allocation21 + $0x4] sm:$0xf]
    %v3760 = vld [vmem:[#allocation21 + $0x8] sm:$0xf]
    %v3761 = vld [vmem:[#allocation21 + $0xc] sm:$0xf]
    %v3762 = vld [vmem:[#allocation21 + $0x10] sm:$0xf]
    %v3763 = vld [vmem:[#allocation21 + $0x14] sm:$0xf]
    %v3764 = vld [vmem:[#allocation21 + $0x18] sm:$0xf]
    %v3765 = vld [vmem:[#allocation21 + $0x1c] sm:$0xf]
    %v3766 = vld [vmem:[#allocation21 + $0x20] sm:$0xf]
    %v3767 = vld [vmem:[#allocation21 + $0x24] sm:$0xf]
    %v3768 = vld [vmem:[#allocation21 + $0x28] sm:$0xf]
    %v3769 = vld [vmem:[#allocation21 + $0x2c] sm:$0xf]
    %v3770 = vld [vmem:[#allocation21 + $0x30] sm:$0xf]
    %v3771 = vld [vmem:[#allocation21 + $0x34] sm:$0xf]
    %v3772 = vld [vmem:[#allocation21 + $0x38] sm:$0xf]
    %v3773 = vld [vmem:[#allocation21 + $0x3c] sm:$0xf]
    %v3774 = vld [vmem:[#allocation21 + $0x40] sm:$0xf]
    %v3775 = vld [vmem:[#allocation21 + $0x44] sm:$0xf]
    %v3776 = vld [vmem:[#allocation21 + $0x48] sm:$0xf]
    %v3777 = vld [vmem:[#allocation21 + $0x4c] sm:$0xf]
    %v3778 = vld [vmem:[#allocation21 + $0x50] sm:$0xf]
    %v3779 = vld [vmem:[#allocation21 + $0x54] sm:$0xf]
    %v3780 = vld [vmem:[#allocation21 + $0x58] sm:$0xf]
    %v3781 = vld [vmem:[#allocation21 + $0x5c] sm:$0xf]
    %v3782 = vld [vmem:[#allocation21 + $0x60] sm:$0xf]
    %v3783 = vld [vmem:[#allocation21 + $0x64] sm:$0xf]
    %v3784 = vld [vmem:[#allocation21 + $0x68] sm:$0xf]
    %v3785 = vld [vmem:[#allocation21 + $0x6c] sm:$0xf]
    %v3786 = vld [vmem:[#allocation21 + $0x70] sm:$0xf]
    %v3787 = vld [vmem:[#allocation21 + $0x74] sm:$0xf]
    %v3788 = vld [vmem:[#allocation21 + $0x78] sm:$0xf]
    %v3789 = vld [vmem:[#allocation21 + $0x7c] sm:$0xf]
    %v3790 = vld [vmem:[#allocation6] sm:$0xf]
    %v3791 = vld [vmem:[#allocation6 + $0x4] sm:$0xf]
    %v3792 = vld [vmem:[#allocation6 + $0x8] sm:$0xf]
    %v3793 = vld [vmem:[#allocation6 + $0xc] sm:$0xf]
    %v3794 = vld [vmem:[#allocation6 + $0x10] sm:$0xf]
    %v3795 = vld [vmem:[#allocation6 + $0x14] sm:$0xf]
    %v3796 = vld [vmem:[#allocation6 + $0x18] sm:$0xf]
    %v3797 = vld [vmem:[#allocation6 + $0x1c] sm:$0xf]
    %v3798 = vld [vmem:[#allocation6 + $0x20] sm:$0xf]
    %v3799 = vld [vmem:[#allocation6 + $0x24] sm:$0xf]
    %v3800 = vld [vmem:[#allocation6 + $0x28] sm:$0xf]
    %v3801 = vld [vmem:[#allocation6 + $0x2c] sm:$0xf]
    %v3802 = vld [vmem:[#allocation6 + $0x30] sm:$0xf]
    %v3803 = vld [vmem:[#allocation6 + $0x34] sm:$0xf]
    %v3804 = vld [vmem:[#allocation7] sm:$0xf]
    %v3805 = vld [vmem:[#allocation7 + $0x4] sm:$0xf]
    %v3806 = vld [vmem:[#allocation7 + $0x8] sm:$0xf]
    %v3807 = vld [vmem:[#allocation7 + $0xc] sm:$0xf]
    %v3808 = vld [vmem:[#allocation7 + $0x10] sm:$0xf]
    %v3809 = vld [vmem:[#allocation7 + $0x14] sm:$0xf]
    %v3810 = vld [vmem:[#allocation7 + $0x18] sm:$0xf]
    %v3811 = vld [vmem:[#allocation7 + $0x1c] sm:$0xf]
    %v3812 = vld [vmem:[#allocation7 + $0x20] sm:$0xf]
    %v3813 = vld [vmem:[#allocation7 + $0x24] sm:$0xf]
    %v3814 = vld [vmem:[#allocation7 + $0x28] sm:$0xf]
    %v3815 = vld [vmem:[#allocation7 + $0x2c] sm:$0xf]
    %v3816 = vld [vmem:[#allocation7 + $0x30] sm:$0xf]
    %v3817 = vld [vmem:[#allocation7 + $0x34] sm:$0xf]
    %v3832 = vunpack.c.l.b16 %v3804
    %v3833 = vunpack.c.l.b16 %v3805
    %v3834 = vunpack.c.l.b16 %v3806
    %v3835 = vunpack.c.l.b16 %v3807
    %v3836 = vunpack.c.l.b16 %v3808
    %v3837 = vunpack.c.l.b16 %v3809
    %v3838 = vunpack.c.l.b16 %v3810
    %v3839 = vunpack.c.l.b16 %v3811
    %v3840 = vunpack.c.l.b16 %v3812
    %v3841 = vunpack.c.l.b16 %v3813
    %v3842 = vunpack.c.l.b16 %v3814
    %v3843 = vunpack.c.l.b16 %v3815
    %v3844 = vunpack.c.l.b16 %v3816
    %v3845 = vunpack.c.l.b16 %v3817
    %v3846 = vpack.c.b16 %v3833, %v3832
    %v3847 = vpack.c.b16 %v3835, %v3834
    %v3848 = vpack.c.b16 %v3837, %v3836
    %v3849 = vpack.c.b16 %v3839, %v3838
    %v3850 = vpack.c.b16 %v3841, %v3840
    %v3851 = vpack.c.b16 %v3843, %v3842
    %v3852 = vpack.c.b16 %v3845, %v3844
    %v3876 = vunpack.c.l.b16 %v3742
    %v3877 = vunpack.c.l.b16 %v3743
    %v3878 = vunpack.c.l.b16 %v3744
    %v3879 = vunpack.c.l.b16 %v3745
    %v3880 = vunpack.c.l.b16 %v3746
    %v3881 = vunpack.c.l.b16 %v3747
    %v3882 = vunpack.c.l.b16 %v3748
    %v3883 = vunpack.c.l.b16 %v3749
    %v3884 = vunpack.c.l.b16 %v3750
    %v3885 = vunpack.c.l.b16 %v3751
    %v3886 = vunpack.c.l.b16 %v3752
    %v3887 = vunpack.c.l.b16 %v3753
    %v3888 = vunpack.c.l.b16 %v3754
    %v3889 = vunpack.c.l.b16 %v3755
    %v3890 = vunpack.c.l.b16 %v3756
    %v3891 = vunpack.c.l.b16 %v3757
    %v3892 = vpack.c.b16 %v3877, %v3876
    %v3893 = vpack.c.b16 %v3879, %v3878
    %v3894 = vpack.c.b16 %v3881, %v3880
    %v3895 = vpack.c.b16 %v3883, %v3882
    %v3896 = vpack.c.b16 %v3885, %v3884
    %v3897 = vpack.c.b16 %v3887, %v3886
    %v3898 = vpack.c.b16 %v3889, %v3888
    %v3899 = vpack.c.b16 %v3891, %v3890
    %3908 = vmatprep.subr.bf16.mxu0 0
    %3909 = vmatpush1.bf16.msra.mxu0 %v3899
    %3910 = vmatprep.subr.bf16.mxu0 0
    %3911 = vmatpush1.bf16.msra.mxu0 %v3898
    %3912 = vmatprep.subr.bf16.mxu0 0
    %3913 = vmatpush1.bf16.msra.mxu0 %v3897
    %3914 = vmatprep.subr.bf16.mxu0 0
    %3915 = vmatpush1.bf16.msra.mxu0 %v3896
    %3916 = vmatprep.subr.bf16.mxu0 0
    %3917 = vmatpush1.bf16.msra.mxu0 %v3895
    %3918 = vmatprep.subr.bf16.mxu0 0
    %3919 = vmatpush1.bf16.msra.mxu0 %v3894
    %3920 = vmatprep.subr.bf16.mxu0 0
    %3921 = vmatpush1.bf16.msra.mxu0 %v3893
    %3922 = vmatprep.subr.bf16.mxu0 0
    %3923 = vmatpush1.bf16.msra.mxu0 %v3892
    %3924 = vmatprep.subr.bf16.mxu0 0
    %3925 = vmatpush2.bf16.msra.mxu0 0
    %3926 = vmatprep.subr.bf16.mxu0 0
    %3927 = vmatpush2.bf16.msra.mxu0 0
    %3928 = vmatprep.subr.bf16.mxu0 0
    %3929 = vmatpush2.bf16.msra.mxu0 0
    %3930 = vmatprep.subr.bf16.mxu0 0
    %3931 = vmatpush2.bf16.msra.mxu0 0
    %3932 = vmatprep.subr.bf16.mxu0 0
    %3933 = vmatpush2.bf16.msra.mxu0 0
    %3934 = vmatprep.subr.bf16.mxu0 0
    %3935 = vmatpush2.bf16.msra.mxu0 0
    %3936 = vmatprep.subr.bf16.mxu0 0
    %3937 = vmatpush2.bf16.msra.mxu0 0
    %3938 = vmatprep.subr.bf16.mxu0 0
    %3939 = vmatpush2.bf16.msra.mxu0 0
    %3940 = vmatprep.mubr.bf16.mxu0 0
    %3941 = vmatmul.mubr.bf16.gmra.mxu0 %v3846
    %v3942 = vpop.f32.mrf.mxu0
    %v3943 = vadd.f32 0.0, %v3942
    %v3944 = vpop.f32.mrf.mxu0
    %v3945 = vpop.f32.mrf.mxu0
    %v3946 = vadd.f32 0.0, %v3945
    %v3947 = vpop.f32.mrf.mxu0
    %3948 = vmatprep.mubr.bf16.mxu0 0
    %3949 = vmatmul.mubr.bf16.gmra.mxu0 %v3847
    %v3950 = vpop.f32.mrf.mxu0
    %v3951 = vadd.f32 0.0, %v3950
    %v3952 = vpop.f32.mrf.mxu0
    %v3953 = vpop.f32.mrf.mxu0
    %v3954 = vadd.f32 0.0, %v3953
    %v3955 = vpop.f32.mrf.mxu0
    %3956 = vmatprep.mubr.bf16.mxu0 0
    %3957 = vmatmul.mubr.bf16.gmra.mxu0 %v3848
    %v3958 = vpop.f32.mrf.mxu0
    %v3959 = vadd.f32 0.0, %v3958
    %v3960 = vpop.f32.mrf.mxu0
    %v3961 = vpop.f32.mrf.mxu0
    %v3962 = vadd.f32 0.0, %v3961
    %v3963 = vpop.f32.mrf.mxu0
    %3964 = vmatprep.mubr.bf16.mxu0 0
    %3965 = vmatmul.mubr.bf16.gmra.mxu0 %v3849
    %v3966 = vpop.f32.mrf.mxu0
    %v3967 = vadd.f32 0.0, %v3966
    %v3968 = vpop.f32.mrf.mxu0
    %v3969 = vpop.f32.mrf.mxu0
    %v3970 = vadd.f32 0.0, %v3969
    %v3971 = vpop.f32.mrf.mxu0
    %3972 = vmatprep.mubr.bf16.mxu0 0
    %3973 = vmatmul.mubr.bf16.gmra.mxu0 %v3850
    %v3974 = vpop.f32.mrf.mxu0
    %v3975 = vadd.f32 0.0, %v3974
    %v3976 = vpop.f32.mrf.mxu0
    %v3977 = vpop.f32.mrf.mxu0
    %v3978 = vadd.f32 0.0, %v3977
    %v3979 = vpop.f32.mrf.mxu0
    %3980 = vmatprep.mubr.bf16.mxu0 0
    %3981 = vmatmul.mubr.bf16.gmra.mxu0 %v3851
    %v3982 = vpop.f32.mrf.mxu0
    %v3983 = vadd.f32 0.0, %v3982
    %v3984 = vpop.f32.mrf.mxu0
    %v3985 = vpop.f32.mrf.mxu0
    %v3986 = vadd.f32 0.0, %v3985
    %v3987 = vpop.f32.mrf.mxu0
    %3988 = vmatprep.mubr.bf16.mxu0 0
    %3989 = vmatmul.mubr.bf16.gmra.mxu0 %v3852
    %v3990 = vpop.f32.mrf.mxu0
    %v3991 = vadd.f32 0.0, %v3990
    %v3992 = vpop.f32.mrf.mxu0
    %v3993 = vpop.f32.mrf.mxu0
    %v3994 = vadd.f32 0.0, %v3993
    %v3995 = vpop.f32.mrf.mxu0
    %3996 = vdwg.mxu0
    %v4011 = vunpack.c.l.b16 %v3790
    %v4012 = vunpack.c.l.b16 %v3791
    %v4013 = vunpack.c.l.b16 %v3792
    %v4014 = vunpack.c.l.b16 %v3793
    %v4015 = vunpack.c.l.b16 %v3794
    %v4016 = vunpack.c.l.b16 %v3795
    %v4017 = vunpack.c.l.b16 %v3796
    %v4018 = vunpack.c.l.b16 %v3797
    %v4019 = vunpack.c.l.b16 %v3798
    %v4020 = vunpack.c.l.b16 %v3799
    %v4021 = vunpack.c.l.b16 %v3800
    %v4022 = vunpack.c.l.b16 %v3801
    %v4023 = vunpack.c.l.b16 %v3802
    %v4024 = vunpack.c.l.b16 %v3803
    %v4025 = vpack.c.b16 %v4012, %v4011
    %v4026 = vpack.c.b16 %v4014, %v4013
    %v4027 = vpack.c.b16 %v4016, %v4015
    %v4028 = vpack.c.b16 %v4018, %v4017
    %v4029 = vpack.c.b16 %v4020, %v4019
    %v4030 = vpack.c.b16 %v4022, %v4021
    %v4031 = vpack.c.b16 %v4024, %v4023
    %v4055 = vunpack.c.l.b16 %v3726
    %v4056 = vunpack.c.l.b16 %v3727
    %v4057 = vunpack.c.l.b16 %v3728
    %v4058 = vunpack.c.l.b16 %v3729
    %v4059 = vunpack.c.l.b16 %v3730
    %v4060 = vunpack.c.l.b16 %v3731
    %v4061 = vunpack.c.l.b16 %v3732
    %v4062 = vunpack.c.l.b16 %v3733
    %v4063 = vunpack.c.l.b16 %v3734
    %v4064 = vunpack.c.l.b16 %v3735
    %v4065 = vunpack.c.l.b16 %v3736
    %v4066 = vunpack.c.l.b16 %v3737
    %v4067 = vunpack.c.l.b16 %v3738
    %v4068 = vunpack.c.l.b16 %v3739
    %v4069 = vunpack.c.l.b16 %v3740
    %v4070 = vunpack.c.l.b16 %v3741
    %v4071 = vpack.c.b16 %v4056, %v4055
    %v4072 = vpack.c.b16 %v4058, %v4057
    %v4073 = vpack.c.b16 %v4060, %v4059
    %v4074 = vpack.c.b16 %v4062, %v4061
    %v4075 = vpack.c.b16 %v4064, %v4063
    %v4076 = vpack.c.b16 %v4066, %v4065
    %v4077 = vpack.c.b16 %v4068, %v4067
    %v4078 = vpack.c.b16 %v4070, %v4069
    %4087 = vmatprep.subr.bf16.mxu0 0
    %4088 = vmatpush1.bf16.msra.mxu0 %v4078
    %4089 = vmatprep.subr.bf16.mxu0 0
    %4090 = vmatpush1.bf16.msra.mxu0 %v4077
    %4091 = vmatprep.subr.bf16.mxu0 0
    %4092 = vmatpush1.bf16.msra.mxu0 %v4076
    %4093 = vmatprep.subr.bf16.mxu0 0
    %4094 = vmatpush1.bf16.msra.mxu0 %v4075
    %4095 = vmatprep.subr.bf16.mxu0 0
    %4096 = vmatpush1.bf16.msra.mxu0 %v4074
    %4097 = vmatprep.subr.bf16.mxu0 0
    %4098 = vmatpush1.bf16.msra.mxu0 %v4073
    %4099 = vmatprep.subr.bf16.mxu0 0
    %4100 = vmatpush1.bf16.msra.mxu0 %v4072
    %4101 = vmatprep.subr.bf16.mxu0 0
    %4102 = vmatpush1.bf16.msra.mxu0 %v4071
    %4103 = vmatprep.subr.bf16.mxu0 0
    %4104 = vmatpush2.bf16.msra.mxu0 0
    %4105 = vmatprep.subr.bf16.mxu0 0
    %4106 = vmatpush2.bf16.msra.mxu0 0
    %4107 = vmatprep.subr.bf16.mxu0 0
    %4108 = vmatpush2.bf16.msra.mxu0 0
    %4109 = vmatprep.subr.bf16.mxu0 0
    %4110 = vmatpush2.bf16.msra.mxu0 0
    %4111 = vmatprep.subr.bf16.mxu0 0
    %4112 = vmatpush2.bf16.msra.mxu0 0
    %4113 = vmatprep.subr.bf16.mxu0 0
    %4114 = vmatpush2.bf16.msra.mxu0 0
    %4115 = vmatprep.subr.bf16.mxu0 0
    %4116 = vmatpush2.bf16.msra.mxu0 0
    %4117 = vmatprep.subr.bf16.mxu0 0
    %4118 = vmatpush2.bf16.msra.mxu0 0
    %4119 = vmatprep.mubr.bf16.mxu0 0
    %4120 = vmatmul.mubr.bf16.gmra.mxu0 %v4025
    %v4121 = vpop.f32.mrf.mxu0
    %v4122 = vadd.f32 %v3943, %v4121
    %v4123 = vpop.f32.mrf.mxu0
    %v4124 = vpop.f32.mrf.mxu0
    %v4125 = vadd.f32 %v3946, %v4124
    %v4126 = vpop.f32.mrf.mxu0
    %4127 = vmatprep.mubr.bf16.mxu0 0
    %4128 = vmatmul.mubr.bf16.gmra.mxu0 %v4026
    %v4129 = vpop.f32.mrf.mxu0
    %v4130 = vadd.f32 %v3951, %v4129
    %v4131 = vpop.f32.mrf.mxu0
    %v4132 = vpop.f32.mrf.mxu0
    %v4133 = vadd.f32 %v3954, %v4132
    %v4134 = vpop.f32.mrf.mxu0
    %4135 = vmatprep.mubr.bf16.mxu0 0
    %4136 = vmatmul.mubr.bf16.gmra.mxu0 %v4027
    %v4137 = vpop.f32.mrf.mxu0
    %v4138 = vadd.f32 %v3959, %v4137
    %v4139 = vpop.f32.mrf.mxu0
    %v4140 = vpop.f32.mrf.mxu0
    %v4141 = vadd.f32 %v3962, %v4140
    %v4142 = vpop.f32.mrf.mxu0
    %4143 = vmatprep.mubr.bf16.mxu0 0
    %4144 = vmatmul.mubr.bf16.gmra.mxu0 %v4028
    %v4145 = vpop.f32.mrf.mxu0
    %v4146 = vadd.f32 %v3967, %v4145
    %v4147 = vpop.f32.mrf.mxu0
    %v4148 = vpop.f32.mrf.mxu0
    %v4149 = vadd.f32 %v3970, %v4148
    %v4150 = vpop.f32.mrf.mxu0
    %4151 = vmatprep.mubr.bf16.mxu0 0
    %4152 = vmatmul.mubr.bf16.gmra.mxu0 %v4029
    %v4153 = vpop.f32.mrf.mxu0
    %v4154 = vadd.f32 %v3975, %v4153
    %v4155 = vpop.f32.mrf.mxu0
    %v4156 = vpop.f32.mrf.mxu0
    %v4157 = vadd.f32 %v3978, %v4156
    %v4158 = vpop.f32.mrf.mxu0
    %4159 = vmatprep.mubr.bf16.mxu0 0
    %4160 = vmatmul.mubr.bf16.gmra.mxu0 %v4030
    %v4161 = vpop.f32.mrf.mxu0
    %v4162 = vadd.f32 %v3983, %v4161
    %v4163 = vpop.f32.mrf.mxu0
    %v4164 = vpop.f32.mrf.mxu0
    %v4165 = vadd.f32 %v3986, %v4164
    %v4166 = vpop.f32.mrf.mxu0
    %4167 = vmatprep.mubr.bf16.mxu0 0
    %4168 = vmatmul.mubr.bf16.gmra.mxu0 %v4031
    %v4169 = vpop.f32.mrf.mxu0
    %v4170 = vadd.f32 %v3991, %v4169
    %v4171 = vpop.f32.mrf.mxu0
    %v4172 = vpop.f32.mrf.mxu0
    %v4173 = vadd.f32 %v3994, %v4172
    %v4174 = vpop.f32.mrf.mxu0
    %4175 = vdwg.mxu0
    %v4176 = vld [vmem:[#allocation6 + $0x8] sm:$0xf]
    %v4177 = vld [vmem:[#allocation6 + $0xc] sm:$0xf]
    %v4178 = vld [vmem:[#allocation6 + $0x10] sm:$0xf]
    %v4179 = vld [vmem:[#allocation6 + $0x14] sm:$0xf]
    %v4180 = vld [vmem:[#allocation6 + $0x18] sm:$0xf]
    %v4181 = vld [vmem:[#allocation6 + $0x1c] sm:$0xf]
    %v4182 = vld [vmem:[#allocation6 + $0x20] sm:$0xf]
    %v4183 = vld [vmem:[#allocation6 + $0x24] sm:$0xf]
    %v4184 = vld [vmem:[#allocation6 + $0x28] sm:$0xf]
    %v4185 = vld [vmem:[#allocation6 + $0x2c] sm:$0xf]
    %v4186 = vld [vmem:[#allocation6 + $0x30] sm:$0xf]
    %v4187 = vld [vmem:[#allocation6 + $0x34] sm:$0xf]
    %v4188 = vld [vmem:[#allocation6 + $0x38] sm:$0xf]
    %v4189 = vld [vmem:[#allocation6 + $0x3c] sm:$0xf]
    %v4204 = vunpack.c.l.b16 %v4176
    %v4205 = vunpack.c.l.b16 %v4177
    %v4206 = vunpack.c.l.b16 %v4178
    %v4207 = vunpack.c.l.b16 %v4179
    %v4208 = vunpack.c.l.b16 %v4180
    %v4209 = vunpack.c.l.b16 %v4181
    %v4210 = vunpack.c.l.b16 %v4182
    %v4211 = vunpack.c.l.b16 %v4183
    %v4212 = vunpack.c.l.b16 %v4184
    %v4213 = vunpack.c.l.b16 %v4185
    %v4214 = vunpack.c.l.b16 %v4186
    %v4215 = vunpack.c.l.b16 %v4187
    %v4216 = vunpack.c.l.b16 %v4188
    %v4217 = vunpack.c.l.b16 %v4189
    %v4218 = vpack.c.b16 %v4205, %v4204
    %v4219 = vpack.c.b16 %v4207, %v4206
    %v4220 = vpack.c.b16 %v4209, %v4208
    %v4221 = vpack.c.b16 %v4211, %v4210
    %v4222 = vpack.c.b16 %v4213, %v4212
    %v4223 = vpack.c.b16 %v4215, %v4214
    %v4224 = vpack.c.b16 %v4217, %v4216
    %v4248 = vunpack.c.l.b16 %v3758
    %v4249 = vunpack.c.l.b16 %v3759
    %v4250 = vunpack.c.l.b16 %v3760
    %v4251 = vunpack.c.l.b16 %v3761
    %v4252 = vunpack.c.l.b16 %v3762
    %v4253 = vunpack.c.l.b16 %v3763
    %v4254 = vunpack.c.l.b16 %v3764
    %v4255 = vunpack.c.l.b16 %v3765
    %v4256 = vunpack.c.l.b16 %v3766
    %v4257 = vunpack.c.l.b16 %v3767
    %v4258 = vunpack.c.l.b16 %v3768
    %v4259 = vunpack.c.l.b16 %v3769
    %v4260 = vunpack.c.l.b16 %v3770
    %v4261 = vunpack.c.l.b16 %v3771
    %v4262 = vunpack.c.l.b16 %v3772
    %v4263 = vunpack.c.l.b16 %v3773
    %v4264 = vpack.c.b16 %v4249, %v4248
    %v4265 = vpack.c.b16 %v4251, %v4250
    %v4266 = vpack.c.b16 %v4253, %v4252
    %v4267 = vpack.c.b16 %v4255, %v4254
    %v4268 = vpack.c.b16 %v4257, %v4256
    %v4269 = vpack.c.b16 %v4259, %v4258
    %v4270 = vpack.c.b16 %v4261, %v4260
    %v4271 = vpack.c.b16 %v4263, %v4262
    %4280 = vmatprep.subr.bf16.mxu0 0
    %4281 = vmatpush1.bf16.msra.mxu0 %v4271
    %4282 = vmatprep.subr.bf16.mxu0 0
    %4283 = vmatpush1.bf16.msra.mxu0 %v4270
    %4284 = vmatprep.subr.bf16.mxu0 0
    %4285 = vmatpush1.bf16.msra.mxu0 %v4269
    %4286 = vmatprep.subr.bf16.mxu0 0
    %4287 = vmatpush1.bf16.msra.mxu0 %v4268
    %4288 = vmatprep.subr.bf16.mxu0 0
    %4289 = vmatpush1.bf16.msra.mxu0 %v4267
    %4290 = vmatprep.subr.bf16.mxu0 0
    %4291 = vmatpush1.bf16.msra.mxu0 %v4266
    %4292 = vmatprep.subr.bf16.mxu0 0
    %4293 = vmatpush1.bf16.msra.mxu0 %v4265
    %4294 = vmatprep.subr.bf16.mxu0 0
    %4295 = vmatpush1.bf16.msra.mxu0 %v4264
    %4296 = vmatprep.subr.bf16.mxu0 0
    %4297 = vmatpush2.bf16.msra.mxu0 0
    %4298 = vmatprep.subr.bf16.mxu0 0
    %4299 = vmatpush2.bf16.msra.mxu0 0
    %4300 = vmatprep.subr.bf16.mxu0 0
    %4301 = vmatpush2.bf16.msra.mxu0 0
    %4302 = vmatprep.subr.bf16.mxu0 0
    %4303 = vmatpush2.bf16.msra.mxu0 0
    %4304 = vmatprep.subr.bf16.mxu0 0
    %4305 = vmatpush2.bf16.msra.mxu0 0
    %4306 = vmatprep.subr.bf16.mxu0 0
    %4307 = vmatpush2.bf16.msra.mxu0 0
    %4308 = vmatprep.subr.bf16.mxu0 0
    %4309 = vmatpush2.bf16.msra.mxu0 0
    %4310 = vmatprep.subr.bf16.mxu0 0
    %4311 = vmatpush2.bf16.msra.mxu0 0
    %4312 = vmatprep.mubr.bf16.mxu0 0
    %4313 = vmatmul.mubr.bf16.gmra.mxu0 %v4218
    %v4314 = vpop.f32.mrf.mxu0
    %v4315 = vadd.f32 0.0, %v4314
    %v4316 = vpop.f32.mrf.mxu0
    %v4317 = vpop.f32.mrf.mxu0
    %v4318 = vadd.f32 0.0, %v4317
    %v4319 = vpop.f32.mrf.mxu0
    %4320 = vmatprep.mubr.bf16.mxu0 0
    %4321 = vmatmul.mubr.bf16.gmra.mxu0 %v4219
    %v4322 = vpop.f32.mrf.mxu0
    %v4323 = vadd.f32 0.0, %v4322
    %v4324 = vpop.f32.mrf.mxu0
    %v4325 = vpop.f32.mrf.mxu0
    %v4326 = vadd.f32 0.0, %v4325
    %v4327 = vpop.f32.mrf.mxu0
    %4328 = vmatprep.mubr.bf16.mxu0 0
    %4329 = vmatmul.mubr.bf16.gmra.mxu0 %v4220
    %v4330 = vpop.f32.mrf.mxu0
    %v4331 = vadd.f32 0.0, %v4330
    %v4332 = vpop.f32.mrf.mxu0
    %v4333 = vpop.f32.mrf.mxu0
    %v4334 = vadd.f32 0.0, %v4333
    %v4335 = vpop.f32.mrf.mxu0
    %4336 = vmatprep.mubr.bf16.mxu0 0
    %4337 = vmatmul.mubr.bf16.gmra.mxu0 %v4221
    %v4338 = vpop.f32.mrf.mxu0
    %v4339 = vadd.f32 0.0, %v4338
    %v4340 = vpop.f32.mrf.mxu0
    %v4341 = vpop.f32.mrf.mxu0
    %v4342 = vadd.f32 0.0, %v4341
    %v4343 = vpop.f32.mrf.mxu0
    %4344 = vmatprep.mubr.bf16.mxu0 0
    %4345 = vmatmul.mubr.bf16.gmra.mxu0 %v4222
    %v4346 = vpop.f32.mrf.mxu0
    %v4347 = vadd.f32 0.0, %v4346
    %v4348 = vpop.f32.mrf.mxu0
    %v4349 = vpop.f32.mrf.mxu0
    %v4350 = vadd.f32 0.0, %v4349
    %v4351 = vpop.f32.mrf.mxu0
    %4352 = vmatprep.mubr.bf16.mxu0 0
    %4353 = vmatmul.mubr.bf16.gmra.mxu0 %v4223
    %v4354 = vpop.f32.mrf.mxu0
    %v4355 = vadd.f32 0.0, %v4354
    %v4356 = vpop.f32.mrf.mxu0
    %v4357 = vpop.f32.mrf.mxu0
    %v4358 = vadd.f32 0.0, %v4357
    %v4359 = vpop.f32.mrf.mxu0
    %4360 = vmatprep.mubr.bf16.mxu0 0
    %4361 = vmatmul.mubr.bf16.gmra.mxu0 %v4224
    %v4362 = vpop.f32.mrf.mxu0
    %v4363 = vadd.f32 0.0, %v4362
    %v4364 = vpop.f32.mrf.mxu0
    %v4365 = vpop.f32.mrf.mxu0
    %v4366 = vadd.f32 0.0, %v4365
    %v4367 = vpop.f32.mrf.mxu0
    %4368 = vdwg.mxu0
    %v4369 = vadd.f32 %v4122, %v4315
    %v4370 = vadd.f32 %v4125, %v4318
    %v4371 = vadd.f32 %v4130, %v4323
    %v4372 = vadd.f32 %v4133, %v4326
    %v4373 = vadd.f32 %v4138, %v4331
    %v4374 = vadd.f32 %v4141, %v4334
    %v4375 = vadd.f32 %v4146, %v4339
    %v4376 = vadd.f32 %v4149, %v4342
    %v4377 = vadd.f32 %v4154, %v4347
    %v4378 = vadd.f32 %v4157, %v4350
    %v4379 = vadd.f32 %v4162, %v4355
    %v4380 = vadd.f32 %v4165, %v4358
    %v4381 = vadd.f32 %v4170, %v4363
    %v4382 = vadd.f32 %v4173, %v4366
    %v4383 = vld [vmem:[#allocation7 + $0x8] sm:$0xf]
    %v4384 = vld [vmem:[#allocation7 + $0xc] sm:$0xf]
    %v4385 = vld [vmem:[#allocation7 + $0x10] sm:$0xf]
    %v4386 = vld [vmem:[#allocation7 + $0x14] sm:$0xf]
    %v4387 = vld [vmem:[#allocation7 + $0x18] sm:$0xf]
    %v4388 = vld [vmem:[#allocation7 + $0x1c] sm:$0xf]
    %v4389 = vld [vmem:[#allocation7 + $0x20] sm:$0xf]
    %v4390 = vld [vmem:[#allocation7 + $0x24] sm:$0xf]
    %v4391 = vld [vmem:[#allocation7 + $0x28] sm:$0xf]
    %v4392 = vld [vmem:[#allocation7 + $0x2c] sm:$0xf]
    %v4393 = vld [vmem:[#allocation7 + $0x30] sm:$0xf]
    %v4394 = vld [vmem:[#allocation7 + $0x34] sm:$0xf]
    %v4395 = vld [vmem:[#allocation7 + $0x38] sm:$0xf]
    %v4396 = vld [vmem:[#allocation7 + $0x3c] sm:$0xf]
    %v4411 = vunpack.c.l.b16 %v4383
    %v4412 = vunpack.c.l.b16 %v4384
    %v4413 = vunpack.c.l.b16 %v4385
    %v4414 = vunpack.c.l.b16 %v4386
    %v4415 = vunpack.c.l.b16 %v4387
    %v4416 = vunpack.c.l.b16 %v4388
    %v4417 = vunpack.c.l.b16 %v4389
    %v4418 = vunpack.c.l.b16 %v4390
    %v4419 = vunpack.c.l.b16 %v4391
    %v4420 = vunpack.c.l.b16 %v4392
    %v4421 = vunpack.c.l.b16 %v4393
    %v4422 = vunpack.c.l.b16 %v4394
    %v4423 = vunpack.c.l.b16 %v4395
    %v4424 = vunpack.c.l.b16 %v4396
    %v4425 = vpack.c.b16 %v4412, %v4411
    %v4426 = vpack.c.b16 %v4414, %v4413
    %v4427 = vpack.c.b16 %v4416, %v4415
    %v4428 = vpack.c.b16 %v4418, %v4417
    %v4429 = vpack.c.b16 %v4420, %v4419
    %v4430 = vpack.c.b16 %v4422, %v4421
    %v4431 = vpack.c.b16 %v4424, %v4423
    %v4455 = vunpack.c.l.b16 %v3774
    %v4456 = vunpack.c.l.b16 %v3775
    %v4457 = vunpack.c.l.b16 %v3776
    %v4458 = vunpack.c.l.b16 %v3777
    %v4459 = vunpack.c.l.b16 %v3778
    %v4460 = vunpack.c.l.b16 %v3779
    %v4461 = vunpack.c.l.b16 %v3780
    %v4462 = vunpack.c.l.b16 %v3781
    %v4463 = vunpack.c.l.b16 %v3782
    %v4464 = vunpack.c.l.b16 %v3783
    %v4465 = vunpack.c.l.b16 %v3784
    %v4466 = vunpack.c.l.b16 %v3785
    %v4467 = vunpack.c.l.b16 %v3786
    %v4468 = vunpack.c.l.b16 %v3787
    %v4469 = vunpack.c.l.b16 %v3788
    %v4470 = vunpack.c.l.b16 %v3789
    %v4471 = vpack.c.b16 %v4456, %v4455
    %v4472 = vpack.c.b16 %v4458, %v4457
    %v4473 = vpack.c.b16 %v4460, %v4459
    %v4474 = vpack.c.b16 %v4462, %v4461
    %v4475 = vpack.c.b16 %v4464, %v4463
    %v4476 = vpack.c.b16 %v4466, %v4465
    %v4477 = vpack.c.b16 %v4468, %v4467
    %v4478 = vpack.c.b16 %v4470, %v4469
    %4487 = vmatprep.subr.bf16.mxu0 0
    %4488 = vmatpush1.bf16.msra.mxu0 %v4478
    %4489 = vmatprep.subr.bf16.mxu0 0
    %4490 = vmatpush1.bf16.msra.mxu0 %v4477
    %4491 = vmatprep.subr.bf16.mxu0 0
    %4492 = vmatpush1.bf16.msra.mxu0 %v4476
    %4493 = vmatprep.subr.bf16.mxu0 0
    %4494 = vmatpush1.bf16.msra.mxu0 %v4475
    %4495 = vmatprep.subr.bf16.mxu0 0
    %4496 = vmatpush1.bf16.msra.mxu0 %v4474
    %4497 = vmatprep.subr.bf16.mxu0 0
    %4498 = vmatpush1.bf16.msra.mxu0 %v4473
    %4499 = vmatprep.subr.bf16.mxu0 0
    %4500 = vmatpush1.bf16.msra.mxu0 %v4472
    %4501 = vmatprep.subr.bf16.mxu0 0
    %4502 = vmatpush1.bf16.msra.mxu0 %v4471
    %4503 = vmatprep.subr.bf16.mxu0 0
    %4504 = vmatpush2.bf16.msra.mxu0 0
    %4505 = vmatprep.subr.bf16.mxu0 0
    %4506 = vmatpush2.bf16.msra.mxu0 0
    %4507 = vmatprep.subr.bf16.mxu0 0
    %4508 = vmatpush2.bf16.msra.mxu0 0
    %4509 = vmatprep.subr.bf16.mxu0 0
    %4510 = vmatpush2.bf16.msra.mxu0 0
    %4511 = vmatprep.subr.bf16.mxu0 0
    %4512 = vmatpush2.bf16.msra.mxu0 0
    %4513 = vmatprep.subr.bf16.mxu0 0
    %4514 = vmatpush2.bf16.msra.mxu0 0
    %4515 = vmatprep.subr.bf16.mxu0 0
    %4516 = vmatpush2.bf16.msra.mxu0 0
    %4517 = vmatprep.subr.bf16.mxu0 0
    %4518 = vmatpush2.bf16.msra.mxu0 0
    %4519 = vmatprep.mubr.bf16.mxu0 0
    %4520 = vmatmul.mubr.bf16.gmra.mxu0 %v4425
    %v4521 = vpop.f32.mrf.mxu0
    %v4522 = vadd.f32 0.0, %v4521
    %v4523 = vpop.f32.mrf.mxu0
    %v4524 = vpop.f32.mrf.mxu0
    %v4525 = vadd.f32 0.0, %v4524
    %v4526 = vpop.f32.mrf.mxu0
    %4527 = vmatprep.mubr.bf16.mxu0 0
    %4528 = vmatmul.mubr.bf16.gmra.mxu0 %v4426
    %v4529 = vpop.f32.mrf.mxu0
    %v4530 = vadd.f32 0.0, %v4529
    %v4531 = vpop.f32.mrf.mxu0
    %v4532 = vpop.f32.mrf.mxu0
    %v4533 = vadd.f32 0.0, %v4532
    %v4534 = vpop.f32.mrf.mxu0
    %4535 = vmatprep.mubr.bf16.mxu0 0
    %4536 = vmatmul.mubr.bf16.gmra.mxu0 %v4427
    %v4537 = vpop.f32.mrf.mxu0
    %v4538 = vadd.f32 0.0, %v4537
    %v4539 = vpop.f32.mrf.mxu0
    %v4540 = vpop.f32.mrf.mxu0
    %v4541 = vadd.f32 0.0, %v4540
    %v4542 = vpop.f32.mrf.mxu0
    %4543 = vmatprep.mubr.bf16.mxu0 0
    %4544 = vmatmul.mubr.bf16.gmra.mxu0 %v4428
    %v4545 = vpop.f32.mrf.mxu0
    %v4546 = vadd.f32 0.0, %v4545
    %v4547 = vpop.f32.mrf.mxu0
    %v4548 = vpop.f32.mrf.mxu0
    %v4549 = vadd.f32 0.0, %v4548
    %v4550 = vpop.f32.mrf.mxu0
    %4551 = vmatprep.mubr.bf16.mxu0 0
    %4552 = vmatmul.mubr.bf16.gmra.mxu0 %v4429
    %v4553 = vpop.f32.mrf.mxu0
    %v4554 = vadd.f32 0.0, %v4553
    %v4555 = vpop.f32.mrf.mxu0
    %v4556 = vpop.f32.mrf.mxu0
    %v4557 = vadd.f32 0.0, %v4556
    %v4558 = vpop.f32.mrf.mxu0
    %4559 = vmatprep.mubr.bf16.mxu0 0
    %4560 = vmatmul.mubr.bf16.gmra.mxu0 %v4430
    %v4561 = vpop.f32.mrf.mxu0
    %v4562 = vadd.f32 0.0, %v4561
    %v4563 = vpop.f32.mrf.mxu0
    %v4564 = vpop.f32.mrf.mxu0
    %v4565 = vadd.f32 0.0, %v4564
    %v4566 = vpop.f32.mrf.mxu0
    %4567 = vmatprep.mubr.bf16.mxu0 0
    %4568 = vmatmul.mubr.bf16.gmra.mxu0 %v4431
    %v4569 = vpop.f32.mrf.mxu0
    %v4570 = vadd.f32 0.0, %v4569
    %v4571 = vpop.f32.mrf.mxu0
    %v4572 = vpop.f32.mrf.mxu0
    %v4573 = vadd.f32 0.0, %v4572
    %v4574 = vpop.f32.mrf.mxu0
    %4575 = vdwg.mxu0
    %v4576 = vadd.f32 %v4369, %v4522
    %v4577 = vadd.f32 %v4370, %v4525
    %v4578 = vadd.f32 %v4371, %v4530
    %v4579 = vadd.f32 %v4372, %v4533
    %v4580 = vadd.f32 %v4373, %v4538
    %v4581 = vadd.f32 %v4374, %v4541
    %v4582 = vadd.f32 %v4375, %v4546
    %v4583 = vadd.f32 %v4376, %v4549
    %v4584 = vadd.f32 %v4377, %v4554
    %v4585 = vadd.f32 %v4378, %v4557
    %v4586 = vadd.f32 %v4379, %v4562
    %v4587 = vadd.f32 %v4380, %v4565
    %v4588 = vadd.f32 %v4381, %v4570
    %v4589 = vadd.f32 %v4382, %v4573
    %v4590 = vld [vmem:[#allocation23] sm:$0x1]
    %v4591 = vmax.f32 %v4576, %v4580
    %v4592 = vmax.f32 %v4578, %v4582
    %v4593 = vmax.f32 %v4591, %v4584
    %v4594 = vmax.f32 %v4592, %v4586
    %v4595 = vmax.f32 %v4593, %v4588
    %v4596 = vmax.f32 %v4595, %v4594
    %v4597 = vmax.f32 %v4577, %v4581
    %v4598 = vmax.f32 %v4579, %v4583
    %v4599 = vmax.f32 %v4597, %v4585
    %v4600 = vmax.f32 %v4598, %v4587
    %v4601 = vmax.f32 %v4599, %v4589
    %v4602 = vmax.f32 %v4601, %v4600
    %v4604 = vlaneseq
    %v4605 = vshrl.u32 %v4604, 7
    %v4606 = vsub.s32 0, %v4605
    %v4607 = vrot.slane %v4590, %v4606
    %v4609 = vadd.f32 %v4596, %v4607
    %v4610 = vadd.f32 %v4602, %v4607
    %v4611 = vadd.f32 %v4576, %v4578
    %v4612 = vadd.f32 %v4611, %v4580
    %v4613 = vadd.f32 %v4612, %v4582
    %v4614 = vadd.f32 %v4613, %v4584
    %v4615 = vadd.f32 %v4614, %v4586
    %v4616 = vadd.f32 %v4615, %v4588
    %v4617 = vadd.f32 %v4577, %v4579
    %v4618 = vadd.f32 %v4617, %v4581
    %v4619 = vadd.f32 %v4618, %v4583
    %v4620 = vadd.f32 %v4619, %v4585
    %v4621 = vadd.f32 %v4620, %v4587
    %v4622 = vadd.f32 %v4621, %v4589
    %v4623 = vmul.f32 %v4616, 0.14285715
    %v4624 = vmul.f32 %v4622, 0.14285715
    %v4625 = vadd.f32 %v4623, %v4607
    %v4626 = vadd.f32 %v4624, %v4607
    %v4627 = vld [vmem:[#allocation24] sm:$0xf]
    %v4628 = vld [vmem:[#allocation24 + $0x4] sm:$0xf]
    %v4629 = vld [vmem:[#allocation24 + $0x8] sm:$0xf]
    %v4630 = vld [vmem:[#allocation24 + $0xc] sm:$0xf]
    %v4631 = vld [vmem:[#allocation24 + $0x10] sm:$0xf]
    %v4632 = vld [vmem:[#allocation24 + $0x14] sm:$0xf]
    %v4633 = vld [vmem:[#allocation24 + $0x18] sm:$0xf]
    %v4634 = vld [vmem:[#allocation24 + $0x1c] sm:$0xf]
    %v4635 = vld [vmem:[#allocation24 + $0x20] sm:$0xf]
    %v4636 = vld [vmem:[#allocation24 + $0x24] sm:$0xf]
    %v4637 = vld [vmem:[#allocation24 + $0x28] sm:$0xf]
    %v4638 = vld [vmem:[#allocation24 + $0x2c] sm:$0xf]
    %v4639 = vld [vmem:[#allocation24 + $0x30] sm:$0xf]
    %v4640 = vld [vmem:[#allocation24 + $0x34] sm:$0xf]
    %v4641 = vld [vmem:[#allocation24 + $0x38] sm:$0xf]
    %v4642 = vld [vmem:[#allocation24 + $0x3c] sm:$0xf]
    %v4643 = vld [vmem:[#allocation24 + $0x40] sm:$0xf]
    %v4644 = vld [vmem:[#allocation24 + $0x44] sm:$0xf]
    %v4645 = vld [vmem:[#allocation24 + $0x48] sm:$0xf]
    %v4646 = vld [vmem:[#allocation24 + $0x4c] sm:$0xf]
    %v4647 = vld [vmem:[#allocation24 + $0x50] sm:$0xf]
    %v4648 = vld [vmem:[#allocation24 + $0x54] sm:$0xf]
    %v4649 = vld [vmem:[#allocation24 + $0x58] sm:$0xf]
    %v4650 = vld [vmem:[#allocation24 + $0x5c] sm:$0xf]
    %v4651 = vld [vmem:[#allocation24 + $0x60] sm:$0xf]
    %v4652 = vld [vmem:[#allocation24 + $0x64] sm:$0xf]
    %v4653 = vld [vmem:[#allocation24 + $0x68] sm:$0xf]
    %v4654 = vld [vmem:[#allocation24 + $0x6c] sm:$0xf]
    %v4655 = vld [vmem:[#allocation24 + $0x70] sm:$0xf]
    %v4656 = vld [vmem:[#allocation24 + $0x74] sm:$0xf]
    %v4657 = vld [vmem:[#allocation24 + $0x78] sm:$0xf]
    %v4658 = vld [vmem:[#allocation24 + $0x7c] sm:$0xf]
    %v4659 = vld [vmem:[#allocation26] sm:$0xf]
    %v4660 = vld [vmem:[#allocation26 + $0x4] sm:$0xf]
    %v4661 = vld [vmem:[#allocation26 + $0x8] sm:$0xf]
    %v4662 = vld [vmem:[#allocation26 + $0xc] sm:$0xf]
    %v4663 = vld [vmem:[#allocation26 + $0x10] sm:$0xf]
    %v4664 = vld [vmem:[#allocation26 + $0x14] sm:$0xf]
    %v4665 = vld [vmem:[#allocation26 + $0x18] sm:$0xf]
    %v4666 = vld [vmem:[#allocation26 + $0x1c] sm:$0xf]
    %v4667 = vld [vmem:[#allocation26 + $0x20] sm:$0xf]
    %v4668 = vld [vmem:[#allocation26 + $0x24] sm:$0xf]
    %v4669 = vld [vmem:[#allocation26 + $0x28] sm:$0xf]
    %v4670 = vld [vmem:[#allocation26 + $0x2c] sm:$0xf]
    %v4671 = vld [vmem:[#allocation26 + $0x30] sm:$0xf]
    %v4672 = vld [vmem:[#allocation26 + $0x34] sm:$0xf]
    %v4673 = vld [vmem:[#allocation26 + $0x38] sm:$0xf]
    %v4674 = vld [vmem:[#allocation26 + $0x3c] sm:$0xf]
    %v4675 = vld [vmem:[#allocation26 + $0x40] sm:$0xf]
    %v4676 = vld [vmem:[#allocation26 + $0x44] sm:$0xf]
    %v4677 = vld [vmem:[#allocation26 + $0x48] sm:$0xf]
    %v4678 = vld [vmem:[#allocation26 + $0x4c] sm:$0xf]
    %v4679 = vld [vmem:[#allocation26 + $0x50] sm:$0xf]
    %v4680 = vld [vmem:[#allocation26 + $0x54] sm:$0xf]
    %v4681 = vld [vmem:[#allocation26 + $0x58] sm:$0xf]
    %v4682 = vld [vmem:[#allocation26 + $0x5c] sm:$0xf]
    %v4683 = vld [vmem:[#allocation26 + $0x60] sm:$0xf]
    %v4684 = vld [vmem:[#allocation26 + $0x64] sm:$0xf]
    %v4685 = vld [vmem:[#allocation26 + $0x68] sm:$0xf]
    %v4686 = vld [vmem:[#allocation26 + $0x6c] sm:$0xf]
    %v4687 = vld [vmem:[#allocation26 + $0x70] sm:$0xf]
    %v4688 = vld [vmem:[#allocation26 + $0x74] sm:$0xf]
    %v4689 = vld [vmem:[#allocation26 + $0x78] sm:$0xf]
    %v4690 = vld [vmem:[#allocation26 + $0x7c] sm:$0xf]
    %v4691 = vld [vmem:[#allocation8] sm:$0xf]
    %v4692 = vld [vmem:[#allocation8 + $0x4] sm:$0xf]
    %v4693 = vld [vmem:[#allocation8 + $0x8] sm:$0xf]
    %v4694 = vld [vmem:[#allocation8 + $0xc] sm:$0xf]
    %v4695 = vld [vmem:[#allocation8 + $0x10] sm:$0xf]
    %v4696 = vld [vmem:[#allocation8 + $0x14] sm:$0xf]
    %v4697 = vld [vmem:[#allocation8 + $0x18] sm:$0xf]
    %v4698 = vld [vmem:[#allocation8 + $0x1c] sm:$0xf]
    %v4699 = vld [vmem:[#allocation8 + $0x20] sm:$0xf]
    %v4700 = vld [vmem:[#allocation8 + $0x24] sm:$0xf]
    %v4701 = vld [vmem:[#allocation8 + $0x28] sm:$0xf]
    %v4702 = vld [vmem:[#allocation8 + $0x2c] sm:$0xf]
    %v4703 = vld [vmem:[#allocation8 + $0x30] sm:$0xf]
    %v4704 = vld [vmem:[#allocation8 + $0x34] sm:$0xf]
    %v4705 = vld [vmem:[#allocation9] sm:$0xf]
    %v4706 = vld [vmem:[#allocation9 + $0x4] sm:$0xf]
    %v4707 = vld [vmem:[#allocation9 + $0x8] sm:$0xf]
    %v4708 = vld [vmem:[#allocation9 + $0xc] sm:$0xf]
    %v4709 = vld [vmem:[#allocation9 + $0x10] sm:$0xf]
    %v4710 = vld [vmem:[#allocation9 + $0x14] sm:$0xf]
    %v4711 = vld [vmem:[#allocation9 + $0x18] sm:$0xf]
    %v4712 = vld [vmem:[#allocation9 + $0x1c] sm:$0xf]
    %v4713 = vld [vmem:[#allocation9 + $0x20] sm:$0xf]
    %v4714 = vld [vmem:[#allocation9 + $0x24] sm:$0xf]
    %v4715 = vld [vmem:[#allocation9 + $0x28] sm:$0xf]
    %v4716 = vld [vmem:[#allocation9 + $0x2c] sm:$0xf]
    %v4717 = vld [vmem:[#allocation9 + $0x30] sm:$0xf]
    %v4718 = vld [vmem:[#allocation9 + $0x34] sm:$0xf]
    %v4733 = vunpack.c.l.b16 %v4705
    %v4734 = vunpack.c.l.b16 %v4706
    %v4735 = vunpack.c.l.b16 %v4707
    %v4736 = vunpack.c.l.b16 %v4708
    %v4737 = vunpack.c.l.b16 %v4709
    %v4738 = vunpack.c.l.b16 %v4710
    %v4739 = vunpack.c.l.b16 %v4711
    %v4740 = vunpack.c.l.b16 %v4712
    %v4741 = vunpack.c.l.b16 %v4713
    %v4742 = vunpack.c.l.b16 %v4714
    %v4743 = vunpack.c.l.b16 %v4715
    %v4744 = vunpack.c.l.b16 %v4716
    %v4745 = vunpack.c.l.b16 %v4717
    %v4746 = vunpack.c.l.b16 %v4718
    %v4747 = vpack.c.b16 %v4734, %v4733
    %v4748 = vpack.c.b16 %v4736, %v4735
    %v4749 = vpack.c.b16 %v4738, %v4737
    %v4750 = vpack.c.b16 %v4740, %v4739
    %v4751 = vpack.c.b16 %v4742, %v4741
    %v4752 = vpack.c.b16 %v4744, %v4743
    %v4753 = vpack.c.b16 %v4746, %v4745
    %v4777 = vunpack.c.l.b16 %v4643
    %v4778 = vunpack.c.l.b16 %v4644
    %v4779 = vunpack.c.l.b16 %v4645
    %v4780 = vunpack.c.l.b16 %v4646
    %v4781 = vunpack.c.l.b16 %v4647
    %v4782 = vunpack.c.l.b16 %v4648
    %v4783 = vunpack.c.l.b16 %v4649
    %v4784 = vunpack.c.l.b16 %v4650
    %v4785 = vunpack.c.l.b16 %v4651
    %v4786 = vunpack.c.l.b16 %v4652
    %v4787 = vunpack.c.l.b16 %v4653
    %v4788 = vunpack.c.l.b16 %v4654
    %v4789 = vunpack.c.l.b16 %v4655
    %v4790 = vunpack.c.l.b16 %v4656
    %v4791 = vunpack.c.l.b16 %v4657
    %v4792 = vunpack.c.l.b16 %v4658
    %v4793 = vpack.c.b16 %v4778, %v4777
    %v4794 = vpack.c.b16 %v4780, %v4779
    %v4795 = vpack.c.b16 %v4782, %v4781
    %v4796 = vpack.c.b16 %v4784, %v4783
    %v4797 = vpack.c.b16 %v4786, %v4785
    %v4798 = vpack.c.b16 %v4788, %v4787
    %v4799 = vpack.c.b16 %v4790, %v4789
    %v4800 = vpack.c.b16 %v4792, %v4791
    %4809 = vmatprep.subr.bf16.mxu0 0
    %4810 = vmatpush1.bf16.msra.mxu0 %v4800
    %4811 = vmatprep.subr.bf16.mxu0 0
    %4812 = vmatpush1.bf16.msra.mxu0 %v4799
    %4813 = vmatprep.subr.bf16.mxu0 0
    %4814 = vmatpush1.bf16.msra.mxu0 %v4798
    %4815 = vmatprep.subr.bf16.mxu0 0
    %4816 = vmatpush1.bf16.msra.mxu0 %v4797
    %4817 = vmatprep.subr.bf16.mxu0 0
    %4818 = vmatpush1.bf16.msra.mxu0 %v4796
    %4819 = vmatprep.subr.bf16.mxu0 0
    %4820 = vmatpush1.bf16.msra.mxu0 %v4795
    %4821 = vmatprep.subr.bf16.mxu0 0
    %4822 = vmatpush1.bf16.msra.mxu0 %v4794
    %4823 = vmatprep.subr.bf16.mxu0 0
    %4824 = vmatpush1.bf16.msra.mxu0 %v4793
    %4825 = vmatprep.subr.bf16.mxu0 0
    %4826 = vmatpush2.bf16.msra.mxu0 0
    %4827 = vmatprep.subr.bf16.mxu0 0
    %4828 = vmatpush2.bf16.msra.mxu0 0
    %4829 = vmatprep.subr.bf16.mxu0 0
    %4830 = vmatpush2.bf16.msra.mxu0 0
    %4831 = vmatprep.subr.bf16.mxu0 0
    %4832 = vmatpush2.bf16.msra.mxu0 0
    %4833 = vmatprep.subr.bf16.mxu0 0
    %4834 = vmatpush2.bf16.msra.mxu0 0
    %4835 = vmatprep.subr.bf16.mxu0 0
    %4836 = vmatpush2.bf16.msra.mxu0 0
    %4837 = vmatprep.subr.bf16.mxu0 0
    %4838 = vmatpush2.bf16.msra.mxu0 0
    %4839 = vmatprep.subr.bf16.mxu0 0
    %4840 = vmatpush2.bf16.msra.mxu0 0
    %4841 = vmatprep.mubr.bf16.mxu0 0
    %4842 = vmatmul.mubr.bf16.gmra.mxu0 %v4747
    %v4843 = vpop.f32.mrf.mxu0
    %v4844 = vadd.f32 0.0, %v4843
    %v4845 = vpop.f32.mrf.mxu0
    %v4846 = vpop.f32.mrf.mxu0
    %v4847 = vadd.f32 0.0, %v4846
    %v4848 = vpop.f32.mrf.mxu0
    %4849 = vmatprep.mubr.bf16.mxu0 0
    %4850 = vmatmul.mubr.bf16.gmra.mxu0 %v4748
    %v4851 = vpop.f32.mrf.mxu0
    %v4852 = vadd.f32 0.0, %v4851
    %v4853 = vpop.f32.mrf.mxu0
    %v4854 = vpop.f32.mrf.mxu0
    %v4855 = vadd.f32 0.0, %v4854
    %v4856 = vpop.f32.mrf.mxu0
    %4857 = vmatprep.mubr.bf16.mxu0 0
    %4858 = vmatmul.mubr.bf16.gmra.mxu0 %v4749
    %v4859 = vpop.f32.mrf.mxu0
    %v4860 = vadd.f32 0.0, %v4859
    %v4861 = vpop.f32.mrf.mxu0
    %v4862 = vpop.f32.mrf.mxu0
    %v4863 = vadd.f32 0.0, %v4862
    %v4864 = vpop.f32.mrf.mxu0
    %4865 = vmatprep.mubr.bf16.mxu0 0
    %4866 = vmatmul.mubr.bf16.gmra.mxu0 %v4750
    %v4867 = vpop.f32.mrf.mxu0
    %v4868 = vadd.f32 0.0, %v4867
    %v4869 = vpop.f32.mrf.mxu0
    %v4870 = vpop.f32.mrf.mxu0
    %v4871 = vadd.f32 0.0, %v4870
    %v4872 = vpop.f32.mrf.mxu0
    %4873 = vmatprep.mubr.bf16.mxu0 0
    %4874 = vmatmul.mubr.bf16.gmra.mxu0 %v4751
    %v4875 = vpop.f32.mrf.mxu0
    %v4876 = vadd.f32 0.0, %v4875
    %v4877 = vpop.f32.mrf.mxu0
    %v4878 = vpop.f32.mrf.mxu0
    %v4879 = vadd.f32 0.0, %v4878
    %v4880 = vpop.f32.mrf.mxu0
    %4881 = vmatprep.mubr.bf16.mxu0 0
    %4882 = vmatmul.mubr.bf16.gmra.mxu0 %v4752
    %v4883 = vpop.f32.mrf.mxu0
    %v4884 = vadd.f32 0.0, %v4883
    %v4885 = vpop.f32.mrf.mxu0
    %v4886 = vpop.f32.mrf.mxu0
    %v4887 = vadd.f32 0.0, %v4886
    %v4888 = vpop.f32.mrf.mxu0
    %4889 = vmatprep.mubr.bf16.mxu0 0
    %4890 = vmatmul.mubr.bf16.gmra.mxu0 %v4753
    %v4891 = vpop.f32.mrf.mxu0
    %v4892 = vadd.f32 0.0, %v4891
    %v4893 = vpop.f32.mrf.mxu0
    %v4894 = vpop.f32.mrf.mxu0
    %v4895 = vadd.f32 0.0, %v4894
    %v4896 = vpop.f32.mrf.mxu0
    %4897 = vdwg.mxu0
    %v4912 = vunpack.c.l.b16 %v4691
    %v4913 = vunpack.c.l.b16 %v4692
    %v4914 = vunpack.c.l.b16 %v4693
    %v4915 = vunpack.c.l.b16 %v4694
    %v4916 = vunpack.c.l.b16 %v4695
    %v4917 = vunpack.c.l.b16 %v4696
    %v4918 = vunpack.c.l.b16 %v4697
    %v4919 = vunpack.c.l.b16 %v4698
    %v4920 = vunpack.c.l.b16 %v4699
    %v4921 = vunpack.c.l.b16 %v4700
    %v4922 = vunpack.c.l.b16 %v4701
    %v4923 = vunpack.c.l.b16 %v4702
    %v4924 = vunpack.c.l.b16 %v4703
    %v4925 = vunpack.c.l.b16 %v4704
    %v4926 = vpack.c.b16 %v4913, %v4912
    %v4927 = vpack.c.b16 %v4915, %v4914
    %v4928 = vpack.c.b16 %v4917, %v4916
    %v4929 = vpack.c.b16 %v4919, %v4918
    %v4930 = vpack.c.b16 %v4921, %v4920
    %v4931 = vpack.c.b16 %v4923, %v4922
    %v4932 = vpack.c.b16 %v4925, %v4924
    %v4956 = vunpack.c.l.b16 %v4627
    %v4957 = vunpack.c.l.b16 %v4628
    %v4958 = vunpack.c.l.b16 %v4629
    %v4959 = vunpack.c.l.b16 %v4630
    %v4960 = vunpack.c.l.b16 %v4631
    %v4961 = vunpack.c.l.b16 %v4632
    %v4962 = vunpack.c.l.b16 %v4633
    %v4963 = vunpack.c.l.b16 %v4634
    %v4964 = vunpack.c.l.b16 %v4635
    %v4965 = vunpack.c.l.b16 %v4636
    %v4966 = vunpack.c.l.b16 %v4637
    %v4967 = vunpack.c.l.b16 %v4638
    %v4968 = vunpack.c.l.b16 %v4639
    %v4969 = vunpack.c.l.b16 %v4640
    %v4970 = vunpack.c.l.b16 %v4641
    %v4971 = vunpack.c.l.b16 %v4642
    %v4972 = vpack.c.b16 %v4957, %v4956
    %v4973 = vpack.c.b16 %v4959, %v4958
    %v4974 = vpack.c.b16 %v4961, %v4960
    %v4975 = vpack.c.b16 %v4963, %v4962
    %v4976 = vpack.c.b16 %v4965, %v4964
    %v4977 = vpack.c.b16 %v4967, %v4966
    %v4978 = vpack.c.b16 %v4969, %v4968
    %v4979 = vpack.c.b16 %v4971, %v4970
    %4988 = vmatprep.subr.bf16.mxu0 0
    %4989 = vmatpush1.bf16.msra.mxu0 %v4979
    %4990 = vmatprep.subr.bf16.mxu0 0
    %4991 = vmatpush1.bf16.msra.mxu0 %v4978
    %4992 = vmatprep.subr.bf16.mxu0 0
    %4993 = vmatpush1.bf16.msra.mxu0 %v4977
    %4994 = vmatprep.subr.bf16.mxu0 0
    %4995 = vmatpush1.bf16.msra.mxu0 %v4976
    %4996 = vmatprep.subr.bf16.mxu0 0
    %4997 = vmatpush1.bf16.msra.mxu0 %v4975
    %4998 = vmatprep.subr.bf16.mxu0 0
    %4999 = vmatpush1.bf16.msra.mxu0 %v4974
    %5000 = vmatprep.subr.bf16.mxu0 0
    %5001 = vmatpush1.bf16.msra.mxu0 %v4973
    %5002 = vmatprep.subr.bf16.mxu0 0
    %5003 = vmatpush1.bf16.msra.mxu0 %v4972
    %5004 = vmatprep.subr.bf16.mxu0 0
    %5005 = vmatpush2.bf16.msra.mxu0 0
    %5006 = vmatprep.subr.bf16.mxu0 0
    %5007 = vmatpush2.bf16.msra.mxu0 0
    %5008 = vmatprep.subr.bf16.mxu0 0
    %5009 = vmatpush2.bf16.msra.mxu0 0
    %5010 = vmatprep.subr.bf16.mxu0 0
    %5011 = vmatpush2.bf16.msra.mxu0 0
    %5012 = vmatprep.subr.bf16.mxu0 0
    %5013 = vmatpush2.bf16.msra.mxu0 0
    %5014 = vmatprep.subr.bf16.mxu0 0
    %5015 = vmatpush2.bf16.msra.mxu0 0
    %5016 = vmatprep.subr.bf16.mxu0 0
    %5017 = vmatpush2.bf16.msra.mxu0 0
    %5018 = vmatprep.subr.bf16.mxu0 0
    %5019 = vmatpush2.bf16.msra.mxu0 0
    %5020 = vmatprep.mubr.bf16.mxu0 0
    %5021 = vmatmul.mubr.bf16.gmra.mxu0 %v4926
    %v5022 = vpop.f32.mrf.mxu0
    %v5023 = vadd.f32 %v4844, %v5022
    %v5024 = vpop.f32.mrf.mxu0
    %v5025 = vpop.f32.mrf.mxu0
    %v5026 = vadd.f32 %v4847, %v5025
    %v5027 = vpop.f32.mrf.mxu0
    %5028 = vmatprep.mubr.bf16.mxu0 0
    %5029 = vmatmul.mubr.bf16.gmra.mxu0 %v4927
    %v5030 = vpop.f32.mrf.mxu0
    %v5031 = vadd.f32 %v4852, %v5030
    %v5032 = vpop.f32.mrf.mxu0
    %v5033 = vpop.f32.mrf.mxu0
    %v5034 = vadd.f32 %v4855, %v5033
    %v5035 = vpop.f32.mrf.mxu0
    %5036 = vmatprep.mubr.bf16.mxu0 0
    %5037 = vmatmul.mubr.bf16.gmra.mxu0 %v4928
    %v5038 = vpop.f32.mrf.mxu0
    %v5039 = vadd.f32 %v4860, %v5038
    %v5040 = vpop.f32.mrf.mxu0
    %v5041 = vpop.f32.mrf.mxu0
    %v5042 = vadd.f32 %v4863, %v5041
    %v5043 = vpop.f32.mrf.mxu0
    %5044 = vmatprep.mubr.bf16.mxu0 0
    %5045 = vmatmul.mubr.bf16.gmra.mxu0 %v4929
    %v5046 = vpop.f32.mrf.mxu0
    %v5047 = vadd.f32 %v4868, %v5046
    %v5048 = vpop.f32.mrf.mxu0
    %v5049 = vpop.f32.mrf.mxu0
    %v5050 = vadd.f32 %v4871, %v5049
    %v5051 = vpop.f32.mrf.mxu0
    %5052 = vmatprep.mubr.bf16.mxu0 0
    %5053 = vmatmul.mubr.bf16.gmra.mxu0 %v4930
    %v5054 = vpop.f32.mrf.mxu0
    %v5055 = vadd.f32 %v4876, %v5054
    %v5056 = vpop.f32.mrf.mxu0
    %v5057 = vpop.f32.mrf.mxu0
    %v5058 = vadd.f32 %v4879, %v5057
    %v5059 = vpop.f32.mrf.mxu0
    %5060 = vmatprep.mubr.bf16.mxu0 0
    %5061 = vmatmul.mubr.bf16.gmra.mxu0 %v4931
    %v5062 = vpop.f32.mrf.mxu0
    %v5063 = vadd.f32 %v4884, %v5062
    %v5064 = vpop.f32.mrf.mxu0
    %v5065 = vpop.f32.mrf.mxu0
    %v5066 = vadd.f32 %v4887, %v5065
    %v5067 = vpop.f32.mrf.mxu0
    %5068 = vmatprep.mubr.bf16.mxu0 0
    %5069 = vmatmul.mubr.bf16.gmra.mxu0 %v4932
    %v5070 = vpop.f32.mrf.mxu0
    %v5071 = vadd.f32 %v4892, %v5070
    %v5072 = vpop.f32.mrf.mxu0
    %v5073 = vpop.f32.mrf.mxu0
    %v5074 = vadd.f32 %v4895, %v5073
    %v5075 = vpop.f32.mrf.mxu0
    %5076 = vdwg.mxu0
    %v5077 = vld [vmem:[#allocation8 + $0x8] sm:$0xf]
    %v5078 = vld [vmem:[#allocation8 + $0xc] sm:$0xf]
    %v5079 = vld [vmem:[#allocation8 + $0x10] sm:$0xf]
    %v5080 = vld [vmem:[#allocation8 + $0x14] sm:$0xf]
    %v5081 = vld [vmem:[#allocation8 + $0x18] sm:$0xf]
    %v5082 = vld [vmem:[#allocation8 + $0x1c] sm:$0xf]
    %v5083 = vld [vmem:[#allocation8 + $0x20] sm:$0xf]
    %v5084 = vld [vmem:[#allocation8 + $0x24] sm:$0xf]
    %v5085 = vld [vmem:[#allocation8 + $0x28] sm:$0xf]
    %v5086 = vld [vmem:[#allocation8 + $0x2c] sm:$0xf]
    %v5087 = vld [vmem:[#allocation8 + $0x30] sm:$0xf]
    %v5088 = vld [vmem:[#allocation8 + $0x34] sm:$0xf]
    %v5089 = vld [vmem:[#allocation8 + $0x38] sm:$0xf]
    %v5090 = vld [vmem:[#allocation8 + $0x3c] sm:$0xf]
    %v5105 = vunpack.c.l.b16 %v5077
    %v5106 = vunpack.c.l.b16 %v5078
    %v5107 = vunpack.c.l.b16 %v5079
    %v5108 = vunpack.c.l.b16 %v5080
    %v5109 = vunpack.c.l.b16 %v5081
    %v5110 = vunpack.c.l.b16 %v5082
    %v5111 = vunpack.c.l.b16 %v5083
    %v5112 = vunpack.c.l.b16 %v5084
    %v5113 = vunpack.c.l.b16 %v5085
    %v5114 = vunpack.c.l.b16 %v5086
    %v5115 = vunpack.c.l.b16 %v5087
    %v5116 = vunpack.c.l.b16 %v5088
    %v5117 = vunpack.c.l.b16 %v5089
    %v5118 = vunpack.c.l.b16 %v5090
    %v5119 = vpack.c.b16 %v5106, %v5105
    %v5120 = vpack.c.b16 %v5108, %v5107
    %v5121 = vpack.c.b16 %v5110, %v5109
    %v5122 = vpack.c.b16 %v5112, %v5111
    %v5123 = vpack.c.b16 %v5114, %v5113
    %v5124 = vpack.c.b16 %v5116, %v5115
    %v5125 = vpack.c.b16 %v5118, %v5117
    %v5149 = vunpack.c.l.b16 %v4659
    %v5150 = vunpack.c.l.b16 %v4660
    %v5151 = vunpack.c.l.b16 %v4661
    %v5152 = vunpack.c.l.b16 %v4662
    %v5153 = vunpack.c.l.b16 %v4663
    %v5154 = vunpack.c.l.b16 %v4664
    %v5155 = vunpack.c.l.b16 %v4665
    %v5156 = vunpack.c.l.b16 %v4666
    %v5157 = vunpack.c.l.b16 %v4667
    %v5158 = vunpack.c.l.b16 %v4668
    %v5159 = vunpack.c.l.b16 %v4669
    %v5160 = vunpack.c.l.b16 %v4670
    %v5161 = vunpack.c.l.b16 %v4671
    %v5162 = vunpack.c.l.b16 %v4672
    %v5163 = vunpack.c.l.b16 %v4673
    %v5164 = vunpack.c.l.b16 %v4674
    %v5165 = vpack.c.b16 %v5150, %v5149
    %v5166 = vpack.c.b16 %v5152, %v5151
    %v5167 = vpack.c.b16 %v5154, %v5153
    %v5168 = vpack.c.b16 %v5156, %v5155
    %v5169 = vpack.c.b16 %v5158, %v5157
    %v5170 = vpack.c.b16 %v5160, %v5159
    %v5171 = vpack.c.b16 %v5162, %v5161
    %v5172 = vpack.c.b16 %v5164, %v5163
    %5181 = vmatprep.subr.bf16.mxu0 0
    %5182 = vmatpush1.bf16.msra.mxu0 %v5172
    %5183 = vmatprep.subr.bf16.mxu0 0
    %5184 = vmatpush1.bf16.msra.mxu0 %v5171
    %5185 = vmatprep.subr.bf16.mxu0 0
    %5186 = vmatpush1.bf16.msra.mxu0 %v5170
    %5187 = vmatprep.subr.bf16.mxu0 0
    %5188 = vmatpush1.bf16.msra.mxu0 %v5169
    %5189 = vmatprep.subr.bf16.mxu0 0
    %5190 = vmatpush1.bf16.msra.mxu0 %v5168
    %5191 = vmatprep.subr.bf16.mxu0 0
    %5192 = vmatpush1.bf16.msra.mxu0 %v5167
    %5193 = vmatprep.subr.bf16.mxu0 0
    %5194 = vmatpush1.bf16.msra.mxu0 %v5166
    %5195 = vmatprep.subr.bf16.mxu0 0
    %5196 = vmatpush1.bf16.msra.mxu0 %v5165
    %5197 = vmatprep.subr.bf16.mxu0 0
    %5198 = vmatpush2.bf16.msra.mxu0 0
    %5199 = vmatprep.subr.bf16.mxu0 0
    %5200 = vmatpush2.bf16.msra.mxu0 0
    %5201 = vmatprep.subr.bf16.mxu0 0
    %5202 = vmatpush2.bf16.msra.mxu0 0
    %5203 = vmatprep.subr.bf16.mxu0 0
    %5204 = vmatpush2.bf16.msra.mxu0 0
    %5205 = vmatprep.subr.bf16.mxu0 0
    %5206 = vmatpush2.bf16.msra.mxu0 0
    %5207 = vmatprep.subr.bf16.mxu0 0
    %5208 = vmatpush2.bf16.msra.mxu0 0
    %5209 = vmatprep.subr.bf16.mxu0 0
    %5210 = vmatpush2.bf16.msra.mxu0 0
    %5211 = vmatprep.subr.bf16.mxu0 0
    %5212 = vmatpush2.bf16.msra.mxu0 0
    %5213 = vmatprep.mubr.bf16.mxu0 0
    %5214 = vmatmul.mubr.bf16.gmra.mxu0 %v5119
    %v5215 = vpop.f32.mrf.mxu0
    %v5216 = vadd.f32 0.0, %v5215
    %v5217 = vpop.f32.mrf.mxu0
    %v5218 = vpop.f32.mrf.mxu0
    %v5219 = vadd.f32 0.0, %v5218
    %v5220 = vpop.f32.mrf.mxu0
    %5221 = vmatprep.mubr.bf16.mxu0 0
    %5222 = vmatmul.mubr.bf16.gmra.mxu0 %v5120
    %v5223 = vpop.f32.mrf.mxu0
    %v5224 = vadd.f32 0.0, %v5223
    %v5225 = vpop.f32.mrf.mxu0
    %v5226 = vpop.f32.mrf.mxu0
    %v5227 = vadd.f32 0.0, %v5226
    %v5228 = vpop.f32.mrf.mxu0
    %5229 = vmatprep.mubr.bf16.mxu0 0
    %5230 = vmatmul.mubr.bf16.gmra.mxu0 %v5121
    %v5231 = vpop.f32.mrf.mxu0
    %v5232 = vadd.f32 0.0, %v5231
    %v5233 = vpop.f32.mrf.mxu0
    %v5234 = vpop.f32.mrf.mxu0
    %v5235 = vadd.f32 0.0, %v5234
    %v5236 = vpop.f32.mrf.mxu0
    %5237 = vmatprep.mubr.bf16.mxu0 0
    %5238 = vmatmul.mubr.bf16.gmra.mxu0 %v5122
    %v5239 = vpop.f32.mrf.mxu0
    %v5240 = vadd.f32 0.0, %v5239
    %v5241 = vpop.f32.mrf.mxu0
    %v5242 = vpop.f32.mrf.mxu0
    %v5243 = vadd.f32 0.0, %v5242
    %v5244 = vpop.f32.mrf.mxu0
    %5245 = vmatprep.mubr.bf16.mxu0 0
    %5246 = vmatmul.mubr.bf16.gmra.mxu0 %v5123
    %v5247 = vpop.f32.mrf.mxu0
    %v5248 = vadd.f32 0.0, %v5247
    %v5249 = vpop.f32.mrf.mxu0
    %v5250 = vpop.f32.mrf.mxu0
    %v5251 = vadd.f32 0.0, %v5250
    %v5252 = vpop.f32.mrf.mxu0
    %5253 = vmatprep.mubr.bf16.mxu0 0
    %5254 = vmatmul.mubr.bf16.gmra.mxu0 %v5124
    %v5255 = vpop.f32.mrf.mxu0
    %v5256 = vadd.f32 0.0, %v5255
    %v5257 = vpop.f32.mrf.mxu0
    %v5258 = vpop.f32.mrf.mxu0
    %v5259 = vadd.f32 0.0, %v5258
    %v5260 = vpop.f32.mrf.mxu0
    %5261 = vmatprep.mubr.bf16.mxu0 0
    %5262 = vmatmul.mubr.bf16.gmra.mxu0 %v5125
    %v5263 = vpop.f32.mrf.mxu0
    %v5264 = vadd.f32 0.0, %v5263
    %v5265 = vpop.f32.mrf.mxu0
    %v5266 = vpop.f32.mrf.mxu0
    %v5267 = vadd.f32 0.0, %v5266
    %v5268 = vpop.f32.mrf.mxu0
    %5269 = vdwg.mxu0
    %v5270 = vadd.f32 %v5023, %v5216
    %v5271 = vadd.f32 %v5026, %v5219
    %v5272 = vadd.f32 %v5031, %v5224
    %v5273 = vadd.f32 %v5034, %v5227
    %v5274 = vadd.f32 %v5039, %v5232
    %v5275 = vadd.f32 %v5042, %v5235
    %v5276 = vadd.f32 %v5047, %v5240
    %v5277 = vadd.f32 %v5050, %v5243
    %v5278 = vadd.f32 %v5055, %v5248
    %v5279 = vadd.f32 %v5058, %v5251
    %v5280 = vadd.f32 %v5063, %v5256
    %v5281 = vadd.f32 %v5066, %v5259
    %v5282 = vadd.f32 %v5071, %v5264
    %v5283 = vadd.f32 %v5074, %v5267
    %v5284 = vld [vmem:[#allocation9 + $0x8] sm:$0xf]
    %v5285 = vld [vmem:[#allocation9 + $0xc] sm:$0xf]
    %v5286 = vld [vmem:[#allocation9 + $0x10] sm:$0xf]
    %v5287 = vld [vmem:[#allocation9 + $0x14] sm:$0xf]
    %v5288 = vld [vmem:[#allocation9 + $0x18] sm:$0xf]
    %v5289 = vld [vmem:[#allocation9 + $0x1c] sm:$0xf]
    %v5290 = vld [vmem:[#allocation9 + $0x20] sm:$0xf]
    %v5291 = vld [vmem:[#allocation9 + $0x24] sm:$0xf]
    %v5292 = vld [vmem:[#allocation9 + $0x28] sm:$0xf]
    %v5293 = vld [vmem:[#allocation9 + $0x2c] sm:$0xf]
    %v5294 = vld [vmem:[#allocation9 + $0x30] sm:$0xf]
    %v5295 = vld [vmem:[#allocation9 + $0x34] sm:$0xf]
    %v5296 = vld [vmem:[#allocation9 + $0x38] sm:$0xf]
    %v5297 = vld [vmem:[#allocation9 + $0x3c] sm:$0xf]
    %v5312 = vunpack.c.l.b16 %v5284
    %v5313 = vunpack.c.l.b16 %v5285
    %v5314 = vunpack.c.l.b16 %v5286
    %v5315 = vunpack.c.l.b16 %v5287
    %v5316 = vunpack.c.l.b16 %v5288
    %v5317 = vunpack.c.l.b16 %v5289
    %v5318 = vunpack.c.l.b16 %v5290
    %v5319 = vunpack.c.l.b16 %v5291
    %v5320 = vunpack.c.l.b16 %v5292
    %v5321 = vunpack.c.l.b16 %v5293
    %v5322 = vunpack.c.l.b16 %v5294
    %v5323 = vunpack.c.l.b16 %v5295
    %v5324 = vunpack.c.l.b16 %v5296
    %v5325 = vunpack.c.l.b16 %v5297
    %v5326 = vpack.c.b16 %v5313, %v5312
    %v5327 = vpack.c.b16 %v5315, %v5314
    %v5328 = vpack.c.b16 %v5317, %v5316
    %v5329 = vpack.c.b16 %v5319, %v5318
    %v5330 = vpack.c.b16 %v5321, %v5320
    %v5331 = vpack.c.b16 %v5323, %v5322
    %v5332 = vpack.c.b16 %v5325, %v5324
    %v5356 = vunpack.c.l.b16 %v4675
    %v5357 = vunpack.c.l.b16 %v4676
    %v5358 = vunpack.c.l.b16 %v4677
    %v5359 = vunpack.c.l.b16 %v4678
    %v5360 = vunpack.c.l.b16 %v4679
    %v5361 = vunpack.c.l.b16 %v4680
    %v5362 = vunpack.c.l.b16 %v4681
    %v5363 = vunpack.c.l.b16 %v4682
    %v5364 = vunpack.c.l.b16 %v4683
    %v5365 = vunpack.c.l.b16 %v4684
    %v5366 = vunpack.c.l.b16 %v4685
    %v5367 = vunpack.c.l.b16 %v4686
    %v5368 = vunpack.c.l.b16 %v4687
    %v5369 = vunpack.c.l.b16 %v4688
    %v5370 = vunpack.c.l.b16 %v4689
    %v5371 = vunpack.c.l.b16 %v4690
    %v5372 = vpack.c.b16 %v5357, %v5356
    %v5373 = vpack.c.b16 %v5359, %v5358
    %v5374 = vpack.c.b16 %v5361, %v5360
    %v5375 = vpack.c.b16 %v5363, %v5362
    %v5376 = vpack.c.b16 %v5365, %v5364
    %v5377 = vpack.c.b16 %v5367, %v5366
    %v5378 = vpack.c.b16 %v5369, %v5368
    %v5379 = vpack.c.b16 %v5371, %v5370
    %5388 = vmatprep.subr.bf16.mxu0 0
    %5389 = vmatpush1.bf16.msra.mxu0 %v5379
    %5390 = vmatprep.subr.bf16.mxu0 0
    %5391 = vmatpush1.bf16.msra.mxu0 %v5378
    %5392 = vmatprep.subr.bf16.mxu0 0
    %5393 = vmatpush1.bf16.msra.mxu0 %v5377
    %5394 = vmatprep.subr.bf16.mxu0 0
    %5395 = vmatpush1.bf16.msra.mxu0 %v5376
    %5396 = vmatprep.subr.bf16.mxu0 0
    %5397 = vmatpush1.bf16.msra.mxu0 %v5375
    %5398 = vmatprep.subr.bf16.mxu0 0
    %5399 = vmatpush1.bf16.msra.mxu0 %v5374
    %5400 = vmatprep.subr.bf16.mxu0 0
    %5401 = vmatpush1.bf16.msra.mxu0 %v5373
    %5402 = vmatprep.subr.bf16.mxu0 0
    %5403 = vmatpush1.bf16.msra.mxu0 %v5372
    %5404 = vmatprep.subr.bf16.mxu0 0
    %5405 = vmatpush2.bf16.msra.mxu0 0
    %5406 = vmatprep.subr.bf16.mxu0 0
    %5407 = vmatpush2.bf16.msra.mxu0 0
    %5408 = vmatprep.subr.bf16.mxu0 0
    %5409 = vmatpush2.bf16.msra.mxu0 0
    %5410 = vmatprep.subr.bf16.mxu0 0
    %5411 = vmatpush2.bf16.msra.mxu0 0
    %5412 = vmatprep.subr.bf16.mxu0 0
    %5413 = vmatpush2.bf16.msra.mxu0 0
    %5414 = vmatprep.subr.bf16.mxu0 0
    %5415 = vmatpush2.bf16.msra.mxu0 0
    %5416 = vmatprep.subr.bf16.mxu0 0
    %5417 = vmatpush2.bf16.msra.mxu0 0
    %5418 = vmatprep.subr.bf16.mxu0 0
    %5419 = vmatpush2.bf16.msra.mxu0 0
    %5420 = vmatprep.mubr.bf16.mxu0 0
    %5421 = vmatmul.mubr.bf16.gmra.mxu0 %v5326
    %v5422 = vpop.f32.mrf.mxu0
    %v5423 = vadd.f32 0.0, %v5422
    %v5424 = vpop.f32.mrf.mxu0
    %v5425 = vpop.f32.mrf.mxu0
    %v5426 = vadd.f32 0.0, %v5425
    %v5427 = vpop.f32.mrf.mxu0
    %5428 = vmatprep.mubr.bf16.mxu0 0
    %5429 = vmatmul.mubr.bf16.gmra.mxu0 %v5327
    %v5430 = vpop.f32.mrf.mxu0
    %v5431 = vadd.f32 0.0, %v5430
    %v5432 = vpop.f32.mrf.mxu0
    %v5433 = vpop.f32.mrf.mxu0
    %v5434 = vadd.f32 0.0, %v5433
    %v5435 = vpop.f32.mrf.mxu0
    %5436 = vmatprep.mubr.bf16.mxu0 0
    %5437 = vmatmul.mubr.bf16.gmra.mxu0 %v5328
    %v5438 = vpop.f32.mrf.mxu0
    %v5439 = vadd.f32 0.0, %v5438
    %v5440 = vpop.f32.mrf.mxu0
    %v5441 = vpop.f32.mrf.mxu0
    %v5442 = vadd.f32 0.0, %v5441
    %v5443 = vpop.f32.mrf.mxu0
    %5444 = vmatprep.mubr.bf16.mxu0 0
    %5445 = vmatmul.mubr.bf16.gmra.mxu0 %v5329
    %v5446 = vpop.f32.mrf.mxu0
    %v5447 = vadd.f32 0.0, %v5446
    %v5448 = vpop.f32.mrf.mxu0
    %v5449 = vpop.f32.mrf.mxu0
    %v5450 = vadd.f32 0.0, %v5449
    %v5451 = vpop.f32.mrf.mxu0
    %5452 = vmatprep.mubr.bf16.mxu0 0
    %5453 = vmatmul.mubr.bf16.gmra.mxu0 %v5330
    %v5454 = vpop.f32.mrf.mxu0
    %v5455 = vadd.f32 0.0, %v5454
    %v5456 = vpop.f32.mrf.mxu0
    %v5457 = vpop.f32.mrf.mxu0
    %v5458 = vadd.f32 0.0, %v5457
    %v5459 = vpop.f32.mrf.mxu0
    %5460 = vmatprep.mubr.bf16.mxu0 0
    %5461 = vmatmul.mubr.bf16.gmra.mxu0 %v5331
    %v5462 = vpop.f32.mrf.mxu0
    %v5463 = vadd.f32 0.0, %v5462
    %v5464 = vpop.f32.mrf.mxu0
    %v5465 = vpop.f32.mrf.mxu0
    %v5466 = vadd.f32 0.0, %v5465
    %v5467 = vpop.f32.mrf.mxu0
    %5468 = vmatprep.mubr.bf16.mxu0 0
    %5469 = vmatmul.mubr.bf16.gmra.mxu0 %v5332
    %v5470 = vpop.f32.mrf.mxu0
    %v5471 = vadd.f32 0.0, %v5470
    %v5472 = vpop.f32.mrf.mxu0
    %v5473 = vpop.f32.mrf.mxu0
    %v5474 = vadd.f32 0.0, %v5473
    %v5475 = vpop.f32.mrf.mxu0
    %5476 = vdwg.mxu0
    %v5477 = vadd.f32 %v5270, %v5423
    %v5478 = vadd.f32 %v5271, %v5426
    %v5479 = vadd.f32 %v5272, %v5431
    %v5480 = vadd.f32 %v5273, %v5434
    %v5481 = vadd.f32 %v5274, %v5439
    %v5482 = vadd.f32 %v5275, %v5442
    %v5483 = vadd.f32 %v5276, %v5447
    %v5484 = vadd.f32 %v5277, %v5450
    %v5485 = vadd.f32 %v5278, %v5455
    %v5486 = vadd.f32 %v5279, %v5458
    %v5487 = vadd.f32 %v5280, %v5463
    %v5488 = vadd.f32 %v5281, %v5466
    %v5489 = vadd.f32 %v5282, %v5471
    %v5490 = vadd.f32 %v5283, %v5474
    %v5491 = vld [vmem:[#allocation27] sm:$0x1]
    %v5492 = vmax.f32 %v5477, %v5481
    %v5493 = vmax.f32 %v5479, %v5483
    %v5494 = vmax.f32 %v5492, %v5485
    %v5495 = vmax.f32 %v5493, %v5487
    %v5496 = vmax.f32 %v5494, %v5489
    %v5497 = vmax.f32 %v5496, %v5495
    %v5498 = vmax.f32 %v5478, %v5482
    %v5499 = vmax.f32 %v5480, %v5484
    %v5500 = vmax.f32 %v5498, %v5486
    %v5501 = vmax.f32 %v5499, %v5488
    %v5502 = vmax.f32 %v5500, %v5490
    %v5503 = vmax.f32 %v5502, %v5501
    %v5505 = vlaneseq
    %v5506 = vshrl.u32 %v5505, 7
    %v5507 = vsub.s32 0, %v5506
    %v5508 = vrot.slane %v5491, %v5507
    %v5510 = vadd.f32 %v5497, %v5508
    %v5511 = vadd.f32 %v5503, %v5508
    %v5512 = vadd.f32 %v5477, %v5479
    %v5513 = vadd.f32 %v5512, %v5481
    %v5514 = vadd.f32 %v5513, %v5483
    %v5515 = vadd.f32 %v5514, %v5485
    %v5516 = vadd.f32 %v5515, %v5487
    %v5517 = vadd.f32 %v5516, %v5489
    %v5518 = vadd.f32 %v5478, %v5480
    %v5519 = vadd.f32 %v5518, %v5482
    %v5520 = vadd.f32 %v5519, %v5484
    %v5521 = vadd.f32 %v5520, %v5486
    %v5522 = vadd.f32 %v5521, %v5488
    %v5523 = vadd.f32 %v5522, %v5490
    %v5524 = vmul.f32 %v5517, 0.14285715
    %v5525 = vmul.f32 %v5523, 0.14285715
    %v5526 = vadd.f32 %v5524, %v5508
    %v5527 = vadd.f32 %v5525, %v5508
    %v5528 = vpack.c.bf16 %v4610, %v4609
    %v5529 = vld [vmem:[%s21] sm:$0xf]
    %v5530 = vld [vmem:[%s21 + $0x4] sm:$0xf]
    %v5531 = vld [vmem:[%s21 + $0x8] sm:$0xf]
    %v5532 = vld [vmem:[%s21 + $0xc] sm:$0xf]
    %v5533 = vld [vmem:[%s21 + $0x10] sm:$0xf]
    %v5534 = vld [vmem:[%s21 + $0x14] sm:$0xf]
    %v5535 = vld [vmem:[%s21 + $0x18] sm:$0xf]
    %v5536 = vld [vmem:[%s21 + $0x1c] sm:$0xf]
    %v5537 = vld [vmem:[%s21 + $0x20] sm:$0xf]
    %v5538 = vld [vmem:[%s21 + $0x24] sm:$0xf]
    %v5539 = vld [vmem:[%s21 + $0x28] sm:$0xf]
    %v5540 = vld [vmem:[%s21 + $0x2c] sm:$0xf]
    %v5541 = vld [vmem:[%s21 + $0x30] sm:$0xf]
    %v5542 = vld [vmem:[%s21 + $0x34] sm:$0xf]
    %v5543 = vld [vmem:[%s21 + $0x38] sm:$0xf]
    %v5544 = vld [vmem:[%s21 + $0x3c] sm:$0xf]
    %v5545 = vpack.c.bf16 %v4626, %v4625
    %v5546 = vld [vmem:[%s21 + $0x40] sm:$0xf]
    %v5547 = vld [vmem:[%s21 + $0x44] sm:$0xf]
    %v5548 = vld [vmem:[%s21 + $0x48] sm:$0xf]
    %v5549 = vld [vmem:[%s21 + $0x4c] sm:$0xf]
    %v5550 = vld [vmem:[%s21 + $0x50] sm:$0xf]
    %v5551 = vld [vmem:[%s21 + $0x54] sm:$0xf]
    %v5552 = vld [vmem:[%s21 + $0x58] sm:$0xf]
    %v5553 = vld [vmem:[%s21 + $0x5c] sm:$0xf]
    %v5554 = vld [vmem:[%s21 + $0x60] sm:$0xf]
    %v5555 = vld [vmem:[%s21 + $0x64] sm:$0xf]
    %v5556 = vld [vmem:[%s21 + $0x68] sm:$0xf]
    %v5557 = vld [vmem:[%s21 + $0x6c] sm:$0xf]
    %v5558 = vld [vmem:[%s21 + $0x70] sm:$0xf]
    %v5559 = vld [vmem:[%s21 + $0x74] sm:$0xf]
    %v5560 = vld [vmem:[%s21 + $0x78] sm:$0xf]
    %v5561 = vld [vmem:[%s21 + $0x7c] sm:$0xf]
    %v5578 = vunpack.c.l.b16 %v5546
    %v5579 = vunpack.c.l.b16 %v5547
    %v5580 = vunpack.c.l.b16 %v5548
    %v5581 = vunpack.c.l.b16 %v5549
    %v5582 = vunpack.c.l.b16 %v5550
    %v5583 = vunpack.c.l.b16 %v5551
    %v5584 = vunpack.c.l.b16 %v5552
    %v5585 = vunpack.c.l.b16 %v5553
    %v5586 = vunpack.c.l.b16 %v5554
    %v5587 = vunpack.c.l.b16 %v5555
    %v5588 = vunpack.c.l.b16 %v5556
    %v5589 = vunpack.c.l.b16 %v5557
    %v5590 = vunpack.c.l.b16 %v5558
    %v5591 = vunpack.c.l.b16 %v5559
    %v5592 = vunpack.c.l.b16 %v5560
    %v5593 = vunpack.c.l.b16 %v5561
    %v5594 = vpack.c.b16 %v5579, %v5578
    %v5595 = vpack.c.b16 %v5581, %v5580
    %v5596 = vpack.c.b16 %v5583, %v5582
    %v5597 = vpack.c.b16 %v5585, %v5584
    %v5598 = vpack.c.b16 %v5587, %v5586
    %v5599 = vpack.c.b16 %v5589, %v5588
    %v5600 = vpack.c.b16 %v5591, %v5590
    %v5601 = vpack.c.b16 %v5593, %v5592
    %5610 = vmatprep.subr.bf16.mxu0 0
    %5611 = vmatpush1.bf16.msra.mxu0 %v5601
    %5612 = vmatprep.subr.bf16.mxu0 0
    %5613 = vmatpush1.bf16.msra.mxu0 %v5600
    %5614 = vmatprep.subr.bf16.mxu0 0
    %5615 = vmatpush1.bf16.msra.mxu0 %v5599
    %5616 = vmatprep.subr.bf16.mxu0 0
    %5617 = vmatpush1.bf16.msra.mxu0 %v5598
    %5618 = vmatprep.subr.bf16.mxu0 0
    %5619 = vmatpush1.bf16.msra.mxu0 %v5597
    %5620 = vmatprep.subr.bf16.mxu0 0
    %5621 = vmatpush1.bf16.msra.mxu0 %v5596
    %5622 = vmatprep.subr.bf16.mxu0 0
    %5623 = vmatpush1.bf16.msra.mxu0 %v5595
    %5624 = vmatprep.subr.bf16.mxu0 0
    %5625 = vmatpush1.bf16.msra.mxu0 %v5594
    %5626 = vmatprep.subr.bf16.mxu0 0
    %5627 = vmatpush2.bf16.msra.mxu0 0
    %5628 = vmatprep.subr.bf16.mxu0 0
    %5629 = vmatpush2.bf16.msra.mxu0 0
    %5630 = vmatprep.subr.bf16.mxu0 0
    %5631 = vmatpush2.bf16.msra.mxu0 0
    %5632 = vmatprep.subr.bf16.mxu0 0
    %5633 = vmatpush2.bf16.msra.mxu0 0
    %5634 = vmatprep.subr.bf16.mxu0 0
    %5635 = vmatpush2.bf16.msra.mxu0 0
    %5636 = vmatprep.subr.bf16.mxu0 0
    %5637 = vmatpush2.bf16.msra.mxu0 0
    %5638 = vmatprep.subr.bf16.mxu0 0
    %5639 = vmatpush2.bf16.msra.mxu0 0
    %5640 = vmatprep.subr.bf16.mxu0 0
    %5641 = vmatpush2.bf16.msra.mxu0 0
    %5642 = vmatprep.mubr.bf16.mxu0 0
    %5643 = vmatmul.mubr.bf16.gmra.mxu0 %v5545
    %v5644 = vpop.f32.mrf.mxu0
    %v5645 = vadd.f32 0.0, %v5644
    %v5646 = vpop.f32.mrf.mxu0
    %v5647 = vpop.f32.mrf.mxu0
    %v5648 = vadd.f32 0.0, %v5647
    %v5649 = vpop.f32.mrf.mxu0
    %5650 = vdwg.mxu0
    %v5667 = vunpack.c.l.b16 %v5529
    %v5668 = vunpack.c.l.b16 %v5530
    %v5669 = vunpack.c.l.b16 %v5531
    %v5670 = vunpack.c.l.b16 %v5532
    %v5671 = vunpack.c.l.b16 %v5533
    %v5672 = vunpack.c.l.b16 %v5534
    %v5673 = vunpack.c.l.b16 %v5535
    %v5674 = vunpack.c.l.b16 %v5536
    %v5675 = vunpack.c.l.b16 %v5537
    %v5676 = vunpack.c.l.b16 %v5538
    %v5677 = vunpack.c.l.b16 %v5539
    %v5678 = vunpack.c.l.b16 %v5540
    %v5679 = vunpack.c.l.b16 %v5541
    %v5680 = vunpack.c.l.b16 %v5542
    %v5681 = vunpack.c.l.b16 %v5543
    %v5682 = vunpack.c.l.b16 %v5544
    %v5683 = vpack.c.b16 %v5668, %v5667
    %v5684 = vpack.c.b16 %v5670, %v5669
    %v5685 = vpack.c.b16 %v5672, %v5671
    %v5686 = vpack.c.b16 %v5674, %v5673
    %v5687 = vpack.c.b16 %v5676, %v5675
    %v5688 = vpack.c.b16 %v5678, %v5677
    %v5689 = vpack.c.b16 %v5680, %v5679
    %v5690 = vpack.c.b16 %v5682, %v5681
    %5699 = vmatprep.subr.bf16.mxu0 0
    %5700 = vmatpush1.bf16.msra.mxu0 %v5690
    %5701 = vmatprep.subr.bf16.mxu0 0
    %5702 = vmatpush1.bf16.msra.mxu0 %v5689
    %5703 = vmatprep.subr.bf16.mxu0 0
    %5704 = vmatpush1.bf16.msra.mxu0 %v5688
    %5705 = vmatprep.subr.bf16.mxu0 0
    %5706 = vmatpush1.bf16.msra.mxu0 %v5687
    %5707 = vmatprep.subr.bf16.mxu0 0
    %5708 = vmatpush1.bf16.msra.mxu0 %v5686
    %5709 = vmatprep.subr.bf16.mxu0 0
    %5710 = vmatpush1.bf16.msra.mxu0 %v5685
    %5711 = vmatprep.subr.bf16.mxu0 0
    %5712 = vmatpush1.bf16.msra.mxu0 %v5684
    %5713 = vmatprep.subr.bf16.mxu0 0
    %5714 = vmatpush1.bf16.msra.mxu0 %v5683
    %5715 = vmatprep.subr.bf16.mxu0 0
    %5716 = vmatpush2.bf16.msra.mxu0 0
    %5717 = vmatprep.subr.bf16.mxu0 0
    %5718 = vmatpush2.bf16.msra.mxu0 0
    %5719 = vmatprep.subr.bf16.mxu0 0
    %5720 = vmatpush2.bf16.msra.mxu0 0
    %5721 = vmatprep.subr.bf16.mxu0 0
    %5722 = vmatpush2.bf16.msra.mxu0 0
    %5723 = vmatprep.subr.bf16.mxu0 0
    %5724 = vmatpush2.bf16.msra.mxu0 0
    %5725 = vmatprep.subr.bf16.mxu0 0
    %5726 = vmatpush2.bf16.msra.mxu0 0
    %5727 = vmatprep.subr.bf16.mxu0 0
    %5728 = vmatpush2.bf16.msra.mxu0 0
    %5729 = vmatprep.subr.bf16.mxu0 0
    %5730 = vmatpush2.bf16.msra.mxu0 0
    %5731 = vmatprep.mubr.bf16.mxu0 0
    %5732 = vmatmul.mubr.bf16.gmra.mxu0 %v5528
    %v5733 = vpop.f32.mrf.mxu0
    %v5734 = vadd.f32 %v5645, %v5733
    %v5735 = vpop.f32.mrf.mxu0
    %v5736 = vpop.f32.mrf.mxu0
    %v5737 = vadd.f32 %v5648, %v5736
    %v5738 = vpop.f32.mrf.mxu0
    %5739 = vdwg.mxu0
    %v5740 = vpack.c.bf16 %v5511, %v5510
    %v5741 = vld [vmem:[%s21 + $0x80] sm:$0xf]
    %v5742 = vld [vmem:[%s21 + $0x84] sm:$0xf]
    %v5743 = vld [vmem:[%s21 + $0x88] sm:$0xf]
    %v5744 = vld [vmem:[%s21 + $0x8c] sm:$0xf]
    %v5745 = vld [vmem:[%s21 + $0x90] sm:$0xf]
    %v5746 = vld [vmem:[%s21 + $0x94] sm:$0xf]
    %v5747 = vld [vmem:[%s21 + $0x98] sm:$0xf]
    %v5748 = vld [vmem:[%s21 + $0x9c] sm:$0xf]
    %v5749 = vld [vmem:[%s21 + $0xa0] sm:$0xf]
    %v5750 = vld [vmem:[%s21 + $0xa4] sm:$0xf]
    %v5751 = vld [vmem:[%s21 + $0xa8] sm:$0xf]
    %v5752 = vld [vmem:[%s21 + $0xac] sm:$0xf]
    %v5753 = vld [vmem:[%s21 + $0xb0] sm:$0xf]
    %v5754 = vld [vmem:[%s21 + $0xb4] sm:$0xf]
    %v5755 = vld [vmem:[%s21 + $0xb8] sm:$0xf]
    %v5756 = vld [vmem:[%s21 + $0xbc] sm:$0xf]
    %v5773 = vunpack.c.l.b16 %v5741
    %v5774 = vunpack.c.l.b16 %v5742
    %v5775 = vunpack.c.l.b16 %v5743
    %v5776 = vunpack.c.l.b16 %v5744
    %v5777 = vunpack.c.l.b16 %v5745
    %v5778 = vunpack.c.l.b16 %v5746
    %v5779 = vunpack.c.l.b16 %v5747
    %v5780 = vunpack.c.l.b16 %v5748
    %v5781 = vunpack.c.l.b16 %v5749
    %v5782 = vunpack.c.l.b16 %v5750
    %v5783 = vunpack.c.l.b16 %v5751
    %v5784 = vunpack.c.l.b16 %v5752
    %v5785 = vunpack.c.l.b16 %v5753
    %v5786 = vunpack.c.l.b16 %v5754
    %v5787 = vunpack.c.l.b16 %v5755
    %v5788 = vunpack.c.l.b16 %v5756
    %v5789 = vpack.c.b16 %v5774, %v5773
    %v5790 = vpack.c.b16 %v5776, %v5775
    %v5791 = vpack.c.b16 %v5778, %v5777
    %v5792 = vpack.c.b16 %v5780, %v5779
    %v5793 = vpack.c.b16 %v5782, %v5781
    %v5794 = vpack.c.b16 %v5784, %v5783
    %v5795 = vpack.c.b16 %v5786, %v5785
    %v5796 = vpack.c.b16 %v5788, %v5787
    %5805 = vmatprep.subr.bf16.mxu0 0
    %5806 = vmatpush1.bf16.msra.mxu0 %v5796
    %5807 = vmatprep.subr.bf16.mxu0 0
    %5808 = vmatpush1.bf16.msra.mxu0 %v5795
    %5809 = vmatprep.subr.bf16.mxu0 0
    %5810 = vmatpush1.bf16.msra.mxu0 %v5794
    %5811 = vmatprep.subr.bf16.mxu0 0
    %5812 = vmatpush1.bf16.msra.mxu0 %v5793
    %5813 = vmatprep.subr.bf16.mxu0 0
    %5814 = vmatpush1.bf16.msra.mxu0 %v5792
    %5815 = vmatprep.subr.bf16.mxu0 0
    %5816 = vmatpush1.bf16.msra.mxu0 %v5791
    %5817 = vmatprep.subr.bf16.mxu0 0
    %5818 = vmatpush1.bf16.msra.mxu0 %v5790
    %5819 = vmatprep.subr.bf16.mxu0 0
    %5820 = vmatpush1.bf16.msra.mxu0 %v5789
    %5821 = vmatprep.subr.bf16.mxu0 0
    %5822 = vmatpush2.bf16.msra.mxu0 0
    %5823 = vmatprep.subr.bf16.mxu0 0
    %5824 = vmatpush2.bf16.msra.mxu0 0
    %5825 = vmatprep.subr.bf16.mxu0 0
    %5826 = vmatpush2.bf16.msra.mxu0 0
    %5827 = vmatprep.subr.bf16.mxu0 0
    %5828 = vmatpush2.bf16.msra.mxu0 0
    %5829 = vmatprep.subr.bf16.mxu0 0
    %5830 = vmatpush2.bf16.msra.mxu0 0
    %5831 = vmatprep.subr.bf16.mxu0 0
    %5832 = vmatpush2.bf16.msra.mxu0 0
    %5833 = vmatprep.subr.bf16.mxu0 0
    %5834 = vmatpush2.bf16.msra.mxu0 0
    %5835 = vmatprep.subr.bf16.mxu0 0
    %5836 = vmatpush2.bf16.msra.mxu0 0
    %5837 = vmatprep.mubr.bf16.mxu0 0
    %5838 = vmatmul.mubr.bf16.gmra.mxu0 %v5740
    %v5839 = vpop.f32.mrf.mxu0
    %v5840 = vadd.f32 0.0, %v5839
    %v5841 = vpop.f32.mrf.mxu0
    %v5842 = vpop.f32.mrf.mxu0
    %v5843 = vadd.f32 0.0, %v5842
    %v5844 = vpop.f32.mrf.mxu0
    %5845 = vdwg.mxu0
    %v5846 = vadd.f32 %v5734, %v5840
    %v5847 = vadd.f32 %v5737, %v5843
    %v5848 = vpack.c.bf16 %v5527, %v5526
    %v5849 = vld [vmem:[%s21 + $0xc0] sm:$0xf]
    %v5850 = vld [vmem:[%s21 + $0xc4] sm:$0xf]
    %v5851 = vld [vmem:[%s21 + $0xc8] sm:$0xf]
    %v5852 = vld [vmem:[%s21 + $0xcc] sm:$0xf]
    %v5853 = vld [vmem:[%s21 + $0xd0] sm:$0xf]
    %v5854 = vld [vmem:[%s21 + $0xd4] sm:$0xf]
    %v5855 = vld [vmem:[%s21 + $0xd8] sm:$0xf]
    %v5856 = vld [vmem:[%s21 + $0xdc] sm:$0xf]
    %v5857 = vld [vmem:[%s21 + $0xe0] sm:$0xf]
    %v5858 = vld [vmem:[%s21 + $0xe4] sm:$0xf]
    %v5859 = vld [vmem:[%s21 + $0xe8] sm:$0xf]
    %v5860 = vld [vmem:[%s21 + $0xec] sm:$0xf]
    %v5861 = vld [vmem:[%s21 + $0xf0] sm:$0xf]
    %v5862 = vld [vmem:[%s21 + $0xf4] sm:$0xf]
    %v5863 = vld [vmem:[%s21 + $0xf8] sm:$0xf]
    %v5864 = vld [vmem:[%s21 + $0xfc] sm:$0xf]
    %v5881 = vunpack.c.l.b16 %v5849
    %v5882 = vunpack.c.l.b16 %v5850
    %v5883 = vunpack.c.l.b16 %v5851
    %v5884 = vunpack.c.l.b16 %v5852
    %v5885 = vunpack.c.l.b16 %v5853
    %v5886 = vunpack.c.l.b16 %v5854
    %v5887 = vunpack.c.l.b16 %v5855
    %v5888 = vunpack.c.l.b16 %v5856
    %v5889 = vunpack.c.l.b16 %v5857
    %v5890 = vunpack.c.l.b16 %v5858
    %v5891 = vunpack.c.l.b16 %v5859
    %v5892 = vunpack.c.l.b16 %v5860
    %v5893 = vunpack.c.l.b16 %v5861
    %v5894 = vunpack.c.l.b16 %v5862
    %v5895 = vunpack.c.l.b16 %v5863
    %v5896 = vunpack.c.l.b16 %v5864
    %v5897 = vpack.c.b16 %v5882, %v5881
    %v5898 = vpack.c.b16 %v5884, %v5883
    %v5899 = vpack.c.b16 %v5886, %v5885
    %v5900 = vpack.c.b16 %v5888, %v5887
    %v5901 = vpack.c.b16 %v5890, %v5889
    %v5902 = vpack.c.b16 %v5892, %v5891
    %v5903 = vpack.c.b16 %v5894, %v5893
    %v5904 = vpack.c.b16 %v5896, %v5895
    %5913 = vmatprep.subr.bf16.mxu0 0
    %5914 = vmatpush1.bf16.msra.mxu0 %v5904
    %5915 = vmatprep.subr.bf16.mxu0 0
    %5916 = vmatpush1.bf16.msra.mxu0 %v5903
    %5917 = vmatprep.subr.bf16.mxu0 0
    %5918 = vmatpush1.bf16.msra.mxu0 %v5902
    %5919 = vmatprep.subr.bf16.mxu0 0
    %5920 = vmatpush1.bf16.msra.mxu0 %v5901
    %5921 = vmatprep.subr.bf16.mxu0 0
    %5922 = vmatpush1.bf16.msra.mxu0 %v5900
    %5923 = vmatprep.subr.bf16.mxu0 0
    %5924 = vmatpush1.bf16.msra.mxu0 %v5899
    %5925 = vmatprep.subr.bf16.mxu0 0
    %5926 = vmatpush1.bf16.msra.mxu0 %v5898
    %5927 = vmatprep.subr.bf16.mxu0 0
    %5928 = vmatpush1.bf16.msra.mxu0 %v5897
    %5929 = vmatprep.subr.bf16.mxu0 0
    %5930 = vmatpush2.bf16.msra.mxu0 0
    %5931 = vmatprep.subr.bf16.mxu0 0
    %5932 = vmatpush2.bf16.msra.mxu0 0
    %5933 = vmatprep.subr.bf16.mxu0 0
    %5934 = vmatpush2.bf16.msra.mxu0 0
    %5935 = vmatprep.subr.bf16.mxu0 0
    %5936 = vmatpush2.bf16.msra.mxu0 0
    %5937 = vmatprep.subr.bf16.mxu0 0
    %5938 = vmatpush2.bf16.msra.mxu0 0
    %5939 = vmatprep.subr.bf16.mxu0 0
    %5940 = vmatpush2.bf16.msra.mxu0 0
    %5941 = vmatprep.subr.bf16.mxu0 0
    %5942 = vmatpush2.bf16.msra.mxu0 0
    %5943 = vmatprep.subr.bf16.mxu0 0
    %5944 = vmatpush2.bf16.msra.mxu0 0
    %5945 = vmatprep.mubr.bf16.mxu0 0
    %5946 = vmatmul.mubr.bf16.gmra.mxu0 %v5848
    %v5947 = vpop.f32.mrf.mxu0
    %v5948 = vadd.f32 0.0, %v5947
    %v5949 = vpop.f32.mrf.mxu0
    %v5950 = vpop.f32.mrf.mxu0
    %v5951 = vadd.f32 0.0, %v5950
    %v5952 = vpop.f32.mrf.mxu0
    %5953 = vdwg.mxu0
    %v5954 = vadd.f32 %v5846, %v5948
    %v5955 = vadd.f32 %v5847, %v5951
    %v5956 = vld [vmem:[#allocation29] sm:$0x1]
    %v5958 = vlaneseq
    %v5959 = vshrl.u32 %v5958, 7
    %v5960 = vsub.s32 0, %v5959
    %v5961 = vrot.slane %v5956, %v5960
    %v5963 = vadd.f32 %v5954, %v5961
    %v5964 = vadd.f32 %v5955, %v5961
    %v5965 = vmax.f32 %v5963, 0.0
    %v5966 = vmax.f32 %v5964, 0.0
    %v5967 = vpack.c.bf16 %v5966, %v5965
    %v5968 = vld [vmem:[#allocation30] sm:$0xf]
    %v5969 = vld [vmem:[#allocation30 + $0x4] sm:$0xf]
    %v5970 = vld [vmem:[#allocation30 + $0x8] sm:$0xf]
    %v5971 = vld [vmem:[#allocation30 + $0xc] sm:$0xf]
    %v5972 = vld [vmem:[#allocation30 + $0x10] sm:$0xf]
    %v5973 = vld [vmem:[#allocation30 + $0x14] sm:$0xf]
    %v5974 = vld [vmem:[#allocation30 + $0x18] sm:$0xf]
    %v5975 = vld [vmem:[#allocation30 + $0x1c] sm:$0xf]
    %v5976 = vld [vmem:[#allocation32] sm:$0x1]
    %v5978 = vlaneseq
    %v5979 = vshrl.u32 %v5978, 7
    %v5980 = vsub.s32 0, %v5979
    %v5981 = vrot.slane %v5976, %v5980
    %v5991 = vunpack.c.l.b16 %v5968
    %v5992 = vunpack.c.l.b16 %v5969
    %v5993 = vunpack.c.l.b16 %v5970
    %v5994 = vunpack.c.l.b16 %v5971
    %v5995 = vunpack.c.l.b16 %v5972
    %v5996 = vunpack.c.l.b16 %v5973
    %v5997 = vunpack.c.l.b16 %v5974
    %v5998 = vunpack.c.l.b16 %v5975
    %v5999 = vpack.c.b16 %v5992, %v5991
    %v6000 = vpack.c.b16 %v5994, %v5993
    %v6001 = vpack.c.b16 %v5996, %v5995
    %v6002 = vpack.c.b16 %v5998, %v5997
    %vm6007 = vcmask 523264
    %v6009 = vsel %vm6007, %v5967, 0
    %6011 = vmatprep.subr.bf16.mxu0 0
    %6012 = vmatpush1.bf16.msra.mxu0 0
    %6013 = vmatprep.subr.bf16.mxu0 0
    %6014 = vmatpush1.bf16.msra.mxu0 0
    %6015 = vmatprep.subr.bf16.mxu0 0
    %6016 = vmatpush1.bf16.msra.mxu0 0
    %6017 = vmatprep.subr.bf16.mxu0 0
    %6018 = vmatpush1.bf16.msra.mxu0 0
    %6019 = vmatprep.subr.bf16.mxu0 0
    %6020 = vmatpush1.bf16.msra.mxu0 %v6002
    %6021 = vmatprep.subr.bf16.mxu0 0
    %6022 = vmatpush1.bf16.msra.mxu0 %v6001
    %6023 = vmatprep.subr.bf16.mxu0 0
    %6024 = vmatpush1.bf16.msra.mxu0 %v6000
    %6025 = vmatprep.subr.bf16.mxu0 0
    %6026 = vmatpush1.bf16.msra.mxu0 %v5999
    %6027 = vmatprep.subr.bf16.mxu0 0
    %6028 = vmatpush2.bf16.msra.mxu0 0
    %6029 = vmatprep.subr.bf16.mxu0 0
    %6030 = vmatpush2.bf16.msra.mxu0 0
    %6031 = vmatprep.subr.bf16.mxu0 0
    %6032 = vmatpush2.bf16.msra.mxu0 0
    %6033 = vmatprep.subr.bf16.mxu0 0
    %6034 = vmatpush2.bf16.msra.mxu0 0
    %6035 = vmatprep.subr.bf16.mxu0 0
    %6036 = vmatpush2.bf16.msra.mxu0 0
    %6037 = vmatprep.subr.bf16.mxu0 0
    %6038 = vmatpush2.bf16.msra.mxu0 0
    %6039 = vmatprep.subr.bf16.mxu0 0
    %6040 = vmatpush2.bf16.msra.mxu0 0
    %6041 = vmatprep.subr.bf16.mxu0 0
    %6042 = vmatpush2.bf16.msra.mxu0 0
    %6043 = vmatprep.mubr.bf16.mxu0 0
    %6044 = vmatmul.mubr.bf16.gmra.mxu0 %v6009
    %v6045 = vpop.f32.mrf.mxu0
    %v6046 = vadd.f32 %v5981, %v6045
    %v6047 = vpop.f32.mrf.mxu0
    %v6048 = vpop.f32.mrf.mxu0
    %v6049 = vadd.f32 %v5981, %v6048
    %v6050 = vpop.f32.mrf.mxu0
    %6051 = vdwg.mxu0
    %v6052 = vmax.f32 %v6046, 0.0
    %v6053 = vmax.f32 %v6049, 0.0
    %v6054 = vpack.c.bf16 %v6053, %v6052
    %v6055 = vld [vmem:[%s25] sm:$0xf]
    %v6056 = vld [vmem:[%s25 + $0x4] sm:$0xf]
    %v6057 = vld [vmem:[%s25 + $0x8] sm:$0xf]
    %v6058 = vld [vmem:[%s25 + $0xc] sm:$0xf]
    %v6059 = vld [vmem:[%s25 + $0x10] sm:$0xf]
    %v6060 = vld [vmem:[%s25 + $0x14] sm:$0xf]
    %v6061 = vld [vmem:[%s25 + $0x18] sm:$0xf]
    %v6062 = vld [vmem:[%s25 + $0x1c] sm:$0xf]
    %v6063 = vld [vmem:[#allocation33] sm:$0x1]
    %v6065 = vlaneseq
    %v6066 = vshrl.u32 %v6065, 7
    %v6067 = vsub.s32 0, %v6066
    %v6068 = vrot.slane %v6063, %v6067
    %v6078 = vunpack.c.l.b16 %v6055
    %v6079 = vunpack.c.l.b16 %v6056
    %v6080 = vunpack.c.l.b16 %v6057
    %v6081 = vunpack.c.l.b16 %v6058
    %v6082 = vunpack.c.l.b16 %v6059
    %v6083 = vunpack.c.l.b16 %v6060
    %v6084 = vunpack.c.l.b16 %v6061
    %v6085 = vunpack.c.l.b16 %v6062
    %v6086 = vpack.c.b16 %v6079, %v6078
    %v6087 = vpack.c.b16 %v6081, %v6080
    %v6088 = vpack.c.b16 %v6083, %v6082
    %v6089 = vpack.c.b16 %v6085, %v6084
    %v6095 = vsel %vm6007, %v6054, 0
    %6097 = vmatprep.subr.bf16.mxu0 0
    %6098 = vmatpush1.bf16.msra.mxu0 0
    %6099 = vmatprep.subr.bf16.mxu0 0
    %6100 = vmatpush1.bf16.msra.mxu0 0
    %6101 = vmatprep.subr.bf16.mxu0 0
    %6102 = vmatpush1.bf16.msra.mxu0 0
    %6103 = vmatprep.subr.bf16.mxu0 0
    %6104 = vmatpush1.bf16.msra.mxu0 0
    %6105 = vmatprep.subr.bf16.mxu0 0
    %6106 = vmatpush1.bf16.msra.mxu0 %v6089
    %6107 = vmatprep.subr.bf16.mxu0 0
    %6108 = vmatpush1.bf16.msra.mxu0 %v6088
    %6109 = vmatprep.subr.bf16.mxu0 0
    %6110 = vmatpush1.bf16.msra.mxu0 %v6087
    %6111 = vmatprep.subr.bf16.mxu0 0
    %6112 = vmatpush1.bf16.msra.mxu0 %v6086
    %6113 = vmatprep.subr.bf16.mxu0 0
    %6114 = vmatpush2.bf16.msra.mxu0 0
    %6115 = vmatprep.subr.bf16.mxu0 0
    %6116 = vmatpush2.bf16.msra.mxu0 0
    %6117 = vmatprep.subr.bf16.mxu0 0
    %6118 = vmatpush2.bf16.msra.mxu0 0
    %6119 = vmatprep.subr.bf16.mxu0 0
    %6120 = vmatpush2.bf16.msra.mxu0 0
    %6121 = vmatprep.subr.bf16.mxu0 0
    %6122 = vmatpush2.bf16.msra.mxu0 0
    %6123 = vmatprep.subr.bf16.mxu0 0
    %6124 = vmatpush2.bf16.msra.mxu0 0
    %6125 = vmatprep.subr.bf16.mxu0 0
    %6126 = vmatpush2.bf16.msra.mxu0 0
    %6127 = vmatprep.subr.bf16.mxu0 0
    %6128 = vmatpush2.bf16.msra.mxu0 0
    %6129 = vmatprep.mubr.bf16.mxu0 0
    %6130 = vmatmul.mubr.bf16.gmra.mxu0 %v6095
    %v6131 = vpop.f32.mrf.mxu0
    %v6132 = vadd.f32 %v6068, %v6131
    %v6133 = vpop.f32.mrf.mxu0
    %v6134 = vpop.f32.mrf.mxu0
    %v6135 = vadd.f32 %v6068, %v6134
    %v6136 = vpop.f32.mrf.mxu0
    %6137 = vdwg.mxu0
    %vm6138 = vcmask 56320
    %6139 = vst.msk [vmem:[%s27] sm:$0xff] %vm6138, %v6132
    %6140 = vst.msk [vmem:[%s27 + $0x8] sm:$0xff] %vm6138, %v6135
    // Predicated region
    $region181: #{lstm_gru_cnn_forward.1} parent=1 // pred_check
      _
    $region182: #{lstm_gru_cnn_forward.1} parent=1 // pred_check_branch
      %6142 = sbr.rel (0) target = $region184
    $region183: #{lstm_gru_cnn_forward.1} parent=1 // pred_region
      _
    $region184: #{lstm_gru_cnn_forward.1} parent=1 // pred_fallthru
      _
    // Predicated region
    $region185: #{lstm_gru_cnn_forward.1} parent=1 // pred_check
      _
    $region186: #{lstm_gru_cnn_forward.1} parent=1 // pred_check_branch
      %6144 = sbr.rel (0) target = $region188
    $region187: #{lstm_gru_cnn_forward.1} parent=1 // pred_region
      _
    $region188: #{lstm_gru_cnn_forward.1} parent=1 // pred_fallthru
      _
    %6145 = vsyncpa [#allocation11], 1
    %6146 = vsyncpa [#allocation13], 1
    %6147 = vsyncpa [#allocation16], 1
    %6148 = vsyncpa [#allocation19], 1
    %6149 = vsyncpa [#allocation22], 1
    %6150 = vsyncpa [#allocation25], 1
    %6151 = vsyncpa [#allocation28], 1
    %6152 = vsyncpa [#allocation31], 1
    %6153 = vsyncpa [#allocation34], 1

</llo_original>
